<compile_context>
chip_gen: v5e
topology: v5e:2x2
jax: 0.10.0
libtpu: 0.0.40
codegen_flags: <defaults>
</compile_context>

<pallas_src>
import jax
import jax.numpy as jnp
from jax.experimental import pallas as pl
from jax.experimental.pallas import tpu as pltpu

# Hidden widths fixed by the PyTorch module.
_H1, _H2, _H3 = 256, 512, 1024

# Row layout of the consolidated f32 "small vector" slab (bias / gamma / beta).
_VEC_LAYOUT = (
    "b1", "g1", "t1",          # encoder layer 1 (width 256)
    "b2", "g2", "t2",          # encoder layer 2 (width 512)
    "b3", "g3", "t3",          # encoder layer 3 (width 1024)
    "bml",                     # fused fc_mu|fc_logvar bias (width 2*latent)
    "b4", "g4", "t4",          # decoder layer 1 (width 1024)
    "b5", "g5", "t5",          # decoder layer 2 (width 512)
    "b6", "g6", "t6",          # decoder layer 3 (width 256)
    "b7",                      # final linear bias (width input_dim)
)
_ROW = {name: i for i, name in enumerate(_VEC_LAYOUT)}
_WEIGHT_ORDER = ("w1", "w2", "w3", "wml", "w4z", "w4c", "w5", "w6", "w7")


# ----------------------------------------------------------------------------
# Pallas kernel: whole CVAE forward, VMEM-resident, with manual weight
# streaming so decoder-weight DMA hides under encoder compute.
# ----------------------------------------------------------------------------
def cvae_kernel(
    # auto-pipelined (VMEM) inputs
    x_ref, c_ref, eps_ref, vec_ref,
    # weights left in HBM (memory_space=pl.ANY), bf16
    w1_hbm, w2_hbm, w3_hbm, wml_hbm, w4z_hbm, w4c_hbm, w5_hbm, w6_hbm, w7_hbm,
    # output: [recon | mu | logvar] lane-packed slab
    out_ref,
    # scratch: one VMEM buffer per weight + DMA semaphores
    w1b, w2b, w3b, wmlb, w4zb, w4cb, w5b, w6b, w7b, sems,
):
    input_dim = x_ref.shape[1]
    latent = eps_ref.shape[1]

    # Kick off every weight DMA (HBM -> VMEM) immediately, in use order; the
    # DMA engine streams them while the MXU works through earlier layers.
    srcs = (w1_hbm, w2_hbm, w3_hbm, wml_hbm, w4z_hbm, w4c_hbm, w5_hbm, w6_hbm, w7_hbm)
    dsts = (w1b, w2b, w3b, wmlb, w4zb, w4cb, w5b, w6b, w7b)
    copies = []
    for i, (s, d) in enumerate(zip(srcs, dsts)):
        cp = pltpu.make_async_copy(s, d, sems.at[i])
        cp.start()
        copies.append(cp)

    def bvec(name, n):
        r = _ROW[name]
        return vec_ref[r:r + 1, :n]          # (1, n) f32

    def mm(h, wbuf):
        # bf16 x bf16 -> f32 accumulation on the MXU.
        return jnp.dot(h.astype(jnp.bfloat16), wbuf[...],
                       preferred_element_type=jnp.float32)

    def lrelu(h):
        return jnp.where(h > 0, h, 0.2 * h)

    def bn(h, gname, tname, n):
        # BatchNorm1d, training mode: batch mean + biased batch variance (f32).
        mean = jnp.mean(h, axis=0, keepdims=True)
        var = jnp.mean((h - mean) * (h - mean), axis=0, keepdims=True)
        inv = jax.lax.rsqrt(var + 1e-5)
        return (h - mean) * inv * bvec(gname, n) + bvec(tname, n)

    x = x_ref[...]
    cond = c_ref[...]
    eps = eps_ref[...]

    # ---- encoder ----
    copies[0].wait()
    h = bn(lrelu(mm(x, w1b) + bvec("b1", _H1)), "g1", "t1", _H1)      # [B, 256]
    copies[1].wait()
    h = bn(lrelu(mm(h, w2b) + bvec("b2", _H2)), "g2", "t2", _H2)      # [B, 512]
    copies[2].wait()
    h = bn(lrelu(mm(h, w3b) + bvec("b3", _H3)), "g3", "t3", _H3)      # [B, 1024]

    # ---- fused fc_mu | fc_logvar head (single [1024, 2*latent] matmul) ----
    copies[3].wait()
    ml = mm(h, wmlb) + bvec("bml", 2 * latent)                        # [B, 2L]
    mu = ml[:, :latent]
    logvar = ml[:, latent:2 * latent]

    # ---- reparameterize (training mode) ----
    z = mu + eps * jnp.exp(0.5 * logvar)

    # ---- decoder: concat(z, cond) @ W4 == z @ W4z + cond @ W4c ----
    copies[4].wait()
    copies[5].wait()
    d = mm(z, w4zb) + mm(cond, w4cb) + bvec("b4", _H3)
    d = bn(lrelu(d), "g4", "t4", _H3)                                 # [B, 1024]
    copies[6].wait()
    d = bn(lrelu(mm(d, w5b) + bvec("b5", _H2)), "g5", "t5", _H2)      # [B, 512]
    copies[7].wait()
    d = bn(lrelu(mm(d, w6b) + bvec("b6", _H1)), "g6", "t6", _H1)      # [B, 256]
    copies[8].wait()
    recon = mm(d, w7b) + bvec("b7", input_dim)                        # [B, in]

    # single lane-packed output slab: [recon | mu | logvar]
    out_ref[:, :input_dim] = recon
    out_ref[:, input_dim:input_dim + latent] = mu
    out_ref[:, input_dim + latent:input_dim + 2 * latent] = logvar


# ----------------------------------------------------------------------------
# Wrapper
# ----------------------------------------------------------------------------
@jax.jit
def cvae_forward(x, condition, eps, weights, vec_slab):
    """weights: tuple of bf16 matrices in _WEIGHT_ORDER; vec_slab: [20, W] f32."""
    B, input_dim = x.shape
    latent = eps.shape[1]
    out_w = input_dim + 2 * latent
    n_w = len(weights)

    in_specs = [
        pl.BlockSpec(x.shape, lambda i: (0, 0)),
        pl.BlockSpec(condition.shape, lambda i: (0, 0)),
        pl.BlockSpec(eps.shape, lambda i: (0, 0)),
        pl.BlockSpec(vec_slab.shape, lambda i: (0, 0)),
    ] + [pl.BlockSpec(memory_space=pl.ANY) for _ in range(n_w)]

    scratch_shapes = [pltpu.VMEM(w.shape, w.dtype) for w in weights]
    scratch_shapes.append(pltpu.SemaphoreType.DMA((n_w,)))

    out = pl.pallas_call(
        cvae_kernel,
        grid=(1,),
        in_specs=in_specs,
        out_specs=pl.BlockSpec((B, out_w), lambda i: (0, 0)),
        out_shape=jax.ShapeDtypeStruct((B, out_w), jnp.float32),
        scratch_shapes=scratch_shapes,
        compiler_params=pltpu.CompilerParams(
            dimension_semantics=("arbitrary",),
            # ~4 MiB actually used; 32 MiB is legal on every generation
            # (v7x has only 64 MiB physical VMEM per TensorCore).
            vmem_limit_bytes=32 * 1024 * 1024,
        ),
    )(x, condition, eps, vec_slab, *weights)

    recon = out[:, :input_dim]
    mu = out[:, input_dim:input_dim + latent]
    logvar = out[:, input_dim + latent:]
    return recon, mu, logvar


# ----------------------------------------------------------------------------
# Deterministic parameter construction (synthetic init, shapes from __init__)
# ----------------------------------------------------------------------------
def make_params(key, input_dim, latent_dim, condition_dim):
    keys = iter(jax.random.split(key, 32))

    def linear(din, dout):
        w = (jax.random.normal(next(keys), (din, dout), jnp.float32)
             * (1.0 / jnp.sqrt(jnp.float32(din))))
        b = jax.random.normal(next(keys), (1, dout), jnp.float32) * 0.01
        return w, b

    def bn_params(d):
        return jnp.ones((1, d), jnp.float32), jnp.zeros((1, d), jnp.float32)

    p = {}
    # encoder: (Linear, LeakyReLU, BN) x 3
    p["w1"], p["b1"] = linear(input_dim, _H1)
    p["g1"], p["t1"] = bn_params(_H1)
    p["w2"], p["b2"] = linear(_H1, _H2)
    p["g2"], p["t2"] = bn_params(_H2)
    p["w3"], p["b3"] = linear(_H2, _H3)
    p["g3"], p["t3"] = bn_params(_H3)

    # fc_mu / fc_logvar, fused into one head
    wmu, bmu = linear(_H3, latent_dim)
    wlv, blv = linear(_H3, latent_dim)
    p["wml"] = jnp.concatenate([wmu, wlv], axis=1)       # [1024, 2*latent]
    p["bml"] = jnp.concatenate([bmu, blv], axis=1)       # [1, 2*latent]

    # decoder layer 1: concat-weight split into z-part and condition-part
    w4, p["b4"] = linear(latent_dim + condition_dim, _H3)
    p["w4z"], p["w4c"] = w4[:latent_dim], w4[latent_dim:]
    p["g4"], p["t4"] = bn_params(_H3)
    p["w5"], p["b5"] = linear(_H3, _H2)
    p["g5"], p["t5"] = bn_params(_H2)
    p["w6"], p["b6"] = linear(_H2, _H1)
    p["g6"], p["t6"] = bn_params(_H1)
    p["w7"], p["b7"] = linear(_H1, input_dim)

    # weights in bf16 (halves HBM bytes; native MXU input dtype)
    for name in _WEIGHT_ORDER:
        p[name] = p[name].astype(jnp.bfloat16)
    return p


def pack_kernel_operands(p):
    """Returns (bf16 weight tuple, consolidated f32 bias/gamma/beta slab)."""
    weights = tuple(p[n] for n in _WEIGHT_ORDER)
    width = max(_H3, max(p[n].shape[1] for n in _VEC_LAYOUT))
    rows = [jnp.pad(p[n], ((0, 0), (0, width - p[n].shape[1]))) for n in _VEC_LAYOUT]
    vec_slab = jnp.concatenate(rows, axis=0)             # [20, width] f32
    return weights, vec_slab


# ----------------------------------------------------------------------------
# Pure-JAX reference (mirrors the kernel's bf16 matmul inputs, f32 BN)
# ----------------------------------------------------------------------------
def cvae_ref(x, cond, eps, p):
    def mm(h, w):
        return jnp.dot(h.astype(jnp.bfloat16), w, preferred_element_type=jnp.float32)

    def lrelu(h):
        return jnp.where(h > 0, h, 0.2 * h)

    def bn(h, g, t):
        m = jnp.mean(h, axis=0, keepdims=True)
        v = jnp.mean((h - m) ** 2, axis=0, keepdims=True)
        return (h - m) * jax.lax.rsqrt(v + 1e-5) * g + t

    latent = eps.shape[1]
    h = bn(lrelu(mm(x, p["w1"]) + p["b1"]), p["g1"], p["t1"])
    h = bn(lrelu(mm(h, p["w2"]) + p["b2"]), p["g2"], p["t2"])
    h = bn(lrelu(mm(h, p["w3"]) + p["b3"]), p["g3"], p["t3"])
    ml = mm(h, p["wml"]) + p["bml"]
    mu, logvar = ml[:, :latent], ml[:, latent:]
    z = mu + eps * jnp.exp(0.5 * logvar)
    d = mm(z, p["w4z"]) + mm(cond, p["w4c"]) + p["b4"]
    d = bn(lrelu(d), p["g4"], p["t4"])
    d = bn(lrelu(mm(d, p["w5"]) + p["b5"]), p["g5"], p["t5"])
    d = bn(lrelu(mm(d, p["w6"]) + p["b6"]), p["g6"], p["t6"])
    recon = mm(d, p["w7"]) + p["b7"]
    return recon, mu, logvar


if __name__ == "__main__":
    B = 8
    input_dim = 16
    latent_dim = 8
    condition_dim = 4

    root = jax.random.PRNGKey(0)
    kx, kc, ke, kp = jax.random.split(root, 4)

    x = jax.random.normal(kx, (B, input_dim), jnp.float32)
    condition = jax.random.normal(kc, (B, condition_dim), jnp.float32)
    eps = jax.random.normal(ke, (B, latent_dim), jnp.float32)

    params = make_params(kp, input_dim, latent_dim, condition_dim)
    weights, vec_slab = pack_kernel_operands(params)

    recon, mu, logvar = cvae_forward(x, condition, eps, weights, vec_slab)
    jax.block_until_ready((recon, mu, logvar))

    r_ref, mu_ref, lv_ref = cvae_ref(x, condition, eps, params)
    assert recon.shape == (B, input_dim)
    assert mu.shape == (B, latent_dim) and logvar.shape == (B, latent_dim)
    assert jnp.allclose(recon, r_ref, atol=2e-2, rtol=2e-2)
    assert jnp.allclose(mu, mu_ref, atol=2e-2, rtol=2e-2)
    assert jnp.allclose(logvar, lv_ref, atol=2e-2, rtol=2e-2)

    print("KERNEL_OK")
</pallas_src>

<mosaic_0001>
module attributes {stable_mosaic.version = 11 : i64} {
  func.func @cvae_kernel(%arg0: i32, %arg1: memref<8x16xf32, #tpu.memory_space<vmem>>, %arg2: memref<8x4xf32, #tpu.memory_space<vmem>>, %arg3: memref<8x8xf32, #tpu.memory_space<vmem>>, %arg4: memref<20x1024xf32, #tpu.memory_space<vmem>>, %arg5: memref<16x256xbf16, #tpu.memory_space<any>>, %arg6: memref<256x512xbf16, #tpu.memory_space<any>>, %arg7: memref<512x1024xbf16, #tpu.memory_space<any>>, %arg8: memref<1024x16xbf16, #tpu.memory_space<any>>, %arg9: memref<8x1024xbf16, #tpu.memory_space<any>>, %arg10: memref<4x1024xbf16, #tpu.memory_space<any>>, %arg11: memref<1024x512xbf16, #tpu.memory_space<any>>, %arg12: memref<512x256xbf16, #tpu.memory_space<any>>, %arg13: memref<256x16xbf16, #tpu.memory_space<any>>, %arg14: memref<8x32xf32, #tpu.memory_space<vmem>>, %arg15: memref<16x256xbf16, #tpu.memory_space<vmem>>, %arg16: memref<256x512xbf16, #tpu.memory_space<vmem>>, %arg17: memref<512x1024xbf16, #tpu.memory_space<vmem>>, %arg18: memref<1024x16xbf16, #tpu.memory_space<vmem>>, %arg19: memref<8x1024xbf16, #tpu.memory_space<vmem>>, %arg20: memref<4x1024xbf16, #tpu.memory_space<vmem>>, %arg21: memref<1024x512xbf16, #tpu.memory_space<vmem>>, %arg22: memref<512x256xbf16, #tpu.memory_space<vmem>>, %arg23: memref<256x16xbf16, #tpu.memory_space<vmem>>, %arg24: memref<9x!tpu.dma_semaphore, #tpu.memory_space<semaphore_mem>>) attributes {dimension_semantics = [#tpu.dimension_semantics<arbitrary>], iteration_bounds = array<i64: 1>, scalar_prefetch = 0 : i64, scratch_operands = 10 : i64, tpu.core_type = #tpu.core_type<tc>, window_params = [{pipeline_mode = #tpu.pipeline_mode<synchronous>, transform_indices = @transform_0, window_bounds = array<i64: 8, 16>}, {pipeline_mode = #tpu.pipeline_mode<synchronous>, transform_indices = @transform_1, window_bounds = array<i64: 8, 4>}, {pipeline_mode = #tpu.pipeline_mode<synchronous>, transform_indices = @transform_2, window_bounds = array<i64: 8, 8>}, {pipeline_mode = #tpu.pipeline_mode<synchronous>, transform_indices = @transform_3, window_bounds = array<i64: 20, 1024>}, {}, {}, {}, {}, {}, {}, {}, {}, {}, {pipeline_mode = #tpu.pipeline_mode<synchronous>, transform_indices = @transform_13, window_bounds = array<i64: 8, 32>}]} {
    %c0_i32 = arith.constant 0 : i32
    %0 = tpu.memref_slice %arg24[%c0_i32] : memref<9x!tpu.dma_semaphore, #tpu.memory_space<semaphore_mem>> -> memref<1x!tpu.dma_semaphore, #tpu.memory_space<semaphore_mem>>
    %1 = tpu.memref_squeeze %0 : memref<1x!tpu.dma_semaphore, #tpu.memory_space<semaphore_mem>> -> memref<!tpu.dma_semaphore, #tpu.memory_space<semaphore_mem>>
    tpu.enqueue_dma source(%arg5 : memref<16x256xbf16, #tpu.memory_space<any>>) target(%arg15 : memref<16x256xbf16, #tpu.memory_space<vmem>>) target_semaphore(%1 : memref<!tpu.dma_semaphore, #tpu.memory_space<semaphore_mem>>)
    %c1_i32 = arith.constant 1 : i32
    %2 = tpu.memref_slice %arg24[%c1_i32] : memref<9x!tpu.dma_semaphore, #tpu.memory_space<semaphore_mem>> -> memref<1x!tpu.dma_semaphore, #tpu.memory_space<semaphore_mem>>
    %3 = tpu.memref_squeeze %2 : memref<1x!tpu.dma_semaphore, #tpu.memory_space<semaphore_mem>> -> memref<!tpu.dma_semaphore, #tpu.memory_space<semaphore_mem>>
    tpu.enqueue_dma source(%arg6 : memref<256x512xbf16, #tpu.memory_space<any>>) target(%arg16 : memref<256x512xbf16, #tpu.memory_space<vmem>>) target_semaphore(%3 : memref<!tpu.dma_semaphore, #tpu.memory_space<semaphore_mem>>)
    %c2_i32 = arith.constant 2 : i32
    %4 = tpu.memref_slice %arg24[%c2_i32] : memref<9x!tpu.dma_semaphore, #tpu.memory_space<semaphore_mem>> -> memref<1x!tpu.dma_semaphore, #tpu.memory_space<semaphore_mem>>
    %5 = tpu.memref_squeeze %4 : memref<1x!tpu.dma_semaphore, #tpu.memory_space<semaphore_mem>> -> memref<!tpu.dma_semaphore, #tpu.memory_space<semaphore_mem>>
    tpu.enqueue_dma source(%arg7 : memref<512x1024xbf16, #tpu.memory_space<any>>) target(%arg17 : memref<512x1024xbf16, #tpu.memory_space<vmem>>) target_semaphore(%5 : memref<!tpu.dma_semaphore, #tpu.memory_space<semaphore_mem>>)
    %c3_i32 = arith.constant 3 : i32
    %6 = tpu.memref_slice %arg24[%c3_i32] : memref<9x!tpu.dma_semaphore, #tpu.memory_space<semaphore_mem>> -> memref<1x!tpu.dma_semaphore, #tpu.memory_space<semaphore_mem>>
    %7 = tpu.memref_squeeze %6 : memref<1x!tpu.dma_semaphore, #tpu.memory_space<semaphore_mem>> -> memref<!tpu.dma_semaphore, #tpu.memory_space<semaphore_mem>>
    tpu.enqueue_dma source(%arg8 : memref<1024x16xbf16, #tpu.memory_space<any>>) target(%arg18 : memref<1024x16xbf16, #tpu.memory_space<vmem>>) target_semaphore(%7 : memref<!tpu.dma_semaphore, #tpu.memory_space<semaphore_mem>>)
    %c4_i32 = arith.constant 4 : i32
    %8 = tpu.memref_slice %arg24[%c4_i32] : memref<9x!tpu.dma_semaphore, #tpu.memory_space<semaphore_mem>> -> memref<1x!tpu.dma_semaphore, #tpu.memory_space<semaphore_mem>>
    %9 = tpu.memref_squeeze %8 : memref<1x!tpu.dma_semaphore, #tpu.memory_space<semaphore_mem>> -> memref<!tpu.dma_semaphore, #tpu.memory_space<semaphore_mem>>
    tpu.enqueue_dma source(%arg9 : memref<8x1024xbf16, #tpu.memory_space<any>>) target(%arg19 : memref<8x1024xbf16, #tpu.memory_space<vmem>>) target_semaphore(%9 : memref<!tpu.dma_semaphore, #tpu.memory_space<semaphore_mem>>)
    %c5_i32 = arith.constant 5 : i32
    %10 = tpu.memref_slice %arg24[%c5_i32] : memref<9x!tpu.dma_semaphore, #tpu.memory_space<semaphore_mem>> -> memref<1x!tpu.dma_semaphore, #tpu.memory_space<semaphore_mem>>
    %11 = tpu.memref_squeeze %10 : memref<1x!tpu.dma_semaphore, #tpu.memory_space<semaphore_mem>> -> memref<!tpu.dma_semaphore, #tpu.memory_space<semaphore_mem>>
    tpu.enqueue_dma source(%arg10 : memref<4x1024xbf16, #tpu.memory_space<any>>) target(%arg20 : memref<4x1024xbf16, #tpu.memory_space<vmem>>) target_semaphore(%11 : memref<!tpu.dma_semaphore, #tpu.memory_space<semaphore_mem>>)
    %c6_i32 = arith.constant 6 : i32
    %12 = tpu.memref_slice %arg24[%c6_i32] : memref<9x!tpu.dma_semaphore, #tpu.memory_space<semaphore_mem>> -> memref<1x!tpu.dma_semaphore, #tpu.memory_space<semaphore_mem>>
    %13 = tpu.memref_squeeze %12 : memref<1x!tpu.dma_semaphore, #tpu.memory_space<semaphore_mem>> -> memref<!tpu.dma_semaphore, #tpu.memory_space<semaphore_mem>>
    tpu.enqueue_dma source(%arg11 : memref<1024x512xbf16, #tpu.memory_space<any>>) target(%arg21 : memref<1024x512xbf16, #tpu.memory_space<vmem>>) target_semaphore(%13 : memref<!tpu.dma_semaphore, #tpu.memory_space<semaphore_mem>>)
    %c7_i32 = arith.constant 7 : i32
    %14 = tpu.memref_slice %arg24[%c7_i32] : memref<9x!tpu.dma_semaphore, #tpu.memory_space<semaphore_mem>> -> memref<1x!tpu.dma_semaphore, #tpu.memory_space<semaphore_mem>>
    %15 = tpu.memref_squeeze %14 : memref<1x!tpu.dma_semaphore, #tpu.memory_space<semaphore_mem>> -> memref<!tpu.dma_semaphore, #tpu.memory_space<semaphore_mem>>
    tpu.enqueue_dma source(%arg12 : memref<512x256xbf16, #tpu.memory_space<any>>) target(%arg22 : memref<512x256xbf16, #tpu.memory_space<vmem>>) target_semaphore(%15 : memref<!tpu.dma_semaphore, #tpu.memory_space<semaphore_mem>>)
    %c8_i32 = arith.constant 8 : i32
    %16 = tpu.memref_slice %arg24[%c8_i32] : memref<9x!tpu.dma_semaphore, #tpu.memory_space<semaphore_mem>> -> memref<1x!tpu.dma_semaphore, #tpu.memory_space<semaphore_mem>>
    %17 = tpu.memref_squeeze %16 : memref<1x!tpu.dma_semaphore, #tpu.memory_space<semaphore_mem>> -> memref<!tpu.dma_semaphore, #tpu.memory_space<semaphore_mem>>
    tpu.enqueue_dma source(%arg13 : memref<256x16xbf16, #tpu.memory_space<any>>) target(%arg23 : memref<256x16xbf16, #tpu.memory_space<vmem>>) target_semaphore(%17 : memref<!tpu.dma_semaphore, #tpu.memory_space<semaphore_mem>>)
    %c0 = arith.constant 0 : index
    %c0_0 = arith.constant 0 : index
    %18 = vector.load %arg1[%c0, %c0_0] : memref<8x16xf32, #tpu.memory_space<vmem>>, vector<8x16xf32>
    %c0_1 = arith.constant 0 : index
    %c0_2 = arith.constant 0 : index
    %19 = vector.load %arg2[%c0_1, %c0_2] : memref<8x4xf32, #tpu.memory_space<vmem>>, vector<8x4xf32>
    %c0_3 = arith.constant 0 : index
    %c0_4 = arith.constant 0 : index
    %20 = vector.load %arg3[%c0_3, %c0_4] : memref<8x8xf32, #tpu.memory_space<vmem>>, vector<8x8xf32>
    %c0_i32_5 = arith.constant 0 : i32
    %21 = tpu.memref_slice %arg24[%c0_i32_5] : memref<9x!tpu.dma_semaphore, #tpu.memory_space<semaphore_mem>> -> memref<1x!tpu.dma_semaphore, #tpu.memory_space<semaphore_mem>>
    %22 = tpu.memref_squeeze %21 : memref<1x!tpu.dma_semaphore, #tpu.memory_space<semaphore_mem>> -> memref<!tpu.dma_semaphore, #tpu.memory_space<semaphore_mem>>
    tpu.wait_dma2 semaphore(%22 : memref<!tpu.dma_semaphore, #tpu.memory_space<semaphore_mem>>) src(%arg5 : memref<16x256xbf16, #tpu.memory_space<any>>) dst(%arg15 : memref<16x256xbf16, #tpu.memory_space<vmem>>)
    %23 = arith.truncf %18 : vector<8x16xf32> to vector<8x16xbf16>
    %c0_6 = arith.constant 0 : index
    %c0_7 = arith.constant 0 : index
    %24 = vector.load %arg15[%c0_6, %c0_7] : memref<16x256xbf16, #tpu.memory_space<vmem>>, vector<16x256xbf16>
    %cst = arith.constant dense<0.000000e+00> : vector<8x256xf32>
    %25 = tpu.matmul %23, %24, %cst {dimension_numbers = #tpu.dot_dimension_numbers<[1], [0], [0], [1], [0, 0, 1, 1], [], []>} : vector<8x16xbf16>, vector<16x256xbf16>, vector<8x256xf32> -> vector<8x256xf32>
    %c0_8 = arith.constant 0 : index
    %c0_9 = arith.constant 0 : index
    %26 = vector.load %arg4[%c0_8, %c0_9] : memref<20x1024xf32, #tpu.memory_space<vmem>>, vector<1x256xf32>
    %27 = vector.broadcast %26 : vector<1x256xf32> to vector<8x256xf32>
    %28 = arith.addf %25, %27 : vector<8x256xf32>
    %cst_10 = arith.constant 0.000000e+00 : f32
    %29 = vector.broadcast %cst_10 : f32 to vector<8x256xf32>
    %30 = arith.cmpf ogt, %28, %29 : vector<8x256xf32>
    %cst_11 = arith.constant 2.000000e-01 : f32
    %31 = vector.broadcast %cst_11 : f32 to vector<8x256xf32>
    %32 = arith.mulf %31, %28 : vector<8x256xf32>
    %33 = arith.select %30, %28, %32 : vector<8x256xi1>, vector<8x256xf32>
    %cst_12 = arith.constant dense<0.000000e+00> : vector<256xf32>
    %34 = vector.multi_reduction <add>, %33, %cst_12 [0] : vector<8x256xf32> to vector<256xf32>
    %35 = vector.shape_cast %34 : vector<256xf32> to vector<1x256xf32>
    %cst_13 = arith.constant 8.000000e+00 : f32
    %36 = vector.broadcast %cst_13 : f32 to vector<1x256xf32>
    %37 = arith.divf %35, %36 : vector<1x256xf32>
    %38 = vector.broadcast %37 : vector<1x256xf32> to vector<8x256xf32>
    %39 = arith.subf %33, %38 : vector<8x256xf32>
    %40 = vector.broadcast %37 : vector<1x256xf32> to vector<8x256xf32>
    %41 = arith.subf %33, %40 : vector<8x256xf32>
    %42 = arith.mulf %39, %41 : vector<8x256xf32>
    %cst_14 = arith.constant dense<0.000000e+00> : vector<256xf32>
    %43 = vector.multi_reduction <add>, %42, %cst_14 [0] : vector<8x256xf32> to vector<256xf32>
    %44 = vector.shape_cast %43 : vector<256xf32> to vector<1x256xf32>
    %cst_15 = arith.constant 8.000000e+00 : f32
    %45 = vector.broadcast %cst_15 : f32 to vector<1x256xf32>
    %46 = arith.divf %44, %45 : vector<1x256xf32>
    %cst_16 = arith.constant 9.99999974E-6 : f32
    %47 = vector.broadcast %cst_16 : f32 to vector<1x256xf32>
    %48 = arith.addf %46, %47 : vector<1x256xf32>
    %49 = math.rsqrt %48 : vector<1x256xf32>
    %50 = vector.broadcast %37 : vector<1x256xf32> to vector<8x256xf32>
    %51 = arith.subf %33, %50 : vector<8x256xf32>
    %52 = vector.broadcast %49 : vector<1x256xf32> to vector<8x256xf32>
    %53 = arith.mulf %51, %52 : vector<8x256xf32>
    %c1 = arith.constant 1 : index
    %c0_17 = arith.constant 0 : index
    %54 = vector.load %arg4[%c1, %c0_17] : memref<20x1024xf32, #tpu.memory_space<vmem>>, vector<1x256xf32>
    %55 = vector.broadcast %54 : vector<1x256xf32> to vector<8x256xf32>
    %56 = arith.mulf %53, %55 : vector<8x256xf32>
    %c2 = arith.constant 2 : index
    %c0_18 = arith.constant 0 : index
    %57 = vector.load %arg4[%c2, %c0_18] : memref<20x1024xf32, #tpu.memory_space<vmem>>, vector<1x256xf32>
    %58 = vector.broadcast %57 : vector<1x256xf32> to vector<8x256xf32>
    %59 = arith.addf %56, %58 : vector<8x256xf32>
    %c1_i32_19 = arith.constant 1 : i32
    %60 = tpu.memref_slice %arg24[%c1_i32_19] : memref<9x!tpu.dma_semaphore, #tpu.memory_space<semaphore_mem>> -> memref<1x!tpu.dma_semaphore, #tpu.memory_space<semaphore_mem>>
    %61 = tpu.memref_squeeze %60 : memref<1x!tpu.dma_semaphore, #tpu.memory_space<semaphore_mem>> -> memref<!tpu.dma_semaphore, #tpu.memory_space<semaphore_mem>>
    tpu.wait_dma2 semaphore(%61 : memref<!tpu.dma_semaphore, #tpu.memory_space<semaphore_mem>>) src(%arg6 : memref<256x512xbf16, #tpu.memory_space<any>>) dst(%arg16 : memref<256x512xbf16, #tpu.memory_space<vmem>>)
    %62 = arith.truncf %59 : vector<8x256xf32> to vector<8x256xbf16>
    %c0_20 = arith.constant 0 : index
    %c0_21 = arith.constant 0 : index
    %63 = vector.load %arg16[%c0_20, %c0_21] : memref<256x512xbf16, #tpu.memory_space<vmem>>, vector<256x512xbf16>
    %cst_22 = arith.constant dense<0.000000e+00> : vector<8x512xf32>
    %64 = tpu.matmul %62, %63, %cst_22 {dimension_numbers = #tpu.dot_dimension_numbers<[1], [0], [0], [1], [0, 0, 1, 1], [], []>} : vector<8x256xbf16>, vector<256x512xbf16>, vector<8x512xf32> -> vector<8x512xf32>
    %c3 = arith.constant 3 : index
    %c0_23 = arith.constant 0 : index
    %65 = vector.load %arg4[%c3, %c0_23] : memref<20x1024xf32, #tpu.memory_space<vmem>>, vector<1x512xf32>
    %66 = vector.broadcast %65 : vector<1x512xf32> to vector<8x512xf32>
    %67 = arith.addf %64, %66 : vector<8x512xf32>
    %cst_24 = arith.constant 0.000000e+00 : f32
    %68 = vector.broadcast %cst_24 : f32 to vector<8x512xf32>
    %69 = arith.cmpf ogt, %67, %68 : vector<8x512xf32>
    %cst_25 = arith.constant 2.000000e-01 : f32
    %70 = vector.broadcast %cst_25 : f32 to vector<8x512xf32>
    %71 = arith.mulf %70, %67 : vector<8x512xf32>
    %72 = arith.select %69, %67, %71 : vector<8x512xi1>, vector<8x512xf32>
    %cst_26 = arith.constant dense<0.000000e+00> : vector<512xf32>
    %73 = vector.multi_reduction <add>, %72, %cst_26 [0] : vector<8x512xf32> to vector<512xf32>
    %74 = vector.shape_cast %73 : vector<512xf32> to vector<1x512xf32>
    %cst_27 = arith.constant 8.000000e+00 : f32
    %75 = vector.broadcast %cst_27 : f32 to vector<1x512xf32>
    %76 = arith.divf %74, %75 : vector<1x512xf32>
    %77 = vector.broadcast %76 : vector<1x512xf32> to vector<8x512xf32>
    %78 = arith.subf %72, %77 : vector<8x512xf32>
    %79 = vector.broadcast %76 : vector<1x512xf32> to vector<8x512xf32>
    %80 = arith.subf %72, %79 : vector<8x512xf32>
    %81 = arith.mulf %78, %80 : vector<8x512xf32>
    %cst_28 = arith.constant dense<0.000000e+00> : vector<512xf32>
    %82 = vector.multi_reduction <add>, %81, %cst_28 [0] : vector<8x512xf32> to vector<512xf32>
    %83 = vector.shape_cast %82 : vector<512xf32> to vector<1x512xf32>
    %cst_29 = arith.constant 8.000000e+00 : f32
    %84 = vector.broadcast %cst_29 : f32 to vector<1x512xf32>
    %85 = arith.divf %83, %84 : vector<1x512xf32>
    %cst_30 = arith.constant 9.99999974E-6 : f32
    %86 = vector.broadcast %cst_30 : f32 to vector<1x512xf32>
    %87 = arith.addf %85, %86 : vector<1x512xf32>
    %88 = math.rsqrt %87 : vector<1x512xf32>
    %89 = vector.broadcast %76 : vector<1x512xf32> to vector<8x512xf32>
    %90 = arith.subf %72, %89 : vector<8x512xf32>
    %91 = vector.broadcast %88 : vector<1x512xf32> to vector<8x512xf32>
    %92 = arith.mulf %90, %91 : vector<8x512xf32>
    %c4 = arith.constant 4 : index
    %c0_31 = arith.constant 0 : index
    %93 = vector.load %arg4[%c4, %c0_31] : memref<20x1024xf32, #tpu.memory_space<vmem>>, vector<1x512xf32>
    %94 = vector.broadcast %93 : vector<1x512xf32> to vector<8x512xf32>
    %95 = arith.mulf %92, %94 : vector<8x512xf32>
    %c5 = arith.constant 5 : index
    %c0_32 = arith.constant 0 : index
    %96 = vector.load %arg4[%c5, %c0_32] : memref<20x1024xf32, #tpu.memory_space<vmem>>, vector<1x512xf32>
    %97 = vector.broadcast %96 : vector<1x512xf32> to vector<8x512xf32>
    %98 = arith.addf %95, %97 : vector<8x512xf32>
    %c2_i32_33 = arith.constant 2 : i32
    %99 = tpu.memref_slice %arg24[%c2_i32_33] : memref<9x!tpu.dma_semaphore, #tpu.memory_space<semaphore_mem>> -> memref<1x!tpu.dma_semaphore, #tpu.memory_space<semaphore_mem>>
    %100 = tpu.memref_squeeze %99 : memref<1x!tpu.dma_semaphore, #tpu.memory_space<semaphore_mem>> -> memref<!tpu.dma_semaphore, #tpu.memory_space<semaphore_mem>>
    tpu.wait_dma2 semaphore(%100 : memref<!tpu.dma_semaphore, #tpu.memory_space<semaphore_mem>>) src(%arg7 : memref<512x1024xbf16, #tpu.memory_space<any>>) dst(%arg17 : memref<512x1024xbf16, #tpu.memory_space<vmem>>)
    %101 = arith.truncf %98 : vector<8x512xf32> to vector<8x512xbf16>
    %c0_34 = arith.constant 0 : index
    %c0_35 = arith.constant 0 : index
    %102 = vector.load %arg17[%c0_34, %c0_35] : memref<512x1024xbf16, #tpu.memory_space<vmem>>, vector<512x1024xbf16>
    %cst_36 = arith.constant dense<0.000000e+00> : vector<8x1024xf32>
    %103 = tpu.matmul %101, %102, %cst_36 {dimension_numbers = #tpu.dot_dimension_numbers<[1], [0], [0], [1], [0, 0, 1, 1], [], []>} : vector<8x512xbf16>, vector<512x1024xbf16>, vector<8x1024xf32> -> vector<8x1024xf32>
    %c6 = arith.constant 6 : index
    %c0_37 = arith.constant 0 : index
    %104 = vector.load %arg4[%c6, %c0_37] : memref<20x1024xf32, #tpu.memory_space<vmem>>, vector<1x1024xf32>
    %105 = vector.broadcast %104 : vector<1x1024xf32> to vector<8x1024xf32>
    %106 = arith.addf %103, %105 : vector<8x1024xf32>
    %cst_38 = arith.constant 0.000000e+00 : f32
    %107 = vector.broadcast %cst_38 : f32 to vector<8x1024xf32>
    %108 = arith.cmpf ogt, %106, %107 : vector<8x1024xf32>
    %cst_39 = arith.constant 2.000000e-01 : f32
    %109 = vector.broadcast %cst_39 : f32 to vector<8x1024xf32>
    %110 = arith.mulf %109, %106 : vector<8x1024xf32>
    %111 = arith.select %108, %106, %110 : vector<8x1024xi1>, vector<8x1024xf32>
    %cst_40 = arith.constant dense<0.000000e+00> : vector<1024xf32>
    %112 = vector.multi_reduction <add>, %111, %cst_40 [0] : vector<8x1024xf32> to vector<1024xf32>
    %113 = vector.shape_cast %112 : vector<1024xf32> to vector<1x1024xf32>
    %cst_41 = arith.constant 8.000000e+00 : f32
    %114 = vector.broadcast %cst_41 : f32 to vector<1x1024xf32>
    %115 = arith.divf %113, %114 : vector<1x1024xf32>
    %116 = vector.broadcast %115 : vector<1x1024xf32> to vector<8x1024xf32>
    %117 = arith.subf %111, %116 : vector<8x1024xf32>
    %118 = vector.broadcast %115 : vector<1x1024xf32> to vector<8x1024xf32>
    %119 = arith.subf %111, %118 : vector<8x1024xf32>
    %120 = arith.mulf %117, %119 : vector<8x1024xf32>
    %cst_42 = arith.constant dense<0.000000e+00> : vector<1024xf32>
    %121 = vector.multi_reduction <add>, %120, %cst_42 [0] : vector<8x1024xf32> to vector<1024xf32>
    %122 = vector.shape_cast %121 : vector<1024xf32> to vector<1x1024xf32>
    %cst_43 = arith.constant 8.000000e+00 : f32
    %123 = vector.broadcast %cst_43 : f32 to vector<1x1024xf32>
    %124 = arith.divf %122, %123 : vector<1x1024xf32>
    %cst_44 = arith.constant 9.99999974E-6 : f32
    %125 = vector.broadcast %cst_44 : f32 to vector<1x1024xf32>
    %126 = arith.addf %124, %125 : vector<1x1024xf32>
    %127 = math.rsqrt %126 : vector<1x1024xf32>
    %128 = vector.broadcast %115 : vector<1x1024xf32> to vector<8x1024xf32>
    %129 = arith.subf %111, %128 : vector<8x1024xf32>
    %130 = vector.broadcast %127 : vector<1x1024xf32> to vector<8x1024xf32>
    %131 = arith.mulf %129, %130 : vector<8x1024xf32>
    %c7 = arith.constant 7 : index
    %c0_45 = arith.constant 0 : index
    %132 = vector.load %arg4[%c7, %c0_45] : memref<20x1024xf32, #tpu.memory_space<vmem>>, vector<1x1024xf32>
    %133 = vector.broadcast %132 : vector<1x1024xf32> to vector<8x1024xf32>
    %134 = arith.mulf %131, %133 : vector<8x1024xf32>
    %c8 = arith.constant 8 : index
    %c0_46 = arith.constant 0 : index
    %135 = vector.load %arg4[%c8, %c0_46] : memref<20x1024xf32, #tpu.memory_space<vmem>>, vector<1x1024xf32>
    %136 = vector.broadcast %135 : vector<1x1024xf32> to vector<8x1024xf32>
    %137 = arith.addf %134, %136 : vector<8x1024xf32>
    %c3_i32_47 = arith.constant 3 : i32
    %138 = tpu.memref_slice %arg24[%c3_i32_47] : memref<9x!tpu.dma_semaphore, #tpu.memory_space<semaphore_mem>> -> memref<1x!tpu.dma_semaphore, #tpu.memory_space<semaphore_mem>>
    %139 = tpu.memref_squeeze %138 : memref<1x!tpu.dma_semaphore, #tpu.memory_space<semaphore_mem>> -> memref<!tpu.dma_semaphore, #tpu.memory_space<semaphore_mem>>
    tpu.wait_dma2 semaphore(%139 : memref<!tpu.dma_semaphore, #tpu.memory_space<semaphore_mem>>) src(%arg8 : memref<1024x16xbf16, #tpu.memory_space<any>>) dst(%arg18 : memref<1024x16xbf16, #tpu.memory_space<vmem>>)
    %140 = arith.truncf %137 : vector<8x1024xf32> to vector<8x1024xbf16>
    %c0_48 = arith.constant 0 : index
    %c0_49 = arith.constant 0 : index
    %141 = vector.load %arg18[%c0_48, %c0_49] : memref<1024x16xbf16, #tpu.memory_space<vmem>>, vector<1024x16xbf16>
    %cst_50 = arith.constant dense<0.000000e+00> : vector<8x16xf32>
    %142 = tpu.matmul %140, %141, %cst_50 {dimension_numbers = #tpu.dot_dimension_numbers<[1], [0], [0], [1], [0, 0, 1, 1], [], []>} : vector<8x1024xbf16>, vector<1024x16xbf16>, vector<8x16xf32> -> vector<8x16xf32>
    %c9 = arith.constant 9 : index
    %c0_51 = arith.constant 0 : index
    %143 = vector.load %arg4[%c9, %c0_51] : memref<20x1024xf32, #tpu.memory_space<vmem>>, vector<1x16xf32>
    %144 = vector.broadcast %143 : vector<1x16xf32> to vector<8x16xf32>
    %145 = arith.addf %142, %144 : vector<8x16xf32>
    %146 = vector.extract_strided_slice %145 {offsets = [0, 0], sizes = [8, 8], strides = [1, 1]} : vector<8x16xf32> to vector<8x8xf32>
    %147 = vector.extract_strided_slice %145 {offsets = [0, 8], sizes = [8, 8], strides = [1, 1]} : vector<8x16xf32> to vector<8x8xf32>
    %cst_52 = arith.constant 5.000000e-01 : f32
    %148 = vector.broadcast %cst_52 : f32 to vector<8x8xf32>
    %149 = arith.mulf %148, %147 : vector<8x8xf32>
    %150 = math.exp %149 : vector<8x8xf32>
    %151 = arith.mulf %20, %150 : vector<8x8xf32>
    %152 = arith.addf %146, %151 : vector<8x8xf32>
    %c4_i32_53 = arith.constant 4 : i32
    %153 = tpu.memref_slice %arg24[%c4_i32_53] : memref<9x!tpu.dma_semaphore, #tpu.memory_space<semaphore_mem>> -> memref<1x!tpu.dma_semaphore, #tpu.memory_space<semaphore_mem>>
    %154 = tpu.memref_squeeze %153 : memref<1x!tpu.dma_semaphore, #tpu.memory_space<semaphore_mem>> -> memref<!tpu.dma_semaphore, #tpu.memory_space<semaphore_mem>>
    tpu.wait_dma2 semaphore(%154 : memref<!tpu.dma_semaphore, #tpu.memory_space<semaphore_mem>>) src(%arg9 : memref<8x1024xbf16, #tpu.memory_space<any>>) dst(%arg19 : memref<8x1024xbf16, #tpu.memory_space<vmem>>)
    %c5_i32_54 = arith.constant 5 : i32
    %155 = tpu.memref_slice %arg24[%c5_i32_54] : memref<9x!tpu.dma_semaphore, #tpu.memory_space<semaphore_mem>> -> memref<1x!tpu.dma_semaphore, #tpu.memory_space<semaphore_mem>>
    %156 = tpu.memref_squeeze %155 : memref<1x!tpu.dma_semaphore, #tpu.memory_space<semaphore_mem>> -> memref<!tpu.dma_semaphore, #tpu.memory_space<semaphore_mem>>
    tpu.wait_dma2 semaphore(%156 : memref<!tpu.dma_semaphore, #tpu.memory_space<semaphore_mem>>) src(%arg10 : memref<4x1024xbf16, #tpu.memory_space<any>>) dst(%arg20 : memref<4x1024xbf16, #tpu.memory_space<vmem>>)
    %157 = arith.truncf %152 : vector<8x8xf32> to vector<8x8xbf16>
    %c0_55 = arith.constant 0 : index
    %c0_56 = arith.constant 0 : index
    %158 = vector.load %arg19[%c0_55, %c0_56] : memref<8x1024xbf16, #tpu.memory_space<vmem>>, vector<8x1024xbf16>
    %cst_57 = arith.constant dense<0.000000e+00> : vector<8x1024xf32>
    %159 = tpu.matmul %157, %158, %cst_57 {dimension_numbers = #tpu.dot_dimension_numbers<[1], [0], [0], [1], [0, 0, 1, 1], [], []>} : vector<8x8xbf16>, vector<8x1024xbf16>, vector<8x1024xf32> -> vector<8x1024xf32>
    %160 = arith.truncf %19 : vector<8x4xf32> to vector<8x4xbf16>
    %c0_58 = arith.constant 0 : index
    %c0_59 = arith.constant 0 : index
    %161 = vector.load %arg20[%c0_58, %c0_59] : memref<4x1024xbf16, #tpu.memory_space<vmem>>, vector<4x1024xbf16>
    %cst_60 = arith.constant dense<0.000000e+00> : vector<8x1024xf32>
    %162 = tpu.matmul %160, %161, %cst_60 {dimension_numbers = #tpu.dot_dimension_numbers<[1], [0], [0], [1], [0, 0, 1, 1], [], []>} : vector<8x4xbf16>, vector<4x1024xbf16>, vector<8x1024xf32> -> vector<8x1024xf32>
    %163 = arith.addf %159, %162 : vector<8x1024xf32>
    %c10 = arith.constant 10 : index
    %c0_61 = arith.constant 0 : index
    %164 = vector.load %arg4[%c10, %c0_61] : memref<20x1024xf32, #tpu.memory_space<vmem>>, vector<1x1024xf32>
    %165 = vector.broadcast %164 : vector<1x1024xf32> to vector<8x1024xf32>
    %166 = arith.addf %163, %165 : vector<8x1024xf32>
    %cst_62 = arith.constant 0.000000e+00 : f32
    %167 = vector.broadcast %cst_62 : f32 to vector<8x1024xf32>
    %168 = arith.cmpf ogt, %166, %167 : vector<8x1024xf32>
    %cst_63 = arith.constant 2.000000e-01 : f32
    %169 = vector.broadcast %cst_63 : f32 to vector<8x1024xf32>
    %170 = arith.mulf %169, %166 : vector<8x1024xf32>
    %171 = arith.select %168, %166, %170 : vector<8x1024xi1>, vector<8x1024xf32>
    %cst_64 = arith.constant dense<0.000000e+00> : vector<1024xf32>
    %172 = vector.multi_reduction <add>, %171, %cst_64 [0] : vector<8x1024xf32> to vector<1024xf32>
    %173 = vector.shape_cast %172 : vector<1024xf32> to vector<1x1024xf32>
    %cst_65 = arith.constant 8.000000e+00 : f32
    %174 = vector.broadcast %cst_65 : f32 to vector<1x1024xf32>
    %175 = arith.divf %173, %174 : vector<1x1024xf32>
    %176 = vector.broadcast %175 : vector<1x1024xf32> to vector<8x1024xf32>
    %177 = arith.subf %171, %176 : vector<8x1024xf32>
    %178 = vector.broadcast %175 : vector<1x1024xf32> to vector<8x1024xf32>
    %179 = arith.subf %171, %178 : vector<8x1024xf32>
    %180 = arith.mulf %177, %179 : vector<8x1024xf32>
    %cst_66 = arith.constant dense<0.000000e+00> : vector<1024xf32>
    %181 = vector.multi_reduction <add>, %180, %cst_66 [0] : vector<8x1024xf32> to vector<1024xf32>
    %182 = vector.shape_cast %181 : vector<1024xf32> to vector<1x1024xf32>
    %cst_67 = arith.constant 8.000000e+00 : f32
    %183 = vector.broadcast %cst_67 : f32 to vector<1x1024xf32>
    %184 = arith.divf %182, %183 : vector<1x1024xf32>
    %cst_68 = arith.constant 9.99999974E-6 : f32
    %185 = vector.broadcast %cst_68 : f32 to vector<1x1024xf32>
    %186 = arith.addf %184, %185 : vector<1x1024xf32>
    %187 = math.rsqrt %186 : vector<1x1024xf32>
    %188 = vector.broadcast %175 : vector<1x1024xf32> to vector<8x1024xf32>
    %189 = arith.subf %171, %188 : vector<8x1024xf32>
    %190 = vector.broadcast %187 : vector<1x1024xf32> to vector<8x1024xf32>
    %191 = arith.mulf %189, %190 : vector<8x1024xf32>
    %c11 = arith.constant 11 : index
    %c0_69 = arith.constant 0 : index
    %192 = vector.load %arg4[%c11, %c0_69] : memref<20x1024xf32, #tpu.memory_space<vmem>>, vector<1x1024xf32>
    %193 = vector.broadcast %192 : vector<1x1024xf32> to vector<8x1024xf32>
    %194 = arith.mulf %191, %193 : vector<8x1024xf32>
    %c12 = arith.constant 12 : index
    %c0_70 = arith.constant 0 : index
    %195 = vector.load %arg4[%c12, %c0_70] : memref<20x1024xf32, #tpu.memory_space<vmem>>, vector<1x1024xf32>
    %196 = vector.broadcast %195 : vector<1x1024xf32> to vector<8x1024xf32>
    %197 = arith.addf %194, %196 : vector<8x1024xf32>
    %c6_i32_71 = arith.constant 6 : i32
    %198 = tpu.memref_slice %arg24[%c6_i32_71] : memref<9x!tpu.dma_semaphore, #tpu.memory_space<semaphore_mem>> -> memref<1x!tpu.dma_semaphore, #tpu.memory_space<semaphore_mem>>
    %199 = tpu.memref_squeeze %198 : memref<1x!tpu.dma_semaphore, #tpu.memory_space<semaphore_mem>> -> memref<!tpu.dma_semaphore, #tpu.memory_space<semaphore_mem>>
    tpu.wait_dma2 semaphore(%199 : memref<!tpu.dma_semaphore, #tpu.memory_space<semaphore_mem>>) src(%arg11 : memref<1024x512xbf16, #tpu.memory_space<any>>) dst(%arg21 : memref<1024x512xbf16, #tpu.memory_space<vmem>>)
    %200 = arith.truncf %197 : vector<8x1024xf32> to vector<8x1024xbf16>
    %c0_72 = arith.constant 0 : index
    %c0_73 = arith.constant 0 : index
    %201 = vector.load %arg21[%c0_72, %c0_73] : memref<1024x512xbf16, #tpu.memory_space<vmem>>, vector<1024x512xbf16>
    %cst_74 = arith.constant dense<0.000000e+00> : vector<8x512xf32>
    %202 = tpu.matmul %200, %201, %cst_74 {dimension_numbers = #tpu.dot_dimension_numbers<[1], [0], [0], [1], [0, 0, 1, 1], [], []>} : vector<8x1024xbf16>, vector<1024x512xbf16>, vector<8x512xf32> -> vector<8x512xf32>
    %c13 = arith.constant 13 : index
    %c0_75 = arith.constant 0 : index
    %203 = vector.load %arg4[%c13, %c0_75] : memref<20x1024xf32, #tpu.memory_space<vmem>>, vector<1x512xf32>
    %204 = vector.broadcast %203 : vector<1x512xf32> to vector<8x512xf32>
    %205 = arith.addf %202, %204 : vector<8x512xf32>
    %cst_76 = arith.constant 0.000000e+00 : f32
    %206 = vector.broadcast %cst_76 : f32 to vector<8x512xf32>
    %207 = arith.cmpf ogt, %205, %206 : vector<8x512xf32>
    %cst_77 = arith.constant 2.000000e-01 : f32
    %208 = vector.broadcast %cst_77 : f32 to vector<8x512xf32>
    %209 = arith.mulf %208, %205 : vector<8x512xf32>
    %210 = arith.select %207, %205, %209 : vector<8x512xi1>, vector<8x512xf32>
    %cst_78 = arith.constant dense<0.000000e+00> : vector<512xf32>
    %211 = vector.multi_reduction <add>, %210, %cst_78 [0] : vector<8x512xf32> to vector<512xf32>
    %212 = vector.shape_cast %211 : vector<512xf32> to vector<1x512xf32>
    %cst_79 = arith.constant 8.000000e+00 : f32
    %213 = vector.broadcast %cst_79 : f32 to vector<1x512xf32>
    %214 = arith.divf %212, %213 : vector<1x512xf32>
    %215 = vector.broadcast %214 : vector<1x512xf32> to vector<8x512xf32>
    %216 = arith.subf %210, %215 : vector<8x512xf32>
    %217 = vector.broadcast %214 : vector<1x512xf32> to vector<8x512xf32>
    %218 = arith.subf %210, %217 : vector<8x512xf32>
    %219 = arith.mulf %216, %218 : vector<8x512xf32>
    %cst_80 = arith.constant dense<0.000000e+00> : vector<512xf32>
    %220 = vector.multi_reduction <add>, %219, %cst_80 [0] : vector<8x512xf32> to vector<512xf32>
    %221 = vector.shape_cast %220 : vector<512xf32> to vector<1x512xf32>
    %cst_81 = arith.constant 8.000000e+00 : f32
    %222 = vector.broadcast %cst_81 : f32 to vector<1x512xf32>
    %223 = arith.divf %221, %222 : vector<1x512xf32>
    %cst_82 = arith.constant 9.99999974E-6 : f32
    %224 = vector.broadcast %cst_82 : f32 to vector<1x512xf32>
    %225 = arith.addf %223, %224 : vector<1x512xf32>
    %226 = math.rsqrt %225 : vector<1x512xf32>
    %227 = vector.broadcast %214 : vector<1x512xf32> to vector<8x512xf32>
    %228 = arith.subf %210, %227 : vector<8x512xf32>
    %229 = vector.broadcast %226 : vector<1x512xf32> to vector<8x512xf32>
    %230 = arith.mulf %228, %229 : vector<8x512xf32>
    %c14 = arith.constant 14 : index
    %c0_83 = arith.constant 0 : index
    %231 = vector.load %arg4[%c14, %c0_83] : memref<20x1024xf32, #tpu.memory_space<vmem>>, vector<1x512xf32>
    %232 = vector.broadcast %231 : vector<1x512xf32> to vector<8x512xf32>
    %233 = arith.mulf %230, %232 : vector<8x512xf32>
    %c15 = arith.constant 15 : index
    %c0_84 = arith.constant 0 : index
    %234 = vector.load %arg4[%c15, %c0_84] : memref<20x1024xf32, #tpu.memory_space<vmem>>, vector<1x512xf32>
    %235 = vector.broadcast %234 : vector<1x512xf32> to vector<8x512xf32>
    %236 = arith.addf %233, %235 : vector<8x512xf32>
    %c7_i32_85 = arith.constant 7 : i32
    %237 = tpu.memref_slice %arg24[%c7_i32_85] : memref<9x!tpu.dma_semaphore, #tpu.memory_space<semaphore_mem>> -> memref<1x!tpu.dma_semaphore, #tpu.memory_space<semaphore_mem>>
    %238 = tpu.memref_squeeze %237 : memref<1x!tpu.dma_semaphore, #tpu.memory_space<semaphore_mem>> -> memref<!tpu.dma_semaphore, #tpu.memory_space<semaphore_mem>>
    tpu.wait_dma2 semaphore(%238 : memref<!tpu.dma_semaphore, #tpu.memory_space<semaphore_mem>>) src(%arg12 : memref<512x256xbf16, #tpu.memory_space<any>>) dst(%arg22 : memref<512x256xbf16, #tpu.memory_space<vmem>>)
    %239 = arith.truncf %236 : vector<8x512xf32> to vector<8x512xbf16>
    %c0_86 = arith.constant 0 : index
    %c0_87 = arith.constant 0 : index
    %240 = vector.load %arg22[%c0_86, %c0_87] : memref<512x256xbf16, #tpu.memory_space<vmem>>, vector<512x256xbf16>
    %cst_88 = arith.constant dense<0.000000e+00> : vector<8x256xf32>
    %241 = tpu.matmul %239, %240, %cst_88 {dimension_numbers = #tpu.dot_dimension_numbers<[1], [0], [0], [1], [0, 0, 1, 1], [], []>} : vector<8x512xbf16>, vector<512x256xbf16>, vector<8x256xf32> -> vector<8x256xf32>
    %c16 = arith.constant 16 : index
    %c0_89 = arith.constant 0 : index
    %242 = vector.load %arg4[%c16, %c0_89] : memref<20x1024xf32, #tpu.memory_space<vmem>>, vector<1x256xf32>
    %243 = vector.broadcast %242 : vector<1x256xf32> to vector<8x256xf32>
    %244 = arith.addf %241, %243 : vector<8x256xf32>
    %cst_90 = arith.constant 0.000000e+00 : f32
    %245 = vector.broadcast %cst_90 : f32 to vector<8x256xf32>
    %246 = arith.cmpf ogt, %244, %245 : vector<8x256xf32>
    %cst_91 = arith.constant 2.000000e-01 : f32
    %247 = vector.broadcast %cst_91 : f32 to vector<8x256xf32>
    %248 = arith.mulf %247, %244 : vector<8x256xf32>
    %249 = arith.select %246, %244, %248 : vector<8x256xi1>, vector<8x256xf32>
    %cst_92 = arith.constant dense<0.000000e+00> : vector<256xf32>
    %250 = vector.multi_reduction <add>, %249, %cst_92 [0] : vector<8x256xf32> to vector<256xf32>
    %251 = vector.shape_cast %250 : vector<256xf32> to vector<1x256xf32>
    %cst_93 = arith.constant 8.000000e+00 : f32
    %252 = vector.broadcast %cst_93 : f32 to vector<1x256xf32>
    %253 = arith.divf %251, %252 : vector<1x256xf32>
    %254 = vector.broadcast %253 : vector<1x256xf32> to vector<8x256xf32>
    %255 = arith.subf %249, %254 : vector<8x256xf32>
    %256 = vector.broadcast %253 : vector<1x256xf32> to vector<8x256xf32>
    %257 = arith.subf %249, %256 : vector<8x256xf32>
    %258 = arith.mulf %255, %257 : vector<8x256xf32>
    %cst_94 = arith.constant dense<0.000000e+00> : vector<256xf32>
    %259 = vector.multi_reduction <add>, %258, %cst_94 [0] : vector<8x256xf32> to vector<256xf32>
    %260 = vector.shape_cast %259 : vector<256xf32> to vector<1x256xf32>
    %cst_95 = arith.constant 8.000000e+00 : f32
    %261 = vector.broadcast %cst_95 : f32 to vector<1x256xf32>
    %262 = arith.divf %260, %261 : vector<1x256xf32>
    %cst_96 = arith.constant 9.99999974E-6 : f32
    %263 = vector.broadcast %cst_96 : f32 to vector<1x256xf32>
    %264 = arith.addf %262, %263 : vector<1x256xf32>
    %265 = math.rsqrt %264 : vector<1x256xf32>
    %266 = vector.broadcast %253 : vector<1x256xf32> to vector<8x256xf32>
    %267 = arith.subf %249, %266 : vector<8x256xf32>
    %268 = vector.broadcast %265 : vector<1x256xf32> to vector<8x256xf32>
    %269 = arith.mulf %267, %268 : vector<8x256xf32>
    %c17 = arith.constant 17 : index
    %c0_97 = arith.constant 0 : index
    %270 = vector.load %arg4[%c17, %c0_97] : memref<20x1024xf32, #tpu.memory_space<vmem>>, vector<1x256xf32>
    %271 = vector.broadcast %270 : vector<1x256xf32> to vector<8x256xf32>
    %272 = arith.mulf %269, %271 : vector<8x256xf32>
    %c18 = arith.constant 18 : index
    %c0_98 = arith.constant 0 : index
    %273 = vector.load %arg4[%c18, %c0_98] : memref<20x1024xf32, #tpu.memory_space<vmem>>, vector<1x256xf32>
    %274 = vector.broadcast %273 : vector<1x256xf32> to vector<8x256xf32>
    %275 = arith.addf %272, %274 : vector<8x256xf32>
    %c8_i32_99 = arith.constant 8 : i32
    %276 = tpu.memref_slice %arg24[%c8_i32_99] : memref<9x!tpu.dma_semaphore, #tpu.memory_space<semaphore_mem>> -> memref<1x!tpu.dma_semaphore, #tpu.memory_space<semaphore_mem>>
    %277 = tpu.memref_squeeze %276 : memref<1x!tpu.dma_semaphore, #tpu.memory_space<semaphore_mem>> -> memref<!tpu.dma_semaphore, #tpu.memory_space<semaphore_mem>>
    tpu.wait_dma2 semaphore(%277 : memref<!tpu.dma_semaphore, #tpu.memory_space<semaphore_mem>>) src(%arg13 : memref<256x16xbf16, #tpu.memory_space<any>>) dst(%arg23 : memref<256x16xbf16, #tpu.memory_space<vmem>>)
    %278 = arith.truncf %275 : vector<8x256xf32> to vector<8x256xbf16>
    %c0_100 = arith.constant 0 : index
    %c0_101 = arith.constant 0 : index
    %279 = vector.load %arg23[%c0_100, %c0_101] : memref<256x16xbf16, #tpu.memory_space<vmem>>, vector<256x16xbf16>
    %cst_102 = arith.constant dense<0.000000e+00> : vector<8x16xf32>
    %280 = tpu.matmul %278, %279, %cst_102 {dimension_numbers = #tpu.dot_dimension_numbers<[1], [0], [0], [1], [0, 0, 1, 1], [], []>} : vector<8x256xbf16>, vector<256x16xbf16>, vector<8x16xf32> -> vector<8x16xf32>
    %c19 = arith.constant 19 : index
    %c0_103 = arith.constant 0 : index
    %281 = vector.load %arg4[%c19, %c0_103] : memref<20x1024xf32, #tpu.memory_space<vmem>>, vector<1x16xf32>
    %282 = vector.broadcast %281 : vector<1x16xf32> to vector<8x16xf32>
    %283 = arith.addf %280, %282 : vector<8x16xf32>
    %c0_104 = arith.constant 0 : index
    %c0_105 = arith.constant 0 : index
    %284 = vector.load %arg14[%c0_104, %c0_105] : memref<8x32xf32, #tpu.memory_space<vmem>>, vector<8x16xf32>
    tpu.vector_store %arg14[%c0_104, %c0_105], %283 {strides = array<i32>} : memref<8x32xf32, #tpu.memory_space<vmem>>, vector<8x16xf32>,
    %c0_106 = arith.constant 0 : index
    %c16_107 = arith.constant 16 : index
    %285 = vector.load %arg14[%c0_106, %c16_107] : memref<8x32xf32, #tpu.memory_space<vmem>>, vector<8x8xf32>
    tpu.vector_store %arg14[%c0_106, %c16_107], %146 {strides = array<i32>} : memref<8x32xf32, #tpu.memory_space<vmem>>, vector<8x8xf32>,
    %c0_108 = arith.constant 0 : index
    %c24 = arith.constant 24 : index
    %286 = vector.load %arg14[%c0_108, %c24] : memref<8x32xf32, #tpu.memory_space<vmem>>, vector<8x8xf32>
    tpu.vector_store %arg14[%c0_108, %c24], %147 {strides = array<i32>} : memref<8x32xf32, #tpu.memory_space<vmem>>, vector<8x8xf32>,
    return
  }
  func.func @transform_0(%arg0: i32) -> (i32, i32) {
    %c0_i32 = arith.constant 0 : i32
    %c0_i32_0 = arith.constant 0 : i32
    %c0_i32_1 = arith.constant 0 : i32
    return %c0_i32, %c0_i32_0 : i32, i32
  }
  func.func @transform_1(%arg0: i32) -> (i32, i32) {
    %c0_i32 = arith.constant 0 : i32
    %c0_i32_0 = arith.constant 0 : i32
    %c0_i32_1 = arith.constant 0 : i32
    return %c0_i32, %c0_i32_0 : i32, i32
  }
  func.func @transform_2(%arg0: i32) -> (i32, i32) {
    %c0_i32 = arith.constant 0 : i32
    %c0_i32_0 = arith.constant 0 : i32
    %c0_i32_1 = arith.constant 0 : i32
    return %c0_i32, %c0_i32_0 : i32, i32
  }
  func.func @transform_3(%arg0: i32) -> (i32, i32) {
    %c0_i32 = arith.constant 0 : i32
    %c0_i32_0 = arith.constant 0 : i32
    %c0_i32_1 = arith.constant 0 : i32
    return %c0_i32, %c0_i32_0 : i32, i32
  }
  func.func @transform_13(%arg0: i32) -> (i32, i32) {
    %c0_i32 = arith.constant 0 : i32
    %c0_i32_0 = arith.constant 0 : i32
    %c0_i32_1 = arith.constant 0 : i32
    return %c0_i32, %c0_i32_0 : i32, i32
  }
}

</mosaic_0001>

<llo_original>
// kernel: cvae_forward.1
$region0: #{cvae_forward.1}
  #allocation0 [shape = 'u32[]', space=smem, size = 0x4, offset = 0x4, fixed_abs, tag = 'smem constant byte address 0x4 - core index']
  #allocation1 [shape = 'u32[72,128]{1,0:T(1,128)}', space=vmem, size = 0x9000, scoped, tag = 'internal scratch']
  #allocation2 [shape = 'bf16[16,256]{1,0:T(8,128)(2,1)}', space=vmem, size = 0x2000, scoped, tag = 'scratch operand']
  #allocation3 [shape = 'bf16[256,512]{1,0:T(8,128)(2,1)}', space=vmem, size = 0x40000, scoped, tag = 'scratch operand']
  #allocation4 [shape = 'bf16[512,1024]{1,0:T(8,128)(2,1)}', space=vmem, size = 0x100000, scoped, tag = 'scratch operand']
  #allocation5 [shape = 'bf16[1024,16]{1,0:T(8,128)(2,1)}', space=vmem, size = 0x40000, scoped, tag = 'scratch operand']
  #allocation6 [shape = 'bf16[8,1024]{1,0:T(8,128)(2,1)}', space=vmem, size = 0x4000, scoped, tag = 'scratch operand']
  #allocation7 [shape = 'bf16[4,1024]{1,0:T(4,128)(2,1)}', space=vmem, size = 0x2000, scoped, tag = 'scratch operand']
  #allocation8 [shape = 'bf16[1024,512]{1,0:T(8,128)(2,1)}', space=vmem, size = 0x100000, scoped, tag = 'scratch operand']
  #allocation9 [shape = 'bf16[512,256]{1,0:T(8,128)(2,1)}', space=vmem, size = 0x40000, scoped, tag = 'scratch operand']
  #allocation10 [shape = 'bf16[256,16]{1,0:T(8,128)(2,1)}', space=vmem, size = 0x10000, scoped, tag = 'scratch operand']
  #allocation11 [shape = 's32[9]{0}', space=sflag, size = 0x24, scoped, tag = 'scratch operand']
  #allocation14 [shape = 's32[]', space=sflag, size = 0x4, offset = 0, fixed_abs, tag = 'sflag constant byte address 0x0 - dummy sync flag']
  #allocation15 [shape = 's32[]', space=sflag, size = 0x4, offset = 0, fixed_abs, tag = 'sflag constant byte address 0x0 - dummy sync flag']
  #allocation16 [shape = 's32[]', space=sflag, size = 0x4, offset = 0, fixed_abs, tag = 'sflag constant byte address 0x0 - dummy sync flag']
  #allocation17 [shape = 's32[]', space=sflag, size = 0x4, offset = 0, fixed_abs, tag = 'sflag constant byte address 0x0 - dummy sync flag']
  #allocation18 [shape = 'u32[]', space=smem, size = 0x4, offset = 0x44, fixed_abs, tag = 'smem constant byte address 0x44 - assertion arg 0']
  #allocation19 [shape = 'u32[]', space=smem, size = 0x4, offset = 0x48, fixed_abs, tag = 'smem constant byte address 0x48 - assertion arg 1']
  #allocation20 [shape = 's32[]', space=sflag, size = 0x4, offset = 0, fixed_abs, tag = 'sflag constant byte address 0x0 - dummy sync flag']
  #allocation21 [shape = 's32[]', space=sflag, size = 0x4, offset = 0, fixed_abs, tag = 'sflag constant byte address 0x0 - dummy sync flag']
  #allocation22 [shape = 's32[]', space=sflag, size = 0x4, offset = 0, fixed_abs, tag = 'sflag constant byte address 0x0 - dummy sync flag']
  #allocation23 [shape = 's32[]', space=sflag, size = 0x4, offset = 0, fixed_abs, tag = 'sflag constant byte address 0x0 - dummy sync flag']
  #allocation24 [shape = 's32[]', space=sflag, size = 0x4, offset = 0, fixed_abs, tag = 'sflag constant byte address 0x0 - dummy sync flag']
  #allocation25 [shape = 's32[]', space=sflag, size = 0x4, offset = 0, fixed_abs, tag = 'sflag constant byte address 0x0 - dummy sync flag']
  #allocation26 [shape = 's32[]', space=sflag, size = 0x4, offset = 0, fixed_abs, tag = 'sflag constant byte address 0x0 - dummy sync flag']
  #allocation27 [shape = 's32[]', space=sflag, size = 0x4, offset = 0, fixed_abs, tag = 'sflag constant byte address 0x0 - dummy sync flag']
  %s0 = inlined_call_operand.vmem [shape: f32[8,16], index: 0, kind: input, shape index: {}]
  %s1 = inlined_call_operand.vmem [shape: f32[8,4], index: 1, kind: input, shape index: {}]
  %s2 = inlined_call_operand.vmem [shape: f32[8,8], index: 2, kind: input, shape index: {}]
  %s3 = inlined_call_operand.hbm [shape: f32[20,1024], index: 3, kind: input, shape index: {}]
  %s4 = inlined_call_operand.vmem [shape: bf16[16,256], index: 4, kind: input, shape index: {}]
  %s5 = inlined_call_operand.vmem [shape: bf16[256,512], index: 5, kind: input, shape index: {}]
  %s6 = inlined_call_operand.hbm [shape: bf16[512,1024], index: 6, kind: input, shape index: {}]
  %s7 = inlined_call_operand.vmem [shape: bf16[1024,16], index: 7, kind: input, shape index: {}]
  %s8 = inlined_call_operand.vmem [shape: bf16[8,1024], index: 8, kind: input, shape index: {}]
  %s9 = inlined_call_operand.vmem [shape: bf16[4,1024], index: 9, kind: input, shape index: {}]
  %s10 = inlined_call_operand.hbm [shape: bf16[1024,512], index: 10, kind: input, shape index: {}]
  %s11 = inlined_call_operand.hbm [shape: bf16[512,256], index: 11, kind: input, shape index: {}]
  %s12 = inlined_call_operand.vmem [shape: bf16[256,16], index: 12, kind: input, shape index: {}]
  %s13 = inlined_call_operand.vmem [shape: f32[8,32], index: 13, kind: output, shape index: {}]
  %s14 = sld [smem:[#allocation0]]
  $region156: #{cvae_forward.1} parent=0
    _
  %s16 = ssub.s32 1, %s14
  %s17 = scalar_select 0, %s16, %s14
  $region1: #{cvae_forward.1} parent=0
    #allocation12 [shape = 'u8[98304]{0}', space=vmem, size = 0x18000, scoped, tag = 'input window, operand 3, single buffered']
    #allocation13 [shape = 's32[1]{0}', space=sflag, size = 0x4, scoped, tag = 'scoped memory for cvae_forward.1']
    %18 = vsyncpa [#allocation13], 0
    // Predicated region
    $region2: #{cvae_forward.1} parent=1 // pred_check
      _
    $region3: #{cvae_forward.1} parent=1 // pred_check_branch
      %20 = sbr.rel (0) target = $region5
    $region4: #{cvae_forward.1} parent=1 // pred_region
      _
    $region5: #{cvae_forward.1} parent=1 // pred_fallthru
      _
    // Predicated region
    $region6: #{cvae_forward.1} parent=1 // pred_check
      _
    $region7: #{cvae_forward.1} parent=1 // pred_check_branch
      %22 = sbr.rel (0) target = $region9
    $region8: #{cvae_forward.1} parent=1 // pred_region
      _
    $region9: #{cvae_forward.1} parent=1 // pred_fallthru
      _
    // Predicated region
    $region10: #{cvae_forward.1} parent=1 // pred_check
      _
    $region11: #{cvae_forward.1} parent=1 // pred_check_branch
      %24 = sbr.rel (0) target = $region13
    $region12: #{cvae_forward.1} parent=1 // pred_region
      _
    $region13: #{cvae_forward.1} parent=1 // pred_fallthru
      _
    // Predicated region
    $region14: #{cvae_forward.1} parent=1 // pred_check
      _
    $region15: #{cvae_forward.1} parent=1 // pred_check_branch
      %26 = sbr.rel (0) target = $region17
    $region16: #{cvae_forward.1} parent=1 // pred_region
      %28 = vsyncadd [#allocation13], 0
      %s29 = sshll.u32 %s3, 4
      %s30 = int_to_ptr.hbm [resolvable:$true] %s29
      %s31 = sshll.u32 [#allocation12], 4
      %s32 = int_to_ptr.vmem [resolvable:$true] %s31
      %37 = dma.hbm_to_vmem [thread:$0]  %s30, 3072, %s32, [#allocation13], 1024, 1024, 64
    $region17: #{cvae_forward.1} parent=1 // pred_fallthru
      _
    // Predicated region
    $region18: #{cvae_forward.1} parent=1 // pred_check
      _
    $region19: #{cvae_forward.1} parent=1 // pred_check_branch
      %39 = sbr.rel (0) target = $region21
    $region20: #{cvae_forward.1} parent=1 // pred_region
      %41 = dma.done [#allocation13], 3072
    $region21: #{cvae_forward.1} parent=1 // pred_fallthru
      _
    // Predicated region
    $region22: #{cvae_forward.1} parent=1 // pred_check
      _
    $region23: #{cvae_forward.1} parent=1 // pred_check_branch
      %44 = sbr.rel (0) target = $region25
    $region24: #{cvae_forward.1} parent=1 // pred_region
      loop: start=0, step=1, limit=1
      $region26: #{cvae_forward.1} parent=24 // loop_pre_header
        _
      $region27: #{cvae_forward.1} parent=24 // loop_header
        %s46 = sphi 0, %s50
        %p47 = scmp.ge.s32.totalorder %s46, 1
        %s51 = sphi %s4, %s4
        %s52 = sphi [#allocation2], [#allocation2]
      $region28: #{cvae_forward.1} parent=24 // loop_header_branch
        %49 = sbr.rel (%p47) target = $region32
      $region29: #{cvae_forward.1} parent=24 // loop_body
        %v53 = vld [vmem:[%s51] sm:$0xff]
        %54 = vst [vmem:[%s52] sm:$0xff] %v53
        %v55 = vld [vmem:[%s51 + $0x8] sm:$0xff]
        %56 = vst [vmem:[%s52 + $0x8] sm:$0xff] %v55
      $region30: #{cvae_forward.1} parent=24 // loop_footer
        %s50 = sadd.s32 1, %s46
      $region31: #{cvae_forward.1} parent=24 // loop_footer_branch
        %45 = sbr.rel target = $region27
      $region32: #{cvae_forward.1} parent=24 // loop_exit
        _
    $region25: #{cvae_forward.1} parent=1 // pred_fallthru
      _
    // Predicated region
    $region33: #{cvae_forward.1} parent=1 // pred_check
      _
    $region34: #{cvae_forward.1} parent=1 // pred_check_branch
      %58 = sbr.rel target = $region36
    $region35: #{cvae_forward.1} parent=1 // pred_region
      _
    $region36: #{cvae_forward.1} parent=1 // pred_fallthru
      _
    // Predicated region
    $region37: #{cvae_forward.1} parent=1 // pred_check
      _
    $region38: #{cvae_forward.1} parent=1 // pred_check_branch
      %61 = sbr.rel (0) target = $region40
    $region39: #{cvae_forward.1} parent=1 // pred_region
      %62 = vsyncadd [#allocation11], 256
    $region40: #{cvae_forward.1} parent=1 // pred_fallthru
      _
    %s63 = scalar_lea.sflag [#allocation11], 1
    // Predicated region
    $region41: #{cvae_forward.1} parent=1 // pred_check
      _
    $region42: #{cvae_forward.1} parent=1 // pred_check_branch
      %65 = sbr.rel (0) target = $region44
    $region43: #{cvae_forward.1} parent=1 // pred_region
      loop: start=0, step=1, limit=1
      $region45: #{cvae_forward.1} parent=43 // loop_pre_header
        _
      $region46: #{cvae_forward.1} parent=43 // loop_header
        %s67 = sphi 0, %s71
        %p68 = scmp.ge.s32.totalorder %s67, 1
        %s72 = sphi %s5, %s5
        %s73 = sphi [#allocation3], [#allocation3]
      $region47: #{cvae_forward.1} parent=43 // loop_header_branch
        %70 = sbr.rel (%p68) target = $region51
      $region48: #{cvae_forward.1} parent=43 // loop_body
        %v74 = vld [vmem:[%s72] sm:$0xff]
        %75 = vst [vmem:[%s73] sm:$0xff] %v74
        %v76 = vld [vmem:[%s72 + $0x8] sm:$0xff]
        %77 = vst [vmem:[%s73 + $0x8] sm:$0xff] %v76
        %v78 = vld [vmem:[%s72 + $0x10] sm:$0xff]
        %79 = vst [vmem:[%s73 + $0x10] sm:$0xff] %v78
        %v80 = vld [vmem:[%s72 + $0x18] sm:$0xff]
        %81 = vst [vmem:[%s73 + $0x18] sm:$0xff] %v80
        %v82 = vld [vmem:[%s72 + $0x20] sm:$0xff]
        %83 = vst [vmem:[%s73 + $0x20] sm:$0xff] %v82
        %v84 = vld [vmem:[%s72 + $0x28] sm:$0xff]
        %85 = vst [vmem:[%s73 + $0x28] sm:$0xff] %v84
        %v86 = vld [vmem:[%s72 + $0x30] sm:$0xff]
        %87 = vst [vmem:[%s73 + $0x30] sm:$0xff] %v86
        %v88 = vld [vmem:[%s72 + $0x38] sm:$0xff]
        %89 = vst [vmem:[%s73 + $0x38] sm:$0xff] %v88
        %v90 = vld [vmem:[%s72 + $0x40] sm:$0xff]
        %91 = vst [vmem:[%s73 + $0x40] sm:$0xff] %v90
        %v92 = vld [vmem:[%s72 + $0x48] sm:$0xff]
        %93 = vst [vmem:[%s73 + $0x48] sm:$0xff] %v92
        %v94 = vld [vmem:[%s72 + $0x50] sm:$0xff]
        %95 = vst [vmem:[%s73 + $0x50] sm:$0xff] %v94
        %v96 = vld [vmem:[%s72 + $0x58] sm:$0xff]
        %97 = vst [vmem:[%s73 + $0x58] sm:$0xff] %v96
        %v98 = vld [vmem:[%s72 + $0x60] sm:$0xff]
        %99 = vst [vmem:[%s73 + $0x60] sm:$0xff] %v98
        %v100 = vld [vmem:[%s72 + $0x68] sm:$0xff]
        %101 = vst [vmem:[%s73 + $0x68] sm:$0xff] %v100
        %v102 = vld [vmem:[%s72 + $0x70] sm:$0xff]
        %103 = vst [vmem:[%s73 + $0x70] sm:$0xff] %v102
        %v104 = vld [vmem:[%s72 + $0x78] sm:$0xff]
        %105 = vst [vmem:[%s73 + $0x78] sm:$0xff] %v104
        %v106 = vld [vmem:[%s72 + $0x80] sm:$0xff]
        %107 = vst [vmem:[%s73 + $0x80] sm:$0xff] %v106
        %v108 = vld [vmem:[%s72 + $0x88] sm:$0xff]
        %109 = vst [vmem:[%s73 + $0x88] sm:$0xff] %v108
        %v110 = vld [vmem:[%s72 + $0x90] sm:$0xff]
        %111 = vst [vmem:[%s73 + $0x90] sm:$0xff] %v110
        %v112 = vld [vmem:[%s72 + $0x98] sm:$0xff]
        %113 = vst [vmem:[%s73 + $0x98] sm:$0xff] %v112
        %v114 = vld [vmem:[%s72 + $0xa0] sm:$0xff]
        %115 = vst [vmem:[%s73 + $0xa0] sm:$0xff] %v114
        %v116 = vld [vmem:[%s72 + $0xa8] sm:$0xff]
        %117 = vst [vmem:[%s73 + $0xa8] sm:$0xff] %v116
        %v118 = vld [vmem:[%s72 + $0xb0] sm:$0xff]
        %119 = vst [vmem:[%s73 + $0xb0] sm:$0xff] %v118
        %v120 = vld [vmem:[%s72 + $0xb8] sm:$0xff]
        %121 = vst [vmem:[%s73 + $0xb8] sm:$0xff] %v120
        %v122 = vld [vmem:[%s72 + $0xc0] sm:$0xff]
        %123 = vst [vmem:[%s73 + $0xc0] sm:$0xff] %v122
        %v124 = vld [vmem:[%s72 + $0xc8] sm:$0xff]
        %125 = vst [vmem:[%s73 + $0xc8] sm:$0xff] %v124
        %v126 = vld [vmem:[%s72 + $0xd0] sm:$0xff]
        %127 = vst [vmem:[%s73 + $0xd0] sm:$0xff] %v126
        %v128 = vld [vmem:[%s72 + $0xd8] sm:$0xff]
        %129 = vst [vmem:[%s73 + $0xd8] sm:$0xff] %v128
        %v130 = vld [vmem:[%s72 + $0xe0] sm:$0xff]
        %131 = vst [vmem:[%s73 + $0xe0] sm:$0xff] %v130
        %v132 = vld [vmem:[%s72 + $0xe8] sm:$0xff]
        %133 = vst [vmem:[%s73 + $0xe8] sm:$0xff] %v132
        %v134 = vld [vmem:[%s72 + $0xf0] sm:$0xff]
        %135 = vst [vmem:[%s73 + $0xf0] sm:$0xff] %v134
        %v136 = vld [vmem:[%s72 + $0xf8] sm:$0xff]
        %137 = vst [vmem:[%s73 + $0xf8] sm:$0xff] %v136
        %v138 = vld [vmem:[%s72 + $0x100] sm:$0xff]
        %139 = vst [vmem:[%s73 + $0x100] sm:$0xff] %v138
        %v140 = vld [vmem:[%s72 + $0x108] sm:$0xff]
        %141 = vst [vmem:[%s73 + $0x108] sm:$0xff] %v140
        %v142 = vld [vmem:[%s72 + $0x110] sm:$0xff]
        %143 = vst [vmem:[%s73 + $0x110] sm:$0xff] %v142
        %v144 = vld [vmem:[%s72 + $0x118] sm:$0xff]
        %145 = vst [vmem:[%s73 + $0x118] sm:$0xff] %v144
        %v146 = vld [vmem:[%s72 + $0x120] sm:$0xff]
        %147 = vst [vmem:[%s73 + $0x120] sm:$0xff] %v146
        %v148 = vld [vmem:[%s72 + $0x128] sm:$0xff]
        %149 = vst [vmem:[%s73 + $0x128] sm:$0xff] %v148
        %v150 = vld [vmem:[%s72 + $0x130] sm:$0xff]
        %151 = vst [vmem:[%s73 + $0x130] sm:$0xff] %v150
        %v152 = vld [vmem:[%s72 + $0x138] sm:$0xff]
        %153 = vst [vmem:[%s73 + $0x138] sm:$0xff] %v152
        %v154 = vld [vmem:[%s72 + $0x140] sm:$0xff]
        %155 = vst [vmem:[%s73 + $0x140] sm:$0xff] %v154
        %v156 = vld [vmem:[%s72 + $0x148] sm:$0xff]
        %157 = vst [vmem:[%s73 + $0x148] sm:$0xff] %v156
        %v158 = vld [vmem:[%s72 + $0x150] sm:$0xff]
        %159 = vst [vmem:[%s73 + $0x150] sm:$0xff] %v158
        %v160 = vld [vmem:[%s72 + $0x158] sm:$0xff]
        %161 = vst [vmem:[%s73 + $0x158] sm:$0xff] %v160
        %v162 = vld [vmem:[%s72 + $0x160] sm:$0xff]
        %163 = vst [vmem:[%s73 + $0x160] sm:$0xff] %v162
        %v164 = vld [vmem:[%s72 + $0x168] sm:$0xff]
        %165 = vst [vmem:[%s73 + $0x168] sm:$0xff] %v164
        %v166 = vld [vmem:[%s72 + $0x170] sm:$0xff]
        %167 = vst [vmem:[%s73 + $0x170] sm:$0xff] %v166
        %v168 = vld [vmem:[%s72 + $0x178] sm:$0xff]
        %169 = vst [vmem:[%s73 + $0x178] sm:$0xff] %v168
        %v170 = vld [vmem:[%s72 + $0x180] sm:$0xff]
        %171 = vst [vmem:[%s73 + $0x180] sm:$0xff] %v170
        %v172 = vld [vmem:[%s72 + $0x188] sm:$0xff]
        %173 = vst [vmem:[%s73 + $0x188] sm:$0xff] %v172
        %v174 = vld [vmem:[%s72 + $0x190] sm:$0xff]
        %175 = vst [vmem:[%s73 + $0x190] sm:$0xff] %v174
        %v176 = vld [vmem:[%s72 + $0x198] sm:$0xff]
        %177 = vst [vmem:[%s73 + $0x198] sm:$0xff] %v176
        %v178 = vld [vmem:[%s72 + $0x1a0] sm:$0xff]
        %179 = vst [vmem:[%s73 + $0x1a0] sm:$0xff] %v178
        %v180 = vld [vmem:[%s72 + $0x1a8] sm:$0xff]
        %181 = vst [vmem:[%s73 + $0x1a8] sm:$0xff] %v180
        %v182 = vld [vmem:[%s72 + $0x1b0] sm:$0xff]
        %183 = vst [vmem:[%s73 + $0x1b0] sm:$0xff] %v182
        %v184 = vld [vmem:[%s72 + $0x1b8] sm:$0xff]
        %185 = vst [vmem:[%s73 + $0x1b8] sm:$0xff] %v184
        %v186 = vld [vmem:[%s72 + $0x1c0] sm:$0xff]
        %187 = vst [vmem:[%s73 + $0x1c0] sm:$0xff] %v186
        %v188 = vld [vmem:[%s72 + $0x1c8] sm:$0xff]
        %189 = vst [vmem:[%s73 + $0x1c8] sm:$0xff] %v188
        %v190 = vld [vmem:[%s72 + $0x1d0] sm:$0xff]
        %191 = vst [vmem:[%s73 + $0x1d0] sm:$0xff] %v190
        %v192 = vld [vmem:[%s72 + $0x1d8] sm:$0xff]
        %193 = vst [vmem:[%s73 + $0x1d8] sm:$0xff] %v192
        %v194 = vld [vmem:[%s72 + $0x1e0] sm:$0xff]
        %195 = vst [vmem:[%s73 + $0x1e0] sm:$0xff] %v194
        %v196 = vld [vmem:[%s72 + $0x1e8] sm:$0xff]
        %197 = vst [vmem:[%s73 + $0x1e8] sm:$0xff] %v196
        %v198 = vld [vmem:[%s72 + $0x1f0] sm:$0xff]
        %199 = vst [vmem:[%s73 + $0x1f0] sm:$0xff] %v198
        %v200 = vld [vmem:[%s72 + $0x1f8] sm:$0xff]
        %201 = vst [vmem:[%s73 + $0x1f8] sm:$0xff] %v200
      $region49: #{cvae_forward.1} parent=43 // loop_footer
        %s71 = sadd.s32 1, %s67
      $region50: #{cvae_forward.1} parent=43 // loop_footer_branch
        %66 = sbr.rel target = $region46
      $region51: #{cvae_forward.1} parent=43 // loop_exit
        _
    $region44: #{cvae_forward.1} parent=1 // pred_fallthru
      _
    // Predicated region
    $region52: #{cvae_forward.1} parent=1 // pred_check
      _
    $region53: #{cvae_forward.1} parent=1 // pred_check_branch
      %203 = sbr.rel target = $region55
    $region54: #{cvae_forward.1} parent=1 // pred_region
      _
    $region55: #{cvae_forward.1} parent=1 // pred_fallthru
      _
    // Predicated region
    $region56: #{cvae_forward.1} parent=1 // pred_check
      _
    $region57: #{cvae_forward.1} parent=1 // pred_check_branch
      %206 = sbr.rel (0) target = $region59
    $region58: #{cvae_forward.1} parent=1 // pred_region
      %207 = vsyncadd %s63, 8192
    $region59: #{cvae_forward.1} parent=1 // pred_fallthru
      _
    %s208 = scalar_lea.sflag [#allocation11], 2
    // Predicated region
    $region60: #{cvae_forward.1} parent=1 // pred_check
      _
    $region61: #{cvae_forward.1} parent=1 // pred_check_branch
      %210 = sbr.rel target = $region63
    $region62: #{cvae_forward.1} parent=1 // pred_region
      %211 = sst [smem:[#allocation18]] [#allocation17]
      %212 = sst [smem:[#allocation19]] [#allocation16]
    $region63: #{cvae_forward.1} parent=1 // pred_fallthru
      _
    %214 = shalt.err (0)
    %s216 = sshll.u32 %s6, 4
    %s217 = int_to_ptr.hbm [resolvable:$true] %s216
    %s218 = sshll.u32 [#allocation4], 4
    %s219 = int_to_ptr.vmem [resolvable:$true] %s218
    %221 = dma.hbm_to_vmem [thread:$0]  %s217, 32768, %s219, %s208
    %s222 = scalar_lea.sflag [#allocation11], 3
    // Predicated region
    $region64: #{cvae_forward.1} parent=1 // pred_check
      _
    $region65: #{cvae_forward.1} parent=1 // pred_check_branch
      %224 = sbr.rel (0) target = $region67
    $region66: #{cvae_forward.1} parent=1 // pred_region
      loop: start=0, step=1, limit=1
      $region68: #{cvae_forward.1} parent=66 // loop_pre_header
        _
      $region69: #{cvae_forward.1} parent=66 // loop_header
        %s226 = sphi 0, %s230
        %p227 = scmp.ge.s32.totalorder %s226, 1
        %s231 = sphi %s7, %s7
        %s232 = sphi [#allocation5], [#allocation5]
      $region70: #{cvae_forward.1} parent=66 // loop_header_branch
        %229 = sbr.rel (%p227) target = $region74
      $region71: #{cvae_forward.1} parent=66 // loop_body
        %v233 = vld [vmem:[%s231] sm:$0xff]
        %234 = vst [vmem:[%s232] sm:$0xff] %v233
        %v235 = vld [vmem:[%s231 + $0x8] sm:$0xff]
        %236 = vst [vmem:[%s232 + $0x8] sm:$0xff] %v235
        %v237 = vld [vmem:[%s231 + $0x10] sm:$0xff]
        %238 = vst [vmem:[%s232 + $0x10] sm:$0xff] %v237
        %v239 = vld [vmem:[%s231 + $0x18] sm:$0xff]
        %240 = vst [vmem:[%s232 + $0x18] sm:$0xff] %v239
        %v241 = vld [vmem:[%s231 + $0x20] sm:$0xff]
        %242 = vst [vmem:[%s232 + $0x20] sm:$0xff] %v241
        %v243 = vld [vmem:[%s231 + $0x28] sm:$0xff]
        %244 = vst [vmem:[%s232 + $0x28] sm:$0xff] %v243
        %v245 = vld [vmem:[%s231 + $0x30] sm:$0xff]
        %246 = vst [vmem:[%s232 + $0x30] sm:$0xff] %v245
        %v247 = vld [vmem:[%s231 + $0x38] sm:$0xff]
        %248 = vst [vmem:[%s232 + $0x38] sm:$0xff] %v247
        %v249 = vld [vmem:[%s231 + $0x40] sm:$0xff]
        %250 = vst [vmem:[%s232 + $0x40] sm:$0xff] %v249
        %v251 = vld [vmem:[%s231 + $0x48] sm:$0xff]
        %252 = vst [vmem:[%s232 + $0x48] sm:$0xff] %v251
        %v253 = vld [vmem:[%s231 + $0x50] sm:$0xff]
        %254 = vst [vmem:[%s232 + $0x50] sm:$0xff] %v253
        %v255 = vld [vmem:[%s231 + $0x58] sm:$0xff]
        %256 = vst [vmem:[%s232 + $0x58] sm:$0xff] %v255
        %v257 = vld [vmem:[%s231 + $0x60] sm:$0xff]
        %258 = vst [vmem:[%s232 + $0x60] sm:$0xff] %v257
        %v259 = vld [vmem:[%s231 + $0x68] sm:$0xff]
        %260 = vst [vmem:[%s232 + $0x68] sm:$0xff] %v259
        %v261 = vld [vmem:[%s231 + $0x70] sm:$0xff]
        %262 = vst [vmem:[%s232 + $0x70] sm:$0xff] %v261
        %v263 = vld [vmem:[%s231 + $0x78] sm:$0xff]
        %264 = vst [vmem:[%s232 + $0x78] sm:$0xff] %v263
        %v265 = vld [vmem:[%s231 + $0x80] sm:$0xff]
        %266 = vst [vmem:[%s232 + $0x80] sm:$0xff] %v265
        %v267 = vld [vmem:[%s231 + $0x88] sm:$0xff]
        %268 = vst [vmem:[%s232 + $0x88] sm:$0xff] %v267
        %v269 = vld [vmem:[%s231 + $0x90] sm:$0xff]
        %270 = vst [vmem:[%s232 + $0x90] sm:$0xff] %v269
        %v271 = vld [vmem:[%s231 + $0x98] sm:$0xff]
        %272 = vst [vmem:[%s232 + $0x98] sm:$0xff] %v271
        %v273 = vld [vmem:[%s231 + $0xa0] sm:$0xff]
        %274 = vst [vmem:[%s232 + $0xa0] sm:$0xff] %v273
        %v275 = vld [vmem:[%s231 + $0xa8] sm:$0xff]
        %276 = vst [vmem:[%s232 + $0xa8] sm:$0xff] %v275
        %v277 = vld [vmem:[%s231 + $0xb0] sm:$0xff]
        %278 = vst [vmem:[%s232 + $0xb0] sm:$0xff] %v277
        %v279 = vld [vmem:[%s231 + $0xb8] sm:$0xff]
        %280 = vst [vmem:[%s232 + $0xb8] sm:$0xff] %v279
        %v281 = vld [vmem:[%s231 + $0xc0] sm:$0xff]
        %282 = vst [vmem:[%s232 + $0xc0] sm:$0xff] %v281
        %v283 = vld [vmem:[%s231 + $0xc8] sm:$0xff]
        %284 = vst [vmem:[%s232 + $0xc8] sm:$0xff] %v283
        %v285 = vld [vmem:[%s231 + $0xd0] sm:$0xff]
        %286 = vst [vmem:[%s232 + $0xd0] sm:$0xff] %v285
        %v287 = vld [vmem:[%s231 + $0xd8] sm:$0xff]
        %288 = vst [vmem:[%s232 + $0xd8] sm:$0xff] %v287
        %v289 = vld [vmem:[%s231 + $0xe0] sm:$0xff]
        %290 = vst [vmem:[%s232 + $0xe0] sm:$0xff] %v289
        %v291 = vld [vmem:[%s231 + $0xe8] sm:$0xff]
        %292 = vst [vmem:[%s232 + $0xe8] sm:$0xff] %v291
        %v293 = vld [vmem:[%s231 + $0xf0] sm:$0xff]
        %294 = vst [vmem:[%s232 + $0xf0] sm:$0xff] %v293
        %v295 = vld [vmem:[%s231 + $0xf8] sm:$0xff]
        %296 = vst [vmem:[%s232 + $0xf8] sm:$0xff] %v295
        %v297 = vld [vmem:[%s231 + $0x100] sm:$0xff]
        %298 = vst [vmem:[%s232 + $0x100] sm:$0xff] %v297
        %v299 = vld [vmem:[%s231 + $0x108] sm:$0xff]
        %300 = vst [vmem:[%s232 + $0x108] sm:$0xff] %v299
        %v301 = vld [vmem:[%s231 + $0x110] sm:$0xff]
        %302 = vst [vmem:[%s232 + $0x110] sm:$0xff] %v301
        %v303 = vld [vmem:[%s231 + $0x118] sm:$0xff]
        %304 = vst [vmem:[%s232 + $0x118] sm:$0xff] %v303
        %v305 = vld [vmem:[%s231 + $0x120] sm:$0xff]
        %306 = vst [vmem:[%s232 + $0x120] sm:$0xff] %v305
        %v307 = vld [vmem:[%s231 + $0x128] sm:$0xff]
        %308 = vst [vmem:[%s232 + $0x128] sm:$0xff] %v307
        %v309 = vld [vmem:[%s231 + $0x130] sm:$0xff]
        %310 = vst [vmem:[%s232 + $0x130] sm:$0xff] %v309
        %v311 = vld [vmem:[%s231 + $0x138] sm:$0xff]
        %312 = vst [vmem:[%s232 + $0x138] sm:$0xff] %v311
        %v313 = vld [vmem:[%s231 + $0x140] sm:$0xff]
        %314 = vst [vmem:[%s232 + $0x140] sm:$0xff] %v313
        %v315 = vld [vmem:[%s231 + $0x148] sm:$0xff]
        %316 = vst [vmem:[%s232 + $0x148] sm:$0xff] %v315
        %v317 = vld [vmem:[%s231 + $0x150] sm:$0xff]
        %318 = vst [vmem:[%s232 + $0x150] sm:$0xff] %v317
        %v319 = vld [vmem:[%s231 + $0x158] sm:$0xff]
        %320 = vst [vmem:[%s232 + $0x158] sm:$0xff] %v319
        %v321 = vld [vmem:[%s231 + $0x160] sm:$0xff]
        %322 = vst [vmem:[%s232 + $0x160] sm:$0xff] %v321
        %v323 = vld [vmem:[%s231 + $0x168] sm:$0xff]
        %324 = vst [vmem:[%s232 + $0x168] sm:$0xff] %v323
        %v325 = vld [vmem:[%s231 + $0x170] sm:$0xff]
        %326 = vst [vmem:[%s232 + $0x170] sm:$0xff] %v325
        %v327 = vld [vmem:[%s231 + $0x178] sm:$0xff]
        %328 = vst [vmem:[%s232 + $0x178] sm:$0xff] %v327
        %v329 = vld [vmem:[%s231 + $0x180] sm:$0xff]
        %330 = vst [vmem:[%s232 + $0x180] sm:$0xff] %v329
        %v331 = vld [vmem:[%s231 + $0x188] sm:$0xff]
        %332 = vst [vmem:[%s232 + $0x188] sm:$0xff] %v331
        %v333 = vld [vmem:[%s231 + $0x190] sm:$0xff]
        %334 = vst [vmem:[%s232 + $0x190] sm:$0xff] %v333
        %v335 = vld [vmem:[%s231 + $0x198] sm:$0xff]
        %336 = vst [vmem:[%s232 + $0x198] sm:$0xff] %v335
        %v337 = vld [vmem:[%s231 + $0x1a0] sm:$0xff]
        %338 = vst [vmem:[%s232 + $0x1a0] sm:$0xff] %v337
        %v339 = vld [vmem:[%s231 + $0x1a8] sm:$0xff]
        %340 = vst [vmem:[%s232 + $0x1a8] sm:$0xff] %v339
        %v341 = vld [vmem:[%s231 + $0x1b0] sm:$0xff]
        %342 = vst [vmem:[%s232 + $0x1b0] sm:$0xff] %v341
        %v343 = vld [vmem:[%s231 + $0x1b8] sm:$0xff]
        %344 = vst [vmem:[%s232 + $0x1b8] sm:$0xff] %v343
        %v345 = vld [vmem:[%s231 + $0x1c0] sm:$0xff]
        %346 = vst [vmem:[%s232 + $0x1c0] sm:$0xff] %v345
        %v347 = vld [vmem:[%s231 + $0x1c8] sm:$0xff]
        %348 = vst [vmem:[%s232 + $0x1c8] sm:$0xff] %v347
        %v349 = vld [vmem:[%s231 + $0x1d0] sm:$0xff]
        %350 = vst [vmem:[%s232 + $0x1d0] sm:$0xff] %v349
        %v351 = vld [vmem:[%s231 + $0x1d8] sm:$0xff]
        %352 = vst [vmem:[%s232 + $0x1d8] sm:$0xff] %v351
        %v353 = vld [vmem:[%s231 + $0x1e0] sm:$0xff]
        %354 = vst [vmem:[%s232 + $0x1e0] sm:$0xff] %v353
        %v355 = vld [vmem:[%s231 + $0x1e8] sm:$0xff]
        %356 = vst [vmem:[%s232 + $0x1e8] sm:$0xff] %v355
        %v357 = vld [vmem:[%s231 + $0x1f0] sm:$0xff]
        %358 = vst [vmem:[%s232 + $0x1f0] sm:$0xff] %v357
        %v359 = vld [vmem:[%s231 + $0x1f8] sm:$0xff]
        %360 = vst [vmem:[%s232 + $0x1f8] sm:$0xff] %v359
      $region72: #{cvae_forward.1} parent=66 // loop_footer
        %s230 = sadd.s32 1, %s226
      $region73: #{cvae_forward.1} parent=66 // loop_footer_branch
        %225 = sbr.rel target = $region69
      $region74: #{cvae_forward.1} parent=66 // loop_exit
        _
    $region67: #{cvae_forward.1} parent=1 // pred_fallthru
      _
    // Predicated region
    $region75: #{cvae_forward.1} parent=1 // pred_check
      _
    $region76: #{cvae_forward.1} parent=1 // pred_check_branch
      %362 = sbr.rel target = $region78
    $region77: #{cvae_forward.1} parent=1 // pred_region
      _
    $region78: #{cvae_forward.1} parent=1 // pred_fallthru
      _
    // Predicated region
    $region79: #{cvae_forward.1} parent=1 // pred_check
      _
    $region80: #{cvae_forward.1} parent=1 // pred_check_branch
      %365 = sbr.rel (0) target = $region82
    $region81: #{cvae_forward.1} parent=1 // pred_region
      %366 = vsyncadd %s222, 8192
    $region82: #{cvae_forward.1} parent=1 // pred_fallthru
      _
    %s367 = scalar_lea.sflag [#allocation11], 4
    // Predicated region
    $region83: #{cvae_forward.1} parent=1 // pred_check
      _
    $region84: #{cvae_forward.1} parent=1 // pred_check_branch
      %369 = sbr.rel (0) target = $region86
    $region85: #{cvae_forward.1} parent=1 // pred_region
      loop: start=0, step=1, limit=1
      $region87: #{cvae_forward.1} parent=85 // loop_pre_header
        _
      $region88: #{cvae_forward.1} parent=85 // loop_header
        %s371 = sphi 0, %s375
        %p372 = scmp.ge.s32.totalorder %s371, 1
        %s376 = sphi %s8, %s8
        %s377 = sphi [#allocation6], [#allocation6]
      $region89: #{cvae_forward.1} parent=85 // loop_header_branch
        %374 = sbr.rel (%p372) target = $region93
      $region90: #{cvae_forward.1} parent=85 // loop_body
        %v378 = vld [vmem:[%s376] sm:$0xff]
        %379 = vst [vmem:[%s377] sm:$0xff] %v378
        %v380 = vld [vmem:[%s376 + $0x8] sm:$0xff]
        %381 = vst [vmem:[%s377 + $0x8] sm:$0xff] %v380
        %v382 = vld [vmem:[%s376 + $0x10] sm:$0xff]
        %383 = vst [vmem:[%s377 + $0x10] sm:$0xff] %v382
        %v384 = vld [vmem:[%s376 + $0x18] sm:$0xff]
        %385 = vst [vmem:[%s377 + $0x18] sm:$0xff] %v384
      $region91: #{cvae_forward.1} parent=85 // loop_footer
        %s375 = sadd.s32 1, %s371
      $region92: #{cvae_forward.1} parent=85 // loop_footer_branch
        %370 = sbr.rel target = $region88
      $region93: #{cvae_forward.1} parent=85 // loop_exit
        _
    $region86: #{cvae_forward.1} parent=1 // pred_fallthru
      _
    // Predicated region
    $region94: #{cvae_forward.1} parent=1 // pred_check
      _
    $region95: #{cvae_forward.1} parent=1 // pred_check_branch
      %387 = sbr.rel target = $region97
    $region96: #{cvae_forward.1} parent=1 // pred_region
      _
    $region97: #{cvae_forward.1} parent=1 // pred_fallthru
      _
    // Predicated region
    $region98: #{cvae_forward.1} parent=1 // pred_check
      _
    $region99: #{cvae_forward.1} parent=1 // pred_check_branch
      %390 = sbr.rel (0) target = $region101
    $region100: #{cvae_forward.1} parent=1 // pred_region
      %391 = vsyncadd %s367, 512
    $region101: #{cvae_forward.1} parent=1 // pred_fallthru
      _
    %s392 = scalar_lea.sflag [#allocation11], 5
    // Predicated region
    $region102: #{cvae_forward.1} parent=1 // pred_check
      _
    $region103: #{cvae_forward.1} parent=1 // pred_check_branch
      %394 = sbr.rel (0) target = $region105
    $region104: #{cvae_forward.1} parent=1 // pred_region
      loop: start=0, step=1, limit=1
      $region106: #{cvae_forward.1} parent=104 // loop_pre_header
        _
      $region107: #{cvae_forward.1} parent=104 // loop_header
        %s396 = sphi 0, %s400
        %p397 = scmp.ge.s32.totalorder %s396, 1
        %s401 = sphi %s9, %s9
        %s402 = sphi [#allocation7], [#allocation7]
      $region108: #{cvae_forward.1} parent=104 // loop_header_branch
        %399 = sbr.rel (%p397) target = $region112
      $region109: #{cvae_forward.1} parent=104 // loop_body
        %v403 = vld [vmem:[%s401] sm:$0xff]
        %404 = vst [vmem:[%s402] sm:$0xff] %v403
        %v405 = vld [vmem:[%s401 + $0x8] sm:$0xff]
        %406 = vst [vmem:[%s402 + $0x8] sm:$0xff] %v405
      $region110: #{cvae_forward.1} parent=104 // loop_footer
        %s400 = sadd.s32 1, %s396
      $region111: #{cvae_forward.1} parent=104 // loop_footer_branch
        %395 = sbr.rel target = $region107
      $region112: #{cvae_forward.1} parent=104 // loop_exit
        _
    $region105: #{cvae_forward.1} parent=1 // pred_fallthru
      _
    // Predicated region
    $region113: #{cvae_forward.1} parent=1 // pred_check
      _
    $region114: #{cvae_forward.1} parent=1 // pred_check_branch
      %408 = sbr.rel target = $region116
    $region115: #{cvae_forward.1} parent=1 // pred_region
      _
    $region116: #{cvae_forward.1} parent=1 // pred_fallthru
      _
    // Predicated region
    $region117: #{cvae_forward.1} parent=1 // pred_check
      _
    $region118: #{cvae_forward.1} parent=1 // pred_check_branch
      %411 = sbr.rel (0) target = $region120
    $region119: #{cvae_forward.1} parent=1 // pred_region
      %412 = vsyncadd %s392, 256
    $region120: #{cvae_forward.1} parent=1 // pred_fallthru
      _
    %s413 = scalar_lea.sflag [#allocation11], 6
    // Predicated region
    $region121: #{cvae_forward.1} parent=1 // pred_check
      _
    $region122: #{cvae_forward.1} parent=1 // pred_check_branch
      %415 = sbr.rel target = $region124
    $region123: #{cvae_forward.1} parent=1 // pred_region
      %416 = sst [smem:[#allocation18]] [#allocation24]
      %417 = sst [smem:[#allocation19]] [#allocation23]
    $region124: #{cvae_forward.1} parent=1 // pred_fallthru
      _
    %419 = shalt.err (0)
    %s421 = sshll.u32 %s10, 4
    %s422 = int_to_ptr.hbm [resolvable:$true] %s421
    %s423 = sshll.u32 [#allocation8], 4
    %s424 = int_to_ptr.vmem [resolvable:$true] %s423
    %426 = dma.hbm_to_vmem [thread:$0]  %s422, 32768, %s424, %s413
    %s427 = scalar_lea.sflag [#allocation11], 7
    // Predicated region
    $region125: #{cvae_forward.1} parent=1 // pred_check
      _
    $region126: #{cvae_forward.1} parent=1 // pred_check_branch
      %429 = sbr.rel target = $region128
    $region127: #{cvae_forward.1} parent=1 // pred_region
      %430 = sst [smem:[#allocation18]] [#allocation26]
      %431 = sst [smem:[#allocation19]] [#allocation25]
    $region128: #{cvae_forward.1} parent=1 // pred_fallthru
      _
    %433 = shalt.err (0)
    %s435 = sshll.u32 %s11, 4
    %s436 = int_to_ptr.hbm [resolvable:$true] %s435
    %s437 = sshll.u32 [#allocation9], 4
    %s438 = int_to_ptr.vmem [resolvable:$true] %s437
    %440 = dma.hbm_to_vmem [thread:$0]  %s436, 8192, %s438, %s427
    %s441 = scalar_lea.sflag [#allocation11], 8
    // Predicated region
    $region129: #{cvae_forward.1} parent=1 // pred_check
      _
    $region130: #{cvae_forward.1} parent=1 // pred_check_branch
      %443 = sbr.rel (0) target = $region132
    $region131: #{cvae_forward.1} parent=1 // pred_region
      loop: start=0, step=1, limit=1
      $region133: #{cvae_forward.1} parent=131 // loop_pre_header
        _
      $region134: #{cvae_forward.1} parent=131 // loop_header
        %s445 = sphi 0, %s449
        %p446 = scmp.ge.s32.totalorder %s445, 1
        %s450 = sphi %s12, %s12
        %s451 = sphi [#allocation10], [#allocation10]
      $region135: #{cvae_forward.1} parent=131 // loop_header_branch
        %448 = sbr.rel (%p446) target = $region139
      $region136: #{cvae_forward.1} parent=131 // loop_body
        %v452 = vld [vmem:[%s450] sm:$0xff]
        %453 = vst [vmem:[%s451] sm:$0xff] %v452
        %v454 = vld [vmem:[%s450 + $0x8] sm:$0xff]
        %455 = vst [vmem:[%s451 + $0x8] sm:$0xff] %v454
        %v456 = vld [vmem:[%s450 + $0x10] sm:$0xff]
        %457 = vst [vmem:[%s451 + $0x10] sm:$0xff] %v456
        %v458 = vld [vmem:[%s450 + $0x18] sm:$0xff]
        %459 = vst [vmem:[%s451 + $0x18] sm:$0xff] %v458
        %v460 = vld [vmem:[%s450 + $0x20] sm:$0xff]
        %461 = vst [vmem:[%s451 + $0x20] sm:$0xff] %v460
        %v462 = vld [vmem:[%s450 + $0x28] sm:$0xff]
        %463 = vst [vmem:[%s451 + $0x28] sm:$0xff] %v462
        %v464 = vld [vmem:[%s450 + $0x30] sm:$0xff]
        %465 = vst [vmem:[%s451 + $0x30] sm:$0xff] %v464
        %v466 = vld [vmem:[%s450 + $0x38] sm:$0xff]
        %467 = vst [vmem:[%s451 + $0x38] sm:$0xff] %v466
        %v468 = vld [vmem:[%s450 + $0x40] sm:$0xff]
        %469 = vst [vmem:[%s451 + $0x40] sm:$0xff] %v468
        %v470 = vld [vmem:[%s450 + $0x48] sm:$0xff]
        %471 = vst [vmem:[%s451 + $0x48] sm:$0xff] %v470
        %v472 = vld [vmem:[%s450 + $0x50] sm:$0xff]
        %473 = vst [vmem:[%s451 + $0x50] sm:$0xff] %v472
        %v474 = vld [vmem:[%s450 + $0x58] sm:$0xff]
        %475 = vst [vmem:[%s451 + $0x58] sm:$0xff] %v474
        %v476 = vld [vmem:[%s450 + $0x60] sm:$0xff]
        %477 = vst [vmem:[%s451 + $0x60] sm:$0xff] %v476
        %v478 = vld [vmem:[%s450 + $0x68] sm:$0xff]
        %479 = vst [vmem:[%s451 + $0x68] sm:$0xff] %v478
        %v480 = vld [vmem:[%s450 + $0x70] sm:$0xff]
        %481 = vst [vmem:[%s451 + $0x70] sm:$0xff] %v480
        %v482 = vld [vmem:[%s450 + $0x78] sm:$0xff]
        %483 = vst [vmem:[%s451 + $0x78] sm:$0xff] %v482
      $region137: #{cvae_forward.1} parent=131 // loop_footer
        %s449 = sadd.s32 1, %s445
      $region138: #{cvae_forward.1} parent=131 // loop_footer_branch
        %444 = sbr.rel target = $region134
      $region139: #{cvae_forward.1} parent=131 // loop_exit
        _
    $region132: #{cvae_forward.1} parent=1 // pred_fallthru
      _
    // Predicated region
    $region140: #{cvae_forward.1} parent=1 // pred_check
      _
    $region141: #{cvae_forward.1} parent=1 // pred_check_branch
      %485 = sbr.rel target = $region143
    $region142: #{cvae_forward.1} parent=1 // pred_region
      _
    $region143: #{cvae_forward.1} parent=1 // pred_fallthru
      _
    // Predicated region
    $region144: #{cvae_forward.1} parent=1 // pred_check
      _
    $region145: #{cvae_forward.1} parent=1 // pred_check_branch
      %488 = sbr.rel (0) target = $region147
    $region146: #{cvae_forward.1} parent=1 // pred_region
      %489 = vsyncadd %s441, 2048
    $region147: #{cvae_forward.1} parent=1 // pred_fallthru
      _
    %v490 = vld [vmem:[%s0] sm:$0xff]
    %v491 = vld [vmem:[%s1] sm:$0xff]
    %v492 = vld [vmem:[%s2] sm:$0xff]
    %s493 = smul.u32 4, 2
    %s494 = smul.u32 %s493, 2
    %s495 = sshll.u32 %s494, 4
    %496 = dma.done [#allocation11], %s495
    %v497 = vpack.c.bf16 %v490, %v490
    %v498 = vld [vmem:[#allocation2] sm:$0xff]
    %v499 = vld [vmem:[#allocation2 + $0x8] sm:$0xff]
    %v500 = vld [vmem:[#allocation12] ss:$8 sm:$0x3]
    %v502 = vperm.slane %v500, 0
    %v503 = vperm.slane %v500, 1
    %v508 = vunpack.c.l.b16 %v498
    %v509 = vunpack.c.h.b16 %v498
    %v510 = vunpack.c.l.b16 %v499
    %v511 = vunpack.c.h.b16 %v499
    %v512 = vpack.c.b16 %v510, %v508
    %v513 = vpack.c.b16 %v511, %v509
    %vm516 = vcmask 130048
    %v518 = vsel %vm516, %v497, 0
    %520 = vmatpush.bf16.msra.mxu0 0
    %521 = vmatpush.bf16.msra.mxu0 0
    %522 = vmatpush.bf16.msra.mxu0 0
    %523 = vmatpush.bf16.msra.mxu0 0
    %524 = vmatpush.bf16.msra.mxu0 0
    %525 = vmatpush.bf16.msra.mxu0 0
    %526 = vmatpush.bf16.msra.mxu0 0
    %527 = vmatpush.bf16.msra.mxu0 %v512
    %528 = vmatmul.bf16.gmra.mxu0 %v518
    %v529 = vpop.f32.mrf.mxu0
    %v530 = vadd.f32 %v502, %v529
    %v531 = vpop.f32.mrf.mxu0
    %532 = vdwg.mxu0
    %533 = vmatpush.bf16.msra.mxu0 0
    %534 = vmatpush.bf16.msra.mxu0 0
    %535 = vmatpush.bf16.msra.mxu0 0
    %536 = vmatpush.bf16.msra.mxu0 0
    %537 = vmatpush.bf16.msra.mxu0 0
    %538 = vmatpush.bf16.msra.mxu0 0
    %539 = vmatpush.bf16.msra.mxu0 0
    %540 = vmatpush.bf16.msra.mxu0 %v513
    %541 = vmatmul.bf16.gmra.mxu0 %v518
    %v542 = vpop.f32.mrf.mxu0
    %v543 = vadd.f32 %v503, %v542
    %v544 = vpop.f32.mrf.mxu0
    %545 = vdwg.mxu0
    %vm546 = vcmp.gt.f32.partialorder %v530, 0.0
    %vm547 = vcmp.gt.f32.partialorder %v543, 0.0
    %v548 = vmul.f32 %v530, 0.2
    %v549 = vmul.f32 %v543, 0.2
    %v550 = vsel %vm546, %v530, %v548
    %v551 = vsel %vm547, %v543, %v549
    %v552 = vrot.slane %v550, 4
    %v553 = vadd.f32 %v550, %v552
    %v554 = vrot.slane %v553, 2
    %v555 = vadd.f32 %v553, %v554
    %v556 = vrot.slane %v555, 1
    %v557 = vadd.f32 %v555, %v556
    %v558 = vrot.slane %v551, 4
    %v559 = vadd.f32 %v551, %v558
    %v560 = vrot.slane %v559, 2
    %v561 = vadd.f32 %v559, %v560
    %v562 = vrot.slane %v561, 1
    %v563 = vadd.f32 %v561, %v562
    %v564 = vrcp.pop 8.0
    %v565 = vmul.f32 8.0, %v564
    %v566 = vsub.f32 1.0, %v565
    %v567 = vmul.f32 %v564, %v566
    %v568 = vadd.f32 %v564, %v567
    %vm569 = vweird.f32 %v564
    %v570 = vsel %vm569, %v564, %v568
    %v571 = vmul.f32 %v557, %v570
    %v572 = vmul.f32 %v563, %v570
    %v573 = vsub.f32 %v550, %v571
    %v574 = vsub.f32 %v551, %v572
    %v575 = vmul.f32 %v573, %v573
    %v576 = vmul.f32 %v574, %v574
    %v577 = vrot.slane %v575, 4
    %v578 = vadd.f32 %v575, %v577
    %v579 = vrot.slane %v578, 2
    %v580 = vadd.f32 %v578, %v579
    %v581 = vrot.slane %v580, 1
    %v582 = vadd.f32 %v580, %v581
    %v583 = vrot.slane %v576, 4
    %v584 = vadd.f32 %v576, %v583
    %v585 = vrot.slane %v584, 2
    %v586 = vadd.f32 %v584, %v585
    %v587 = vrot.slane %v586, 1
    %v588 = vadd.f32 %v586, %v587
    %v589 = vmul.f32 %v582, %v570
    %v590 = vmul.f32 %v588, %v570
    %v591 = vadd.f32 %v589, 1e-05
    %v592 = vadd.f32 %v590, 1e-05
    %v593 = vrsqrt.pop %v591
    %v594 = vmul.f32 %v593, %v591
    %v595 = vmul.f32 %v594, %v593
    %v596 = vmul.f32 0.5, %v595
    %v597 = vsub.f32 1.5, %v596
    %v598 = vmul.f32 %v593, %v597
    %vm599 = vweird.f32 %v591
    %vm600 = vweird.f32 %v593
    %vm601 = vmor %vm599, %vm600
    %v602 = vsel %vm601, %v593, %v598
    %v603 = vrsqrt.pop %v592
    %v604 = vmul.f32 %v603, %v592
    %v605 = vmul.f32 %v604, %v603
    %v606 = vmul.f32 0.5, %v605
    %v607 = vsub.f32 1.5, %v606
    %v608 = vmul.f32 %v603, %v607
    %vm609 = vweird.f32 %v592
    %vm610 = vweird.f32 %v603
    %vm611 = vmor %vm609, %vm610
    %v612 = vsel %vm611, %v603, %v608
    %v613 = vmul.f32 %v573, %v602
    %v614 = vmul.f32 %v574, %v612
    %s615 = scalar_lea.vmem [#allocation12], 1
    %v616 = vld [vmem:[%s615] ss:$8 sm:$0x3]
    %v618 = vperm.slane %v616, 0
    %v619 = vperm.slane %v616, 1
    %v622 = vmul.f32 %v613, %v618
    %v623 = vmul.f32 %v614, %v619
    %s624 = scalar_lea.vmem [#allocation12], 2
    %v625 = vld [vmem:[%s624] ss:$8 sm:$0x3]
    %v627 = vperm.slane %v625, 0
    %v628 = vperm.slane %v625, 1
    %v631 = vadd.f32 %v622, %v627
    %v632 = vadd.f32 %v623, %v628
    %s633 = smul.u32 4, 32
    %s634 = smul.u32 %s633, 4
    %s635 = sshll.u32 %s634, 4
    %636 = dma.done %s63, %s635
    %v637 = vpack.c.bf16 %v631, %v631
    %v638 = vpack.c.bf16 %v632, %v632
    %v639 = vld [vmem:[#allocation3] sm:$0xff]
    %v640 = vld [vmem:[#allocation3 + $0x8] sm:$0xff]
    %v641 = vld [vmem:[#allocation3 + $0x10] sm:$0xff]
    %v642 = vld [vmem:[#allocation3 + $0x18] sm:$0xff]
    %v643 = vld [vmem:[#allocation3 + $0x20] sm:$0xff]
    %v644 = vld [vmem:[#allocation3 + $0x28] sm:$0xff]
    %v645 = vld [vmem:[#allocation3 + $0x30] sm:$0xff]
    %v646 = vld [vmem:[#allocation3 + $0x38] sm:$0xff]
    %v647 = vld [vmem:[#allocation3 + $0x40] sm:$0xff]
    %v648 = vld [vmem:[#allocation3 + $0x48] sm:$0xff]
    %v649 = vld [vmem:[#allocation3 + $0x50] sm:$0xff]
    %v650 = vld [vmem:[#allocation3 + $0x58] sm:$0xff]
    %v651 = vld [vmem:[#allocation3 + $0x60] sm:$0xff]
    %v652 = vld [vmem:[#allocation3 + $0x68] sm:$0xff]
    %v653 = vld [vmem:[#allocation3 + $0x70] sm:$0xff]
    %v654 = vld [vmem:[#allocation3 + $0x78] sm:$0xff]
    %v655 = vld [vmem:[#allocation3 + $0x80] sm:$0xff]
    %v656 = vld [vmem:[#allocation3 + $0x88] sm:$0xff]
    %v657 = vld [vmem:[#allocation3 + $0x90] sm:$0xff]
    %v658 = vld [vmem:[#allocation3 + $0x98] sm:$0xff]
    %v659 = vld [vmem:[#allocation3 + $0xa0] sm:$0xff]
    %v660 = vld [vmem:[#allocation3 + $0xa8] sm:$0xff]
    %v661 = vld [vmem:[#allocation3 + $0xb0] sm:$0xff]
    %v662 = vld [vmem:[#allocation3 + $0xb8] sm:$0xff]
    %v663 = vld [vmem:[#allocation3 + $0xc0] sm:$0xff]
    %v664 = vld [vmem:[#allocation3 + $0xc8] sm:$0xff]
    %v665 = vld [vmem:[#allocation3 + $0xd0] sm:$0xff]
    %v666 = vld [vmem:[#allocation3 + $0xd8] sm:$0xff]
    %v667 = vld [vmem:[#allocation3 + $0xe0] sm:$0xff]
    %v668 = vld [vmem:[#allocation3 + $0xe8] sm:$0xff]
    %v669 = vld [vmem:[#allocation3 + $0xf0] sm:$0xff]
    %v670 = vld [vmem:[#allocation3 + $0xf8] sm:$0xff]
    %v671 = vld [vmem:[#allocation3 + $0x100] sm:$0xff]
    %v672 = vld [vmem:[#allocation3 + $0x108] sm:$0xff]
    %v673 = vld [vmem:[#allocation3 + $0x110] sm:$0xff]
    %v674 = vld [vmem:[#allocation3 + $0x118] sm:$0xff]
    %v675 = vld [vmem:[#allocation3 + $0x120] sm:$0xff]
    %v676 = vld [vmem:[#allocation3 + $0x128] sm:$0xff]
    %v677 = vld [vmem:[#allocation3 + $0x130] sm:$0xff]
    %v678 = vld [vmem:[#allocation3 + $0x138] sm:$0xff]
    %v679 = vld [vmem:[#allocation3 + $0x140] sm:$0xff]
    %v680 = vld [vmem:[#allocation3 + $0x148] sm:$0xff]
    %v681 = vld [vmem:[#allocation3 + $0x150] sm:$0xff]
    %v682 = vld [vmem:[#allocation3 + $0x158] sm:$0xff]
    %v683 = vld [vmem:[#allocation3 + $0x160] sm:$0xff]
    %v684 = vld [vmem:[#allocation3 + $0x168] sm:$0xff]
    %v685 = vld [vmem:[#allocation3 + $0x170] sm:$0xff]
    %v686 = vld [vmem:[#allocation3 + $0x178] sm:$0xff]
    %v687 = vld [vmem:[#allocation3 + $0x180] sm:$0xff]
    %v688 = vld [vmem:[#allocation3 + $0x188] sm:$0xff]
    %v689 = vld [vmem:[#allocation3 + $0x190] sm:$0xff]
    %v690 = vld [vmem:[#allocation3 + $0x198] sm:$0xff]
    %v691 = vld [vmem:[#allocation3 + $0x1a0] sm:$0xff]
    %v692 = vld [vmem:[#allocation3 + $0x1a8] sm:$0xff]
    %v693 = vld [vmem:[#allocation3 + $0x1b0] sm:$0xff]
    %v694 = vld [vmem:[#allocation3 + $0x1b8] sm:$0xff]
    %v695 = vld [vmem:[#allocation3 + $0x1c0] sm:$0xff]
    %v696 = vld [vmem:[#allocation3 + $0x1c8] sm:$0xff]
    %v697 = vld [vmem:[#allocation3 + $0x1d0] sm:$0xff]
    %v698 = vld [vmem:[#allocation3 + $0x1d8] sm:$0xff]
    %v699 = vld [vmem:[#allocation3 + $0x1e0] sm:$0xff]
    %v700 = vld [vmem:[#allocation3 + $0x1e8] sm:$0xff]
    %v701 = vld [vmem:[#allocation3 + $0x1f0] sm:$0xff]
    %v702 = vld [vmem:[#allocation3 + $0x1f8] sm:$0xff]
    %s703 = scalar_lea.vmem [#allocation12], 3
    %v704 = vld [vmem:[%s703] ss:$8 sm:$0xf]
    %v706 = vperm.slane %v704, 0
    %v707 = vperm.slane %v704, 1
    %v708 = vperm.slane %v704, 2
    %v709 = vperm.slane %v704, 3
    %v778 = vunpack.c.l.b16 %v639
    %v779 = vunpack.c.h.b16 %v639
    %v780 = vunpack.c.l.b16 %v640
    %v781 = vunpack.c.h.b16 %v640
    %v782 = vunpack.c.l.b16 %v641
    %v783 = vunpack.c.h.b16 %v641
    %v784 = vunpack.c.l.b16 %v642
    %v785 = vunpack.c.h.b16 %v642
    %v786 = vunpack.c.l.b16 %v643
    %v787 = vunpack.c.h.b16 %v643
    %v788 = vunpack.c.l.b16 %v644
    %v789 = vunpack.c.h.b16 %v644
    %v790 = vunpack.c.l.b16 %v645
    %v791 = vunpack.c.h.b16 %v645
    %v792 = vunpack.c.l.b16 %v646
    %v793 = vunpack.c.h.b16 %v646
    %v794 = vunpack.c.l.b16 %v647
    %v795 = vunpack.c.h.b16 %v647
    %v796 = vunpack.c.l.b16 %v648
    %v797 = vunpack.c.h.b16 %v648
    %v798 = vunpack.c.l.b16 %v649
    %v799 = vunpack.c.h.b16 %v649
    %v800 = vunpack.c.l.b16 %v650
    %v801 = vunpack.c.h.b16 %v650
    %v802 = vunpack.c.l.b16 %v651
    %v803 = vunpack.c.h.b16 %v651
    %v804 = vunpack.c.l.b16 %v652
    %v805 = vunpack.c.h.b16 %v652
    %v806 = vunpack.c.l.b16 %v653
    %v807 = vunpack.c.h.b16 %v653
    %v808 = vunpack.c.l.b16 %v654
    %v809 = vunpack.c.h.b16 %v654
    %v810 = vunpack.c.l.b16 %v655
    %v811 = vunpack.c.h.b16 %v655
    %v812 = vunpack.c.l.b16 %v656
    %v813 = vunpack.c.h.b16 %v656
    %v814 = vunpack.c.l.b16 %v657
    %v815 = vunpack.c.h.b16 %v657
    %v816 = vunpack.c.l.b16 %v658
    %v817 = vunpack.c.h.b16 %v658
    %v818 = vunpack.c.l.b16 %v659
    %v819 = vunpack.c.h.b16 %v659
    %v820 = vunpack.c.l.b16 %v660
    %v821 = vunpack.c.h.b16 %v660
    %v822 = vunpack.c.l.b16 %v661
    %v823 = vunpack.c.h.b16 %v661
    %v824 = vunpack.c.l.b16 %v662
    %v825 = vunpack.c.h.b16 %v662
    %v826 = vunpack.c.l.b16 %v663
    %v827 = vunpack.c.h.b16 %v663
    %v828 = vunpack.c.l.b16 %v664
    %v829 = vunpack.c.h.b16 %v664
    %v830 = vunpack.c.l.b16 %v665
    %v831 = vunpack.c.h.b16 %v665
    %v832 = vunpack.c.l.b16 %v666
    %v833 = vunpack.c.h.b16 %v666
    %v834 = vunpack.c.l.b16 %v667
    %v835 = vunpack.c.h.b16 %v667
    %v836 = vunpack.c.l.b16 %v668
    %v837 = vunpack.c.h.b16 %v668
    %v838 = vunpack.c.l.b16 %v669
    %v839 = vunpack.c.h.b16 %v669
    %v840 = vunpack.c.l.b16 %v670
    %v841 = vunpack.c.h.b16 %v670
    %v842 = vunpack.c.l.b16 %v671
    %v843 = vunpack.c.h.b16 %v671
    %v844 = vunpack.c.l.b16 %v672
    %v845 = vunpack.c.h.b16 %v672
    %v846 = vunpack.c.l.b16 %v673
    %v847 = vunpack.c.h.b16 %v673
    %v848 = vunpack.c.l.b16 %v674
    %v849 = vunpack.c.h.b16 %v674
    %v850 = vunpack.c.l.b16 %v675
    %v851 = vunpack.c.h.b16 %v675
    %v852 = vunpack.c.l.b16 %v676
    %v853 = vunpack.c.h.b16 %v676
    %v854 = vunpack.c.l.b16 %v677
    %v855 = vunpack.c.h.b16 %v677
    %v856 = vunpack.c.l.b16 %v678
    %v857 = vunpack.c.h.b16 %v678
    %v858 = vunpack.c.l.b16 %v679
    %v859 = vunpack.c.h.b16 %v679
    %v860 = vunpack.c.l.b16 %v680
    %v861 = vunpack.c.h.b16 %v680
    %v862 = vunpack.c.l.b16 %v681
    %v863 = vunpack.c.h.b16 %v681
    %v864 = vunpack.c.l.b16 %v682
    %v865 = vunpack.c.h.b16 %v682
    %v866 = vunpack.c.l.b16 %v683
    %v867 = vunpack.c.h.b16 %v683
    %v868 = vunpack.c.l.b16 %v684
    %v869 = vunpack.c.h.b16 %v684
    %v870 = vunpack.c.l.b16 %v685
    %v871 = vunpack.c.h.b16 %v685
    %v872 = vunpack.c.l.b16 %v686
    %v873 = vunpack.c.h.b16 %v686
    %v874 = vunpack.c.l.b16 %v687
    %v875 = vunpack.c.h.b16 %v687
    %v876 = vunpack.c.l.b16 %v688
    %v877 = vunpack.c.h.b16 %v688
    %v878 = vunpack.c.l.b16 %v689
    %v879 = vunpack.c.h.b16 %v689
    %v880 = vunpack.c.l.b16 %v690
    %v881 = vunpack.c.h.b16 %v690
    %v882 = vunpack.c.l.b16 %v691
    %v883 = vunpack.c.h.b16 %v691
    %v884 = vunpack.c.l.b16 %v692
    %v885 = vunpack.c.h.b16 %v692
    %v886 = vunpack.c.l.b16 %v693
    %v887 = vunpack.c.h.b16 %v693
    %v888 = vunpack.c.l.b16 %v694
    %v889 = vunpack.c.h.b16 %v694
    %v890 = vunpack.c.l.b16 %v695
    %v891 = vunpack.c.h.b16 %v695
    %v892 = vunpack.c.l.b16 %v696
    %v893 = vunpack.c.h.b16 %v696
    %v894 = vunpack.c.l.b16 %v697
    %v895 = vunpack.c.h.b16 %v697
    %v896 = vunpack.c.l.b16 %v698
    %v897 = vunpack.c.h.b16 %v698
    %v898 = vunpack.c.l.b16 %v699
    %v899 = vunpack.c.h.b16 %v699
    %v900 = vunpack.c.l.b16 %v700
    %v901 = vunpack.c.h.b16 %v700
    %v902 = vunpack.c.l.b16 %v701
    %v903 = vunpack.c.h.b16 %v701
    %v904 = vunpack.c.l.b16 %v702
    %v905 = vunpack.c.h.b16 %v702
    %v906 = vpack.c.b16 %v782, %v778
    %v907 = vpack.c.b16 %v783, %v779
    %v908 = vpack.c.b16 %v784, %v780
    %v909 = vpack.c.b16 %v785, %v781
    %v910 = vpack.c.b16 %v790, %v786
    %v911 = vpack.c.b16 %v791, %v787
    %v912 = vpack.c.b16 %v792, %v788
    %v913 = vpack.c.b16 %v793, %v789
    %v914 = vpack.c.b16 %v798, %v794
    %v915 = vpack.c.b16 %v799, %v795
    %v916 = vpack.c.b16 %v800, %v796
    %v917 = vpack.c.b16 %v801, %v797
    %v918 = vpack.c.b16 %v806, %v802
    %v919 = vpack.c.b16 %v807, %v803
    %v920 = vpack.c.b16 %v808, %v804
    %v921 = vpack.c.b16 %v809, %v805
    %v922 = vpack.c.b16 %v814, %v810
    %v923 = vpack.c.b16 %v815, %v811
    %v924 = vpack.c.b16 %v816, %v812
    %v925 = vpack.c.b16 %v817, %v813
    %v926 = vpack.c.b16 %v822, %v818
    %v927 = vpack.c.b16 %v823, %v819
    %v928 = vpack.c.b16 %v824, %v820
    %v929 = vpack.c.b16 %v825, %v821
    %v930 = vpack.c.b16 %v830, %v826
    %v931 = vpack.c.b16 %v831, %v827
    %v932 = vpack.c.b16 %v832, %v828
    %v933 = vpack.c.b16 %v833, %v829
    %v934 = vpack.c.b16 %v838, %v834
    %v935 = vpack.c.b16 %v839, %v835
    %v936 = vpack.c.b16 %v840, %v836
    %v937 = vpack.c.b16 %v841, %v837
    %v938 = vpack.c.b16 %v846, %v842
    %v939 = vpack.c.b16 %v847, %v843
    %v940 = vpack.c.b16 %v848, %v844
    %v941 = vpack.c.b16 %v849, %v845
    %v942 = vpack.c.b16 %v854, %v850
    %v943 = vpack.c.b16 %v855, %v851
    %v944 = vpack.c.b16 %v856, %v852
    %v945 = vpack.c.b16 %v857, %v853
    %v946 = vpack.c.b16 %v862, %v858
    %v947 = vpack.c.b16 %v863, %v859
    %v948 = vpack.c.b16 %v864, %v860
    %v949 = vpack.c.b16 %v865, %v861
    %v950 = vpack.c.b16 %v870, %v866
    %v951 = vpack.c.b16 %v871, %v867
    %v952 = vpack.c.b16 %v872, %v868
    %v953 = vpack.c.b16 %v873, %v869
    %v954 = vpack.c.b16 %v878, %v874
    %v955 = vpack.c.b16 %v879, %v875
    %v956 = vpack.c.b16 %v880, %v876
    %v957 = vpack.c.b16 %v881, %v877
    %v958 = vpack.c.b16 %v886, %v882
    %v959 = vpack.c.b16 %v887, %v883
    %v960 = vpack.c.b16 %v888, %v884
    %v961 = vpack.c.b16 %v889, %v885
    %v962 = vpack.c.b16 %v894, %v890
    %v963 = vpack.c.b16 %v895, %v891
    %v964 = vpack.c.b16 %v896, %v892
    %v965 = vpack.c.b16 %v897, %v893
    %v966 = vpack.c.b16 %v902, %v898
    %v967 = vpack.c.b16 %v903, %v899
    %v968 = vpack.c.b16 %v904, %v900
    %v969 = vpack.c.b16 %v905, %v901
    %1034 = vmatpush.bf16.msra.mxu0 %v934
    %1035 = vmatpush.bf16.msra.mxu0 %v930
    %1036 = vmatpush.bf16.msra.mxu0 %v926
    %1037 = vmatpush.bf16.msra.mxu0 %v922
    %1038 = vmatpush.bf16.msra.mxu0 %v918
    %1039 = vmatpush.bf16.msra.mxu0 %v914
    %1040 = vmatpush.bf16.msra.mxu0 %v910
    %1041 = vmatpush.bf16.msra.mxu0 %v906
    %1042 = vmatmul.bf16.gmra.mxu0 %v637
    %v1043 = vpop.f32.mrf.mxu0
    %v1044 = vadd.f32 %v706, %v1043
    %v1045 = vpop.f32.mrf.mxu0
    %1046 = vdwg.mxu0
    %1047 = vmatpush.bf16.msra.mxu0 %v966
    %1048 = vmatpush.bf16.msra.mxu0 %v962
    %1049 = vmatpush.bf16.msra.mxu0 %v958
    %1050 = vmatpush.bf16.msra.mxu0 %v954
    %1051 = vmatpush.bf16.msra.mxu0 %v950
    %1052 = vmatpush.bf16.msra.mxu0 %v946
    %1053 = vmatpush.bf16.msra.mxu0 %v942
    %1054 = vmatpush.bf16.msra.mxu0 %v938
    %1055 = vmatmul.bf16.gmra.mxu0 %v638
    %v1056 = vpop.f32.mrf.mxu0
    %v1057 = vadd.f32 %v1044, %v1056
    %v1058 = vpop.f32.mrf.mxu0
    %1059 = vdwg.mxu0
    %1060 = vmatpush.bf16.msra.mxu0 %v935
    %1061 = vmatpush.bf16.msra.mxu0 %v931
    %1062 = vmatpush.bf16.msra.mxu0 %v927
    %1063 = vmatpush.bf16.msra.mxu0 %v923
    %1064 = vmatpush.bf16.msra.mxu0 %v919
    %1065 = vmatpush.bf16.msra.mxu0 %v915
    %1066 = vmatpush.bf16.msra.mxu0 %v911
    %1067 = vmatpush.bf16.msra.mxu0 %v907
    %1068 = vmatmul.bf16.gmra.mxu0 %v637
    %v1069 = vpop.f32.mrf.mxu0
    %v1070 = vadd.f32 %v707, %v1069
    %v1071 = vpop.f32.mrf.mxu0
    %1072 = vdwg.mxu0
    %1073 = vmatpush.bf16.msra.mxu0 %v967
    %1074 = vmatpush.bf16.msra.mxu0 %v963
    %1075 = vmatpush.bf16.msra.mxu0 %v959
    %1076 = vmatpush.bf16.msra.mxu0 %v955
    %1077 = vmatpush.bf16.msra.mxu0 %v951
    %1078 = vmatpush.bf16.msra.mxu0 %v947
    %1079 = vmatpush.bf16.msra.mxu0 %v943
    %1080 = vmatpush.bf16.msra.mxu0 %v939
    %1081 = vmatmul.bf16.gmra.mxu0 %v638
    %v1082 = vpop.f32.mrf.mxu0
    %v1083 = vadd.f32 %v1070, %v1082
    %v1084 = vpop.f32.mrf.mxu0
    %1085 = vdwg.mxu0
    %1086 = vmatpush.bf16.msra.mxu0 %v936
    %1087 = vmatpush.bf16.msra.mxu0 %v932
    %1088 = vmatpush.bf16.msra.mxu0 %v928
    %1089 = vmatpush.bf16.msra.mxu0 %v924
    %1090 = vmatpush.bf16.msra.mxu0 %v920
    %1091 = vmatpush.bf16.msra.mxu0 %v916
    %1092 = vmatpush.bf16.msra.mxu0 %v912
    %1093 = vmatpush.bf16.msra.mxu0 %v908
    %1094 = vmatmul.bf16.gmra.mxu0 %v637
    %v1095 = vpop.f32.mrf.mxu0
    %v1096 = vadd.f32 %v708, %v1095
    %v1097 = vpop.f32.mrf.mxu0
    %1098 = vdwg.mxu0
    %1099 = vmatpush.bf16.msra.mxu0 %v968
    %1100 = vmatpush.bf16.msra.mxu0 %v964
    %1101 = vmatpush.bf16.msra.mxu0 %v960
    %1102 = vmatpush.bf16.msra.mxu0 %v956
    %1103 = vmatpush.bf16.msra.mxu0 %v952
    %1104 = vmatpush.bf16.msra.mxu0 %v948
    %1105 = vmatpush.bf16.msra.mxu0 %v944
    %1106 = vmatpush.bf16.msra.mxu0 %v940
    %1107 = vmatmul.bf16.gmra.mxu0 %v638
    %v1108 = vpop.f32.mrf.mxu0
    %v1109 = vadd.f32 %v1096, %v1108
    %v1110 = vpop.f32.mrf.mxu0
    %1111 = vdwg.mxu0
    %1112 = vmatpush.bf16.msra.mxu0 %v937
    %1113 = vmatpush.bf16.msra.mxu0 %v933
    %1114 = vmatpush.bf16.msra.mxu0 %v929
    %1115 = vmatpush.bf16.msra.mxu0 %v925
    %1116 = vmatpush.bf16.msra.mxu0 %v921
    %1117 = vmatpush.bf16.msra.mxu0 %v917
    %1118 = vmatpush.bf16.msra.mxu0 %v913
    %1119 = vmatpush.bf16.msra.mxu0 %v909
    %1120 = vmatmul.bf16.gmra.mxu0 %v637
    %v1121 = vpop.f32.mrf.mxu0
    %v1122 = vadd.f32 %v709, %v1121
    %v1123 = vpop.f32.mrf.mxu0
    %1124 = vdwg.mxu0
    %1125 = vmatpush.bf16.msra.mxu0 %v969
    %1126 = vmatpush.bf16.msra.mxu0 %v965
    %1127 = vmatpush.bf16.msra.mxu0 %v961
    %1128 = vmatpush.bf16.msra.mxu0 %v957
    %1129 = vmatpush.bf16.msra.mxu0 %v953
    %1130 = vmatpush.bf16.msra.mxu0 %v949
    %1131 = vmatpush.bf16.msra.mxu0 %v945
    %1132 = vmatpush.bf16.msra.mxu0 %v941
    %1133 = vmatmul.bf16.gmra.mxu0 %v638
    %v1134 = vpop.f32.mrf.mxu0
    %v1135 = vadd.f32 %v1122, %v1134
    %v1136 = vpop.f32.mrf.mxu0
    %1137 = vdwg.mxu0
    %vm1138 = vcmp.gt.f32.partialorder %v1057, 0.0
    %vm1139 = vcmp.gt.f32.partialorder %v1083, 0.0
    %vm1140 = vcmp.gt.f32.partialorder %v1109, 0.0
    %vm1141 = vcmp.gt.f32.partialorder %v1135, 0.0
    %v1142 = vmul.f32 %v1057, 0.2
    %v1143 = vmul.f32 %v1083, 0.2
    %v1144 = vmul.f32 %v1109, 0.2
    %v1145 = vmul.f32 %v1135, 0.2
    %v1146 = vsel %vm1138, %v1057, %v1142
    %v1147 = vsel %vm1139, %v1083, %v1143
    %v1148 = vsel %vm1140, %v1109, %v1144
    %v1149 = vsel %vm1141, %v1135, %v1145
    %v1150 = vrot.slane %v1146, 4
    %v1151 = vadd.f32 %v1146, %v1150
    %v1152 = vrot.slane %v1151, 2
    %v1153 = vadd.f32 %v1151, %v1152
    %v1154 = vrot.slane %v1153, 1
    %v1155 = vadd.f32 %v1153, %v1154
    %v1156 = vrot.slane %v1147, 4
    %v1157 = vadd.f32 %v1147, %v1156
    %v1158 = vrot.slane %v1157, 2
    %v1159 = vadd.f32 %v1157, %v1158
    %v1160 = vrot.slane %v1159, 1
    %v1161 = vadd.f32 %v1159, %v1160
    %v1162 = vrot.slane %v1148, 4
    %v1163 = vadd.f32 %v1148, %v1162
    %v1164 = vrot.slane %v1163, 2
    %v1165 = vadd.f32 %v1163, %v1164
    %v1166 = vrot.slane %v1165, 1
    %v1167 = vadd.f32 %v1165, %v1166
    %v1168 = vrot.slane %v1149, 4
    %v1169 = vadd.f32 %v1149, %v1168
    %v1170 = vrot.slane %v1169, 2
    %v1171 = vadd.f32 %v1169, %v1170
    %v1172 = vrot.slane %v1171, 1
    %v1173 = vadd.f32 %v1171, %v1172
    %v1174 = vmul.f32 %v1155, %v570
    %v1175 = vmul.f32 %v1161, %v570
    %v1176 = vmul.f32 %v1167, %v570
    %v1177 = vmul.f32 %v1173, %v570
    %v1178 = vsub.f32 %v1146, %v1174
    %v1179 = vsub.f32 %v1147, %v1175
    %v1180 = vsub.f32 %v1148, %v1176
    %v1181 = vsub.f32 %v1149, %v1177
    %v1182 = vmul.f32 %v1178, %v1178
    %v1183 = vmul.f32 %v1179, %v1179
    %v1184 = vmul.f32 %v1180, %v1180
    %v1185 = vmul.f32 %v1181, %v1181
    %v1186 = vrot.slane %v1182, 4
    %v1187 = vadd.f32 %v1182, %v1186
    %v1188 = vrot.slane %v1187, 2
    %v1189 = vadd.f32 %v1187, %v1188
    %v1190 = vrot.slane %v1189, 1
    %v1191 = vadd.f32 %v1189, %v1190
    %v1192 = vrot.slane %v1183, 4
    %v1193 = vadd.f32 %v1183, %v1192
    %v1194 = vrot.slane %v1193, 2
    %v1195 = vadd.f32 %v1193, %v1194
    %v1196 = vrot.slane %v1195, 1
    %v1197 = vadd.f32 %v1195, %v1196
    %v1198 = vrot.slane %v1184, 4
    %v1199 = vadd.f32 %v1184, %v1198
    %v1200 = vrot.slane %v1199, 2
    %v1201 = vadd.f32 %v1199, %v1200
    %v1202 = vrot.slane %v1201, 1
    %v1203 = vadd.f32 %v1201, %v1202
    %v1204 = vrot.slane %v1185, 4
    %v1205 = vadd.f32 %v1185, %v1204
    %v1206 = vrot.slane %v1205, 2
    %v1207 = vadd.f32 %v1205, %v1206
    %v1208 = vrot.slane %v1207, 1
    %v1209 = vadd.f32 %v1207, %v1208
    %v1210 = vmul.f32 %v1191, %v570
    %v1211 = vmul.f32 %v1197, %v570
    %v1212 = vmul.f32 %v1203, %v570
    %v1213 = vmul.f32 %v1209, %v570
    %v1214 = vadd.f32 %v1210, 1e-05
    %v1215 = vadd.f32 %v1211, 1e-05
    %v1216 = vadd.f32 %v1212, 1e-05
    %v1217 = vadd.f32 %v1213, 1e-05
    %v1218 = vrsqrt.pop %v1214
    %v1219 = vmul.f32 %v1218, %v1214
    %v1220 = vmul.f32 %v1219, %v1218
    %v1221 = vmul.f32 0.5, %v1220
    %v1222 = vsub.f32 1.5, %v1221
    %v1223 = vmul.f32 %v1218, %v1222
    %vm1224 = vweird.f32 %v1214
    %vm1225 = vweird.f32 %v1218
    %vm1226 = vmor %vm1224, %vm1225
    %v1227 = vsel %vm1226, %v1218, %v1223
    %v1228 = vrsqrt.pop %v1215
    %v1229 = vmul.f32 %v1228, %v1215
    %v1230 = vmul.f32 %v1229, %v1228
    %v1231 = vmul.f32 0.5, %v1230
    %v1232 = vsub.f32 1.5, %v1231
    %v1233 = vmul.f32 %v1228, %v1232
    %vm1234 = vweird.f32 %v1215
    %vm1235 = vweird.f32 %v1228
    %vm1236 = vmor %vm1234, %vm1235
    %v1237 = vsel %vm1236, %v1228, %v1233
    %v1238 = vrsqrt.pop %v1216
    %v1239 = vmul.f32 %v1238, %v1216
    %v1240 = vmul.f32 %v1239, %v1238
    %v1241 = vmul.f32 0.5, %v1240
    %v1242 = vsub.f32 1.5, %v1241
    %v1243 = vmul.f32 %v1238, %v1242
    %vm1244 = vweird.f32 %v1216
    %vm1245 = vweird.f32 %v1238
    %vm1246 = vmor %vm1244, %vm1245
    %v1247 = vsel %vm1246, %v1238, %v1243
    %v1248 = vrsqrt.pop %v1217
    %v1249 = vmul.f32 %v1248, %v1217
    %v1250 = vmul.f32 %v1249, %v1248
    %v1251 = vmul.f32 0.5, %v1250
    %v1252 = vsub.f32 1.5, %v1251
    %v1253 = vmul.f32 %v1248, %v1252
    %vm1254 = vweird.f32 %v1217
    %vm1255 = vweird.f32 %v1248
    %vm1256 = vmor %vm1254, %vm1255
    %v1257 = vsel %vm1256, %v1248, %v1253
    %v1258 = vmul.f32 %v1178, %v1227
    %v1259 = vmul.f32 %v1179, %v1237
    %v1260 = vmul.f32 %v1180, %v1247
    %v1261 = vmul.f32 %v1181, %v1257
    %s1262 = scalar_lea.vmem [#allocation12], 4
    %v1263 = vld [vmem:[%s1262] ss:$8 sm:$0xf]
    %v1265 = vperm.slane %v1263, 0
    %v1266 = vperm.slane %v1263, 1
    %v1267 = vperm.slane %v1263, 2
    %v1268 = vperm.slane %v1263, 3
    %v1273 = vmul.f32 %v1258, %v1265
    %v1274 = vmul.f32 %v1259, %v1266
    %v1275 = vmul.f32 %v1260, %v1267
    %v1276 = vmul.f32 %v1261, %v1268
    %s1277 = scalar_lea.vmem [#allocation12], 5
    %v1278 = vld [vmem:[%s1277] ss:$8 sm:$0xf]
    %v1280 = vperm.slane %v1278, 0
    %v1281 = vperm.slane %v1278, 1
    %v1282 = vperm.slane %v1278, 2
    %v1283 = vperm.slane %v1278, 3
    %v1288 = vadd.f32 %v1273, %v1280
    %v1289 = vadd.f32 %v1274, %v1281
    %v1290 = vadd.f32 %v1275, %v1282
    %v1291 = vadd.f32 %v1276, %v1283
    %s1292 = smul.u32 4, 64
    %s1293 = smul.u32 %s1292, 8
    %s1294 = sshll.u32 %s1293, 4
    %1295 = dma.done %s208, %s1294
    %v1296 = vpack.c.bf16 %v1288, %v1288
    %v1297 = vpack.c.bf16 %v1289, %v1289
    %v1298 = vpack.c.bf16 %v1290, %v1290
    %v1299 = vpack.c.bf16 %v1291, %v1291
    %v1300 = vld [vmem:[#allocation4] sm:$0xff]
    %v1301 = vld [vmem:[#allocation4 + $0x8] sm:$0xff]
    %v1302 = vld [vmem:[#allocation4 + $0x10] sm:$0xff]
    %v1303 = vld [vmem:[#allocation4 + $0x18] sm:$0xff]
    %v1304 = vld [vmem:[#allocation4 + $0x20] sm:$0xff]
    %v1305 = vld [vmem:[#allocation4 + $0x28] sm:$0xff]
    %v1306 = vld [vmem:[#allocation4 + $0x30] sm:$0xff]
    %v1307 = vld [vmem:[#allocation4 + $0x38] sm:$0xff]
    %v1308 = vld [vmem:[#allocation4 + $0x40] sm:$0xff]
    %v1309 = vld [vmem:[#allocation4 + $0x48] sm:$0xff]
    %v1310 = vld [vmem:[#allocation4 + $0x50] sm:$0xff]
    %v1311 = vld [vmem:[#allocation4 + $0x58] sm:$0xff]
    %v1312 = vld [vmem:[#allocation4 + $0x60] sm:$0xff]
    %v1313 = vld [vmem:[#allocation4 + $0x68] sm:$0xff]
    %v1314 = vld [vmem:[#allocation4 + $0x70] sm:$0xff]
    %v1315 = vld [vmem:[#allocation4 + $0x78] sm:$0xff]
    %v1316 = vld [vmem:[#allocation4 + $0x80] sm:$0xff]
    %v1317 = vld [vmem:[#allocation4 + $0x88] sm:$0xff]
    %v1318 = vld [vmem:[#allocation4 + $0x90] sm:$0xff]
    %v1319 = vld [vmem:[#allocation4 + $0x98] sm:$0xff]
    %v1320 = vld [vmem:[#allocation4 + $0xa0] sm:$0xff]
    %v1321 = vld [vmem:[#allocation4 + $0xa8] sm:$0xff]
    %v1322 = vld [vmem:[#allocation4 + $0xb0] sm:$0xff]
    %v1323 = vld [vmem:[#allocation4 + $0xb8] sm:$0xff]
    %v1324 = vld [vmem:[#allocation4 + $0xc0] sm:$0xff]
    %v1325 = vld [vmem:[#allocation4 + $0xc8] sm:$0xff]
    %v1326 = vld [vmem:[#allocation4 + $0xd0] sm:$0xff]
    %v1327 = vld [vmem:[#allocation4 + $0xd8] sm:$0xff]
    %v1328 = vld [vmem:[#allocation4 + $0xe0] sm:$0xff]
    %v1329 = vld [vmem:[#allocation4 + $0xe8] sm:$0xff]
    %v1330 = vld [vmem:[#allocation4 + $0xf0] sm:$0xff]
    %v1331 = vld [vmem:[#allocation4 + $0xf8] sm:$0xff]
    %v1332 = vld [vmem:[#allocation4 + $0x100] sm:$0xff]
    %v1333 = vld [vmem:[#allocation4 + $0x108] sm:$0xff]
    %v1334 = vld [vmem:[#allocation4 + $0x110] sm:$0xff]
    %v1335 = vld [vmem:[#allocation4 + $0x118] sm:$0xff]
    %v1336 = vld [vmem:[#allocation4 + $0x120] sm:$0xff]
    %v1337 = vld [vmem:[#allocation4 + $0x128] sm:$0xff]
    %v1338 = vld [vmem:[#allocation4 + $0x130] sm:$0xff]
    %v1339 = vld [vmem:[#allocation4 + $0x138] sm:$0xff]
    %v1340 = vld [vmem:[#allocation4 + $0x140] sm:$0xff]
    %v1341 = vld [vmem:[#allocation4 + $0x148] sm:$0xff]
    %v1342 = vld [vmem:[#allocation4 + $0x150] sm:$0xff]
    %v1343 = vld [vmem:[#allocation4 + $0x158] sm:$0xff]
    %v1344 = vld [vmem:[#allocation4 + $0x160] sm:$0xff]
    %v1345 = vld [vmem:[#allocation4 + $0x168] sm:$0xff]
    %v1346 = vld [vmem:[#allocation4 + $0x170] sm:$0xff]
    %v1347 = vld [vmem:[#allocation4 + $0x178] sm:$0xff]
    %v1348 = vld [vmem:[#allocation4 + $0x180] sm:$0xff]
    %v1349 = vld [vmem:[#allocation4 + $0x188] sm:$0xff]
    %v1350 = vld [vmem:[#allocation4 + $0x190] sm:$0xff]
    %v1351 = vld [vmem:[#allocation4 + $0x198] sm:$0xff]
    %v1352 = vld [vmem:[#allocation4 + $0x1a0] sm:$0xff]
    %v1353 = vld [vmem:[#allocation4 + $0x1a8] sm:$0xff]
    %v1354 = vld [vmem:[#allocation4 + $0x1b0] sm:$0xff]
    %v1355 = vld [vmem:[#allocation4 + $0x1b8] sm:$0xff]
    %v1356 = vld [vmem:[#allocation4 + $0x1c0] sm:$0xff]
    %v1357 = vld [vmem:[#allocation4 + $0x1c8] sm:$0xff]
    %v1358 = vld [vmem:[#allocation4 + $0x1d0] sm:$0xff]
    %v1359 = vld [vmem:[#allocation4 + $0x1d8] sm:$0xff]
    %v1360 = vld [vmem:[#allocation4 + $0x1e0] sm:$0xff]
    %v1361 = vld [vmem:[#allocation4 + $0x1e8] sm:$0xff]
    %v1362 = vld [vmem:[#allocation4 + $0x1f0] sm:$0xff]
    %v1363 = vld [vmem:[#allocation4 + $0x1f8] sm:$0xff]
    %v1364 = vld [vmem:[#allocation4 + $0x200] sm:$0xff]
    %v1365 = vld [vmem:[#allocation4 + $0x208] sm:$0xff]
    %v1366 = vld [vmem:[#allocation4 + $0x210] sm:$0xff]
    %v1367 = vld [vmem:[#allocation4 + $0x218] sm:$0xff]
    %v1368 = vld [vmem:[#allocation4 + $0x220] sm:$0xff]
    %v1369 = vld [vmem:[#allocation4 + $0x228] sm:$0xff]
    %v1370 = vld [vmem:[#allocation4 + $0x230] sm:$0xff]
    %v1371 = vld [vmem:[#allocation4 + $0x238] sm:$0xff]
    %v1372 = vld [vmem:[#allocation4 + $0x240] sm:$0xff]
    %v1373 = vld [vmem:[#allocation4 + $0x248] sm:$0xff]
    %v1374 = vld [vmem:[#allocation4 + $0x250] sm:$0xff]
    %v1375 = vld [vmem:[#allocation4 + $0x258] sm:$0xff]
    %v1376 = vld [vmem:[#allocation4 + $0x260] sm:$0xff]
    %v1377 = vld [vmem:[#allocation4 + $0x268] sm:$0xff]
    %v1378 = vld [vmem:[#allocation4 + $0x270] sm:$0xff]
    %v1379 = vld [vmem:[#allocation4 + $0x278] sm:$0xff]
    %v1380 = vld [vmem:[#allocation4 + $0x280] sm:$0xff]
    %v1381 = vld [vmem:[#allocation4 + $0x288] sm:$0xff]
    %v1382 = vld [vmem:[#allocation4 + $0x290] sm:$0xff]
    %v1383 = vld [vmem:[#allocation4 + $0x298] sm:$0xff]
    %v1384 = vld [vmem:[#allocation4 + $0x2a0] sm:$0xff]
    %v1385 = vld [vmem:[#allocation4 + $0x2a8] sm:$0xff]
    %v1386 = vld [vmem:[#allocation4 + $0x2b0] sm:$0xff]
    %v1387 = vld [vmem:[#allocation4 + $0x2b8] sm:$0xff]
    %v1388 = vld [vmem:[#allocation4 + $0x2c0] sm:$0xff]
    %v1389 = vld [vmem:[#allocation4 + $0x2c8] sm:$0xff]
    %v1390 = vld [vmem:[#allocation4 + $0x2d0] sm:$0xff]
    %v1391 = vld [vmem:[#allocation4 + $0x2d8] sm:$0xff]
    %v1392 = vld [vmem:[#allocation4 + $0x2e0] sm:$0xff]
    %v1393 = vld [vmem:[#allocation4 + $0x2e8] sm:$0xff]
    %v1394 = vld [vmem:[#allocation4 + $0x2f0] sm:$0xff]
    %v1395 = vld [vmem:[#allocation4 + $0x2f8] sm:$0xff]
    %v1396 = vld [vmem:[#allocation4 + $0x300] sm:$0xff]
    %v1397 = vld [vmem:[#allocation4 + $0x308] sm:$0xff]
    %v1398 = vld [vmem:[#allocation4 + $0x310] sm:$0xff]
    %v1399 = vld [vmem:[#allocation4 + $0x318] sm:$0xff]
    %v1400 = vld [vmem:[#allocation4 + $0x320] sm:$0xff]
    %v1401 = vld [vmem:[#allocation4 + $0x328] sm:$0xff]
    %v1402 = vld [vmem:[#allocation4 + $0x330] sm:$0xff]
    %v1403 = vld [vmem:[#allocation4 + $0x338] sm:$0xff]
    %v1404 = vld [vmem:[#allocation4 + $0x340] sm:$0xff]
    %v1405 = vld [vmem:[#allocation4 + $0x348] sm:$0xff]
    %v1406 = vld [vmem:[#allocation4 + $0x350] sm:$0xff]
    %v1407 = vld [vmem:[#allocation4 + $0x358] sm:$0xff]
    %v1408 = vld [vmem:[#allocation4 + $0x360] sm:$0xff]
    %v1409 = vld [vmem:[#allocation4 + $0x368] sm:$0xff]
    %v1410 = vld [vmem:[#allocation4 + $0x370] sm:$0xff]
    %v1411 = vld [vmem:[#allocation4 + $0x378] sm:$0xff]
    %v1412 = vld [vmem:[#allocation4 + $0x380] sm:$0xff]
    %v1413 = vld [vmem:[#allocation4 + $0x388] sm:$0xff]
    %v1414 = vld [vmem:[#allocation4 + $0x390] sm:$0xff]
    %v1415 = vld [vmem:[#allocation4 + $0x398] sm:$0xff]
    %v1416 = vld [vmem:[#allocation4 + $0x3a0] sm:$0xff]
    %v1417 = vld [vmem:[#allocation4 + $0x3a8] sm:$0xff]
    %v1418 = vld [vmem:[#allocation4 + $0x3b0] sm:$0xff]
    %v1419 = vld [vmem:[#allocation4 + $0x3b8] sm:$0xff]
    %v1420 = vld [vmem:[#allocation4 + $0x3c0] sm:$0xff]
    %v1421 = vld [vmem:[#allocation4 + $0x3c8] sm:$0xff]
    %v1422 = vld [vmem:[#allocation4 + $0x3d0] sm:$0xff]
    %v1423 = vld [vmem:[#allocation4 + $0x3d8] sm:$0xff]
    %v1424 = vld [vmem:[#allocation4 + $0x3e0] sm:$0xff]
    %v1425 = vld [vmem:[#allocation4 + $0x3e8] sm:$0xff]
    %v1426 = vld [vmem:[#allocation4 + $0x3f0] sm:$0xff]
    %v1427 = vld [vmem:[#allocation4 + $0x3f8] sm:$0xff]
    %v1428 = vld [vmem:[#allocation4 + $0x400] sm:$0xff]
    %v1429 = vld [vmem:[#allocation4 + $0x408] sm:$0xff]
    %v1430 = vld [vmem:[#allocation4 + $0x410] sm:$0xff]
    %v1431 = vld [vmem:[#allocation4 + $0x418] sm:$0xff]
    %v1432 = vld [vmem:[#allocation4 + $0x420] sm:$0xff]
    %v1433 = vld [vmem:[#allocation4 + $0x428] sm:$0xff]
    %v1434 = vld [vmem:[#allocation4 + $0x430] sm:$0xff]
    %v1435 = vld [vmem:[#allocation4 + $0x438] sm:$0xff]
    %v1436 = vld [vmem:[#allocation4 + $0x440] sm:$0xff]
    %v1437 = vld [vmem:[#allocation4 + $0x448] sm:$0xff]
    %v1438 = vld [vmem:[#allocation4 + $0x450] sm:$0xff]
    %v1439 = vld [vmem:[#allocation4 + $0x458] sm:$0xff]
    %v1440 = vld [vmem:[#allocation4 + $0x460] sm:$0xff]
    %v1441 = vld [vmem:[#allocation4 + $0x468] sm:$0xff]
    %v1442 = vld [vmem:[#allocation4 + $0x470] sm:$0xff]
    %v1443 = vld [vmem:[#allocation4 + $0x478] sm:$0xff]
    %v1444 = vld [vmem:[#allocation4 + $0x480] sm:$0xff]
    %v1445 = vld [vmem:[#allocation4 + $0x488] sm:$0xff]
    %v1446 = vld [vmem:[#allocation4 + $0x490] sm:$0xff]
    %v1447 = vld [vmem:[#allocation4 + $0x498] sm:$0xff]
    %v1448 = vld [vmem:[#allocation4 + $0x4a0] sm:$0xff]
    %v1449 = vld [vmem:[#allocation4 + $0x4a8] sm:$0xff]
    %v1450 = vld [vmem:[#allocation4 + $0x4b0] sm:$0xff]
    %v1451 = vld [vmem:[#allocation4 + $0x4b8] sm:$0xff]
    %v1452 = vld [vmem:[#allocation4 + $0x4c0] sm:$0xff]
    %v1453 = vld [vmem:[#allocation4 + $0x4c8] sm:$0xff]
    %v1454 = vld [vmem:[#allocation4 + $0x4d0] sm:$0xff]
    %v1455 = vld [vmem:[#allocation4 + $0x4d8] sm:$0xff]
    %v1456 = vld [vmem:[#allocation4 + $0x4e0] sm:$0xff]
    %v1457 = vld [vmem:[#allocation4 + $0x4e8] sm:$0xff]
    %v1458 = vld [vmem:[#allocation4 + $0x4f0] sm:$0xff]
    %v1459 = vld [vmem:[#allocation4 + $0x4f8] sm:$0xff]
    %v1460 = vld [vmem:[#allocation4 + $0x500] sm:$0xff]
    %v1461 = vld [vmem:[#allocation4 + $0x508] sm:$0xff]
    %v1462 = vld [vmem:[#allocation4 + $0x510] sm:$0xff]
    %v1463 = vld [vmem:[#allocation4 + $0x518] sm:$0xff]
    %v1464 = vld [vmem:[#allocation4 + $0x520] sm:$0xff]
    %v1465 = vld [vmem:[#allocation4 + $0x528] sm:$0xff]
    %v1466 = vld [vmem:[#allocation4 + $0x530] sm:$0xff]
    %v1467 = vld [vmem:[#allocation4 + $0x538] sm:$0xff]
    %v1468 = vld [vmem:[#allocation4 + $0x540] sm:$0xff]
    %v1469 = vld [vmem:[#allocation4 + $0x548] sm:$0xff]
    %v1470 = vld [vmem:[#allocation4 + $0x550] sm:$0xff]
    %v1471 = vld [vmem:[#allocation4 + $0x558] sm:$0xff]
    %v1472 = vld [vmem:[#allocation4 + $0x560] sm:$0xff]
    %v1473 = vld [vmem:[#allocation4 + $0x568] sm:$0xff]
    %v1474 = vld [vmem:[#allocation4 + $0x570] sm:$0xff]
    %v1475 = vld [vmem:[#allocation4 + $0x578] sm:$0xff]
    %v1476 = vld [vmem:[#allocation4 + $0x580] sm:$0xff]
    %v1477 = vld [vmem:[#allocation4 + $0x588] sm:$0xff]
    %v1478 = vld [vmem:[#allocation4 + $0x590] sm:$0xff]
    %v1479 = vld [vmem:[#allocation4 + $0x598] sm:$0xff]
    %v1480 = vld [vmem:[#allocation4 + $0x5a0] sm:$0xff]
    %v1481 = vld [vmem:[#allocation4 + $0x5a8] sm:$0xff]
    %v1482 = vld [vmem:[#allocation4 + $0x5b0] sm:$0xff]
    %v1483 = vld [vmem:[#allocation4 + $0x5b8] sm:$0xff]
    %v1484 = vld [vmem:[#allocation4 + $0x5c0] sm:$0xff]
    %v1485 = vld [vmem:[#allocation4 + $0x5c8] sm:$0xff]
    %v1486 = vld [vmem:[#allocation4 + $0x5d0] sm:$0xff]
    %v1487 = vld [vmem:[#allocation4 + $0x5d8] sm:$0xff]
    %v1488 = vld [vmem:[#allocation4 + $0x5e0] sm:$0xff]
    %v1489 = vld [vmem:[#allocation4 + $0x5e8] sm:$0xff]
    %v1490 = vld [vmem:[#allocation4 + $0x5f0] sm:$0xff]
    %v1491 = vld [vmem:[#allocation4 + $0x5f8] sm:$0xff]
    %v1492 = vld [vmem:[#allocation4 + $0x600] sm:$0xff]
    %v1493 = vld [vmem:[#allocation4 + $0x608] sm:$0xff]
    %v1494 = vld [vmem:[#allocation4 + $0x610] sm:$0xff]
    %v1495 = vld [vmem:[#allocation4 + $0x618] sm:$0xff]
    %v1496 = vld [vmem:[#allocation4 + $0x620] sm:$0xff]
    %v1497 = vld [vmem:[#allocation4 + $0x628] sm:$0xff]
    %v1498 = vld [vmem:[#allocation4 + $0x630] sm:$0xff]
    %v1499 = vld [vmem:[#allocation4 + $0x638] sm:$0xff]
    %v1500 = vld [vmem:[#allocation4 + $0x640] sm:$0xff]
    %v1501 = vld [vmem:[#allocation4 + $0x648] sm:$0xff]
    %v1502 = vld [vmem:[#allocation4 + $0x650] sm:$0xff]
    %v1503 = vld [vmem:[#allocation4 + $0x658] sm:$0xff]
    %v1504 = vld [vmem:[#allocation4 + $0x660] sm:$0xff]
    %v1505 = vld [vmem:[#allocation4 + $0x668] sm:$0xff]
    %v1506 = vld [vmem:[#allocation4 + $0x670] sm:$0xff]
    %v1507 = vld [vmem:[#allocation4 + $0x678] sm:$0xff]
    %v1508 = vld [vmem:[#allocation4 + $0x680] sm:$0xff]
    %v1509 = vld [vmem:[#allocation4 + $0x688] sm:$0xff]
    %v1510 = vld [vmem:[#allocation4 + $0x690] sm:$0xff]
    %v1511 = vld [vmem:[#allocation4 + $0x698] sm:$0xff]
    %v1512 = vld [vmem:[#allocation4 + $0x6a0] sm:$0xff]
    %v1513 = vld [vmem:[#allocation4 + $0x6a8] sm:$0xff]
    %v1514 = vld [vmem:[#allocation4 + $0x6b0] sm:$0xff]
    %v1515 = vld [vmem:[#allocation4 + $0x6b8] sm:$0xff]
    %v1516 = vld [vmem:[#allocation4 + $0x6c0] sm:$0xff]
    %v1517 = vld [vmem:[#allocation4 + $0x6c8] sm:$0xff]
    %v1518 = vld [vmem:[#allocation4 + $0x6d0] sm:$0xff]
    %v1519 = vld [vmem:[#allocation4 + $0x6d8] sm:$0xff]
    %v1520 = vld [vmem:[#allocation4 + $0x6e0] sm:$0xff]
    %v1521 = vld [vmem:[#allocation4 + $0x6e8] sm:$0xff]
    %v1522 = vld [vmem:[#allocation4 + $0x6f0] sm:$0xff]
    %v1523 = vld [vmem:[#allocation4 + $0x6f8] sm:$0xff]
    %v1524 = vld [vmem:[#allocation4 + $0x700] sm:$0xff]
    %v1525 = vld [vmem:[#allocation4 + $0x708] sm:$0xff]
    %v1526 = vld [vmem:[#allocation4 + $0x710] sm:$0xff]
    %v1527 = vld [vmem:[#allocation4 + $0x718] sm:$0xff]
    %v1528 = vld [vmem:[#allocation4 + $0x720] sm:$0xff]
    %v1529 = vld [vmem:[#allocation4 + $0x728] sm:$0xff]
    %v1530 = vld [vmem:[#allocation4 + $0x730] sm:$0xff]
    %v1531 = vld [vmem:[#allocation4 + $0x738] sm:$0xff]
    %v1532 = vld [vmem:[#allocation4 + $0x740] sm:$0xff]
    %v1533 = vld [vmem:[#allocation4 + $0x748] sm:$0xff]
    %v1534 = vld [vmem:[#allocation4 + $0x750] sm:$0xff]
    %v1535 = vld [vmem:[#allocation4 + $0x758] sm:$0xff]
    %v1536 = vld [vmem:[#allocation4 + $0x760] sm:$0xff]
    %v1537 = vld [vmem:[#allocation4 + $0x768] sm:$0xff]
    %v1538 = vld [vmem:[#allocation4 + $0x770] sm:$0xff]
    %v1539 = vld [vmem:[#allocation4 + $0x778] sm:$0xff]
    %v1540 = vld [vmem:[#allocation4 + $0x780] sm:$0xff]
    %v1541 = vld [vmem:[#allocation4 + $0x788] sm:$0xff]
    %v1542 = vld [vmem:[#allocation4 + $0x790] sm:$0xff]
    %v1543 = vld [vmem:[#allocation4 + $0x798] sm:$0xff]
    %v1544 = vld [vmem:[#allocation4 + $0x7a0] sm:$0xff]
    %v1545 = vld [vmem:[#allocation4 + $0x7a8] sm:$0xff]
    %v1546 = vld [vmem:[#allocation4 + $0x7b0] sm:$0xff]
    %v1547 = vld [vmem:[#allocation4 + $0x7b8] sm:$0xff]
    %v1548 = vld [vmem:[#allocation4 + $0x7c0] sm:$0xff]
    %v1549 = vld [vmem:[#allocation4 + $0x7c8] sm:$0xff]
    %v1550 = vld [vmem:[#allocation4 + $0x7d0] sm:$0xff]
    %v1551 = vld [vmem:[#allocation4 + $0x7d8] sm:$0xff]
    %v1552 = vld [vmem:[#allocation4 + $0x7e0] sm:$0xff]
    %v1553 = vld [vmem:[#allocation4 + $0x7e8] sm:$0xff]
    %v1554 = vld [vmem:[#allocation4 + $0x7f0] sm:$0xff]
    %v1555 = vld [vmem:[#allocation4 + $0x7f8] sm:$0xff]
    %s1556 = scalar_lea.vmem [#allocation12], 6
    %v1557 = vld [vmem:[%s1556] ss:$8 sm:$0xf]
    %v1558 = vld [vmem:[%s1556] ss:$8 sm:$0xf0]
    %v1559 = vor.u32 %v1557, %v1558
    %v1561 = vperm.slane %v1559, 0
    %v1562 = vperm.slane %v1559, 1
    %v1563 = vperm.slane %v1559, 2
    %v1564 = vperm.slane %v1559, 3
    %v1565 = vperm.slane %v1559, 4
    %v1566 = vperm.slane %v1559, 5
    %v1567 = vperm.slane %v1559, 6
    %v1568 = vperm.slane %v1559, 7
    %v1833 = vunpack.c.l.b16 %v1300
    %v1834 = vunpack.c.h.b16 %v1300
    %v1835 = vunpack.c.l.b16 %v1301
    %v1836 = vunpack.c.h.b16 %v1301
    %v1837 = vunpack.c.l.b16 %v1302
    %v1838 = vunpack.c.h.b16 %v1302
    %v1839 = vunpack.c.l.b16 %v1303
    %v1840 = vunpack.c.h.b16 %v1303
    %v1841 = vunpack.c.l.b16 %v1304
    %v1842 = vunpack.c.h.b16 %v1304
    %v1843 = vunpack.c.l.b16 %v1305
    %v1844 = vunpack.c.h.b16 %v1305
    %v1845 = vunpack.c.l.b16 %v1306
    %v1846 = vunpack.c.h.b16 %v1306
    %v1847 = vunpack.c.l.b16 %v1307
    %v1848 = vunpack.c.h.b16 %v1307
    %v1849 = vunpack.c.l.b16 %v1308
    %v1850 = vunpack.c.h.b16 %v1308
    %v1851 = vunpack.c.l.b16 %v1309
    %v1852 = vunpack.c.h.b16 %v1309
    %v1853 = vunpack.c.l.b16 %v1310
    %v1854 = vunpack.c.h.b16 %v1310
    %v1855 = vunpack.c.l.b16 %v1311
    %v1856 = vunpack.c.h.b16 %v1311
    %v1857 = vunpack.c.l.b16 %v1312
    %v1858 = vunpack.c.h.b16 %v1312
    %v1859 = vunpack.c.l.b16 %v1313
    %v1860 = vunpack.c.h.b16 %v1313
    %v1861 = vunpack.c.l.b16 %v1314
    %v1862 = vunpack.c.h.b16 %v1314
    %v1863 = vunpack.c.l.b16 %v1315
    %v1864 = vunpack.c.h.b16 %v1315
    %v1865 = vunpack.c.l.b16 %v1316
    %v1866 = vunpack.c.h.b16 %v1316
    %v1867 = vunpack.c.l.b16 %v1317
    %v1868 = vunpack.c.h.b16 %v1317
    %v1869 = vunpack.c.l.b16 %v1318
    %v1870 = vunpack.c.h.b16 %v1318
    %v1871 = vunpack.c.l.b16 %v1319
    %v1872 = vunpack.c.h.b16 %v1319
    %v1873 = vunpack.c.l.b16 %v1320
    %v1874 = vunpack.c.h.b16 %v1320
    %v1875 = vunpack.c.l.b16 %v1321
    %v1876 = vunpack.c.h.b16 %v1321
    %v1877 = vunpack.c.l.b16 %v1322
    %v1878 = vunpack.c.h.b16 %v1322
    %v1879 = vunpack.c.l.b16 %v1323
    %v1880 = vunpack.c.h.b16 %v1323
    %v1881 = vunpack.c.l.b16 %v1324
    %v1882 = vunpack.c.h.b16 %v1324
    %v1883 = vunpack.c.l.b16 %v1325
    %v1884 = vunpack.c.h.b16 %v1325
    %v1885 = vunpack.c.l.b16 %v1326
    %v1886 = vunpack.c.h.b16 %v1326
    %v1887 = vunpack.c.l.b16 %v1327
    %v1888 = vunpack.c.h.b16 %v1327
    %v1889 = vunpack.c.l.b16 %v1328
    %v1890 = vunpack.c.h.b16 %v1328
    %v1891 = vunpack.c.l.b16 %v1329
    %v1892 = vunpack.c.h.b16 %v1329
    %v1893 = vunpack.c.l.b16 %v1330
    %v1894 = vunpack.c.h.b16 %v1330
    %v1895 = vunpack.c.l.b16 %v1331
    %v1896 = vunpack.c.h.b16 %v1331
    %v1897 = vunpack.c.l.b16 %v1332
    %v1898 = vunpack.c.h.b16 %v1332
    %v1899 = vunpack.c.l.b16 %v1333
    %v1900 = vunpack.c.h.b16 %v1333
    %v1901 = vunpack.c.l.b16 %v1334
    %v1902 = vunpack.c.h.b16 %v1334
    %v1903 = vunpack.c.l.b16 %v1335
    %v1904 = vunpack.c.h.b16 %v1335
    %v1905 = vunpack.c.l.b16 %v1336
    %v1906 = vunpack.c.h.b16 %v1336
    %v1907 = vunpack.c.l.b16 %v1337
    %v1908 = vunpack.c.h.b16 %v1337
    %v1909 = vunpack.c.l.b16 %v1338
    %v1910 = vunpack.c.h.b16 %v1338
    %v1911 = vunpack.c.l.b16 %v1339
    %v1912 = vunpack.c.h.b16 %v1339
    %v1913 = vunpack.c.l.b16 %v1340
    %v1914 = vunpack.c.h.b16 %v1340
    %v1915 = vunpack.c.l.b16 %v1341
    %v1916 = vunpack.c.h.b16 %v1341
    %v1917 = vunpack.c.l.b16 %v1342
    %v1918 = vunpack.c.h.b16 %v1342
    %v1919 = vunpack.c.l.b16 %v1343
    %v1920 = vunpack.c.h.b16 %v1343
    %v1921 = vunpack.c.l.b16 %v1344
    %v1922 = vunpack.c.h.b16 %v1344
    %v1923 = vunpack.c.l.b16 %v1345
    %v1924 = vunpack.c.h.b16 %v1345
    %v1925 = vunpack.c.l.b16 %v1346
    %v1926 = vunpack.c.h.b16 %v1346
    %v1927 = vunpack.c.l.b16 %v1347
    %v1928 = vunpack.c.h.b16 %v1347
    %v1929 = vunpack.c.l.b16 %v1348
    %v1930 = vunpack.c.h.b16 %v1348
    %v1931 = vunpack.c.l.b16 %v1349
    %v1932 = vunpack.c.h.b16 %v1349
    %v1933 = vunpack.c.l.b16 %v1350
    %v1934 = vunpack.c.h.b16 %v1350
    %v1935 = vunpack.c.l.b16 %v1351
    %v1936 = vunpack.c.h.b16 %v1351
    %v1937 = vunpack.c.l.b16 %v1352
    %v1938 = vunpack.c.h.b16 %v1352
    %v1939 = vunpack.c.l.b16 %v1353
    %v1940 = vunpack.c.h.b16 %v1353
    %v1941 = vunpack.c.l.b16 %v1354
    %v1942 = vunpack.c.h.b16 %v1354
    %v1943 = vunpack.c.l.b16 %v1355
    %v1944 = vunpack.c.h.b16 %v1355
    %v1945 = vunpack.c.l.b16 %v1356
    %v1946 = vunpack.c.h.b16 %v1356
    %v1947 = vunpack.c.l.b16 %v1357
    %v1948 = vunpack.c.h.b16 %v1357
    %v1949 = vunpack.c.l.b16 %v1358
    %v1950 = vunpack.c.h.b16 %v1358
    %v1951 = vunpack.c.l.b16 %v1359
    %v1952 = vunpack.c.h.b16 %v1359
    %v1953 = vunpack.c.l.b16 %v1360
    %v1954 = vunpack.c.h.b16 %v1360
    %v1955 = vunpack.c.l.b16 %v1361
    %v1956 = vunpack.c.h.b16 %v1361
    %v1957 = vunpack.c.l.b16 %v1362
    %v1958 = vunpack.c.h.b16 %v1362
    %v1959 = vunpack.c.l.b16 %v1363
    %v1960 = vunpack.c.h.b16 %v1363
    %v1961 = vunpack.c.l.b16 %v1364
    %v1962 = vunpack.c.h.b16 %v1364
    %v1963 = vunpack.c.l.b16 %v1365
    %v1964 = vunpack.c.h.b16 %v1365
    %v1965 = vunpack.c.l.b16 %v1366
    %v1966 = vunpack.c.h.b16 %v1366
    %v1967 = vunpack.c.l.b16 %v1367
    %v1968 = vunpack.c.h.b16 %v1367
    %v1969 = vunpack.c.l.b16 %v1368
    %v1970 = vunpack.c.h.b16 %v1368
    %v1971 = vunpack.c.l.b16 %v1369
    %v1972 = vunpack.c.h.b16 %v1369
    %v1973 = vunpack.c.l.b16 %v1370
    %v1974 = vunpack.c.h.b16 %v1370
    %v1975 = vunpack.c.l.b16 %v1371
    %v1976 = vunpack.c.h.b16 %v1371
    %v1977 = vunpack.c.l.b16 %v1372
    %v1978 = vunpack.c.h.b16 %v1372
    %v1979 = vunpack.c.l.b16 %v1373
    %v1980 = vunpack.c.h.b16 %v1373
    %v1981 = vunpack.c.l.b16 %v1374
    %v1982 = vunpack.c.h.b16 %v1374
    %v1983 = vunpack.c.l.b16 %v1375
    %v1984 = vunpack.c.h.b16 %v1375
    %v1985 = vunpack.c.l.b16 %v1376
    %v1986 = vunpack.c.h.b16 %v1376
    %v1987 = vunpack.c.l.b16 %v1377
    %v1988 = vunpack.c.h.b16 %v1377
    %v1989 = vunpack.c.l.b16 %v1378
    %v1990 = vunpack.c.h.b16 %v1378
    %v1991 = vunpack.c.l.b16 %v1379
    %v1992 = vunpack.c.h.b16 %v1379
    %v1993 = vunpack.c.l.b16 %v1380
    %v1994 = vunpack.c.h.b16 %v1380
    %v1995 = vunpack.c.l.b16 %v1381
    %v1996 = vunpack.c.h.b16 %v1381
    %v1997 = vunpack.c.l.b16 %v1382
    %v1998 = vunpack.c.h.b16 %v1382
    %v1999 = vunpack.c.l.b16 %v1383
    %v2000 = vunpack.c.h.b16 %v1383
    %v2001 = vunpack.c.l.b16 %v1384
    %v2002 = vunpack.c.h.b16 %v1384
    %v2003 = vunpack.c.l.b16 %v1385
    %v2004 = vunpack.c.h.b16 %v1385
    %v2005 = vunpack.c.l.b16 %v1386
    %v2006 = vunpack.c.h.b16 %v1386
    %v2007 = vunpack.c.l.b16 %v1387
    %v2008 = vunpack.c.h.b16 %v1387
    %v2009 = vunpack.c.l.b16 %v1388
    %v2010 = vunpack.c.h.b16 %v1388
    %v2011 = vunpack.c.l.b16 %v1389
    %v2012 = vunpack.c.h.b16 %v1389
    %v2013 = vunpack.c.l.b16 %v1390
    %v2014 = vunpack.c.h.b16 %v1390
    %v2015 = vunpack.c.l.b16 %v1391
    %v2016 = vunpack.c.h.b16 %v1391
    %v2017 = vunpack.c.l.b16 %v1392
    %v2018 = vunpack.c.h.b16 %v1392
    %v2019 = vunpack.c.l.b16 %v1393
    %v2020 = vunpack.c.h.b16 %v1393
    %v2021 = vunpack.c.l.b16 %v1394
    %v2022 = vunpack.c.h.b16 %v1394
    %v2023 = vunpack.c.l.b16 %v1395
    %v2024 = vunpack.c.h.b16 %v1395
    %v2025 = vunpack.c.l.b16 %v1396
    %v2026 = vunpack.c.h.b16 %v1396
    %v2027 = vunpack.c.l.b16 %v1397
    %v2028 = vunpack.c.h.b16 %v1397
    %v2029 = vunpack.c.l.b16 %v1398
    %v2030 = vunpack.c.h.b16 %v1398
    %v2031 = vunpack.c.l.b16 %v1399
    %v2032 = vunpack.c.h.b16 %v1399
    %v2033 = vunpack.c.l.b16 %v1400
    %v2034 = vunpack.c.h.b16 %v1400
    %v2035 = vunpack.c.l.b16 %v1401
    %v2036 = vunpack.c.h.b16 %v1401
    %v2037 = vunpack.c.l.b16 %v1402
    %v2038 = vunpack.c.h.b16 %v1402
    %v2039 = vunpack.c.l.b16 %v1403
    %v2040 = vunpack.c.h.b16 %v1403
    %v2041 = vunpack.c.l.b16 %v1404
    %v2042 = vunpack.c.h.b16 %v1404
    %v2043 = vunpack.c.l.b16 %v1405
    %v2044 = vunpack.c.h.b16 %v1405
    %v2045 = vunpack.c.l.b16 %v1406
    %v2046 = vunpack.c.h.b16 %v1406
    %v2047 = vunpack.c.l.b16 %v1407
    %v2048 = vunpack.c.h.b16 %v1407
    %v2049 = vunpack.c.l.b16 %v1408
    %v2050 = vunpack.c.h.b16 %v1408
    %v2051 = vunpack.c.l.b16 %v1409
    %v2052 = vunpack.c.h.b16 %v1409
    %v2053 = vunpack.c.l.b16 %v1410
    %v2054 = vunpack.c.h.b16 %v1410
    %v2055 = vunpack.c.l.b16 %v1411
    %v2056 = vunpack.c.h.b16 %v1411
    %v2057 = vunpack.c.l.b16 %v1412
    %v2058 = vunpack.c.h.b16 %v1412
    %v2059 = vunpack.c.l.b16 %v1413
    %v2060 = vunpack.c.h.b16 %v1413
    %v2061 = vunpack.c.l.b16 %v1414
    %v2062 = vunpack.c.h.b16 %v1414
    %v2063 = vunpack.c.l.b16 %v1415
    %v2064 = vunpack.c.h.b16 %v1415
    %v2065 = vunpack.c.l.b16 %v1416
    %v2066 = vunpack.c.h.b16 %v1416
    %v2067 = vunpack.c.l.b16 %v1417
    %v2068 = vunpack.c.h.b16 %v1417
    %v2069 = vunpack.c.l.b16 %v1418
    %v2070 = vunpack.c.h.b16 %v1418
    %v2071 = vunpack.c.l.b16 %v1419
    %v2072 = vunpack.c.h.b16 %v1419
    %v2073 = vunpack.c.l.b16 %v1420
    %v2074 = vunpack.c.h.b16 %v1420
    %v2075 = vunpack.c.l.b16 %v1421
    %v2076 = vunpack.c.h.b16 %v1421
    %v2077 = vunpack.c.l.b16 %v1422
    %v2078 = vunpack.c.h.b16 %v1422
    %v2079 = vunpack.c.l.b16 %v1423
    %v2080 = vunpack.c.h.b16 %v1423
    %v2081 = vunpack.c.l.b16 %v1424
    %v2082 = vunpack.c.h.b16 %v1424
    %v2083 = vunpack.c.l.b16 %v1425
    %v2084 = vunpack.c.h.b16 %v1425
    %v2085 = vunpack.c.l.b16 %v1426
    %v2086 = vunpack.c.h.b16 %v1426
    %v2087 = vunpack.c.l.b16 %v1427
    %v2088 = vunpack.c.h.b16 %v1427
    %v2089 = vunpack.c.l.b16 %v1428
    %v2090 = vunpack.c.h.b16 %v1428
    %v2091 = vunpack.c.l.b16 %v1429
    %v2092 = vunpack.c.h.b16 %v1429
    %v2093 = vunpack.c.l.b16 %v1430
    %v2094 = vunpack.c.h.b16 %v1430
    %v2095 = vunpack.c.l.b16 %v1431
    %v2096 = vunpack.c.h.b16 %v1431
    %v2097 = vunpack.c.l.b16 %v1432
    %v2098 = vunpack.c.h.b16 %v1432
    %v2099 = vunpack.c.l.b16 %v1433
    %v2100 = vunpack.c.h.b16 %v1433
    %v2101 = vunpack.c.l.b16 %v1434
    %v2102 = vunpack.c.h.b16 %v1434
    %v2103 = vunpack.c.l.b16 %v1435
    %v2104 = vunpack.c.h.b16 %v1435
    %v2105 = vunpack.c.l.b16 %v1436
    %v2106 = vunpack.c.h.b16 %v1436
    %v2107 = vunpack.c.l.b16 %v1437
    %v2108 = vunpack.c.h.b16 %v1437
    %v2109 = vunpack.c.l.b16 %v1438
    %v2110 = vunpack.c.h.b16 %v1438
    %v2111 = vunpack.c.l.b16 %v1439
    %v2112 = vunpack.c.h.b16 %v1439
    %v2113 = vunpack.c.l.b16 %v1440
    %v2114 = vunpack.c.h.b16 %v1440
    %v2115 = vunpack.c.l.b16 %v1441
    %v2116 = vunpack.c.h.b16 %v1441
    %v2117 = vunpack.c.l.b16 %v1442
    %v2118 = vunpack.c.h.b16 %v1442
    %v2119 = vunpack.c.l.b16 %v1443
    %v2120 = vunpack.c.h.b16 %v1443
    %v2121 = vunpack.c.l.b16 %v1444
    %v2122 = vunpack.c.h.b16 %v1444
    %v2123 = vunpack.c.l.b16 %v1445
    %v2124 = vunpack.c.h.b16 %v1445
    %v2125 = vunpack.c.l.b16 %v1446
    %v2126 = vunpack.c.h.b16 %v1446
    %v2127 = vunpack.c.l.b16 %v1447
    %v2128 = vunpack.c.h.b16 %v1447
    %v2129 = vunpack.c.l.b16 %v1448
    %v2130 = vunpack.c.h.b16 %v1448
    %v2131 = vunpack.c.l.b16 %v1449
    %v2132 = vunpack.c.h.b16 %v1449
    %v2133 = vunpack.c.l.b16 %v1450
    %v2134 = vunpack.c.h.b16 %v1450
    %v2135 = vunpack.c.l.b16 %v1451
    %v2136 = vunpack.c.h.b16 %v1451
    %v2137 = vunpack.c.l.b16 %v1452
    %v2138 = vunpack.c.h.b16 %v1452
    %v2139 = vunpack.c.l.b16 %v1453
    %v2140 = vunpack.c.h.b16 %v1453
    %v2141 = vunpack.c.l.b16 %v1454
    %v2142 = vunpack.c.h.b16 %v1454
    %v2143 = vunpack.c.l.b16 %v1455
    %v2144 = vunpack.c.h.b16 %v1455
    %v2145 = vunpack.c.l.b16 %v1456
    %v2146 = vunpack.c.h.b16 %v1456
    %v2147 = vunpack.c.l.b16 %v1457
    %v2148 = vunpack.c.h.b16 %v1457
    %v2149 = vunpack.c.l.b16 %v1458
    %v2150 = vunpack.c.h.b16 %v1458
    %v2151 = vunpack.c.l.b16 %v1459
    %v2152 = vunpack.c.h.b16 %v1459
    %v2153 = vunpack.c.l.b16 %v1460
    %v2154 = vunpack.c.h.b16 %v1460
    %v2155 = vunpack.c.l.b16 %v1461
    %v2156 = vunpack.c.h.b16 %v1461
    %v2157 = vunpack.c.l.b16 %v1462
    %v2158 = vunpack.c.h.b16 %v1462
    %v2159 = vunpack.c.l.b16 %v1463
    %v2160 = vunpack.c.h.b16 %v1463
    %v2161 = vunpack.c.l.b16 %v1464
    %v2162 = vunpack.c.h.b16 %v1464
    %v2163 = vunpack.c.l.b16 %v1465
    %v2164 = vunpack.c.h.b16 %v1465
    %v2165 = vunpack.c.l.b16 %v1466
    %v2166 = vunpack.c.h.b16 %v1466
    %v2167 = vunpack.c.l.b16 %v1467
    %v2168 = vunpack.c.h.b16 %v1467
    %v2169 = vunpack.c.l.b16 %v1468
    %v2170 = vunpack.c.h.b16 %v1468
    %v2171 = vunpack.c.l.b16 %v1469
    %v2172 = vunpack.c.h.b16 %v1469
    %v2173 = vunpack.c.l.b16 %v1470
    %v2174 = vunpack.c.h.b16 %v1470
    %v2175 = vunpack.c.l.b16 %v1471
    %v2176 = vunpack.c.h.b16 %v1471
    %v2177 = vunpack.c.l.b16 %v1472
    %v2178 = vunpack.c.h.b16 %v1472
    %v2179 = vunpack.c.l.b16 %v1473
    %v2180 = vunpack.c.h.b16 %v1473
    %v2181 = vunpack.c.l.b16 %v1474
    %v2182 = vunpack.c.h.b16 %v1474
    %v2183 = vunpack.c.l.b16 %v1475
    %v2184 = vunpack.c.h.b16 %v1475
    %v2185 = vunpack.c.l.b16 %v1476
    %v2186 = vunpack.c.h.b16 %v1476
    %v2187 = vunpack.c.l.b16 %v1477
    %v2188 = vunpack.c.h.b16 %v1477
    %v2189 = vunpack.c.l.b16 %v1478
    %v2190 = vunpack.c.h.b16 %v1478
    %v2191 = vunpack.c.l.b16 %v1479
    %v2192 = vunpack.c.h.b16 %v1479
    %v2193 = vunpack.c.l.b16 %v1480
    %v2194 = vunpack.c.h.b16 %v1480
    %v2195 = vunpack.c.l.b16 %v1481
    %v2196 = vunpack.c.h.b16 %v1481
    %v2197 = vunpack.c.l.b16 %v1482
    %v2198 = vunpack.c.h.b16 %v1482
    %v2199 = vunpack.c.l.b16 %v1483
    %v2200 = vunpack.c.h.b16 %v1483
    %v2201 = vunpack.c.l.b16 %v1484
    %v2202 = vunpack.c.h.b16 %v1484
    %v2203 = vunpack.c.l.b16 %v1485
    %v2204 = vunpack.c.h.b16 %v1485
    %v2205 = vunpack.c.l.b16 %v1486
    %v2206 = vunpack.c.h.b16 %v1486
    %v2207 = vunpack.c.l.b16 %v1487
    %v2208 = vunpack.c.h.b16 %v1487
    %v2209 = vunpack.c.l.b16 %v1488
    %v2210 = vunpack.c.h.b16 %v1488
    %v2211 = vunpack.c.l.b16 %v1489
    %v2212 = vunpack.c.h.b16 %v1489
    %v2213 = vunpack.c.l.b16 %v1490
    %v2214 = vunpack.c.h.b16 %v1490
    %v2215 = vunpack.c.l.b16 %v1491
    %v2216 = vunpack.c.h.b16 %v1491
    %v2217 = vunpack.c.l.b16 %v1492
    %v2218 = vunpack.c.h.b16 %v1492
    %v2219 = vunpack.c.l.b16 %v1493
    %v2220 = vunpack.c.h.b16 %v1493
    %v2221 = vunpack.c.l.b16 %v1494
    %v2222 = vunpack.c.h.b16 %v1494
    %v2223 = vunpack.c.l.b16 %v1495
    %v2224 = vunpack.c.h.b16 %v1495
    %v2225 = vunpack.c.l.b16 %v1496
    %v2226 = vunpack.c.h.b16 %v1496
    %v2227 = vunpack.c.l.b16 %v1497
    %v2228 = vunpack.c.h.b16 %v1497
    %v2229 = vunpack.c.l.b16 %v1498
    %v2230 = vunpack.c.h.b16 %v1498
    %v2231 = vunpack.c.l.b16 %v1499
    %v2232 = vunpack.c.h.b16 %v1499
    %v2233 = vunpack.c.l.b16 %v1500
    %v2234 = vunpack.c.h.b16 %v1500
    %v2235 = vunpack.c.l.b16 %v1501
    %v2236 = vunpack.c.h.b16 %v1501
    %v2237 = vunpack.c.l.b16 %v1502
    %v2238 = vunpack.c.h.b16 %v1502
    %v2239 = vunpack.c.l.b16 %v1503
    %v2240 = vunpack.c.h.b16 %v1503
    %v2241 = vunpack.c.l.b16 %v1504
    %v2242 = vunpack.c.h.b16 %v1504
    %v2243 = vunpack.c.l.b16 %v1505
    %v2244 = vunpack.c.h.b16 %v1505
    %v2245 = vunpack.c.l.b16 %v1506
    %v2246 = vunpack.c.h.b16 %v1506
    %v2247 = vunpack.c.l.b16 %v1507
    %v2248 = vunpack.c.h.b16 %v1507
    %v2249 = vunpack.c.l.b16 %v1508
    %v2250 = vunpack.c.h.b16 %v1508
    %v2251 = vunpack.c.l.b16 %v1509
    %v2252 = vunpack.c.h.b16 %v1509
    %v2253 = vunpack.c.l.b16 %v1510
    %v2254 = vunpack.c.h.b16 %v1510
    %v2255 = vunpack.c.l.b16 %v1511
    %v2256 = vunpack.c.h.b16 %v1511
    %v2257 = vunpack.c.l.b16 %v1512
    %v2258 = vunpack.c.h.b16 %v1512
    %v2259 = vunpack.c.l.b16 %v1513
    %v2260 = vunpack.c.h.b16 %v1513
    %v2261 = vunpack.c.l.b16 %v1514
    %v2262 = vunpack.c.h.b16 %v1514
    %v2263 = vunpack.c.l.b16 %v1515
    %v2264 = vunpack.c.h.b16 %v1515
    %v2265 = vunpack.c.l.b16 %v1516
    %v2266 = vunpack.c.h.b16 %v1516
    %v2267 = vunpack.c.l.b16 %v1517
    %v2268 = vunpack.c.h.b16 %v1517
    %v2269 = vunpack.c.l.b16 %v1518
    %v2270 = vunpack.c.h.b16 %v1518
    %v2271 = vunpack.c.l.b16 %v1519
    %v2272 = vunpack.c.h.b16 %v1519
    %v2273 = vunpack.c.l.b16 %v1520
    %v2274 = vunpack.c.h.b16 %v1520
    %v2275 = vunpack.c.l.b16 %v1521
    %v2276 = vunpack.c.h.b16 %v1521
    %v2277 = vunpack.c.l.b16 %v1522
    %v2278 = vunpack.c.h.b16 %v1522
    %v2279 = vunpack.c.l.b16 %v1523
    %v2280 = vunpack.c.h.b16 %v1523
    %v2281 = vunpack.c.l.b16 %v1524
    %v2282 = vunpack.c.h.b16 %v1524
    %v2283 = vunpack.c.l.b16 %v1525
    %v2284 = vunpack.c.h.b16 %v1525
    %v2285 = vunpack.c.l.b16 %v1526
    %v2286 = vunpack.c.h.b16 %v1526
    %v2287 = vunpack.c.l.b16 %v1527
    %v2288 = vunpack.c.h.b16 %v1527
    %v2289 = vunpack.c.l.b16 %v1528
    %v2290 = vunpack.c.h.b16 %v1528
    %v2291 = vunpack.c.l.b16 %v1529
    %v2292 = vunpack.c.h.b16 %v1529
    %v2293 = vunpack.c.l.b16 %v1530
    %v2294 = vunpack.c.h.b16 %v1530
    %v2295 = vunpack.c.l.b16 %v1531
    %v2296 = vunpack.c.h.b16 %v1531
    %v2297 = vunpack.c.l.b16 %v1532
    %v2298 = vunpack.c.h.b16 %v1532
    %v2299 = vunpack.c.l.b16 %v1533
    %v2300 = vunpack.c.h.b16 %v1533
    %v2301 = vunpack.c.l.b16 %v1534
    %v2302 = vunpack.c.h.b16 %v1534
    %v2303 = vunpack.c.l.b16 %v1535
    %v2304 = vunpack.c.h.b16 %v1535
    %v2305 = vunpack.c.l.b16 %v1536
    %v2306 = vunpack.c.h.b16 %v1536
    %v2307 = vunpack.c.l.b16 %v1537
    %v2308 = vunpack.c.h.b16 %v1537
    %v2309 = vunpack.c.l.b16 %v1538
    %v2310 = vunpack.c.h.b16 %v1538
    %v2311 = vunpack.c.l.b16 %v1539
    %v2312 = vunpack.c.h.b16 %v1539
    %v2313 = vunpack.c.l.b16 %v1540
    %v2314 = vunpack.c.h.b16 %v1540
    %v2315 = vunpack.c.l.b16 %v1541
    %v2316 = vunpack.c.h.b16 %v1541
    %v2317 = vunpack.c.l.b16 %v1542
    %v2318 = vunpack.c.h.b16 %v1542
    %v2319 = vunpack.c.l.b16 %v1543
    %v2320 = vunpack.c.h.b16 %v1543
    %v2321 = vunpack.c.l.b16 %v1544
    %v2322 = vunpack.c.h.b16 %v1544
    %v2323 = vunpack.c.l.b16 %v1545
    %v2324 = vunpack.c.h.b16 %v1545
    %v2325 = vunpack.c.l.b16 %v1546
    %v2326 = vunpack.c.h.b16 %v1546
    %v2327 = vunpack.c.l.b16 %v1547
    %v2328 = vunpack.c.h.b16 %v1547
    %v2329 = vunpack.c.l.b16 %v1548
    %v2330 = vunpack.c.h.b16 %v1548
    %v2331 = vunpack.c.l.b16 %v1549
    %v2332 = vunpack.c.h.b16 %v1549
    %v2333 = vunpack.c.l.b16 %v1550
    %v2334 = vunpack.c.h.b16 %v1550
    %v2335 = vunpack.c.l.b16 %v1551
    %v2336 = vunpack.c.h.b16 %v1551
    %v2337 = vunpack.c.l.b16 %v1552
    %v2338 = vunpack.c.h.b16 %v1552
    %v2339 = vunpack.c.l.b16 %v1553
    %v2340 = vunpack.c.h.b16 %v1553
    %v2341 = vunpack.c.l.b16 %v1554
    %v2342 = vunpack.c.h.b16 %v1554
    %v2343 = vunpack.c.l.b16 %v1555
    %v2344 = vunpack.c.h.b16 %v1555
    %v2345 = vpack.c.b16 %v1841, %v1833
    %v2346 = vpack.c.b16 %v1842, %v1834
    %v2347 = vpack.c.b16 %v1843, %v1835
    %v2348 = vpack.c.b16 %v1844, %v1836
    %v2349 = vpack.c.b16 %v1845, %v1837
    %v2350 = vpack.c.b16 %v1846, %v1838
    %v2351 = vpack.c.b16 %v1847, %v1839
    %v2352 = vpack.c.b16 %v1848, %v1840
    %v2353 = vpack.c.b16 %v1857, %v1849
    %v2354 = vpack.c.b16 %v1858, %v1850
    %v2355 = vpack.c.b16 %v1859, %v1851
    %v2356 = vpack.c.b16 %v1860, %v1852
    %v2357 = vpack.c.b16 %v1861, %v1853
    %v2358 = vpack.c.b16 %v1862, %v1854
    %v2359 = vpack.c.b16 %v1863, %v1855
    %v2360 = vpack.c.b16 %v1864, %v1856
    %v2361 = vpack.c.b16 %v1873, %v1865
    %v2362 = vpack.c.b16 %v1874, %v1866
    %v2363 = vpack.c.b16 %v1875, %v1867
    %v2364 = vpack.c.b16 %v1876, %v1868
    %v2365 = vpack.c.b16 %v1877, %v1869
    %v2366 = vpack.c.b16 %v1878, %v1870
    %v2367 = vpack.c.b16 %v1879, %v1871
    %v2368 = vpack.c.b16 %v1880, %v1872
    %v2369 = vpack.c.b16 %v1889, %v1881
    %v2370 = vpack.c.b16 %v1890, %v1882
    %v2371 = vpack.c.b16 %v1891, %v1883
    %v2372 = vpack.c.b16 %v1892, %v1884
    %v2373 = vpack.c.b16 %v1893, %v1885
    %v2374 = vpack.c.b16 %v1894, %v1886
    %v2375 = vpack.c.b16 %v1895, %v1887
    %v2376 = vpack.c.b16 %v1896, %v1888
    %v2377 = vpack.c.b16 %v1905, %v1897
    %v2378 = vpack.c.b16 %v1906, %v1898
    %v2379 = vpack.c.b16 %v1907, %v1899
    %v2380 = vpack.c.b16 %v1908, %v1900
    %v2381 = vpack.c.b16 %v1909, %v1901
    %v2382 = vpack.c.b16 %v1910, %v1902
    %v2383 = vpack.c.b16 %v1911, %v1903
    %v2384 = vpack.c.b16 %v1912, %v1904
    %v2385 = vpack.c.b16 %v1921, %v1913
    %v2386 = vpack.c.b16 %v1922, %v1914
    %v2387 = vpack.c.b16 %v1923, %v1915
    %v2388 = vpack.c.b16 %v1924, %v1916
    %v2389 = vpack.c.b16 %v1925, %v1917
    %v2390 = vpack.c.b16 %v1926, %v1918
    %v2391 = vpack.c.b16 %v1927, %v1919
    %v2392 = vpack.c.b16 %v1928, %v1920
    %v2393 = vpack.c.b16 %v1937, %v1929
    %v2394 = vpack.c.b16 %v1938, %v1930
    %v2395 = vpack.c.b16 %v1939, %v1931
    %v2396 = vpack.c.b16 %v1940, %v1932
    %v2397 = vpack.c.b16 %v1941, %v1933
    %v2398 = vpack.c.b16 %v1942, %v1934
    %v2399 = vpack.c.b16 %v1943, %v1935
    %v2400 = vpack.c.b16 %v1944, %v1936
    %v2401 = vpack.c.b16 %v1953, %v1945
    %v2402 = vpack.c.b16 %v1954, %v1946
    %v2403 = vpack.c.b16 %v1955, %v1947
    %v2404 = vpack.c.b16 %v1956, %v1948
    %v2405 = vpack.c.b16 %v1957, %v1949
    %v2406 = vpack.c.b16 %v1958, %v1950
    %v2407 = vpack.c.b16 %v1959, %v1951
    %v2408 = vpack.c.b16 %v1960, %v1952
    %v2409 = vpack.c.b16 %v1969, %v1961
    %v2410 = vpack.c.b16 %v1970, %v1962
    %v2411 = vpack.c.b16 %v1971, %v1963
    %v2412 = vpack.c.b16 %v1972, %v1964
    %v2413 = vpack.c.b16 %v1973, %v1965
    %v2414 = vpack.c.b16 %v1974, %v1966
    %v2415 = vpack.c.b16 %v1975, %v1967
    %v2416 = vpack.c.b16 %v1976, %v1968
    %v2417 = vpack.c.b16 %v1985, %v1977
    %v2418 = vpack.c.b16 %v1986, %v1978
    %v2419 = vpack.c.b16 %v1987, %v1979
    %v2420 = vpack.c.b16 %v1988, %v1980
    %v2421 = vpack.c.b16 %v1989, %v1981
    %v2422 = vpack.c.b16 %v1990, %v1982
    %v2423 = vpack.c.b16 %v1991, %v1983
    %v2424 = vpack.c.b16 %v1992, %v1984
    %v2425 = vpack.c.b16 %v2001, %v1993
    %v2426 = vpack.c.b16 %v2002, %v1994
    %v2427 = vpack.c.b16 %v2003, %v1995
    %v2428 = vpack.c.b16 %v2004, %v1996
    %v2429 = vpack.c.b16 %v2005, %v1997
    %v2430 = vpack.c.b16 %v2006, %v1998
    %v2431 = vpack.c.b16 %v2007, %v1999
    %v2432 = vpack.c.b16 %v2008, %v2000
    %v2433 = vpack.c.b16 %v2017, %v2009
    %v2434 = vpack.c.b16 %v2018, %v2010
    %v2435 = vpack.c.b16 %v2019, %v2011
    %v2436 = vpack.c.b16 %v2020, %v2012
    %v2437 = vpack.c.b16 %v2021, %v2013
    %v2438 = vpack.c.b16 %v2022, %v2014
    %v2439 = vpack.c.b16 %v2023, %v2015
    %v2440 = vpack.c.b16 %v2024, %v2016
    %v2441 = vpack.c.b16 %v2033, %v2025
    %v2442 = vpack.c.b16 %v2034, %v2026
    %v2443 = vpack.c.b16 %v2035, %v2027
    %v2444 = vpack.c.b16 %v2036, %v2028
    %v2445 = vpack.c.b16 %v2037, %v2029
    %v2446 = vpack.c.b16 %v2038, %v2030
    %v2447 = vpack.c.b16 %v2039, %v2031
    %v2448 = vpack.c.b16 %v2040, %v2032
    %v2449 = vpack.c.b16 %v2049, %v2041
    %v2450 = vpack.c.b16 %v2050, %v2042
    %v2451 = vpack.c.b16 %v2051, %v2043
    %v2452 = vpack.c.b16 %v2052, %v2044
    %v2453 = vpack.c.b16 %v2053, %v2045
    %v2454 = vpack.c.b16 %v2054, %v2046
    %v2455 = vpack.c.b16 %v2055, %v2047
    %v2456 = vpack.c.b16 %v2056, %v2048
    %v2457 = vpack.c.b16 %v2065, %v2057
    %v2458 = vpack.c.b16 %v2066, %v2058
    %v2459 = vpack.c.b16 %v2067, %v2059
    %v2460 = vpack.c.b16 %v2068, %v2060
    %v2461 = vpack.c.b16 %v2069, %v2061
    %v2462 = vpack.c.b16 %v2070, %v2062
    %v2463 = vpack.c.b16 %v2071, %v2063
    %v2464 = vpack.c.b16 %v2072, %v2064
    %v2465 = vpack.c.b16 %v2081, %v2073
    %v2466 = vpack.c.b16 %v2082, %v2074
    %v2467 = vpack.c.b16 %v2083, %v2075
    %v2468 = vpack.c.b16 %v2084, %v2076
    %v2469 = vpack.c.b16 %v2085, %v2077
    %v2470 = vpack.c.b16 %v2086, %v2078
    %v2471 = vpack.c.b16 %v2087, %v2079
    %v2472 = vpack.c.b16 %v2088, %v2080
    %v2473 = vpack.c.b16 %v2097, %v2089
    %v2474 = vpack.c.b16 %v2098, %v2090
    %v2475 = vpack.c.b16 %v2099, %v2091
    %v2476 = vpack.c.b16 %v2100, %v2092
    %v2477 = vpack.c.b16 %v2101, %v2093
    %v2478 = vpack.c.b16 %v2102, %v2094
    %v2479 = vpack.c.b16 %v2103, %v2095
    %v2480 = vpack.c.b16 %v2104, %v2096
    %v2481 = vpack.c.b16 %v2113, %v2105
    %v2482 = vpack.c.b16 %v2114, %v2106
    %v2483 = vpack.c.b16 %v2115, %v2107
    %v2484 = vpack.c.b16 %v2116, %v2108
    %v2485 = vpack.c.b16 %v2117, %v2109
    %v2486 = vpack.c.b16 %v2118, %v2110
    %v2487 = vpack.c.b16 %v2119, %v2111
    %v2488 = vpack.c.b16 %v2120, %v2112
    %v2489 = vpack.c.b16 %v2129, %v2121
    %v2490 = vpack.c.b16 %v2130, %v2122
    %v2491 = vpack.c.b16 %v2131, %v2123
    %v2492 = vpack.c.b16 %v2132, %v2124
    %v2493 = vpack.c.b16 %v2133, %v2125
    %v2494 = vpack.c.b16 %v2134, %v2126
    %v2495 = vpack.c.b16 %v2135, %v2127
    %v2496 = vpack.c.b16 %v2136, %v2128
    %v2497 = vpack.c.b16 %v2145, %v2137
    %v2498 = vpack.c.b16 %v2146, %v2138
    %v2499 = vpack.c.b16 %v2147, %v2139
    %v2500 = vpack.c.b16 %v2148, %v2140
    %v2501 = vpack.c.b16 %v2149, %v2141
    %v2502 = vpack.c.b16 %v2150, %v2142
    %v2503 = vpack.c.b16 %v2151, %v2143
    %v2504 = vpack.c.b16 %v2152, %v2144
    %v2505 = vpack.c.b16 %v2161, %v2153
    %v2506 = vpack.c.b16 %v2162, %v2154
    %v2507 = vpack.c.b16 %v2163, %v2155
    %v2508 = vpack.c.b16 %v2164, %v2156
    %v2509 = vpack.c.b16 %v2165, %v2157
    %v2510 = vpack.c.b16 %v2166, %v2158
    %v2511 = vpack.c.b16 %v2167, %v2159
    %v2512 = vpack.c.b16 %v2168, %v2160
    %v2513 = vpack.c.b16 %v2177, %v2169
    %v2514 = vpack.c.b16 %v2178, %v2170
    %v2515 = vpack.c.b16 %v2179, %v2171
    %v2516 = vpack.c.b16 %v2180, %v2172
    %v2517 = vpack.c.b16 %v2181, %v2173
    %v2518 = vpack.c.b16 %v2182, %v2174
    %v2519 = vpack.c.b16 %v2183, %v2175
    %v2520 = vpack.c.b16 %v2184, %v2176
    %v2521 = vpack.c.b16 %v2193, %v2185
    %v2522 = vpack.c.b16 %v2194, %v2186
    %v2523 = vpack.c.b16 %v2195, %v2187
    %v2524 = vpack.c.b16 %v2196, %v2188
    %v2525 = vpack.c.b16 %v2197, %v2189
    %v2526 = vpack.c.b16 %v2198, %v2190
    %v2527 = vpack.c.b16 %v2199, %v2191
    %v2528 = vpack.c.b16 %v2200, %v2192
    %v2529 = vpack.c.b16 %v2209, %v2201
    %v2530 = vpack.c.b16 %v2210, %v2202
    %v2531 = vpack.c.b16 %v2211, %v2203
    %v2532 = vpack.c.b16 %v2212, %v2204
    %v2533 = vpack.c.b16 %v2213, %v2205
    %v2534 = vpack.c.b16 %v2214, %v2206
    %v2535 = vpack.c.b16 %v2215, %v2207
    %v2536 = vpack.c.b16 %v2216, %v2208
    %v2537 = vpack.c.b16 %v2225, %v2217
    %v2538 = vpack.c.b16 %v2226, %v2218
    %v2539 = vpack.c.b16 %v2227, %v2219
    %v2540 = vpack.c.b16 %v2228, %v2220
    %v2541 = vpack.c.b16 %v2229, %v2221
    %v2542 = vpack.c.b16 %v2230, %v2222
    %v2543 = vpack.c.b16 %v2231, %v2223
    %v2544 = vpack.c.b16 %v2232, %v2224
    %v2545 = vpack.c.b16 %v2241, %v2233
    %v2546 = vpack.c.b16 %v2242, %v2234
    %v2547 = vpack.c.b16 %v2243, %v2235
    %v2548 = vpack.c.b16 %v2244, %v2236
    %v2549 = vpack.c.b16 %v2245, %v2237
    %v2550 = vpack.c.b16 %v2246, %v2238
    %v2551 = vpack.c.b16 %v2247, %v2239
    %v2552 = vpack.c.b16 %v2248, %v2240
    %v2553 = vpack.c.b16 %v2257, %v2249
    %v2554 = vpack.c.b16 %v2258, %v2250
    %v2555 = vpack.c.b16 %v2259, %v2251
    %v2556 = vpack.c.b16 %v2260, %v2252
    %v2557 = vpack.c.b16 %v2261, %v2253
    %v2558 = vpack.c.b16 %v2262, %v2254
    %v2559 = vpack.c.b16 %v2263, %v2255
    %v2560 = vpack.c.b16 %v2264, %v2256
    %v2561 = vpack.c.b16 %v2273, %v2265
    %v2562 = vpack.c.b16 %v2274, %v2266
    %v2563 = vpack.c.b16 %v2275, %v2267
    %v2564 = vpack.c.b16 %v2276, %v2268
    %v2565 = vpack.c.b16 %v2277, %v2269
    %v2566 = vpack.c.b16 %v2278, %v2270
    %v2567 = vpack.c.b16 %v2279, %v2271
    %v2568 = vpack.c.b16 %v2280, %v2272
    %v2569 = vpack.c.b16 %v2289, %v2281
    %v2570 = vpack.c.b16 %v2290, %v2282
    %v2571 = vpack.c.b16 %v2291, %v2283
    %v2572 = vpack.c.b16 %v2292, %v2284
    %v2573 = vpack.c.b16 %v2293, %v2285
    %v2574 = vpack.c.b16 %v2294, %v2286
    %v2575 = vpack.c.b16 %v2295, %v2287
    %v2576 = vpack.c.b16 %v2296, %v2288
    %v2577 = vpack.c.b16 %v2305, %v2297
    %v2578 = vpack.c.b16 %v2306, %v2298
    %v2579 = vpack.c.b16 %v2307, %v2299
    %v2580 = vpack.c.b16 %v2308, %v2300
    %v2581 = vpack.c.b16 %v2309, %v2301
    %v2582 = vpack.c.b16 %v2310, %v2302
    %v2583 = vpack.c.b16 %v2311, %v2303
    %v2584 = vpack.c.b16 %v2312, %v2304
    %v2585 = vpack.c.b16 %v2321, %v2313
    %v2586 = vpack.c.b16 %v2322, %v2314
    %v2587 = vpack.c.b16 %v2323, %v2315
    %v2588 = vpack.c.b16 %v2324, %v2316
    %v2589 = vpack.c.b16 %v2325, %v2317
    %v2590 = vpack.c.b16 %v2326, %v2318
    %v2591 = vpack.c.b16 %v2327, %v2319
    %v2592 = vpack.c.b16 %v2328, %v2320
    %v2593 = vpack.c.b16 %v2337, %v2329
    %v2594 = vpack.c.b16 %v2338, %v2330
    %v2595 = vpack.c.b16 %v2339, %v2331
    %v2596 = vpack.c.b16 %v2340, %v2332
    %v2597 = vpack.c.b16 %v2341, %v2333
    %v2598 = vpack.c.b16 %v2342, %v2334
    %v2599 = vpack.c.b16 %v2343, %v2335
    %v2600 = vpack.c.b16 %v2344, %v2336
    %2857 = vmatpush.bf16.msra.mxu0 %v2401
    %2858 = vmatpush.bf16.msra.mxu0 %v2393
    %2859 = vmatpush.bf16.msra.mxu0 %v2385
    %2860 = vmatpush.bf16.msra.mxu0 %v2377
    %2861 = vmatpush.bf16.msra.mxu0 %v2369
    %2862 = vmatpush.bf16.msra.mxu0 %v2361
    %2863 = vmatpush.bf16.msra.mxu0 %v2353
    %2864 = vmatpush.bf16.msra.mxu0 %v2345
    %2865 = vmatmul.bf16.gmra.mxu0 %v1296
    %v2866 = vpop.f32.mrf.mxu0
    %v2867 = vadd.f32 %v1561, %v2866
    %v2868 = vpop.f32.mrf.mxu0
    %2869 = vdwg.mxu0
    %2870 = vmatpush.bf16.msra.mxu0 %v2465
    %2871 = vmatpush.bf16.msra.mxu0 %v2457
    %2872 = vmatpush.bf16.msra.mxu0 %v2449
    %2873 = vmatpush.bf16.msra.mxu0 %v2441
    %2874 = vmatpush.bf16.msra.mxu0 %v2433
    %2875 = vmatpush.bf16.msra.mxu0 %v2425
    %2876 = vmatpush.bf16.msra.mxu0 %v2417
    %2877 = vmatpush.bf16.msra.mxu0 %v2409
    %2878 = vmatmul.bf16.gmra.mxu0 %v1297
    %v2879 = vpop.f32.mrf.mxu0
    %v2880 = vadd.f32 %v2867, %v2879
    %v2881 = vpop.f32.mrf.mxu0
    %2882 = vdwg.mxu0
    %2883 = vmatpush.bf16.msra.mxu0 %v2529
    %2884 = vmatpush.bf16.msra.mxu0 %v2521
    %2885 = vmatpush.bf16.msra.mxu0 %v2513
    %2886 = vmatpush.bf16.msra.mxu0 %v2505
    %2887 = vmatpush.bf16.msra.mxu0 %v2497
    %2888 = vmatpush.bf16.msra.mxu0 %v2489
    %2889 = vmatpush.bf16.msra.mxu0 %v2481
    %2890 = vmatpush.bf16.msra.mxu0 %v2473
    %2891 = vmatmul.bf16.gmra.mxu0 %v1298
    %v2892 = vpop.f32.mrf.mxu0
    %v2893 = vadd.f32 %v2880, %v2892
    %v2894 = vpop.f32.mrf.mxu0
    %2895 = vdwg.mxu0
    %2896 = vmatpush.bf16.msra.mxu0 %v2593
    %2897 = vmatpush.bf16.msra.mxu0 %v2585
    %2898 = vmatpush.bf16.msra.mxu0 %v2577
    %2899 = vmatpush.bf16.msra.mxu0 %v2569
    %2900 = vmatpush.bf16.msra.mxu0 %v2561
    %2901 = vmatpush.bf16.msra.mxu0 %v2553
    %2902 = vmatpush.bf16.msra.mxu0 %v2545
    %2903 = vmatpush.bf16.msra.mxu0 %v2537
    %2904 = vmatmul.bf16.gmra.mxu0 %v1299
    %v2905 = vpop.f32.mrf.mxu0
    %v2906 = vadd.f32 %v2893, %v2905
    %v2907 = vpop.f32.mrf.mxu0
    %2908 = vdwg.mxu0
    %2909 = vmatpush.bf16.msra.mxu0 %v2402
    %2910 = vmatpush.bf16.msra.mxu0 %v2394
    %2911 = vmatpush.bf16.msra.mxu0 %v2386
    %2912 = vmatpush.bf16.msra.mxu0 %v2378
    %2913 = vmatpush.bf16.msra.mxu0 %v2370
    %2914 = vmatpush.bf16.msra.mxu0 %v2362
    %2915 = vmatpush.bf16.msra.mxu0 %v2354
    %2916 = vmatpush.bf16.msra.mxu0 %v2346
    %2917 = vmatmul.bf16.gmra.mxu0 %v1296
    %v2918 = vpop.f32.mrf.mxu0
    %v2919 = vadd.f32 %v1562, %v2918
    %v2920 = vpop.f32.mrf.mxu0
    %2921 = vdwg.mxu0
    %2922 = vmatpush.bf16.msra.mxu0 %v2466
    %2923 = vmatpush.bf16.msra.mxu0 %v2458
    %2924 = vmatpush.bf16.msra.mxu0 %v2450
    %2925 = vmatpush.bf16.msra.mxu0 %v2442
    %2926 = vmatpush.bf16.msra.mxu0 %v2434
    %2927 = vmatpush.bf16.msra.mxu0 %v2426
    %2928 = vmatpush.bf16.msra.mxu0 %v2418
    %2929 = vmatpush.bf16.msra.mxu0 %v2410
    %2930 = vmatmul.bf16.gmra.mxu0 %v1297
    %v2931 = vpop.f32.mrf.mxu0
    %v2932 = vadd.f32 %v2919, %v2931
    %v2933 = vpop.f32.mrf.mxu0
    %2934 = vdwg.mxu0
    %2935 = vmatpush.bf16.msra.mxu0 %v2530
    %2936 = vmatpush.bf16.msra.mxu0 %v2522
    %2937 = vmatpush.bf16.msra.mxu0 %v2514
    %2938 = vmatpush.bf16.msra.mxu0 %v2506
    %2939 = vmatpush.bf16.msra.mxu0 %v2498
    %2940 = vmatpush.bf16.msra.mxu0 %v2490
    %2941 = vmatpush.bf16.msra.mxu0 %v2482
    %2942 = vmatpush.bf16.msra.mxu0 %v2474
    %2943 = vmatmul.bf16.gmra.mxu0 %v1298
    %v2944 = vpop.f32.mrf.mxu0
    %v2945 = vadd.f32 %v2932, %v2944
    %v2946 = vpop.f32.mrf.mxu0
    %2947 = vdwg.mxu0
    %2948 = vmatpush.bf16.msra.mxu0 %v2594
    %2949 = vmatpush.bf16.msra.mxu0 %v2586
    %2950 = vmatpush.bf16.msra.mxu0 %v2578
    %2951 = vmatpush.bf16.msra.mxu0 %v2570
    %2952 = vmatpush.bf16.msra.mxu0 %v2562
    %2953 = vmatpush.bf16.msra.mxu0 %v2554
    %2954 = vmatpush.bf16.msra.mxu0 %v2546
    %2955 = vmatpush.bf16.msra.mxu0 %v2538
    %2956 = vmatmul.bf16.gmra.mxu0 %v1299
    %v2957 = vpop.f32.mrf.mxu0
    %v2958 = vadd.f32 %v2945, %v2957
    %v2959 = vpop.f32.mrf.mxu0
    %2960 = vdwg.mxu0
    %2961 = vmatpush.bf16.msra.mxu0 %v2403
    %2962 = vmatpush.bf16.msra.mxu0 %v2395
    %2963 = vmatpush.bf16.msra.mxu0 %v2387
    %2964 = vmatpush.bf16.msra.mxu0 %v2379
    %2965 = vmatpush.bf16.msra.mxu0 %v2371
    %2966 = vmatpush.bf16.msra.mxu0 %v2363
    %2967 = vmatpush.bf16.msra.mxu0 %v2355
    %2968 = vmatpush.bf16.msra.mxu0 %v2347
    %2969 = vmatmul.bf16.gmra.mxu0 %v1296
    %v2970 = vpop.f32.mrf.mxu0
    %v2971 = vadd.f32 %v1563, %v2970
    %v2972 = vpop.f32.mrf.mxu0
    %2973 = vdwg.mxu0
    %2974 = vmatpush.bf16.msra.mxu0 %v2467
    %2975 = vmatpush.bf16.msra.mxu0 %v2459
    %2976 = vmatpush.bf16.msra.mxu0 %v2451
    %2977 = vmatpush.bf16.msra.mxu0 %v2443
    %2978 = vmatpush.bf16.msra.mxu0 %v2435
    %2979 = vmatpush.bf16.msra.mxu0 %v2427
    %2980 = vmatpush.bf16.msra.mxu0 %v2419
    %2981 = vmatpush.bf16.msra.mxu0 %v2411
    %2982 = vmatmul.bf16.gmra.mxu0 %v1297
    %v2983 = vpop.f32.mrf.mxu0
    %v2984 = vadd.f32 %v2971, %v2983
    %v2985 = vpop.f32.mrf.mxu0
    %2986 = vdwg.mxu0
    %2987 = vmatpush.bf16.msra.mxu0 %v2531
    %2988 = vmatpush.bf16.msra.mxu0 %v2523
    %2989 = vmatpush.bf16.msra.mxu0 %v2515
    %2990 = vmatpush.bf16.msra.mxu0 %v2507
    %2991 = vmatpush.bf16.msra.mxu0 %v2499
    %2992 = vmatpush.bf16.msra.mxu0 %v2491
    %2993 = vmatpush.bf16.msra.mxu0 %v2483
    %2994 = vmatpush.bf16.msra.mxu0 %v2475
    %2995 = vmatmul.bf16.gmra.mxu0 %v1298
    %v2996 = vpop.f32.mrf.mxu0
    %v2997 = vadd.f32 %v2984, %v2996
    %v2998 = vpop.f32.mrf.mxu0
    %2999 = vdwg.mxu0
    %3000 = vmatpush.bf16.msra.mxu0 %v2595
    %3001 = vmatpush.bf16.msra.mxu0 %v2587
    %3002 = vmatpush.bf16.msra.mxu0 %v2579
    %3003 = vmatpush.bf16.msra.mxu0 %v2571
    %3004 = vmatpush.bf16.msra.mxu0 %v2563
    %3005 = vmatpush.bf16.msra.mxu0 %v2555
    %3006 = vmatpush.bf16.msra.mxu0 %v2547
    %3007 = vmatpush.bf16.msra.mxu0 %v2539
    %3008 = vmatmul.bf16.gmra.mxu0 %v1299
    %v3009 = vpop.f32.mrf.mxu0
    %v3010 = vadd.f32 %v2997, %v3009
    %v3011 = vpop.f32.mrf.mxu0
    %3012 = vdwg.mxu0
    %3013 = vmatpush.bf16.msra.mxu0 %v2404
    %3014 = vmatpush.bf16.msra.mxu0 %v2396
    %3015 = vmatpush.bf16.msra.mxu0 %v2388
    %3016 = vmatpush.bf16.msra.mxu0 %v2380
    %3017 = vmatpush.bf16.msra.mxu0 %v2372
    %3018 = vmatpush.bf16.msra.mxu0 %v2364
    %3019 = vmatpush.bf16.msra.mxu0 %v2356
    %3020 = vmatpush.bf16.msra.mxu0 %v2348
    %3021 = vmatmul.bf16.gmra.mxu0 %v1296
    %v3022 = vpop.f32.mrf.mxu0
    %v3023 = vadd.f32 %v1564, %v3022
    %v3024 = vpop.f32.mrf.mxu0
    %3025 = vdwg.mxu0
    %3026 = vmatpush.bf16.msra.mxu0 %v2468
    %3027 = vmatpush.bf16.msra.mxu0 %v2460
    %3028 = vmatpush.bf16.msra.mxu0 %v2452
    %3029 = vmatpush.bf16.msra.mxu0 %v2444
    %3030 = vmatpush.bf16.msra.mxu0 %v2436
    %3031 = vmatpush.bf16.msra.mxu0 %v2428
    %3032 = vmatpush.bf16.msra.mxu0 %v2420
    %3033 = vmatpush.bf16.msra.mxu0 %v2412
    %3034 = vmatmul.bf16.gmra.mxu0 %v1297
    %v3035 = vpop.f32.mrf.mxu0
    %v3036 = vadd.f32 %v3023, %v3035
    %v3037 = vpop.f32.mrf.mxu0
    %3038 = vdwg.mxu0
    %3039 = vmatpush.bf16.msra.mxu0 %v2532
    %3040 = vmatpush.bf16.msra.mxu0 %v2524
    %3041 = vmatpush.bf16.msra.mxu0 %v2516
    %3042 = vmatpush.bf16.msra.mxu0 %v2508
    %3043 = vmatpush.bf16.msra.mxu0 %v2500
    %3044 = vmatpush.bf16.msra.mxu0 %v2492
    %3045 = vmatpush.bf16.msra.mxu0 %v2484
    %3046 = vmatpush.bf16.msra.mxu0 %v2476
    %3047 = vmatmul.bf16.gmra.mxu0 %v1298
    %v3048 = vpop.f32.mrf.mxu0
    %v3049 = vadd.f32 %v3036, %v3048
    %v3050 = vpop.f32.mrf.mxu0
    %3051 = vdwg.mxu0
    %3052 = vmatpush.bf16.msra.mxu0 %v2596
    %3053 = vmatpush.bf16.msra.mxu0 %v2588
    %3054 = vmatpush.bf16.msra.mxu0 %v2580
    %3055 = vmatpush.bf16.msra.mxu0 %v2572
    %3056 = vmatpush.bf16.msra.mxu0 %v2564
    %3057 = vmatpush.bf16.msra.mxu0 %v2556
    %3058 = vmatpush.bf16.msra.mxu0 %v2548
    %3059 = vmatpush.bf16.msra.mxu0 %v2540
    %3060 = vmatmul.bf16.gmra.mxu0 %v1299
    %v3061 = vpop.f32.mrf.mxu0
    %v3062 = vadd.f32 %v3049, %v3061
    %v3063 = vpop.f32.mrf.mxu0
    %3064 = vdwg.mxu0
    %3065 = vmatpush.bf16.msra.mxu0 %v2405
    %3066 = vmatpush.bf16.msra.mxu0 %v2397
    %3067 = vmatpush.bf16.msra.mxu0 %v2389
    %3068 = vmatpush.bf16.msra.mxu0 %v2381
    %3069 = vmatpush.bf16.msra.mxu0 %v2373
    %3070 = vmatpush.bf16.msra.mxu0 %v2365
    %3071 = vmatpush.bf16.msra.mxu0 %v2357
    %3072 = vmatpush.bf16.msra.mxu0 %v2349
    %3073 = vmatmul.bf16.gmra.mxu0 %v1296
    %v3074 = vpop.f32.mrf.mxu0
    %v3075 = vadd.f32 %v1565, %v3074
    %v3076 = vpop.f32.mrf.mxu0
    %3077 = vdwg.mxu0
    %3078 = vmatpush.bf16.msra.mxu0 %v2469
    %3079 = vmatpush.bf16.msra.mxu0 %v2461
    %3080 = vmatpush.bf16.msra.mxu0 %v2453
    %3081 = vmatpush.bf16.msra.mxu0 %v2445
    %3082 = vmatpush.bf16.msra.mxu0 %v2437
    %3083 = vmatpush.bf16.msra.mxu0 %v2429
    %3084 = vmatpush.bf16.msra.mxu0 %v2421
    %3085 = vmatpush.bf16.msra.mxu0 %v2413
    %3086 = vmatmul.bf16.gmra.mxu0 %v1297
    %v3087 = vpop.f32.mrf.mxu0
    %v3088 = vadd.f32 %v3075, %v3087
    %v3089 = vpop.f32.mrf.mxu0
    %3090 = vdwg.mxu0
    %3091 = vmatpush.bf16.msra.mxu0 %v2533
    %3092 = vmatpush.bf16.msra.mxu0 %v2525
    %3093 = vmatpush.bf16.msra.mxu0 %v2517
    %3094 = vmatpush.bf16.msra.mxu0 %v2509
    %3095 = vmatpush.bf16.msra.mxu0 %v2501
    %3096 = vmatpush.bf16.msra.mxu0 %v2493
    %3097 = vmatpush.bf16.msra.mxu0 %v2485
    %3098 = vmatpush.bf16.msra.mxu0 %v2477
    %3099 = vmatmul.bf16.gmra.mxu0 %v1298
    %v3100 = vpop.f32.mrf.mxu0
    %v3101 = vadd.f32 %v3088, %v3100
    %v3102 = vpop.f32.mrf.mxu0
    %3103 = vdwg.mxu0
    %3104 = vmatpush.bf16.msra.mxu0 %v2597
    %3105 = vmatpush.bf16.msra.mxu0 %v2589
    %3106 = vmatpush.bf16.msra.mxu0 %v2581
    %3107 = vmatpush.bf16.msra.mxu0 %v2573
    %3108 = vmatpush.bf16.msra.mxu0 %v2565
    %3109 = vmatpush.bf16.msra.mxu0 %v2557
    %3110 = vmatpush.bf16.msra.mxu0 %v2549
    %3111 = vmatpush.bf16.msra.mxu0 %v2541
    %3112 = vmatmul.bf16.gmra.mxu0 %v1299
    %v3113 = vpop.f32.mrf.mxu0
    %v3114 = vadd.f32 %v3101, %v3113
    %v3115 = vpop.f32.mrf.mxu0
    %3116 = vdwg.mxu0
    %3117 = vmatpush.bf16.msra.mxu0 %v2406
    %3118 = vmatpush.bf16.msra.mxu0 %v2398
    %3119 = vmatpush.bf16.msra.mxu0 %v2390
    %3120 = vmatpush.bf16.msra.mxu0 %v2382
    %3121 = vmatpush.bf16.msra.mxu0 %v2374
    %3122 = vmatpush.bf16.msra.mxu0 %v2366
    %3123 = vmatpush.bf16.msra.mxu0 %v2358
    %3124 = vmatpush.bf16.msra.mxu0 %v2350
    %3125 = vmatmul.bf16.gmra.mxu0 %v1296
    %v3126 = vpop.f32.mrf.mxu0
    %v3127 = vadd.f32 %v1566, %v3126
    %v3128 = vpop.f32.mrf.mxu0
    %3129 = vdwg.mxu0
    %3130 = vmatpush.bf16.msra.mxu0 %v2470
    %3131 = vmatpush.bf16.msra.mxu0 %v2462
    %3132 = vmatpush.bf16.msra.mxu0 %v2454
    %3133 = vmatpush.bf16.msra.mxu0 %v2446
    %3134 = vmatpush.bf16.msra.mxu0 %v2438
    %3135 = vmatpush.bf16.msra.mxu0 %v2430
    %3136 = vmatpush.bf16.msra.mxu0 %v2422
    %3137 = vmatpush.bf16.msra.mxu0 %v2414
    %3138 = vmatmul.bf16.gmra.mxu0 %v1297
    %v3139 = vpop.f32.mrf.mxu0
    %v3140 = vadd.f32 %v3127, %v3139
    %v3141 = vpop.f32.mrf.mxu0
    %3142 = vdwg.mxu0
    %3143 = vmatpush.bf16.msra.mxu0 %v2534
    %3144 = vmatpush.bf16.msra.mxu0 %v2526
    %3145 = vmatpush.bf16.msra.mxu0 %v2518
    %3146 = vmatpush.bf16.msra.mxu0 %v2510
    %3147 = vmatpush.bf16.msra.mxu0 %v2502
    %3148 = vmatpush.bf16.msra.mxu0 %v2494
    %3149 = vmatpush.bf16.msra.mxu0 %v2486
    %3150 = vmatpush.bf16.msra.mxu0 %v2478
    %3151 = vmatmul.bf16.gmra.mxu0 %v1298
    %v3152 = vpop.f32.mrf.mxu0
    %v3153 = vadd.f32 %v3140, %v3152
    %v3154 = vpop.f32.mrf.mxu0
    %3155 = vdwg.mxu0
    %3156 = vmatpush.bf16.msra.mxu0 %v2598
    %3157 = vmatpush.bf16.msra.mxu0 %v2590
    %3158 = vmatpush.bf16.msra.mxu0 %v2582
    %3159 = vmatpush.bf16.msra.mxu0 %v2574
    %3160 = vmatpush.bf16.msra.mxu0 %v2566
    %3161 = vmatpush.bf16.msra.mxu0 %v2558
    %3162 = vmatpush.bf16.msra.mxu0 %v2550
    %3163 = vmatpush.bf16.msra.mxu0 %v2542
    %3164 = vmatmul.bf16.gmra.mxu0 %v1299
    %v3165 = vpop.f32.mrf.mxu0
    %v3166 = vadd.f32 %v3153, %v3165
    %v3167 = vpop.f32.mrf.mxu0
    %3168 = vdwg.mxu0
    %3169 = vmatpush.bf16.msra.mxu0 %v2407
    %3170 = vmatpush.bf16.msra.mxu0 %v2399
    %3171 = vmatpush.bf16.msra.mxu0 %v2391
    %3172 = vmatpush.bf16.msra.mxu0 %v2383
    %3173 = vmatpush.bf16.msra.mxu0 %v2375
    %3174 = vmatpush.bf16.msra.mxu0 %v2367
    %3175 = vmatpush.bf16.msra.mxu0 %v2359
    %3176 = vmatpush.bf16.msra.mxu0 %v2351
    %3177 = vmatmul.bf16.gmra.mxu0 %v1296
    %v3178 = vpop.f32.mrf.mxu0
    %v3179 = vadd.f32 %v1567, %v3178
    %v3180 = vpop.f32.mrf.mxu0
    %3181 = vdwg.mxu0
    %3182 = vmatpush.bf16.msra.mxu0 %v2471
    %3183 = vmatpush.bf16.msra.mxu0 %v2463
    %3184 = vmatpush.bf16.msra.mxu0 %v2455
    %3185 = vmatpush.bf16.msra.mxu0 %v2447
    %3186 = vmatpush.bf16.msra.mxu0 %v2439
    %3187 = vmatpush.bf16.msra.mxu0 %v2431
    %3188 = vmatpush.bf16.msra.mxu0 %v2423
    %3189 = vmatpush.bf16.msra.mxu0 %v2415
    %3190 = vmatmul.bf16.gmra.mxu0 %v1297
    %v3191 = vpop.f32.mrf.mxu0
    %v3192 = vadd.f32 %v3179, %v3191
    %v3193 = vpop.f32.mrf.mxu0
    %3194 = vdwg.mxu0
    %3195 = vmatpush.bf16.msra.mxu0 %v2535
    %3196 = vmatpush.bf16.msra.mxu0 %v2527
    %3197 = vmatpush.bf16.msra.mxu0 %v2519
    %3198 = vmatpush.bf16.msra.mxu0 %v2511
    %3199 = vmatpush.bf16.msra.mxu0 %v2503
    %3200 = vmatpush.bf16.msra.mxu0 %v2495
    %3201 = vmatpush.bf16.msra.mxu0 %v2487
    %3202 = vmatpush.bf16.msra.mxu0 %v2479
    %3203 = vmatmul.bf16.gmra.mxu0 %v1298
    %v3204 = vpop.f32.mrf.mxu0
    %v3205 = vadd.f32 %v3192, %v3204
    %v3206 = vpop.f32.mrf.mxu0
    %3207 = vdwg.mxu0
    %3208 = vmatpush.bf16.msra.mxu0 %v2599
    %3209 = vmatpush.bf16.msra.mxu0 %v2591
    %3210 = vmatpush.bf16.msra.mxu0 %v2583
    %3211 = vmatpush.bf16.msra.mxu0 %v2575
    %3212 = vmatpush.bf16.msra.mxu0 %v2567
    %3213 = vmatpush.bf16.msra.mxu0 %v2559
    %3214 = vmatpush.bf16.msra.mxu0 %v2551
    %3215 = vmatpush.bf16.msra.mxu0 %v2543
    %3216 = vmatmul.bf16.gmra.mxu0 %v1299
    %v3217 = vpop.f32.mrf.mxu0
    %v3218 = vadd.f32 %v3205, %v3217
    %v3219 = vpop.f32.mrf.mxu0
    %3220 = vdwg.mxu0
    %3221 = vmatpush.bf16.msra.mxu0 %v2408
    %3222 = vmatpush.bf16.msra.mxu0 %v2400
    %3223 = vmatpush.bf16.msra.mxu0 %v2392
    %3224 = vmatpush.bf16.msra.mxu0 %v2384
    %3225 = vmatpush.bf16.msra.mxu0 %v2376
    %3226 = vmatpush.bf16.msra.mxu0 %v2368
    %3227 = vmatpush.bf16.msra.mxu0 %v2360
    %3228 = vmatpush.bf16.msra.mxu0 %v2352
    %3229 = vmatmul.bf16.gmra.mxu0 %v1296
    %v3230 = vpop.f32.mrf.mxu0
    %v3231 = vadd.f32 %v1568, %v3230
    %v3232 = vpop.f32.mrf.mxu0
    %3233 = vdwg.mxu0
    %3234 = vmatpush.bf16.msra.mxu0 %v2472
    %3235 = vmatpush.bf16.msra.mxu0 %v2464
    %3236 = vmatpush.bf16.msra.mxu0 %v2456
    %3237 = vmatpush.bf16.msra.mxu0 %v2448
    %3238 = vmatpush.bf16.msra.mxu0 %v2440
    %3239 = vmatpush.bf16.msra.mxu0 %v2432
    %3240 = vmatpush.bf16.msra.mxu0 %v2424
    %3241 = vmatpush.bf16.msra.mxu0 %v2416
    %3242 = vmatmul.bf16.gmra.mxu0 %v1297
    %v3243 = vpop.f32.mrf.mxu0
    %v3244 = vadd.f32 %v3231, %v3243
    %v3245 = vpop.f32.mrf.mxu0
    %3246 = vdwg.mxu0
    %3247 = vmatpush.bf16.msra.mxu0 %v2536
    %3248 = vmatpush.bf16.msra.mxu0 %v2528
    %3249 = vmatpush.bf16.msra.mxu0 %v2520
    %3250 = vmatpush.bf16.msra.mxu0 %v2512
    %3251 = vmatpush.bf16.msra.mxu0 %v2504
    %3252 = vmatpush.bf16.msra.mxu0 %v2496
    %3253 = vmatpush.bf16.msra.mxu0 %v2488
    %3254 = vmatpush.bf16.msra.mxu0 %v2480
    %3255 = vmatmul.bf16.gmra.mxu0 %v1298
    %v3256 = vpop.f32.mrf.mxu0
    %v3257 = vadd.f32 %v3244, %v3256
    %v3258 = vpop.f32.mrf.mxu0
    %3259 = vdwg.mxu0
    %3260 = vmatpush.bf16.msra.mxu0 %v2600
    %3261 = vmatpush.bf16.msra.mxu0 %v2592
    %3262 = vmatpush.bf16.msra.mxu0 %v2584
    %3263 = vmatpush.bf16.msra.mxu0 %v2576
    %3264 = vmatpush.bf16.msra.mxu0 %v2568
    %3265 = vmatpush.bf16.msra.mxu0 %v2560
    %3266 = vmatpush.bf16.msra.mxu0 %v2552
    %3267 = vmatpush.bf16.msra.mxu0 %v2544
    %3268 = vmatmul.bf16.gmra.mxu0 %v1299
    %v3269 = vpop.f32.mrf.mxu0
    %v3270 = vadd.f32 %v3257, %v3269
    %v3271 = vpop.f32.mrf.mxu0
    %3272 = vdwg.mxu0
    %vm3273 = vcmp.gt.f32.partialorder %v2906, 0.0
    %vm3274 = vcmp.gt.f32.partialorder %v2958, 0.0
    %vm3275 = vcmp.gt.f32.partialorder %v3010, 0.0
    %vm3276 = vcmp.gt.f32.partialorder %v3062, 0.0
    %vm3277 = vcmp.gt.f32.partialorder %v3114, 0.0
    %vm3278 = vcmp.gt.f32.partialorder %v3166, 0.0
    %vm3279 = vcmp.gt.f32.partialorder %v3218, 0.0
    %vm3280 = vcmp.gt.f32.partialorder %v3270, 0.0
    %v3281 = vmul.f32 %v2906, 0.2
    %v3282 = vmul.f32 %v2958, 0.2
    %v3283 = vmul.f32 %v3010, 0.2
    %v3284 = vmul.f32 %v3062, 0.2
    %v3285 = vmul.f32 %v3114, 0.2
    %v3286 = vmul.f32 %v3166, 0.2
    %v3287 = vmul.f32 %v3218, 0.2
    %v3288 = vmul.f32 %v3270, 0.2
    %v3289 = vsel %vm3273, %v2906, %v3281
    %v3290 = vsel %vm3274, %v2958, %v3282
    %v3291 = vsel %vm3275, %v3010, %v3283
    %v3292 = vsel %vm3276, %v3062, %v3284
    %v3293 = vsel %vm3277, %v3114, %v3285
    %v3294 = vsel %vm3278, %v3166, %v3286
    %v3295 = vsel %vm3279, %v3218, %v3287
    %v3296 = vsel %vm3280, %v3270, %v3288
    %v3297 = vrot.slane %v3289, 4
    %v3298 = vadd.f32 %v3289, %v3297
    %v3299 = vrot.slane %v3298, 2
    %v3300 = vadd.f32 %v3298, %v3299
    %v3301 = vrot.slane %v3300, 1
    %v3302 = vadd.f32 %v3300, %v3301
    %v3303 = vrot.slane %v3290, 4
    %v3304 = vadd.f32 %v3290, %v3303
    %v3305 = vrot.slane %v3304, 2
    %v3306 = vadd.f32 %v3304, %v3305
    %v3307 = vrot.slane %v3306, 1
    %v3308 = vadd.f32 %v3306, %v3307
    %v3309 = vrot.slane %v3291, 4
    %v3310 = vadd.f32 %v3291, %v3309
    %v3311 = vrot.slane %v3310, 2
    %v3312 = vadd.f32 %v3310, %v3311
    %v3313 = vrot.slane %v3312, 1
    %v3314 = vadd.f32 %v3312, %v3313
    %v3315 = vrot.slane %v3292, 4
    %v3316 = vadd.f32 %v3292, %v3315
    %v3317 = vrot.slane %v3316, 2
    %v3318 = vadd.f32 %v3316, %v3317
    %v3319 = vrot.slane %v3318, 1
    %v3320 = vadd.f32 %v3318, %v3319
    %v3321 = vrot.slane %v3293, 4
    %v3322 = vadd.f32 %v3293, %v3321
    %v3323 = vrot.slane %v3322, 2
    %v3324 = vadd.f32 %v3322, %v3323
    %v3325 = vrot.slane %v3324, 1
    %v3326 = vadd.f32 %v3324, %v3325
    %v3327 = vrot.slane %v3294, 4
    %v3328 = vadd.f32 %v3294, %v3327
    %v3329 = vrot.slane %v3328, 2
    %v3330 = vadd.f32 %v3328, %v3329
    %v3331 = vrot.slane %v3330, 1
    %v3332 = vadd.f32 %v3330, %v3331
    %v3333 = vrot.slane %v3295, 4
    %v3334 = vadd.f32 %v3295, %v3333
    %v3335 = vrot.slane %v3334, 2
    %v3336 = vadd.f32 %v3334, %v3335
    %v3337 = vrot.slane %v3336, 1
    %v3338 = vadd.f32 %v3336, %v3337
    %v3339 = vrot.slane %v3296, 4
    %v3340 = vadd.f32 %v3296, %v3339
    %v3341 = vrot.slane %v3340, 2
    %v3342 = vadd.f32 %v3340, %v3341
    %v3343 = vrot.slane %v3342, 1
    %v3344 = vadd.f32 %v3342, %v3343
    %v3345 = vmul.f32 %v3302, %v570
    %v3346 = vmul.f32 %v3308, %v570
    %v3347 = vmul.f32 %v3314, %v570
    %v3348 = vmul.f32 %v3320, %v570
    %v3349 = vmul.f32 %v3326, %v570
    %v3350 = vmul.f32 %v3332, %v570
    %v3351 = vmul.f32 %v3338, %v570
    %v3352 = vmul.f32 %v3344, %v570
    %v3353 = vsub.f32 %v3289, %v3345
    %v3354 = vsub.f32 %v3290, %v3346
    %v3355 = vsub.f32 %v3291, %v3347
    %v3356 = vsub.f32 %v3292, %v3348
    %v3357 = vsub.f32 %v3293, %v3349
    %v3358 = vsub.f32 %v3294, %v3350
    %v3359 = vsub.f32 %v3295, %v3351
    %v3360 = vsub.f32 %v3296, %v3352
    %v3361 = vmul.f32 %v3353, %v3353
    %v3362 = vmul.f32 %v3354, %v3354
    %v3363 = vmul.f32 %v3355, %v3355
    %v3364 = vmul.f32 %v3356, %v3356
    %v3365 = vmul.f32 %v3357, %v3357
    %v3366 = vmul.f32 %v3358, %v3358
    %v3367 = vmul.f32 %v3359, %v3359
    %v3368 = vmul.f32 %v3360, %v3360
    %v3369 = vrot.slane %v3361, 4
    %v3370 = vadd.f32 %v3361, %v3369
    %v3371 = vrot.slane %v3370, 2
    %v3372 = vadd.f32 %v3370, %v3371
    %v3373 = vrot.slane %v3372, 1
    %v3374 = vadd.f32 %v3372, %v3373
    %v3375 = vrot.slane %v3362, 4
    %v3376 = vadd.f32 %v3362, %v3375
    %v3377 = vrot.slane %v3376, 2
    %v3378 = vadd.f32 %v3376, %v3377
    %v3379 = vrot.slane %v3378, 1
    %v3380 = vadd.f32 %v3378, %v3379
    %v3381 = vrot.slane %v3363, 4
    %v3382 = vadd.f32 %v3363, %v3381
    %v3383 = vrot.slane %v3382, 2
    %v3384 = vadd.f32 %v3382, %v3383
    %v3385 = vrot.slane %v3384, 1
    %v3386 = vadd.f32 %v3384, %v3385
    %v3387 = vrot.slane %v3364, 4
    %v3388 = vadd.f32 %v3364, %v3387
    %v3389 = vrot.slane %v3388, 2
    %v3390 = vadd.f32 %v3388, %v3389
    %v3391 = vrot.slane %v3390, 1
    %v3392 = vadd.f32 %v3390, %v3391
    %v3393 = vrot.slane %v3365, 4
    %v3394 = vadd.f32 %v3365, %v3393
    %v3395 = vrot.slane %v3394, 2
    %v3396 = vadd.f32 %v3394, %v3395
    %v3397 = vrot.slane %v3396, 1
    %v3398 = vadd.f32 %v3396, %v3397
    %v3399 = vrot.slane %v3366, 4
    %v3400 = vadd.f32 %v3366, %v3399
    %v3401 = vrot.slane %v3400, 2
    %v3402 = vadd.f32 %v3400, %v3401
    %v3403 = vrot.slane %v3402, 1
    %v3404 = vadd.f32 %v3402, %v3403
    %v3405 = vrot.slane %v3367, 4
    %v3406 = vadd.f32 %v3367, %v3405
    %v3407 = vrot.slane %v3406, 2
    %v3408 = vadd.f32 %v3406, %v3407
    %v3409 = vrot.slane %v3408, 1
    %v3410 = vadd.f32 %v3408, %v3409
    %v3411 = vrot.slane %v3368, 4
    %v3412 = vadd.f32 %v3368, %v3411
    %v3413 = vrot.slane %v3412, 2
    %v3414 = vadd.f32 %v3412, %v3413
    %v3415 = vrot.slane %v3414, 1
    %v3416 = vadd.f32 %v3414, %v3415
    %v3417 = vmul.f32 %v3374, %v570
    %v3418 = vmul.f32 %v3380, %v570
    %v3419 = vmul.f32 %v3386, %v570
    %v3420 = vmul.f32 %v3392, %v570
    %v3421 = vmul.f32 %v3398, %v570
    %v3422 = vmul.f32 %v3404, %v570
    %v3423 = vmul.f32 %v3410, %v570
    %v3424 = vmul.f32 %v3416, %v570
    %v3425 = vadd.f32 %v3417, 1e-05
    %v3426 = vadd.f32 %v3418, 1e-05
    %v3427 = vadd.f32 %v3419, 1e-05
    %v3428 = vadd.f32 %v3420, 1e-05
    %v3429 = vadd.f32 %v3421, 1e-05
    %v3430 = vadd.f32 %v3422, 1e-05
    %v3431 = vadd.f32 %v3423, 1e-05
    %v3432 = vadd.f32 %v3424, 1e-05
    %v3433 = vrsqrt.pop %v3425
    %v3434 = vmul.f32 %v3433, %v3425
    %v3435 = vmul.f32 %v3434, %v3433
    %v3436 = vmul.f32 0.5, %v3435
    %v3437 = vsub.f32 1.5, %v3436
    %v3438 = vmul.f32 %v3433, %v3437
    %vm3439 = vweird.f32 %v3425
    %vm3440 = vweird.f32 %v3433
    %vm3441 = vmor %vm3439, %vm3440
    %v3442 = vsel %vm3441, %v3433, %v3438
    %v3443 = vrsqrt.pop %v3426
    %v3444 = vmul.f32 %v3443, %v3426
    %v3445 = vmul.f32 %v3444, %v3443
    %v3446 = vmul.f32 0.5, %v3445
    %v3447 = vsub.f32 1.5, %v3446
    %v3448 = vmul.f32 %v3443, %v3447
    %vm3449 = vweird.f32 %v3426
    %vm3450 = vweird.f32 %v3443
    %vm3451 = vmor %vm3449, %vm3450
    %v3452 = vsel %vm3451, %v3443, %v3448
    %v3453 = vrsqrt.pop %v3427
    %v3454 = vmul.f32 %v3453, %v3427
    %v3455 = vmul.f32 %v3454, %v3453
    %v3456 = vmul.f32 0.5, %v3455
    %v3457 = vsub.f32 1.5, %v3456
    %v3458 = vmul.f32 %v3453, %v3457
    %vm3459 = vweird.f32 %v3427
    %vm3460 = vweird.f32 %v3453
    %vm3461 = vmor %vm3459, %vm3460
    %v3462 = vsel %vm3461, %v3453, %v3458
    %v3463 = vrsqrt.pop %v3428
    %v3464 = vmul.f32 %v3463, %v3428
    %v3465 = vmul.f32 %v3464, %v3463
    %v3466 = vmul.f32 0.5, %v3465
    %v3467 = vsub.f32 1.5, %v3466
    %v3468 = vmul.f32 %v3463, %v3467
    %vm3469 = vweird.f32 %v3428
    %vm3470 = vweird.f32 %v3463
    %vm3471 = vmor %vm3469, %vm3470
    %v3472 = vsel %vm3471, %v3463, %v3468
    %v3473 = vrsqrt.pop %v3429
    %v3474 = vmul.f32 %v3473, %v3429
    %v3475 = vmul.f32 %v3474, %v3473
    %v3476 = vmul.f32 0.5, %v3475
    %v3477 = vsub.f32 1.5, %v3476
    %v3478 = vmul.f32 %v3473, %v3477
    %vm3479 = vweird.f32 %v3429
    %vm3480 = vweird.f32 %v3473
    %vm3481 = vmor %vm3479, %vm3480
    %v3482 = vsel %vm3481, %v3473, %v3478
    %v3483 = vrsqrt.pop %v3430
    %v3484 = vmul.f32 %v3483, %v3430
    %v3485 = vmul.f32 %v3484, %v3483
    %v3486 = vmul.f32 0.5, %v3485
    %v3487 = vsub.f32 1.5, %v3486
    %v3488 = vmul.f32 %v3483, %v3487
    %vm3489 = vweird.f32 %v3430
    %vm3490 = vweird.f32 %v3483
    %vm3491 = vmor %vm3489, %vm3490
    %v3492 = vsel %vm3491, %v3483, %v3488
    %v3493 = vrsqrt.pop %v3431
    %v3494 = vmul.f32 %v3493, %v3431
    %v3495 = vmul.f32 %v3494, %v3493
    %v3496 = vmul.f32 0.5, %v3495
    %v3497 = vsub.f32 1.5, %v3496
    %v3498 = vmul.f32 %v3493, %v3497
    %vm3499 = vweird.f32 %v3431
    %vm3500 = vweird.f32 %v3493
    %vm3501 = vmor %vm3499, %vm3500
    %v3502 = vsel %vm3501, %v3493, %v3498
    %v3503 = vrsqrt.pop %v3432
    %v3504 = vmul.f32 %v3503, %v3432
    %v3505 = vmul.f32 %v3504, %v3503
    %v3506 = vmul.f32 0.5, %v3505
    %v3507 = vsub.f32 1.5, %v3506
    %v3508 = vmul.f32 %v3503, %v3507
    %vm3509 = vweird.f32 %v3432
    %vm3510 = vweird.f32 %v3503
    %vm3511 = vmor %vm3509, %vm3510
    %v3512 = vsel %vm3511, %v3503, %v3508
    %v3513 = vmul.f32 %v3353, %v3442
    %v3514 = vmul.f32 %v3354, %v3452
    %v3515 = vmul.f32 %v3355, %v3462
    %v3516 = vmul.f32 %v3356, %v3472
    %v3517 = vmul.f32 %v3357, %v3482
    %v3518 = vmul.f32 %v3358, %v3492
    %v3519 = vmul.f32 %v3359, %v3502
    %v3520 = vmul.f32 %v3360, %v3512
    %s3521 = scalar_lea.vmem [#allocation12], 7
    %v3522 = vld [vmem:[%s3521] ss:$8 sm:$0xf]
    %v3523 = vld [vmem:[%s3521] ss:$8 sm:$0xf0]
    %v3524 = vor.u32 %v3522, %v3523
    %v3526 = vperm.slane %v3524, 0
    %v3527 = vperm.slane %v3524, 1
    %v3528 = vperm.slane %v3524, 2
    %v3529 = vperm.slane %v3524, 3
    %v3530 = vperm.slane %v3524, 4
    %v3531 = vperm.slane %v3524, 5
    %v3532 = vperm.slane %v3524, 6
    %v3533 = vperm.slane %v3524, 7
    %v3542 = vmul.f32 %v3513, %v3526
    %v3543 = vmul.f32 %v3514, %v3527
    %v3544 = vmul.f32 %v3515, %v3528
    %v3545 = vmul.f32 %v3516, %v3529
    %v3546 = vmul.f32 %v3517, %v3530
    %v3547 = vmul.f32 %v3518, %v3531
    %v3548 = vmul.f32 %v3519, %v3532
    %v3549 = vmul.f32 %v3520, %v3533
    %s3550 = scalar_lea.vmem [#allocation12], 64
    %v3551 = vld [vmem:[%s3550] ss:$8 sm:$0xf]
    %v3552 = vld [vmem:[%s3550] ss:$8 sm:$0xf0]
    %v3553 = vor.u32 %v3551, %v3552
    %v3555 = vperm.slane %v3553, 0
    %v3556 = vperm.slane %v3553, 1
    %v3557 = vperm.slane %v3553, 2
    %v3558 = vperm.slane %v3553, 3
    %v3559 = vperm.slane %v3553, 4
    %v3560 = vperm.slane %v3553, 5
    %v3561 = vperm.slane %v3553, 6
    %v3562 = vperm.slane %v3553, 7
    %v3571 = vadd.f32 %v3542, %v3555
    %v3572 = vadd.f32 %v3543, %v3556
    %v3573 = vadd.f32 %v3544, %v3557
    %v3574 = vadd.f32 %v3545, %v3558
    %v3575 = vadd.f32 %v3546, %v3559
    %v3576 = vadd.f32 %v3547, %v3560
    %v3577 = vadd.f32 %v3548, %v3561
    %v3578 = vadd.f32 %v3549, %v3562
    %s3579 = smul.u32 4, 128
    %s3580 = smul.u32 %s3579, 1
    %s3581 = sshll.u32 %s3580, 4
    %3582 = dma.done %s222, %s3581
    %v3583 = vpack.c.bf16 %v3571, %v3571
    %v3584 = vpack.c.bf16 %v3572, %v3572
    %v3585 = vpack.c.bf16 %v3573, %v3573
    %v3586 = vpack.c.bf16 %v3574, %v3574
    %v3587 = vpack.c.bf16 %v3575, %v3575
    %v3588 = vpack.c.bf16 %v3576, %v3576
    %v3589 = vpack.c.bf16 %v3577, %v3577
    %v3590 = vpack.c.bf16 %v3578, %v3578
    %v3591 = vld [vmem:[#allocation5] sm:$0xf]
    %v3592 = vld [vmem:[#allocation5 + $0x4] sm:$0xf]
    %v3593 = vld [vmem:[#allocation5 + $0x8] sm:$0xf]
    %v3594 = vld [vmem:[#allocation5 + $0xc] sm:$0xf]
    %v3595 = vld [vmem:[#allocation5 + $0x10] sm:$0xf]
    %v3596 = vld [vmem:[#allocation5 + $0x14] sm:$0xf]
    %v3597 = vld [vmem:[#allocation5 + $0x18] sm:$0xf]
    %v3598 = vld [vmem:[#allocation5 + $0x1c] sm:$0xf]
    %v3599 = vld [vmem:[#allocation5 + $0x20] sm:$0xf]
    %v3600 = vld [vmem:[#allocation5 + $0x24] sm:$0xf]
    %v3601 = vld [vmem:[#allocation5 + $0x28] sm:$0xf]
    %v3602 = vld [vmem:[#allocation5 + $0x2c] sm:$0xf]
    %v3603 = vld [vmem:[#allocation5 + $0x30] sm:$0xf]
    %v3604 = vld [vmem:[#allocation5 + $0x34] sm:$0xf]
    %v3605 = vld [vmem:[#allocation5 + $0x38] sm:$0xf]
    %v3606 = vld [vmem:[#allocation5 + $0x3c] sm:$0xf]
    %v3607 = vld [vmem:[#allocation5 + $0x40] sm:$0xf]
    %v3608 = vld [vmem:[#allocation5 + $0x44] sm:$0xf]
    %v3609 = vld [vmem:[#allocation5 + $0x48] sm:$0xf]
    %v3610 = vld [vmem:[#allocation5 + $0x4c] sm:$0xf]
    %v3611 = vld [vmem:[#allocation5 + $0x50] sm:$0xf]
    %v3612 = vld [vmem:[#allocation5 + $0x54] sm:$0xf]
    %v3613 = vld [vmem:[#allocation5 + $0x58] sm:$0xf]
    %v3614 = vld [vmem:[#allocation5 + $0x5c] sm:$0xf]
    %v3615 = vld [vmem:[#allocation5 + $0x60] sm:$0xf]
    %v3616 = vld [vmem:[#allocation5 + $0x64] sm:$0xf]
    %v3617 = vld [vmem:[#allocation5 + $0x68] sm:$0xf]
    %v3618 = vld [vmem:[#allocation5 + $0x6c] sm:$0xf]
    %v3619 = vld [vmem:[#allocation5 + $0x70] sm:$0xf]
    %v3620 = vld [vmem:[#allocation5 + $0x74] sm:$0xf]
    %v3621 = vld [vmem:[#allocation5 + $0x78] sm:$0xf]
    %v3622 = vld [vmem:[#allocation5 + $0x7c] sm:$0xf]
    %v3623 = vld [vmem:[#allocation5 + $0x80] sm:$0xf]
    %v3624 = vld [vmem:[#allocation5 + $0x84] sm:$0xf]
    %v3625 = vld [vmem:[#allocation5 + $0x88] sm:$0xf]
    %v3626 = vld [vmem:[#allocation5 + $0x8c] sm:$0xf]
    %v3627 = vld [vmem:[#allocation5 + $0x90] sm:$0xf]
    %v3628 = vld [vmem:[#allocation5 + $0x94] sm:$0xf]
    %v3629 = vld [vmem:[#allocation5 + $0x98] sm:$0xf]
    %v3630 = vld [vmem:[#allocation5 + $0x9c] sm:$0xf]
    %v3631 = vld [vmem:[#allocation5 + $0xa0] sm:$0xf]
    %v3632 = vld [vmem:[#allocation5 + $0xa4] sm:$0xf]
    %v3633 = vld [vmem:[#allocation5 + $0xa8] sm:$0xf]
    %v3634 = vld [vmem:[#allocation5 + $0xac] sm:$0xf]
    %v3635 = vld [vmem:[#allocation5 + $0xb0] sm:$0xf]
    %v3636 = vld [vmem:[#allocation5 + $0xb4] sm:$0xf]
    %v3637 = vld [vmem:[#allocation5 + $0xb8] sm:$0xf]
    %v3638 = vld [vmem:[#allocation5 + $0xbc] sm:$0xf]
    %v3639 = vld [vmem:[#allocation5 + $0xc0] sm:$0xf]
    %v3640 = vld [vmem:[#allocation5 + $0xc4] sm:$0xf]
    %v3641 = vld [vmem:[#allocation5 + $0xc8] sm:$0xf]
    %v3642 = vld [vmem:[#allocation5 + $0xcc] sm:$0xf]
    %v3643 = vld [vmem:[#allocation5 + $0xd0] sm:$0xf]
    %v3644 = vld [vmem:[#allocation5 + $0xd4] sm:$0xf]
    %v3645 = vld [vmem:[#allocation5 + $0xd8] sm:$0xf]
    %v3646 = vld [vmem:[#allocation5 + $0xdc] sm:$0xf]
    %v3647 = vld [vmem:[#allocation5 + $0xe0] sm:$0xf]
    %v3648 = vld [vmem:[#allocation5 + $0xe4] sm:$0xf]
    %v3649 = vld [vmem:[#allocation5 + $0xe8] sm:$0xf]
    %v3650 = vld [vmem:[#allocation5 + $0xec] sm:$0xf]
    %v3651 = vld [vmem:[#allocation5 + $0xf0] sm:$0xf]
    %v3652 = vld [vmem:[#allocation5 + $0xf4] sm:$0xf]
    %v3653 = vld [vmem:[#allocation5 + $0xf8] sm:$0xf]
    %v3654 = vld [vmem:[#allocation5 + $0xfc] sm:$0xf]
    %v3655 = vld [vmem:[#allocation5 + $0x100] sm:$0xf]
    %v3656 = vld [vmem:[#allocation5 + $0x104] sm:$0xf]
    %v3657 = vld [vmem:[#allocation5 + $0x108] sm:$0xf]
    %v3658 = vld [vmem:[#allocation5 + $0x10c] sm:$0xf]
    %v3659 = vld [vmem:[#allocation5 + $0x110] sm:$0xf]
    %v3660 = vld [vmem:[#allocation5 + $0x114] sm:$0xf]
    %v3661 = vld [vmem:[#allocation5 + $0x118] sm:$0xf]
    %v3662 = vld [vmem:[#allocation5 + $0x11c] sm:$0xf]
    %v3663 = vld [vmem:[#allocation5 + $0x120] sm:$0xf]
    %v3664 = vld [vmem:[#allocation5 + $0x124] sm:$0xf]
    %v3665 = vld [vmem:[#allocation5 + $0x128] sm:$0xf]
    %v3666 = vld [vmem:[#allocation5 + $0x12c] sm:$0xf]
    %v3667 = vld [vmem:[#allocation5 + $0x130] sm:$0xf]
    %v3668 = vld [vmem:[#allocation5 + $0x134] sm:$0xf]
    %v3669 = vld [vmem:[#allocation5 + $0x138] sm:$0xf]
    %v3670 = vld [vmem:[#allocation5 + $0x13c] sm:$0xf]
    %v3671 = vld [vmem:[#allocation5 + $0x140] sm:$0xf]
    %v3672 = vld [vmem:[#allocation5 + $0x144] sm:$0xf]
    %v3673 = vld [vmem:[#allocation5 + $0x148] sm:$0xf]
    %v3674 = vld [vmem:[#allocation5 + $0x14c] sm:$0xf]
    %v3675 = vld [vmem:[#allocation5 + $0x150] sm:$0xf]
    %v3676 = vld [vmem:[#allocation5 + $0x154] sm:$0xf]
    %v3677 = vld [vmem:[#allocation5 + $0x158] sm:$0xf]
    %v3678 = vld [vmem:[#allocation5 + $0x15c] sm:$0xf]
    %v3679 = vld [vmem:[#allocation5 + $0x160] sm:$0xf]
    %v3680 = vld [vmem:[#allocation5 + $0x164] sm:$0xf]
    %v3681 = vld [vmem:[#allocation5 + $0x168] sm:$0xf]
    %v3682 = vld [vmem:[#allocation5 + $0x16c] sm:$0xf]
    %v3683 = vld [vmem:[#allocation5 + $0x170] sm:$0xf]
    %v3684 = vld [vmem:[#allocation5 + $0x174] sm:$0xf]
    %v3685 = vld [vmem:[#allocation5 + $0x178] sm:$0xf]
    %v3686 = vld [vmem:[#allocation5 + $0x17c] sm:$0xf]
    %v3687 = vld [vmem:[#allocation5 + $0x180] sm:$0xf]
    %v3688 = vld [vmem:[#allocation5 + $0x184] sm:$0xf]
    %v3689 = vld [vmem:[#allocation5 + $0x188] sm:$0xf]
    %v3690 = vld [vmem:[#allocation5 + $0x18c] sm:$0xf]
    %v3691 = vld [vmem:[#allocation5 + $0x190] sm:$0xf]
    %v3692 = vld [vmem:[#allocation5 + $0x194] sm:$0xf]
    %v3693 = vld [vmem:[#allocation5 + $0x198] sm:$0xf]
    %v3694 = vld [vmem:[#allocation5 + $0x19c] sm:$0xf]
    %v3695 = vld [vmem:[#allocation5 + $0x1a0] sm:$0xf]
    %v3696 = vld [vmem:[#allocation5 + $0x1a4] sm:$0xf]
    %v3697 = vld [vmem:[#allocation5 + $0x1a8] sm:$0xf]
    %v3698 = vld [vmem:[#allocation5 + $0x1ac] sm:$0xf]
    %v3699 = vld [vmem:[#allocation5 + $0x1b0] sm:$0xf]
    %v3700 = vld [vmem:[#allocation5 + $0x1b4] sm:$0xf]
    %v3701 = vld [vmem:[#allocation5 + $0x1b8] sm:$0xf]
    %v3702 = vld [vmem:[#allocation5 + $0x1bc] sm:$0xf]
    %v3703 = vld [vmem:[#allocation5 + $0x1c0] sm:$0xf]
    %v3704 = vld [vmem:[#allocation5 + $0x1c4] sm:$0xf]
    %v3705 = vld [vmem:[#allocation5 + $0x1c8] sm:$0xf]
    %v3706 = vld [vmem:[#allocation5 + $0x1cc] sm:$0xf]
    %v3707 = vld [vmem:[#allocation5 + $0x1d0] sm:$0xf]
    %v3708 = vld [vmem:[#allocation5 + $0x1d4] sm:$0xf]
    %v3709 = vld [vmem:[#allocation5 + $0x1d8] sm:$0xf]
    %v3710 = vld [vmem:[#allocation5 + $0x1dc] sm:$0xf]
    %v3711 = vld [vmem:[#allocation5 + $0x1e0] sm:$0xf]
    %v3712 = vld [vmem:[#allocation5 + $0x1e4] sm:$0xf]
    %v3713 = vld [vmem:[#allocation5 + $0x1e8] sm:$0xf]
    %v3714 = vld [vmem:[#allocation5 + $0x1ec] sm:$0xf]
    %v3715 = vld [vmem:[#allocation5 + $0x1f0] sm:$0xf]
    %v3716 = vld [vmem:[#allocation5 + $0x1f4] sm:$0xf]
    %v3717 = vld [vmem:[#allocation5 + $0x1f8] sm:$0xf]
    %v3718 = vld [vmem:[#allocation5 + $0x1fc] sm:$0xf]
    %v3719 = vld [vmem:[#allocation12 + $0x41] ss:$0 sm:$0xff]
    %v3848 = vunpack.c.l.b16 %v3591
    %v3849 = vunpack.c.l.b16 %v3592
    %v3850 = vunpack.c.l.b16 %v3593
    %v3851 = vunpack.c.l.b16 %v3594
    %v3852 = vunpack.c.l.b16 %v3595
    %v3853 = vunpack.c.l.b16 %v3596
    %v3854 = vunpack.c.l.b16 %v3597
    %v3855 = vunpack.c.l.b16 %v3598
    %v3856 = vunpack.c.l.b16 %v3599
    %v3857 = vunpack.c.l.b16 %v3600
    %v3858 = vunpack.c.l.b16 %v3601
    %v3859 = vunpack.c.l.b16 %v3602
    %v3860 = vunpack.c.l.b16 %v3603
    %v3861 = vunpack.c.l.b16 %v3604
    %v3862 = vunpack.c.l.b16 %v3605
    %v3863 = vunpack.c.l.b16 %v3606
    %v3864 = vunpack.c.l.b16 %v3607
    %v3865 = vunpack.c.l.b16 %v3608
    %v3866 = vunpack.c.l.b16 %v3609
    %v3867 = vunpack.c.l.b16 %v3610
    %v3868 = vunpack.c.l.b16 %v3611
    %v3869 = vunpack.c.l.b16 %v3612
    %v3870 = vunpack.c.l.b16 %v3613
    %v3871 = vunpack.c.l.b16 %v3614
    %v3872 = vunpack.c.l.b16 %v3615
    %v3873 = vunpack.c.l.b16 %v3616
    %v3874 = vunpack.c.l.b16 %v3617
    %v3875 = vunpack.c.l.b16 %v3618
    %v3876 = vunpack.c.l.b16 %v3619
    %v3877 = vunpack.c.l.b16 %v3620
    %v3878 = vunpack.c.l.b16 %v3621
    %v3879 = vunpack.c.l.b16 %v3622
    %v3880 = vunpack.c.l.b16 %v3623
    %v3881 = vunpack.c.l.b16 %v3624
    %v3882 = vunpack.c.l.b16 %v3625
    %v3883 = vunpack.c.l.b16 %v3626
    %v3884 = vunpack.c.l.b16 %v3627
    %v3885 = vunpack.c.l.b16 %v3628
    %v3886 = vunpack.c.l.b16 %v3629
    %v3887 = vunpack.c.l.b16 %v3630
    %v3888 = vunpack.c.l.b16 %v3631
    %v3889 = vunpack.c.l.b16 %v3632
    %v3890 = vunpack.c.l.b16 %v3633
    %v3891 = vunpack.c.l.b16 %v3634
    %v3892 = vunpack.c.l.b16 %v3635
    %v3893 = vunpack.c.l.b16 %v3636
    %v3894 = vunpack.c.l.b16 %v3637
    %v3895 = vunpack.c.l.b16 %v3638
    %v3896 = vunpack.c.l.b16 %v3639
    %v3897 = vunpack.c.l.b16 %v3640
    %v3898 = vunpack.c.l.b16 %v3641
    %v3899 = vunpack.c.l.b16 %v3642
    %v3900 = vunpack.c.l.b16 %v3643
    %v3901 = vunpack.c.l.b16 %v3644
    %v3902 = vunpack.c.l.b16 %v3645
    %v3903 = vunpack.c.l.b16 %v3646
    %v3904 = vunpack.c.l.b16 %v3647
    %v3905 = vunpack.c.l.b16 %v3648
    %v3906 = vunpack.c.l.b16 %v3649
    %v3907 = vunpack.c.l.b16 %v3650
    %v3908 = vunpack.c.l.b16 %v3651
    %v3909 = vunpack.c.l.b16 %v3652
    %v3910 = vunpack.c.l.b16 %v3653
    %v3911 = vunpack.c.l.b16 %v3654
    %v3912 = vunpack.c.l.b16 %v3655
    %v3913 = vunpack.c.l.b16 %v3656
    %v3914 = vunpack.c.l.b16 %v3657
    %v3915 = vunpack.c.l.b16 %v3658
    %v3916 = vunpack.c.l.b16 %v3659
    %v3917 = vunpack.c.l.b16 %v3660
    %v3918 = vunpack.c.l.b16 %v3661
    %v3919 = vunpack.c.l.b16 %v3662
    %v3920 = vunpack.c.l.b16 %v3663
    %v3921 = vunpack.c.l.b16 %v3664
    %v3922 = vunpack.c.l.b16 %v3665
    %v3923 = vunpack.c.l.b16 %v3666
    %v3924 = vunpack.c.l.b16 %v3667
    %v3925 = vunpack.c.l.b16 %v3668
    %v3926 = vunpack.c.l.b16 %v3669
    %v3927 = vunpack.c.l.b16 %v3670
    %v3928 = vunpack.c.l.b16 %v3671
    %v3929 = vunpack.c.l.b16 %v3672
    %v3930 = vunpack.c.l.b16 %v3673
    %v3931 = vunpack.c.l.b16 %v3674
    %v3932 = vunpack.c.l.b16 %v3675
    %v3933 = vunpack.c.l.b16 %v3676
    %v3934 = vunpack.c.l.b16 %v3677
    %v3935 = vunpack.c.l.b16 %v3678
    %v3936 = vunpack.c.l.b16 %v3679
    %v3937 = vunpack.c.l.b16 %v3680
    %v3938 = vunpack.c.l.b16 %v3681
    %v3939 = vunpack.c.l.b16 %v3682
    %v3940 = vunpack.c.l.b16 %v3683
    %v3941 = vunpack.c.l.b16 %v3684
    %v3942 = vunpack.c.l.b16 %v3685
    %v3943 = vunpack.c.l.b16 %v3686
    %v3944 = vunpack.c.l.b16 %v3687
    %v3945 = vunpack.c.l.b16 %v3688
    %v3946 = vunpack.c.l.b16 %v3689
    %v3947 = vunpack.c.l.b16 %v3690
    %v3948 = vunpack.c.l.b16 %v3691
    %v3949 = vunpack.c.l.b16 %v3692
    %v3950 = vunpack.c.l.b16 %v3693
    %v3951 = vunpack.c.l.b16 %v3694
    %v3952 = vunpack.c.l.b16 %v3695
    %v3953 = vunpack.c.l.b16 %v3696
    %v3954 = vunpack.c.l.b16 %v3697
    %v3955 = vunpack.c.l.b16 %v3698
    %v3956 = vunpack.c.l.b16 %v3699
    %v3957 = vunpack.c.l.b16 %v3700
    %v3958 = vunpack.c.l.b16 %v3701
    %v3959 = vunpack.c.l.b16 %v3702
    %v3960 = vunpack.c.l.b16 %v3703
    %v3961 = vunpack.c.l.b16 %v3704
    %v3962 = vunpack.c.l.b16 %v3705
    %v3963 = vunpack.c.l.b16 %v3706
    %v3964 = vunpack.c.l.b16 %v3707
    %v3965 = vunpack.c.l.b16 %v3708
    %v3966 = vunpack.c.l.b16 %v3709
    %v3967 = vunpack.c.l.b16 %v3710
    %v3968 = vunpack.c.l.b16 %v3711
    %v3969 = vunpack.c.l.b16 %v3712
    %v3970 = vunpack.c.l.b16 %v3713
    %v3971 = vunpack.c.l.b16 %v3714
    %v3972 = vunpack.c.l.b16 %v3715
    %v3973 = vunpack.c.l.b16 %v3716
    %v3974 = vunpack.c.l.b16 %v3717
    %v3975 = vunpack.c.l.b16 %v3718
    %v3976 = vpack.c.b16 %v3849, %v3848
    %v3977 = vpack.c.b16 %v3851, %v3850
    %v3978 = vpack.c.b16 %v3853, %v3852
    %v3979 = vpack.c.b16 %v3855, %v3854
    %v3980 = vpack.c.b16 %v3857, %v3856
    %v3981 = vpack.c.b16 %v3859, %v3858
    %v3982 = vpack.c.b16 %v3861, %v3860
    %v3983 = vpack.c.b16 %v3863, %v3862
    %v3984 = vpack.c.b16 %v3865, %v3864
    %v3985 = vpack.c.b16 %v3867, %v3866
    %v3986 = vpack.c.b16 %v3869, %v3868
    %v3987 = vpack.c.b16 %v3871, %v3870
    %v3988 = vpack.c.b16 %v3873, %v3872
    %v3989 = vpack.c.b16 %v3875, %v3874
    %v3990 = vpack.c.b16 %v3877, %v3876
    %v3991 = vpack.c.b16 %v3879, %v3878
    %v3992 = vpack.c.b16 %v3881, %v3880
    %v3993 = vpack.c.b16 %v3883, %v3882
    %v3994 = vpack.c.b16 %v3885, %v3884
    %v3995 = vpack.c.b16 %v3887, %v3886
    %v3996 = vpack.c.b16 %v3889, %v3888
    %v3997 = vpack.c.b16 %v3891, %v3890
    %v3998 = vpack.c.b16 %v3893, %v3892
    %v3999 = vpack.c.b16 %v3895, %v3894
    %v4000 = vpack.c.b16 %v3897, %v3896
    %v4001 = vpack.c.b16 %v3899, %v3898
    %v4002 = vpack.c.b16 %v3901, %v3900
    %v4003 = vpack.c.b16 %v3903, %v3902
    %v4004 = vpack.c.b16 %v3905, %v3904
    %v4005 = vpack.c.b16 %v3907, %v3906
    %v4006 = vpack.c.b16 %v3909, %v3908
    %v4007 = vpack.c.b16 %v3911, %v3910
    %v4008 = vpack.c.b16 %v3913, %v3912
    %v4009 = vpack.c.b16 %v3915, %v3914
    %v4010 = vpack.c.b16 %v3917, %v3916
    %v4011 = vpack.c.b16 %v3919, %v3918
    %v4012 = vpack.c.b16 %v3921, %v3920
    %v4013 = vpack.c.b16 %v3923, %v3922
    %v4014 = vpack.c.b16 %v3925, %v3924
    %v4015 = vpack.c.b16 %v3927, %v3926
    %v4016 = vpack.c.b16 %v3929, %v3928
    %v4017 = vpack.c.b16 %v3931, %v3930
    %v4018 = vpack.c.b16 %v3933, %v3932
    %v4019 = vpack.c.b16 %v3935, %v3934
    %v4020 = vpack.c.b16 %v3937, %v3936
    %v4021 = vpack.c.b16 %v3939, %v3938
    %v4022 = vpack.c.b16 %v3941, %v3940
    %v4023 = vpack.c.b16 %v3943, %v3942
    %v4024 = vpack.c.b16 %v3945, %v3944
    %v4025 = vpack.c.b16 %v3947, %v3946
    %v4026 = vpack.c.b16 %v3949, %v3948
    %v4027 = vpack.c.b16 %v3951, %v3950
    %v4028 = vpack.c.b16 %v3953, %v3952
    %v4029 = vpack.c.b16 %v3955, %v3954
    %v4030 = vpack.c.b16 %v3957, %v3956
    %v4031 = vpack.c.b16 %v3959, %v3958
    %v4032 = vpack.c.b16 %v3961, %v3960
    %v4033 = vpack.c.b16 %v3963, %v3962
    %v4034 = vpack.c.b16 %v3965, %v3964
    %v4035 = vpack.c.b16 %v3967, %v3966
    %v4036 = vpack.c.b16 %v3969, %v3968
    %v4037 = vpack.c.b16 %v3971, %v3970
    %v4038 = vpack.c.b16 %v3973, %v3972
    %v4039 = vpack.c.b16 %v3975, %v3974
    %4104 = vmatpush.bf16.msra.mxu0 %v3983
    %4105 = vmatpush.bf16.msra.mxu0 %v3982
    %4106 = vmatpush.bf16.msra.mxu0 %v3981
    %4107 = vmatpush.bf16.msra.mxu0 %v3980
    %4108 = vmatpush.bf16.msra.mxu0 %v3979
    %4109 = vmatpush.bf16.msra.mxu0 %v3978
    %4110 = vmatpush.bf16.msra.mxu0 %v3977
    %4111 = vmatpush.bf16.msra.mxu0 %v3976
    %4112 = vmatmul.bf16.gmra.mxu0 %v3583
    %v4113 = vpop.f32.mrf.mxu0
    %v4114 = vadd.f32 %v3719, %v4113
    %v4115 = vpop.f32.mrf.mxu0
    %4116 = vdwg.mxu0
    %4117 = vmatpush.bf16.msra.mxu0 %v3991
    %4118 = vmatpush.bf16.msra.mxu0 %v3990
    %4119 = vmatpush.bf16.msra.mxu0 %v3989
    %4120 = vmatpush.bf16.msra.mxu0 %v3988
    %4121 = vmatpush.bf16.msra.mxu0 %v3987
    %4122 = vmatpush.bf16.msra.mxu0 %v3986
    %4123 = vmatpush.bf16.msra.mxu0 %v3985
    %4124 = vmatpush.bf16.msra.mxu0 %v3984
    %4125 = vmatmul.bf16.gmra.mxu0 %v3584
    %v4126 = vpop.f32.mrf.mxu0
    %v4127 = vadd.f32 %v4114, %v4126
    %v4128 = vpop.f32.mrf.mxu0
    %4129 = vdwg.mxu0
    %4130 = vmatpush.bf16.msra.mxu0 %v3999
    %4131 = vmatpush.bf16.msra.mxu0 %v3998
    %4132 = vmatpush.bf16.msra.mxu0 %v3997
    %4133 = vmatpush.bf16.msra.mxu0 %v3996
    %4134 = vmatpush.bf16.msra.mxu0 %v3995
    %4135 = vmatpush.bf16.msra.mxu0 %v3994
    %4136 = vmatpush.bf16.msra.mxu0 %v3993
    %4137 = vmatpush.bf16.msra.mxu0 %v3992
    %4138 = vmatmul.bf16.gmra.mxu0 %v3585
    %v4139 = vpop.f32.mrf.mxu0
    %v4140 = vadd.f32 %v4127, %v4139
    %v4141 = vpop.f32.mrf.mxu0
    %4142 = vdwg.mxu0
    %4143 = vmatpush.bf16.msra.mxu0 %v4007
    %4144 = vmatpush.bf16.msra.mxu0 %v4006
    %4145 = vmatpush.bf16.msra.mxu0 %v4005
    %4146 = vmatpush.bf16.msra.mxu0 %v4004
    %4147 = vmatpush.bf16.msra.mxu0 %v4003
    %4148 = vmatpush.bf16.msra.mxu0 %v4002
    %4149 = vmatpush.bf16.msra.mxu0 %v4001
    %4150 = vmatpush.bf16.msra.mxu0 %v4000
    %4151 = vmatmul.bf16.gmra.mxu0 %v3586
    %v4152 = vpop.f32.mrf.mxu0
    %v4153 = vadd.f32 %v4140, %v4152
    %v4154 = vpop.f32.mrf.mxu0
    %4155 = vdwg.mxu0
    %4156 = vmatpush.bf16.msra.mxu0 %v4015
    %4157 = vmatpush.bf16.msra.mxu0 %v4014
    %4158 = vmatpush.bf16.msra.mxu0 %v4013
    %4159 = vmatpush.bf16.msra.mxu0 %v4012
    %4160 = vmatpush.bf16.msra.mxu0 %v4011
    %4161 = vmatpush.bf16.msra.mxu0 %v4010
    %4162 = vmatpush.bf16.msra.mxu0 %v4009
    %4163 = vmatpush.bf16.msra.mxu0 %v4008
    %4164 = vmatmul.bf16.gmra.mxu0 %v3587
    %v4165 = vpop.f32.mrf.mxu0
    %v4166 = vadd.f32 %v4153, %v4165
    %v4167 = vpop.f32.mrf.mxu0
    %4168 = vdwg.mxu0
    %4169 = vmatpush.bf16.msra.mxu0 %v4023
    %4170 = vmatpush.bf16.msra.mxu0 %v4022
    %4171 = vmatpush.bf16.msra.mxu0 %v4021
    %4172 = vmatpush.bf16.msra.mxu0 %v4020
    %4173 = vmatpush.bf16.msra.mxu0 %v4019
    %4174 = vmatpush.bf16.msra.mxu0 %v4018
    %4175 = vmatpush.bf16.msra.mxu0 %v4017
    %4176 = vmatpush.bf16.msra.mxu0 %v4016
    %4177 = vmatmul.bf16.gmra.mxu0 %v3588
    %v4178 = vpop.f32.mrf.mxu0
    %v4179 = vadd.f32 %v4166, %v4178
    %v4180 = vpop.f32.mrf.mxu0
    %4181 = vdwg.mxu0
    %4182 = vmatpush.bf16.msra.mxu0 %v4031
    %4183 = vmatpush.bf16.msra.mxu0 %v4030
    %4184 = vmatpush.bf16.msra.mxu0 %v4029
    %4185 = vmatpush.bf16.msra.mxu0 %v4028
    %4186 = vmatpush.bf16.msra.mxu0 %v4027
    %4187 = vmatpush.bf16.msra.mxu0 %v4026
    %4188 = vmatpush.bf16.msra.mxu0 %v4025
    %4189 = vmatpush.bf16.msra.mxu0 %v4024
    %4190 = vmatmul.bf16.gmra.mxu0 %v3589
    %v4191 = vpop.f32.mrf.mxu0
    %v4192 = vadd.f32 %v4179, %v4191
    %v4193 = vpop.f32.mrf.mxu0
    %4194 = vdwg.mxu0
    %4195 = vmatpush.bf16.msra.mxu0 %v4039
    %4196 = vmatpush.bf16.msra.mxu0 %v4038
    %4197 = vmatpush.bf16.msra.mxu0 %v4037
    %4198 = vmatpush.bf16.msra.mxu0 %v4036
    %4199 = vmatpush.bf16.msra.mxu0 %v4035
    %4200 = vmatpush.bf16.msra.mxu0 %v4034
    %4201 = vmatpush.bf16.msra.mxu0 %v4033
    %4202 = vmatpush.bf16.msra.mxu0 %v4032
    %4203 = vmatmul.bf16.gmra.mxu0 %v3590
    %v4204 = vpop.f32.mrf.mxu0
    %v4205 = vadd.f32 %v4192, %v4204
    %v4206 = vpop.f32.mrf.mxu0
    %4207 = vdwg.mxu0
    %v4208 = vmul.f32 %v4205, 0.5
    %v4209 = vmul.f32 %v4208, 1.442695
    %v4210 = vpow.pop %v4209
    %4212 = vrot.lane.b32.xlu0 %v4210, 120
    %v4213 = vpop.permute.xlu0 %4212
    %v4215 = vmul.f32 %v492, %v4213
    %v4216 = vadd.f32 %v4205, %v4215
    %s4217 = smul.u32 4, 1
    %s4218 = smul.u32 %s4217, 8
    %s4219 = sshll.u32 %s4218, 4
    %4220 = dma.done %s367, %s4219
    %s4221 = smul.u32 2, 1
    %s4222 = smul.u32 %s4221, 8
    %s4223 = sshll.u32 %s4222, 4
    %4224 = dma.done %s392, %s4223
    %v4225 = vpack.c.bf16 %v4216, %v4216
    %v4226 = vld [vmem:[#allocation6] sm:$0xff]
    %v4227 = vld [vmem:[#allocation6 + $0x8] sm:$0xff]
    %v4228 = vld [vmem:[#allocation6 + $0x10] sm:$0xff]
    %v4229 = vld [vmem:[#allocation6 + $0x18] sm:$0xff]
    %v4230 = vpack.c.bf16 %v491, %v491
    %v4231 = vld [vmem:[#allocation7] sm:$0xff]
    %v4232 = vld [vmem:[#allocation7 + $0x8] sm:$0xff]
    %4234 = vst [vmem:[#allocation1] ss:$4 sm:$0xff] %v4231
    %s4236 = scalar_lea.vmem [#allocation1], 32
    %4237 = vst [vmem:[%s4236] ss:$4 sm:$0xff] %v4232
    %v4238 = vld.sshfl [vmem:[#allocation1] sm:$0xff pattern:$0x73625140]
    %v4239 = vld.sshfl [vmem:[#allocation1 + $0x8] sm:$0xff pattern:$0x73625140]
    %v4240 = vld.sshfl [vmem:[#allocation1 + $0x10] sm:$0xff pattern:$0x73625140]
    %v4241 = vld.sshfl [vmem:[#allocation1 + $0x18] sm:$0xff pattern:$0x73625140]
    %v4242 = vld.sshfl [vmem:[#allocation1 + $0x20] sm:$0xff pattern:$0x73625140]
    %v4243 = vld.sshfl [vmem:[#allocation1 + $0x28] sm:$0xff pattern:$0x73625140]
    %v4244 = vld.sshfl [vmem:[#allocation1 + $0x30] sm:$0xff pattern:$0x73625140]
    %v4245 = vld.sshfl [vmem:[#allocation1 + $0x38] sm:$0xff pattern:$0x73625140]
    %vm4246 = vcmask 31744
    %v4248 = vsel %vm4246, %v4230, 0
    %vm4250 = vcmask 1041408
    %v4251 = vsel %vm4250, %v4238, 0
    %v4253 = vsel %vm4250, %v4239, 0
    %v4255 = vsel %vm4250, %v4240, 0
    %v4257 = vsel %vm4250, %v4241, 0
    %v4259 = vsel %vm4250, %v4242, 0
    %v4261 = vsel %vm4250, %v4243, 0
    %v4263 = vsel %vm4250, %v4244, 0
    %v4265 = vsel %vm4250, %v4245, 0
    %4267 = vmatpush.bf16.msra.mxu0 0
    %4268 = vmatpush.bf16.msra.mxu0 0
    %4269 = vmatpush.bf16.msra.mxu0 0
    %4270 = vmatpush.bf16.msra.mxu0 0
    %4271 = vmatpush.bf16.msra.mxu0 0
    %4272 = vmatpush.bf16.msra.mxu0 0
    %4273 = vmatpush.bf16.msra.mxu0 0
    %4274 = vmatpush.bf16.msra.mxu0 %v4251
    %4275 = vmatmul.bf16.gmra.mxu0 %v4248
    %v4276 = vpop.f32.mrf.mxu0
    %v4277 = vadd.f32 0.0, %v4276
    %v4278 = vpop.f32.mrf.mxu0
    %4279 = vdwg.mxu0
    %4280 = vmatpush.bf16.msra.mxu0 0
    %4281 = vmatpush.bf16.msra.mxu0 0
    %4282 = vmatpush.bf16.msra.mxu0 0
    %4283 = vmatpush.bf16.msra.mxu0 0
    %4284 = vmatpush.bf16.msra.mxu0 0
    %4285 = vmatpush.bf16.msra.mxu0 0
    %4286 = vmatpush.bf16.msra.mxu0 0
    %4287 = vmatpush.bf16.msra.mxu0 %v4253
    %4288 = vmatmul.bf16.gmra.mxu0 %v4248
    %v4289 = vpop.f32.mrf.mxu0
    %v4290 = vadd.f32 0.0, %v4289
    %v4291 = vpop.f32.mrf.mxu0
    %4292 = vdwg.mxu0
    %4293 = vmatpush.bf16.msra.mxu0 0
    %4294 = vmatpush.bf16.msra.mxu0 0
    %4295 = vmatpush.bf16.msra.mxu0 0
    %4296 = vmatpush.bf16.msra.mxu0 0
    %4297 = vmatpush.bf16.msra.mxu0 0
    %4298 = vmatpush.bf16.msra.mxu0 0
    %4299 = vmatpush.bf16.msra.mxu0 0
    %4300 = vmatpush.bf16.msra.mxu0 %v4255
    %4301 = vmatmul.bf16.gmra.mxu0 %v4248
    %v4302 = vpop.f32.mrf.mxu0
    %v4303 = vadd.f32 0.0, %v4302
    %v4304 = vpop.f32.mrf.mxu0
    %4305 = vdwg.mxu0
    %4306 = vmatpush.bf16.msra.mxu0 0
    %4307 = vmatpush.bf16.msra.mxu0 0
    %4308 = vmatpush.bf16.msra.mxu0 0
    %4309 = vmatpush.bf16.msra.mxu0 0
    %4310 = vmatpush.bf16.msra.mxu0 0
    %4311 = vmatpush.bf16.msra.mxu0 0
    %4312 = vmatpush.bf16.msra.mxu0 0
    %4313 = vmatpush.bf16.msra.mxu0 %v4257
    %4314 = vmatmul.bf16.gmra.mxu0 %v4248
    %v4315 = vpop.f32.mrf.mxu0
    %v4316 = vadd.f32 0.0, %v4315
    %v4317 = vpop.f32.mrf.mxu0
    %4318 = vdwg.mxu0
    %4319 = vmatpush.bf16.msra.mxu0 0
    %4320 = vmatpush.bf16.msra.mxu0 0
    %4321 = vmatpush.bf16.msra.mxu0 0
    %4322 = vmatpush.bf16.msra.mxu0 0
    %4323 = vmatpush.bf16.msra.mxu0 0
    %4324 = vmatpush.bf16.msra.mxu0 0
    %4325 = vmatpush.bf16.msra.mxu0 0
    %4326 = vmatpush.bf16.msra.mxu0 %v4259
    %4327 = vmatmul.bf16.gmra.mxu0 %v4248
    %v4328 = vpop.f32.mrf.mxu0
    %v4329 = vadd.f32 0.0, %v4328
    %v4330 = vpop.f32.mrf.mxu0
    %4331 = vdwg.mxu0
    %4332 = vmatpush.bf16.msra.mxu0 0
    %4333 = vmatpush.bf16.msra.mxu0 0
    %4334 = vmatpush.bf16.msra.mxu0 0
    %4335 = vmatpush.bf16.msra.mxu0 0
    %4336 = vmatpush.bf16.msra.mxu0 0
    %4337 = vmatpush.bf16.msra.mxu0 0
    %4338 = vmatpush.bf16.msra.mxu0 0
    %4339 = vmatpush.bf16.msra.mxu0 %v4261
    %4340 = vmatmul.bf16.gmra.mxu0 %v4248
    %v4341 = vpop.f32.mrf.mxu0
    %v4342 = vadd.f32 0.0, %v4341
    %v4343 = vpop.f32.mrf.mxu0
    %4344 = vdwg.mxu0
    %4345 = vmatpush.bf16.msra.mxu0 0
    %4346 = vmatpush.bf16.msra.mxu0 0
    %4347 = vmatpush.bf16.msra.mxu0 0
    %4348 = vmatpush.bf16.msra.mxu0 0
    %4349 = vmatpush.bf16.msra.mxu0 0
    %4350 = vmatpush.bf16.msra.mxu0 0
    %4351 = vmatpush.bf16.msra.mxu0 0
    %4352 = vmatpush.bf16.msra.mxu0 %v4263
    %4353 = vmatmul.bf16.gmra.mxu0 %v4248
    %v4354 = vpop.f32.mrf.mxu0
    %v4355 = vadd.f32 0.0, %v4354
    %v4356 = vpop.f32.mrf.mxu0
    %4357 = vdwg.mxu0
    %4358 = vmatpush.bf16.msra.mxu0 0
    %4359 = vmatpush.bf16.msra.mxu0 0
    %4360 = vmatpush.bf16.msra.mxu0 0
    %4361 = vmatpush.bf16.msra.mxu0 0
    %4362 = vmatpush.bf16.msra.mxu0 0
    %4363 = vmatpush.bf16.msra.mxu0 0
    %4364 = vmatpush.bf16.msra.mxu0 0
    %4365 = vmatpush.bf16.msra.mxu0 %v4265
    %4366 = vmatmul.bf16.gmra.mxu0 %v4248
    %v4367 = vpop.f32.mrf.mxu0
    %v4368 = vadd.f32 0.0, %v4367
    %v4369 = vpop.f32.mrf.mxu0
    %4370 = vdwg.mxu0
    %v4375 = vunpack.c.l.b16 %v4226
    %v4376 = vunpack.c.h.b16 %v4226
    %v4377 = vunpack.c.l.b16 %v4227
    %v4378 = vunpack.c.h.b16 %v4227
    %v4379 = vunpack.c.l.b16 %v4228
    %v4380 = vunpack.c.h.b16 %v4228
    %v4381 = vunpack.c.l.b16 %v4229
    %v4382 = vunpack.c.h.b16 %v4229
    %v4383 = vpack.c.b16 %v4375, %v4375
    %v4384 = vpack.c.b16 %v4376, %v4376
    %v4385 = vpack.c.b16 %v4377, %v4377
    %v4386 = vpack.c.b16 %v4378, %v4378
    %v4387 = vpack.c.b16 %v4379, %v4379
    %v4388 = vpack.c.b16 %v4380, %v4380
    %v4389 = vpack.c.b16 %v4381, %v4381
    %v4390 = vpack.c.b16 %v4382, %v4382
    %vm4391 = vcmask 64512
    %v4393 = vsel %vm4391, %v4225, 0
    %vm4395 = vcmask 1043456
    %v4397 = vsel %vm4395, %v4383, 0
    %v4400 = vsel %vm4395, %v4384, 0
    %v4403 = vsel %vm4395, %v4385, 0
    %v4406 = vsel %vm4395, %v4386, 0
    %v4409 = vsel %vm4395, %v4387, 0
    %v4412 = vsel %vm4395, %v4388, 0
    %v4415 = vsel %vm4395, %v4389, 0
    %v4418 = vsel %vm4395, %v4390, 0
    %4420 = vmatpush.bf16.msra.mxu0 0
    %4421 = vmatpush.bf16.msra.mxu0 0
    %4422 = vmatpush.bf16.msra.mxu0 0
    %4423 = vmatpush.bf16.msra.mxu0 0
    %4424 = vmatpush.bf16.msra.mxu0 0
    %4425 = vmatpush.bf16.msra.mxu0 0
    %4426 = vmatpush.bf16.msra.mxu0 0
    %4427 = vmatpush.bf16.msra.mxu0 %v4397
    %4428 = vmatmul.bf16.gmra.mxu0 %v4393
    %v4429 = vpop.f32.mrf.mxu0
    %v4430 = vadd.f32 %v4277, %v4429
    %v4431 = vpop.f32.mrf.mxu0
    %4432 = vdwg.mxu0
    %4433 = vmatpush.bf16.msra.mxu0 0
    %4434 = vmatpush.bf16.msra.mxu0 0
    %4435 = vmatpush.bf16.msra.mxu0 0
    %4436 = vmatpush.bf16.msra.mxu0 0
    %4437 = vmatpush.bf16.msra.mxu0 0
    %4438 = vmatpush.bf16.msra.mxu0 0
    %4439 = vmatpush.bf16.msra.mxu0 0
    %4440 = vmatpush.bf16.msra.mxu0 %v4400
    %4441 = vmatmul.bf16.gmra.mxu0 %v4393
    %v4442 = vpop.f32.mrf.mxu0
    %v4443 = vadd.f32 %v4290, %v4442
    %v4444 = vpop.f32.mrf.mxu0
    %4445 = vdwg.mxu0
    %4446 = vmatpush.bf16.msra.mxu0 0
    %4447 = vmatpush.bf16.msra.mxu0 0
    %4448 = vmatpush.bf16.msra.mxu0 0
    %4449 = vmatpush.bf16.msra.mxu0 0
    %4450 = vmatpush.bf16.msra.mxu0 0
    %4451 = vmatpush.bf16.msra.mxu0 0
    %4452 = vmatpush.bf16.msra.mxu0 0
    %4453 = vmatpush.bf16.msra.mxu0 %v4403
    %4454 = vmatmul.bf16.gmra.mxu0 %v4393
    %v4455 = vpop.f32.mrf.mxu0
    %v4456 = vadd.f32 %v4303, %v4455
    %v4457 = vpop.f32.mrf.mxu0
    %4458 = vdwg.mxu0
    %4459 = vmatpush.bf16.msra.mxu0 0
    %4460 = vmatpush.bf16.msra.mxu0 0
    %4461 = vmatpush.bf16.msra.mxu0 0
    %4462 = vmatpush.bf16.msra.mxu0 0
    %4463 = vmatpush.bf16.msra.mxu0 0
    %4464 = vmatpush.bf16.msra.mxu0 0
    %4465 = vmatpush.bf16.msra.mxu0 0
    %4466 = vmatpush.bf16.msra.mxu0 %v4406
    %4467 = vmatmul.bf16.gmra.mxu0 %v4393
    %v4468 = vpop.f32.mrf.mxu0
    %v4469 = vadd.f32 %v4316, %v4468
    %v4470 = vpop.f32.mrf.mxu0
    %4471 = vdwg.mxu0
    %4472 = vmatpush.bf16.msra.mxu0 0
    %4473 = vmatpush.bf16.msra.mxu0 0
    %4474 = vmatpush.bf16.msra.mxu0 0
    %4475 = vmatpush.bf16.msra.mxu0 0
    %4476 = vmatpush.bf16.msra.mxu0 0
    %4477 = vmatpush.bf16.msra.mxu0 0
    %4478 = vmatpush.bf16.msra.mxu0 0
    %4479 = vmatpush.bf16.msra.mxu0 %v4409
    %4480 = vmatmul.bf16.gmra.mxu0 %v4393
    %v4481 = vpop.f32.mrf.mxu0
    %v4482 = vadd.f32 %v4329, %v4481
    %v4483 = vpop.f32.mrf.mxu0
    %4484 = vdwg.mxu0
    %4485 = vmatpush.bf16.msra.mxu0 0
    %4486 = vmatpush.bf16.msra.mxu0 0
    %4487 = vmatpush.bf16.msra.mxu0 0
    %4488 = vmatpush.bf16.msra.mxu0 0
    %4489 = vmatpush.bf16.msra.mxu0 0
    %4490 = vmatpush.bf16.msra.mxu0 0
    %4491 = vmatpush.bf16.msra.mxu0 0
    %4492 = vmatpush.bf16.msra.mxu0 %v4412
    %4493 = vmatmul.bf16.gmra.mxu0 %v4393
    %v4494 = vpop.f32.mrf.mxu0
    %v4495 = vadd.f32 %v4342, %v4494
    %v4496 = vpop.f32.mrf.mxu0
    %4497 = vdwg.mxu0
    %4498 = vmatpush.bf16.msra.mxu0 0
    %4499 = vmatpush.bf16.msra.mxu0 0
    %4500 = vmatpush.bf16.msra.mxu0 0
    %4501 = vmatpush.bf16.msra.mxu0 0
    %4502 = vmatpush.bf16.msra.mxu0 0
    %4503 = vmatpush.bf16.msra.mxu0 0
    %4504 = vmatpush.bf16.msra.mxu0 0
    %4505 = vmatpush.bf16.msra.mxu0 %v4415
    %4506 = vmatmul.bf16.gmra.mxu0 %v4393
    %v4507 = vpop.f32.mrf.mxu0
    %v4508 = vadd.f32 %v4355, %v4507
    %v4509 = vpop.f32.mrf.mxu0
    %4510 = vdwg.mxu0
    %4511 = vmatpush.bf16.msra.mxu0 0
    %4512 = vmatpush.bf16.msra.mxu0 0
    %4513 = vmatpush.bf16.msra.mxu0 0
    %4514 = vmatpush.bf16.msra.mxu0 0
    %4515 = vmatpush.bf16.msra.mxu0 0
    %4516 = vmatpush.bf16.msra.mxu0 0
    %4517 = vmatpush.bf16.msra.mxu0 0
    %4518 = vmatpush.bf16.msra.mxu0 %v4418
    %4519 = vmatmul.bf16.gmra.mxu0 %v4393
    %v4520 = vpop.f32.mrf.mxu0
    %v4521 = vadd.f32 %v4368, %v4520
    %v4522 = vpop.f32.mrf.mxu0
    %4523 = vdwg.mxu0
    %s4524 = scalar_lea.vmem [#allocation12], 66
    %v4525 = vld [vmem:[%s4524] ss:$8 sm:$0xf]
    %v4526 = vld [vmem:[%s4524] ss:$8 sm:$0xf0]
    %v4527 = vor.u32 %v4525, %v4526
    %v4529 = vperm.slane %v4527, 0
    %v4530 = vperm.slane %v4527, 1
    %v4531 = vperm.slane %v4527, 2
    %v4532 = vperm.slane %v4527, 3
    %v4533 = vperm.slane %v4527, 4
    %v4534 = vperm.slane %v4527, 5
    %v4535 = vperm.slane %v4527, 6
    %v4536 = vperm.slane %v4527, 7
    %v4545 = vadd.f32 %v4430, %v4529
    %v4546 = vadd.f32 %v4443, %v4530
    %v4547 = vadd.f32 %v4456, %v4531
    %v4548 = vadd.f32 %v4469, %v4532
    %v4549 = vadd.f32 %v4482, %v4533
    %v4550 = vadd.f32 %v4495, %v4534
    %v4551 = vadd.f32 %v4508, %v4535
    %v4552 = vadd.f32 %v4521, %v4536
    %vm4553 = vcmp.gt.f32.partialorder %v4545, 0.0
    %vm4554 = vcmp.gt.f32.partialorder %v4546, 0.0
    %vm4555 = vcmp.gt.f32.partialorder %v4547, 0.0
    %vm4556 = vcmp.gt.f32.partialorder %v4548, 0.0
    %vm4557 = vcmp.gt.f32.partialorder %v4549, 0.0
    %vm4558 = vcmp.gt.f32.partialorder %v4550, 0.0
    %vm4559 = vcmp.gt.f32.partialorder %v4551, 0.0
    %vm4560 = vcmp.gt.f32.partialorder %v4552, 0.0
    %v4561 = vmul.f32 %v4545, 0.2
    %v4562 = vmul.f32 %v4546, 0.2
    %v4563 = vmul.f32 %v4547, 0.2
    %v4564 = vmul.f32 %v4548, 0.2
    %v4565 = vmul.f32 %v4549, 0.2
    %v4566 = vmul.f32 %v4550, 0.2
    %v4567 = vmul.f32 %v4551, 0.2
    %v4568 = vmul.f32 %v4552, 0.2
    %v4569 = vsel %vm4553, %v4545, %v4561
    %v4570 = vsel %vm4554, %v4546, %v4562
    %v4571 = vsel %vm4555, %v4547, %v4563
    %v4572 = vsel %vm4556, %v4548, %v4564
    %v4573 = vsel %vm4557, %v4549, %v4565
    %v4574 = vsel %vm4558, %v4550, %v4566
    %v4575 = vsel %vm4559, %v4551, %v4567
    %v4576 = vsel %vm4560, %v4552, %v4568
    %v4577 = vrot.slane %v4569, 4
    %v4578 = vadd.f32 %v4569, %v4577
    %v4579 = vrot.slane %v4578, 2
    %v4580 = vadd.f32 %v4578, %v4579
    %v4581 = vrot.slane %v4580, 1
    %v4582 = vadd.f32 %v4580, %v4581
    %v4583 = vrot.slane %v4570, 4
    %v4584 = vadd.f32 %v4570, %v4583
    %v4585 = vrot.slane %v4584, 2
    %v4586 = vadd.f32 %v4584, %v4585
    %v4587 = vrot.slane %v4586, 1
    %v4588 = vadd.f32 %v4586, %v4587
    %v4589 = vrot.slane %v4571, 4
    %v4590 = vadd.f32 %v4571, %v4589
    %v4591 = vrot.slane %v4590, 2
    %v4592 = vadd.f32 %v4590, %v4591
    %v4593 = vrot.slane %v4592, 1
    %v4594 = vadd.f32 %v4592, %v4593
    %v4595 = vrot.slane %v4572, 4
    %v4596 = vadd.f32 %v4572, %v4595
    %v4597 = vrot.slane %v4596, 2
    %v4598 = vadd.f32 %v4596, %v4597
    %v4599 = vrot.slane %v4598, 1
    %v4600 = vadd.f32 %v4598, %v4599
    %v4601 = vrot.slane %v4573, 4
    %v4602 = vadd.f32 %v4573, %v4601
    %v4603 = vrot.slane %v4602, 2
    %v4604 = vadd.f32 %v4602, %v4603
    %v4605 = vrot.slane %v4604, 1
    %v4606 = vadd.f32 %v4604, %v4605
    %v4607 = vrot.slane %v4574, 4
    %v4608 = vadd.f32 %v4574, %v4607
    %v4609 = vrot.slane %v4608, 2
    %v4610 = vadd.f32 %v4608, %v4609
    %v4611 = vrot.slane %v4610, 1
    %v4612 = vadd.f32 %v4610, %v4611
    %v4613 = vrot.slane %v4575, 4
    %v4614 = vadd.f32 %v4575, %v4613
    %v4615 = vrot.slane %v4614, 2
    %v4616 = vadd.f32 %v4614, %v4615
    %v4617 = vrot.slane %v4616, 1
    %v4618 = vadd.f32 %v4616, %v4617
    %v4619 = vrot.slane %v4576, 4
    %v4620 = vadd.f32 %v4576, %v4619
    %v4621 = vrot.slane %v4620, 2
    %v4622 = vadd.f32 %v4620, %v4621
    %v4623 = vrot.slane %v4622, 1
    %v4624 = vadd.f32 %v4622, %v4623
    %v4625 = vmul.f32 %v4582, %v570
    %v4626 = vmul.f32 %v4588, %v570
    %v4627 = vmul.f32 %v4594, %v570
    %v4628 = vmul.f32 %v4600, %v570
    %v4629 = vmul.f32 %v4606, %v570
    %v4630 = vmul.f32 %v4612, %v570
    %v4631 = vmul.f32 %v4618, %v570
    %v4632 = vmul.f32 %v4624, %v570
    %v4633 = vsub.f32 %v4569, %v4625
    %v4634 = vsub.f32 %v4570, %v4626
    %v4635 = vsub.f32 %v4571, %v4627
    %v4636 = vsub.f32 %v4572, %v4628
    %v4637 = vsub.f32 %v4573, %v4629
    %v4638 = vsub.f32 %v4574, %v4630
    %v4639 = vsub.f32 %v4575, %v4631
    %v4640 = vsub.f32 %v4576, %v4632
    %v4641 = vmul.f32 %v4633, %v4633
    %v4642 = vmul.f32 %v4634, %v4634
    %v4643 = vmul.f32 %v4635, %v4635
    %v4644 = vmul.f32 %v4636, %v4636
    %v4645 = vmul.f32 %v4637, %v4637
    %v4646 = vmul.f32 %v4638, %v4638
    %v4647 = vmul.f32 %v4639, %v4639
    %v4648 = vmul.f32 %v4640, %v4640
    %v4649 = vrot.slane %v4641, 4
    %v4650 = vadd.f32 %v4641, %v4649
    %v4651 = vrot.slane %v4650, 2
    %v4652 = vadd.f32 %v4650, %v4651
    %v4653 = vrot.slane %v4652, 1
    %v4654 = vadd.f32 %v4652, %v4653
    %v4655 = vrot.slane %v4642, 4
    %v4656 = vadd.f32 %v4642, %v4655
    %v4657 = vrot.slane %v4656, 2
    %v4658 = vadd.f32 %v4656, %v4657
    %v4659 = vrot.slane %v4658, 1
    %v4660 = vadd.f32 %v4658, %v4659
    %v4661 = vrot.slane %v4643, 4
    %v4662 = vadd.f32 %v4643, %v4661
    %v4663 = vrot.slane %v4662, 2
    %v4664 = vadd.f32 %v4662, %v4663
    %v4665 = vrot.slane %v4664, 1
    %v4666 = vadd.f32 %v4664, %v4665
    %v4667 = vrot.slane %v4644, 4
    %v4668 = vadd.f32 %v4644, %v4667
    %v4669 = vrot.slane %v4668, 2
    %v4670 = vadd.f32 %v4668, %v4669
    %v4671 = vrot.slane %v4670, 1
    %v4672 = vadd.f32 %v4670, %v4671
    %v4673 = vrot.slane %v4645, 4
    %v4674 = vadd.f32 %v4645, %v4673
    %v4675 = vrot.slane %v4674, 2
    %v4676 = vadd.f32 %v4674, %v4675
    %v4677 = vrot.slane %v4676, 1
    %v4678 = vadd.f32 %v4676, %v4677
    %v4679 = vrot.slane %v4646, 4
    %v4680 = vadd.f32 %v4646, %v4679
    %v4681 = vrot.slane %v4680, 2
    %v4682 = vadd.f32 %v4680, %v4681
    %v4683 = vrot.slane %v4682, 1
    %v4684 = vadd.f32 %v4682, %v4683
    %v4685 = vrot.slane %v4647, 4
    %v4686 = vadd.f32 %v4647, %v4685
    %v4687 = vrot.slane %v4686, 2
    %v4688 = vadd.f32 %v4686, %v4687
    %v4689 = vrot.slane %v4688, 1
    %v4690 = vadd.f32 %v4688, %v4689
    %v4691 = vrot.slane %v4648, 4
    %v4692 = vadd.f32 %v4648, %v4691
    %v4693 = vrot.slane %v4692, 2
    %v4694 = vadd.f32 %v4692, %v4693
    %v4695 = vrot.slane %v4694, 1
    %v4696 = vadd.f32 %v4694, %v4695
    %v4697 = vmul.f32 %v4654, %v570
    %v4698 = vmul.f32 %v4660, %v570
    %v4699 = vmul.f32 %v4666, %v570
    %v4700 = vmul.f32 %v4672, %v570
    %v4701 = vmul.f32 %v4678, %v570
    %v4702 = vmul.f32 %v4684, %v570
    %v4703 = vmul.f32 %v4690, %v570
    %v4704 = vmul.f32 %v4696, %v570
    %v4705 = vadd.f32 %v4697, 1e-05
    %v4706 = vadd.f32 %v4698, 1e-05
    %v4707 = vadd.f32 %v4699, 1e-05
    %v4708 = vadd.f32 %v4700, 1e-05
    %v4709 = vadd.f32 %v4701, 1e-05
    %v4710 = vadd.f32 %v4702, 1e-05
    %v4711 = vadd.f32 %v4703, 1e-05
    %v4712 = vadd.f32 %v4704, 1e-05
    %v4713 = vrsqrt.pop %v4705
    %v4714 = vmul.f32 %v4713, %v4705
    %v4715 = vmul.f32 %v4714, %v4713
    %v4716 = vmul.f32 0.5, %v4715
    %v4717 = vsub.f32 1.5, %v4716
    %v4718 = vmul.f32 %v4713, %v4717
    %vm4719 = vweird.f32 %v4705
    %vm4720 = vweird.f32 %v4713
    %vm4721 = vmor %vm4719, %vm4720
    %v4722 = vsel %vm4721, %v4713, %v4718
    %v4723 = vrsqrt.pop %v4706
    %v4724 = vmul.f32 %v4723, %v4706
    %v4725 = vmul.f32 %v4724, %v4723
    %v4726 = vmul.f32 0.5, %v4725
    %v4727 = vsub.f32 1.5, %v4726
    %v4728 = vmul.f32 %v4723, %v4727
    %vm4729 = vweird.f32 %v4706
    %vm4730 = vweird.f32 %v4723
    %vm4731 = vmor %vm4729, %vm4730
    %v4732 = vsel %vm4731, %v4723, %v4728
    %v4733 = vrsqrt.pop %v4707
    %v4734 = vmul.f32 %v4733, %v4707
    %v4735 = vmul.f32 %v4734, %v4733
    %v4736 = vmul.f32 0.5, %v4735
    %v4737 = vsub.f32 1.5, %v4736
    %v4738 = vmul.f32 %v4733, %v4737
    %vm4739 = vweird.f32 %v4707
    %vm4740 = vweird.f32 %v4733
    %vm4741 = vmor %vm4739, %vm4740
    %v4742 = vsel %vm4741, %v4733, %v4738
    %v4743 = vrsqrt.pop %v4708
    %v4744 = vmul.f32 %v4743, %v4708
    %v4745 = vmul.f32 %v4744, %v4743
    %v4746 = vmul.f32 0.5, %v4745
    %v4747 = vsub.f32 1.5, %v4746
    %v4748 = vmul.f32 %v4743, %v4747
    %vm4749 = vweird.f32 %v4708
    %vm4750 = vweird.f32 %v4743
    %vm4751 = vmor %vm4749, %vm4750
    %v4752 = vsel %vm4751, %v4743, %v4748
    %v4753 = vrsqrt.pop %v4709
    %v4754 = vmul.f32 %v4753, %v4709
    %v4755 = vmul.f32 %v4754, %v4753
    %v4756 = vmul.f32 0.5, %v4755
    %v4757 = vsub.f32 1.5, %v4756
    %v4758 = vmul.f32 %v4753, %v4757
    %vm4759 = vweird.f32 %v4709
    %vm4760 = vweird.f32 %v4753
    %vm4761 = vmor %vm4759, %vm4760
    %v4762 = vsel %vm4761, %v4753, %v4758
    %v4763 = vrsqrt.pop %v4710
    %v4764 = vmul.f32 %v4763, %v4710
    %v4765 = vmul.f32 %v4764, %v4763
    %v4766 = vmul.f32 0.5, %v4765
    %v4767 = vsub.f32 1.5, %v4766
    %v4768 = vmul.f32 %v4763, %v4767
    %vm4769 = vweird.f32 %v4710
    %vm4770 = vweird.f32 %v4763
    %vm4771 = vmor %vm4769, %vm4770
    %v4772 = vsel %vm4771, %v4763, %v4768
    %v4773 = vrsqrt.pop %v4711
    %v4774 = vmul.f32 %v4773, %v4711
    %v4775 = vmul.f32 %v4774, %v4773
    %v4776 = vmul.f32 0.5, %v4775
    %v4777 = vsub.f32 1.5, %v4776
    %v4778 = vmul.f32 %v4773, %v4777
    %vm4779 = vweird.f32 %v4711
    %vm4780 = vweird.f32 %v4773
    %vm4781 = vmor %vm4779, %vm4780
    %v4782 = vsel %vm4781, %v4773, %v4778
    %v4783 = vrsqrt.pop %v4712
    %v4784 = vmul.f32 %v4783, %v4712
    %v4785 = vmul.f32 %v4784, %v4783
    %v4786 = vmul.f32 0.5, %v4785
    %v4787 = vsub.f32 1.5, %v4786
    %v4788 = vmul.f32 %v4783, %v4787
    %vm4789 = vweird.f32 %v4712
    %vm4790 = vweird.f32 %v4783
    %vm4791 = vmor %vm4789, %vm4790
    %v4792 = vsel %vm4791, %v4783, %v4788
    %v4793 = vmul.f32 %v4633, %v4722
    %v4794 = vmul.f32 %v4634, %v4732
    %v4795 = vmul.f32 %v4635, %v4742
    %v4796 = vmul.f32 %v4636, %v4752
    %v4797 = vmul.f32 %v4637, %v4762
    %v4798 = vmul.f32 %v4638, %v4772
    %v4799 = vmul.f32 %v4639, %v4782
    %v4800 = vmul.f32 %v4640, %v4792
    %s4801 = scalar_lea.vmem [#allocation12], 67
    %v4802 = vld [vmem:[%s4801] ss:$8 sm:$0xf]
    %v4803 = vld [vmem:[%s4801] ss:$8 sm:$0xf0]
    %v4804 = vor.u32 %v4802, %v4803
    %v4806 = vperm.slane %v4804, 0
    %v4807 = vperm.slane %v4804, 1
    %v4808 = vperm.slane %v4804, 2
    %v4809 = vperm.slane %v4804, 3
    %v4810 = vperm.slane %v4804, 4
    %v4811 = vperm.slane %v4804, 5
    %v4812 = vperm.slane %v4804, 6
    %v4813 = vperm.slane %v4804, 7
    %v4822 = vmul.f32 %v4793, %v4806
    %v4823 = vmul.f32 %v4794, %v4807
    %v4824 = vmul.f32 %v4795, %v4808
    %v4825 = vmul.f32 %v4796, %v4809
    %v4826 = vmul.f32 %v4797, %v4810
    %v4827 = vmul.f32 %v4798, %v4811
    %v4828 = vmul.f32 %v4799, %v4812
    %v4829 = vmul.f32 %v4800, %v4813
    %s4830 = scalar_lea.vmem [#allocation12], 68
    %v4831 = vld [vmem:[%s4830] ss:$8 sm:$0xf]
    %v4832 = vld [vmem:[%s4830] ss:$8 sm:$0xf0]
    %v4833 = vor.u32 %v4831, %v4832
    %v4835 = vperm.slane %v4833, 0
    %v4836 = vperm.slane %v4833, 1
    %v4837 = vperm.slane %v4833, 2
    %v4838 = vperm.slane %v4833, 3
    %v4839 = vperm.slane %v4833, 4
    %v4840 = vperm.slane %v4833, 5
    %v4841 = vperm.slane %v4833, 6
    %v4842 = vperm.slane %v4833, 7
    %v4851 = vadd.f32 %v4822, %v4835
    %v4852 = vadd.f32 %v4823, %v4836
    %v4853 = vadd.f32 %v4824, %v4837
    %v4854 = vadd.f32 %v4825, %v4838
    %v4855 = vadd.f32 %v4826, %v4839
    %v4856 = vadd.f32 %v4827, %v4840
    %v4857 = vadd.f32 %v4828, %v4841
    %v4858 = vadd.f32 %v4829, %v4842
    %s4859 = smul.u32 %s3579, 4
    %s4860 = sshll.u32 %s4859, 4
    %4861 = dma.done %s413, %s4860
    %v4862 = vpack.c.bf16 %v4851, %v4851
    %v4863 = vpack.c.bf16 %v4852, %v4852
    %v4864 = vpack.c.bf16 %v4853, %v4853
    %v4865 = vpack.c.bf16 %v4854, %v4854
    %v4866 = vpack.c.bf16 %v4855, %v4855
    %v4867 = vpack.c.bf16 %v4856, %v4856
    %v4868 = vpack.c.bf16 %v4857, %v4857
    %v4869 = vpack.c.bf16 %v4858, %v4858
    %v4870 = vld [vmem:[#allocation8] sm:$0xff]
    %v4871 = vld [vmem:[#allocation8 + $0x8] sm:$0xff]
    %v4872 = vld [vmem:[#allocation8 + $0x10] sm:$0xff]
    %v4873 = vld [vmem:[#allocation8 + $0x18] sm:$0xff]
    %v4874 = vld [vmem:[#allocation8 + $0x20] sm:$0xff]
    %v4875 = vld [vmem:[#allocation8 + $0x28] sm:$0xff]
    %v4876 = vld [vmem:[#allocation8 + $0x30] sm:$0xff]
    %v4877 = vld [vmem:[#allocation8 + $0x38] sm:$0xff]
    %v4878 = vld [vmem:[#allocation8 + $0x40] sm:$0xff]
    %v4879 = vld [vmem:[#allocation8 + $0x48] sm:$0xff]
    %v4880 = vld [vmem:[#allocation8 + $0x50] sm:$0xff]
    %v4881 = vld [vmem:[#allocation8 + $0x58] sm:$0xff]
    %v4882 = vld [vmem:[#allocation8 + $0x60] sm:$0xff]
    %v4883 = vld [vmem:[#allocation8 + $0x68] sm:$0xff]
    %v4884 = vld [vmem:[#allocation8 + $0x70] sm:$0xff]
    %v4885 = vld [vmem:[#allocation8 + $0x78] sm:$0xff]
    %v4886 = vld [vmem:[#allocation8 + $0x80] sm:$0xff]
    %v4887 = vld [vmem:[#allocation8 + $0x88] sm:$0xff]
    %v4888 = vld [vmem:[#allocation8 + $0x90] sm:$0xff]
    %v4889 = vld [vmem:[#allocation8 + $0x98] sm:$0xff]
    %v4890 = vld [vmem:[#allocation8 + $0xa0] sm:$0xff]
    %v4891 = vld [vmem:[#allocation8 + $0xa8] sm:$0xff]
    %v4892 = vld [vmem:[#allocation8 + $0xb0] sm:$0xff]
    %v4893 = vld [vmem:[#allocation8 + $0xb8] sm:$0xff]
    %v4894 = vld [vmem:[#allocation8 + $0xc0] sm:$0xff]
    %v4895 = vld [vmem:[#allocation8 + $0xc8] sm:$0xff]
    %v4896 = vld [vmem:[#allocation8 + $0xd0] sm:$0xff]
    %v4897 = vld [vmem:[#allocation8 + $0xd8] sm:$0xff]
    %v4898 = vld [vmem:[#allocation8 + $0xe0] sm:$0xff]
    %v4899 = vld [vmem:[#allocation8 + $0xe8] sm:$0xff]
    %v4900 = vld [vmem:[#allocation8 + $0xf0] sm:$0xff]
    %v4901 = vld [vmem:[#allocation8 + $0xf8] sm:$0xff]
    %v4902 = vld [vmem:[#allocation8 + $0x100] sm:$0xff]
    %v4903 = vld [vmem:[#allocation8 + $0x108] sm:$0xff]
    %v4904 = vld [vmem:[#allocation8 + $0x110] sm:$0xff]
    %v4905 = vld [vmem:[#allocation8 + $0x118] sm:$0xff]
    %v4906 = vld [vmem:[#allocation8 + $0x120] sm:$0xff]
    %v4907 = vld [vmem:[#allocation8 + $0x128] sm:$0xff]
    %v4908 = vld [vmem:[#allocation8 + $0x130] sm:$0xff]
    %v4909 = vld [vmem:[#allocation8 + $0x138] sm:$0xff]
    %v4910 = vld [vmem:[#allocation8 + $0x140] sm:$0xff]
    %v4911 = vld [vmem:[#allocation8 + $0x148] sm:$0xff]
    %v4912 = vld [vmem:[#allocation8 + $0x150] sm:$0xff]
    %v4913 = vld [vmem:[#allocation8 + $0x158] sm:$0xff]
    %v4914 = vld [vmem:[#allocation8 + $0x160] sm:$0xff]
    %v4915 = vld [vmem:[#allocation8 + $0x168] sm:$0xff]
    %v4916 = vld [vmem:[#allocation8 + $0x170] sm:$0xff]
    %v4917 = vld [vmem:[#allocation8 + $0x178] sm:$0xff]
    %v4918 = vld [vmem:[#allocation8 + $0x180] sm:$0xff]
    %v4919 = vld [vmem:[#allocation8 + $0x188] sm:$0xff]
    %v4920 = vld [vmem:[#allocation8 + $0x190] sm:$0xff]
    %v4921 = vld [vmem:[#allocation8 + $0x198] sm:$0xff]
    %v4922 = vld [vmem:[#allocation8 + $0x1a0] sm:$0xff]
    %v4923 = vld [vmem:[#allocation8 + $0x1a8] sm:$0xff]
    %v4924 = vld [vmem:[#allocation8 + $0x1b0] sm:$0xff]
    %v4925 = vld [vmem:[#allocation8 + $0x1b8] sm:$0xff]
    %v4926 = vld [vmem:[#allocation8 + $0x1c0] sm:$0xff]
    %v4927 = vld [vmem:[#allocation8 + $0x1c8] sm:$0xff]
    %v4928 = vld [vmem:[#allocation8 + $0x1d0] sm:$0xff]
    %v4929 = vld [vmem:[#allocation8 + $0x1d8] sm:$0xff]
    %v4930 = vld [vmem:[#allocation8 + $0x1e0] sm:$0xff]
    %v4931 = vld [vmem:[#allocation8 + $0x1e8] sm:$0xff]
    %v4932 = vld [vmem:[#allocation8 + $0x1f0] sm:$0xff]
    %v4933 = vld [vmem:[#allocation8 + $0x1f8] sm:$0xff]
    %v4934 = vld [vmem:[#allocation8 + $0x200] sm:$0xff]
    %v4935 = vld [vmem:[#allocation8 + $0x208] sm:$0xff]
    %v4936 = vld [vmem:[#allocation8 + $0x210] sm:$0xff]
    %v4937 = vld [vmem:[#allocation8 + $0x218] sm:$0xff]
    %v4938 = vld [vmem:[#allocation8 + $0x220] sm:$0xff]
    %v4939 = vld [vmem:[#allocation8 + $0x228] sm:$0xff]
    %v4940 = vld [vmem:[#allocation8 + $0x230] sm:$0xff]
    %v4941 = vld [vmem:[#allocation8 + $0x238] sm:$0xff]
    %v4942 = vld [vmem:[#allocation8 + $0x240] sm:$0xff]
    %v4943 = vld [vmem:[#allocation8 + $0x248] sm:$0xff]
    %v4944 = vld [vmem:[#allocation8 + $0x250] sm:$0xff]
    %v4945 = vld [vmem:[#allocation8 + $0x258] sm:$0xff]
    %v4946 = vld [vmem:[#allocation8 + $0x260] sm:$0xff]
    %v4947 = vld [vmem:[#allocation8 + $0x268] sm:$0xff]
    %v4948 = vld [vmem:[#allocation8 + $0x270] sm:$0xff]
    %v4949 = vld [vmem:[#allocation8 + $0x278] sm:$0xff]
    %v4950 = vld [vmem:[#allocation8 + $0x280] sm:$0xff]
    %v4951 = vld [vmem:[#allocation8 + $0x288] sm:$0xff]
    %v4952 = vld [vmem:[#allocation8 + $0x290] sm:$0xff]
    %v4953 = vld [vmem:[#allocation8 + $0x298] sm:$0xff]
    %v4954 = vld [vmem:[#allocation8 + $0x2a0] sm:$0xff]
    %v4955 = vld [vmem:[#allocation8 + $0x2a8] sm:$0xff]
    %v4956 = vld [vmem:[#allocation8 + $0x2b0] sm:$0xff]
    %v4957 = vld [vmem:[#allocation8 + $0x2b8] sm:$0xff]
    %v4958 = vld [vmem:[#allocation8 + $0x2c0] sm:$0xff]
    %v4959 = vld [vmem:[#allocation8 + $0x2c8] sm:$0xff]
    %v4960 = vld [vmem:[#allocation8 + $0x2d0] sm:$0xff]
    %v4961 = vld [vmem:[#allocation8 + $0x2d8] sm:$0xff]
    %v4962 = vld [vmem:[#allocation8 + $0x2e0] sm:$0xff]
    %v4963 = vld [vmem:[#allocation8 + $0x2e8] sm:$0xff]
    %v4964 = vld [vmem:[#allocation8 + $0x2f0] sm:$0xff]
    %v4965 = vld [vmem:[#allocation8 + $0x2f8] sm:$0xff]
    %v4966 = vld [vmem:[#allocation8 + $0x300] sm:$0xff]
    %v4967 = vld [vmem:[#allocation8 + $0x308] sm:$0xff]
    %v4968 = vld [vmem:[#allocation8 + $0x310] sm:$0xff]
    %v4969 = vld [vmem:[#allocation8 + $0x318] sm:$0xff]
    %v4970 = vld [vmem:[#allocation8 + $0x320] sm:$0xff]
    %v4971 = vld [vmem:[#allocation8 + $0x328] sm:$0xff]
    %v4972 = vld [vmem:[#allocation8 + $0x330] sm:$0xff]
    %v4973 = vld [vmem:[#allocation8 + $0x338] sm:$0xff]
    %v4974 = vld [vmem:[#allocation8 + $0x340] sm:$0xff]
    %v4975 = vld [vmem:[#allocation8 + $0x348] sm:$0xff]
    %v4976 = vld [vmem:[#allocation8 + $0x350] sm:$0xff]
    %v4977 = vld [vmem:[#allocation8 + $0x358] sm:$0xff]
    %v4978 = vld [vmem:[#allocation8 + $0x360] sm:$0xff]
    %v4979 = vld [vmem:[#allocation8 + $0x368] sm:$0xff]
    %v4980 = vld [vmem:[#allocation8 + $0x370] sm:$0xff]
    %v4981 = vld [vmem:[#allocation8 + $0x378] sm:$0xff]
    %v4982 = vld [vmem:[#allocation8 + $0x380] sm:$0xff]
    %v4983 = vld [vmem:[#allocation8 + $0x388] sm:$0xff]
    %v4984 = vld [vmem:[#allocation8 + $0x390] sm:$0xff]
    %v4985 = vld [vmem:[#allocation8 + $0x398] sm:$0xff]
    %v4986 = vld [vmem:[#allocation8 + $0x3a0] sm:$0xff]
    %v4987 = vld [vmem:[#allocation8 + $0x3a8] sm:$0xff]
    %v4988 = vld [vmem:[#allocation8 + $0x3b0] sm:$0xff]
    %v4989 = vld [vmem:[#allocation8 + $0x3b8] sm:$0xff]
    %v4990 = vld [vmem:[#allocation8 + $0x3c0] sm:$0xff]
    %v4991 = vld [vmem:[#allocation8 + $0x3c8] sm:$0xff]
    %v4992 = vld [vmem:[#allocation8 + $0x3d0] sm:$0xff]
    %v4993 = vld [vmem:[#allocation8 + $0x3d8] sm:$0xff]
    %v4994 = vld [vmem:[#allocation8 + $0x3e0] sm:$0xff]
    %v4995 = vld [vmem:[#allocation8 + $0x3e8] sm:$0xff]
    %v4996 = vld [vmem:[#allocation8 + $0x3f0] sm:$0xff]
    %v4997 = vld [vmem:[#allocation8 + $0x3f8] sm:$0xff]
    %v4998 = vld [vmem:[#allocation8 + $0x400] sm:$0xff]
    %v4999 = vld [vmem:[#allocation8 + $0x408] sm:$0xff]
    %v5000 = vld [vmem:[#allocation8 + $0x410] sm:$0xff]
    %v5001 = vld [vmem:[#allocation8 + $0x418] sm:$0xff]
    %v5002 = vld [vmem:[#allocation8 + $0x420] sm:$0xff]
    %v5003 = vld [vmem:[#allocation8 + $0x428] sm:$0xff]
    %v5004 = vld [vmem:[#allocation8 + $0x430] sm:$0xff]
    %v5005 = vld [vmem:[#allocation8 + $0x438] sm:$0xff]
    %v5006 = vld [vmem:[#allocation8 + $0x440] sm:$0xff]
    %v5007 = vld [vmem:[#allocation8 + $0x448] sm:$0xff]
    %v5008 = vld [vmem:[#allocation8 + $0x450] sm:$0xff]
    %v5009 = vld [vmem:[#allocation8 + $0x458] sm:$0xff]
    %v5010 = vld [vmem:[#allocation8 + $0x460] sm:$0xff]
    %v5011 = vld [vmem:[#allocation8 + $0x468] sm:$0xff]
    %v5012 = vld [vmem:[#allocation8 + $0x470] sm:$0xff]
    %v5013 = vld [vmem:[#allocation8 + $0x478] sm:$0xff]
    %v5014 = vld [vmem:[#allocation8 + $0x480] sm:$0xff]
    %v5015 = vld [vmem:[#allocation8 + $0x488] sm:$0xff]
    %v5016 = vld [vmem:[#allocation8 + $0x490] sm:$0xff]
    %v5017 = vld [vmem:[#allocation8 + $0x498] sm:$0xff]
    %v5018 = vld [vmem:[#allocation8 + $0x4a0] sm:$0xff]
    %v5019 = vld [vmem:[#allocation8 + $0x4a8] sm:$0xff]
    %v5020 = vld [vmem:[#allocation8 + $0x4b0] sm:$0xff]
    %v5021 = vld [vmem:[#allocation8 + $0x4b8] sm:$0xff]
    %v5022 = vld [vmem:[#allocation8 + $0x4c0] sm:$0xff]
    %v5023 = vld [vmem:[#allocation8 + $0x4c8] sm:$0xff]
    %v5024 = vld [vmem:[#allocation8 + $0x4d0] sm:$0xff]
    %v5025 = vld [vmem:[#allocation8 + $0x4d8] sm:$0xff]
    %v5026 = vld [vmem:[#allocation8 + $0x4e0] sm:$0xff]
    %v5027 = vld [vmem:[#allocation8 + $0x4e8] sm:$0xff]
    %v5028 = vld [vmem:[#allocation8 + $0x4f0] sm:$0xff]
    %v5029 = vld [vmem:[#allocation8 + $0x4f8] sm:$0xff]
    %v5030 = vld [vmem:[#allocation8 + $0x500] sm:$0xff]
    %v5031 = vld [vmem:[#allocation8 + $0x508] sm:$0xff]
    %v5032 = vld [vmem:[#allocation8 + $0x510] sm:$0xff]
    %v5033 = vld [vmem:[#allocation8 + $0x518] sm:$0xff]
    %v5034 = vld [vmem:[#allocation8 + $0x520] sm:$0xff]
    %v5035 = vld [vmem:[#allocation8 + $0x528] sm:$0xff]
    %v5036 = vld [vmem:[#allocation8 + $0x530] sm:$0xff]
    %v5037 = vld [vmem:[#allocation8 + $0x538] sm:$0xff]
    %v5038 = vld [vmem:[#allocation8 + $0x540] sm:$0xff]
    %v5039 = vld [vmem:[#allocation8 + $0x548] sm:$0xff]
    %v5040 = vld [vmem:[#allocation8 + $0x550] sm:$0xff]
    %v5041 = vld [vmem:[#allocation8 + $0x558] sm:$0xff]
    %v5042 = vld [vmem:[#allocation8 + $0x560] sm:$0xff]
    %v5043 = vld [vmem:[#allocation8 + $0x568] sm:$0xff]
    %v5044 = vld [vmem:[#allocation8 + $0x570] sm:$0xff]
    %v5045 = vld [vmem:[#allocation8 + $0x578] sm:$0xff]
    %v5046 = vld [vmem:[#allocation8 + $0x580] sm:$0xff]
    %v5047 = vld [vmem:[#allocation8 + $0x588] sm:$0xff]
    %v5048 = vld [vmem:[#allocation8 + $0x590] sm:$0xff]
    %v5049 = vld [vmem:[#allocation8 + $0x598] sm:$0xff]
    %v5050 = vld [vmem:[#allocation8 + $0x5a0] sm:$0xff]
    %v5051 = vld [vmem:[#allocation8 + $0x5a8] sm:$0xff]
    %v5052 = vld [vmem:[#allocation8 + $0x5b0] sm:$0xff]
    %v5053 = vld [vmem:[#allocation8 + $0x5b8] sm:$0xff]
    %v5054 = vld [vmem:[#allocation8 + $0x5c0] sm:$0xff]
    %v5055 = vld [vmem:[#allocation8 + $0x5c8] sm:$0xff]
    %v5056 = vld [vmem:[#allocation8 + $0x5d0] sm:$0xff]
    %v5057 = vld [vmem:[#allocation8 + $0x5d8] sm:$0xff]
    %v5058 = vld [vmem:[#allocation8 + $0x5e0] sm:$0xff]
    %v5059 = vld [vmem:[#allocation8 + $0x5e8] sm:$0xff]
    %v5060 = vld [vmem:[#allocation8 + $0x5f0] sm:$0xff]
    %v5061 = vld [vmem:[#allocation8 + $0x5f8] sm:$0xff]
    %v5062 = vld [vmem:[#allocation8 + $0x600] sm:$0xff]
    %v5063 = vld [vmem:[#allocation8 + $0x608] sm:$0xff]
    %v5064 = vld [vmem:[#allocation8 + $0x610] sm:$0xff]
    %v5065 = vld [vmem:[#allocation8 + $0x618] sm:$0xff]
    %v5066 = vld [vmem:[#allocation8 + $0x620] sm:$0xff]
    %v5067 = vld [vmem:[#allocation8 + $0x628] sm:$0xff]
    %v5068 = vld [vmem:[#allocation8 + $0x630] sm:$0xff]
    %v5069 = vld [vmem:[#allocation8 + $0x638] sm:$0xff]
    %v5070 = vld [vmem:[#allocation8 + $0x640] sm:$0xff]
    %v5071 = vld [vmem:[#allocation8 + $0x648] sm:$0xff]
    %v5072 = vld [vmem:[#allocation8 + $0x650] sm:$0xff]
    %v5073 = vld [vmem:[#allocation8 + $0x658] sm:$0xff]
    %v5074 = vld [vmem:[#allocation8 + $0x660] sm:$0xff]
    %v5075 = vld [vmem:[#allocation8 + $0x668] sm:$0xff]
    %v5076 = vld [vmem:[#allocation8 + $0x670] sm:$0xff]
    %v5077 = vld [vmem:[#allocation8 + $0x678] sm:$0xff]
    %v5078 = vld [vmem:[#allocation8 + $0x680] sm:$0xff]
    %v5079 = vld [vmem:[#allocation8 + $0x688] sm:$0xff]
    %v5080 = vld [vmem:[#allocation8 + $0x690] sm:$0xff]
    %v5081 = vld [vmem:[#allocation8 + $0x698] sm:$0xff]
    %v5082 = vld [vmem:[#allocation8 + $0x6a0] sm:$0xff]
    %v5083 = vld [vmem:[#allocation8 + $0x6a8] sm:$0xff]
    %v5084 = vld [vmem:[#allocation8 + $0x6b0] sm:$0xff]
    %v5085 = vld [vmem:[#allocation8 + $0x6b8] sm:$0xff]
    %v5086 = vld [vmem:[#allocation8 + $0x6c0] sm:$0xff]
    %v5087 = vld [vmem:[#allocation8 + $0x6c8] sm:$0xff]
    %v5088 = vld [vmem:[#allocation8 + $0x6d0] sm:$0xff]
    %v5089 = vld [vmem:[#allocation8 + $0x6d8] sm:$0xff]
    %v5090 = vld [vmem:[#allocation8 + $0x6e0] sm:$0xff]
    %v5091 = vld [vmem:[#allocation8 + $0x6e8] sm:$0xff]
    %v5092 = vld [vmem:[#allocation8 + $0x6f0] sm:$0xff]
    %v5093 = vld [vmem:[#allocation8 + $0x6f8] sm:$0xff]
    %v5094 = vld [vmem:[#allocation8 + $0x700] sm:$0xff]
    %v5095 = vld [vmem:[#allocation8 + $0x708] sm:$0xff]
    %v5096 = vld [vmem:[#allocation8 + $0x710] sm:$0xff]
    %v5097 = vld [vmem:[#allocation8 + $0x718] sm:$0xff]
    %v5098 = vld [vmem:[#allocation8 + $0x720] sm:$0xff]
    %v5099 = vld [vmem:[#allocation8 + $0x728] sm:$0xff]
    %v5100 = vld [vmem:[#allocation8 + $0x730] sm:$0xff]
    %v5101 = vld [vmem:[#allocation8 + $0x738] sm:$0xff]
    %v5102 = vld [vmem:[#allocation8 + $0x740] sm:$0xff]
    %v5103 = vld [vmem:[#allocation8 + $0x748] sm:$0xff]
    %v5104 = vld [vmem:[#allocation8 + $0x750] sm:$0xff]
    %v5105 = vld [vmem:[#allocation8 + $0x758] sm:$0xff]
    %v5106 = vld [vmem:[#allocation8 + $0x760] sm:$0xff]
    %v5107 = vld [vmem:[#allocation8 + $0x768] sm:$0xff]
    %v5108 = vld [vmem:[#allocation8 + $0x770] sm:$0xff]
    %v5109 = vld [vmem:[#allocation8 + $0x778] sm:$0xff]
    %v5110 = vld [vmem:[#allocation8 + $0x780] sm:$0xff]
    %v5111 = vld [vmem:[#allocation8 + $0x788] sm:$0xff]
    %v5112 = vld [vmem:[#allocation8 + $0x790] sm:$0xff]
    %v5113 = vld [vmem:[#allocation8 + $0x798] sm:$0xff]
    %v5114 = vld [vmem:[#allocation8 + $0x7a0] sm:$0xff]
    %v5115 = vld [vmem:[#allocation8 + $0x7a8] sm:$0xff]
    %v5116 = vld [vmem:[#allocation8 + $0x7b0] sm:$0xff]
    %v5117 = vld [vmem:[#allocation8 + $0x7b8] sm:$0xff]
    %v5118 = vld [vmem:[#allocation8 + $0x7c0] sm:$0xff]
    %v5119 = vld [vmem:[#allocation8 + $0x7c8] sm:$0xff]
    %v5120 = vld [vmem:[#allocation8 + $0x7d0] sm:$0xff]
    %v5121 = vld [vmem:[#allocation8 + $0x7d8] sm:$0xff]
    %v5122 = vld [vmem:[#allocation8 + $0x7e0] sm:$0xff]
    %v5123 = vld [vmem:[#allocation8 + $0x7e8] sm:$0xff]
    %v5124 = vld [vmem:[#allocation8 + $0x7f0] sm:$0xff]
    %v5125 = vld [vmem:[#allocation8 + $0x7f8] sm:$0xff]
    %s5126 = scalar_lea.vmem [#allocation12], 69
    %v5127 = vld [vmem:[%s5126] ss:$8 sm:$0xf]
    %v5129 = vperm.slane %v5127, 0
    %v5130 = vperm.slane %v5127, 1
    %v5131 = vperm.slane %v5127, 2
    %v5132 = vperm.slane %v5127, 3
    %v5393 = vunpack.c.l.b16 %v4870
    %v5394 = vunpack.c.h.b16 %v4870
    %v5395 = vunpack.c.l.b16 %v4871
    %v5396 = vunpack.c.h.b16 %v4871
    %v5397 = vunpack.c.l.b16 %v4872
    %v5398 = vunpack.c.h.b16 %v4872
    %v5399 = vunpack.c.l.b16 %v4873
    %v5400 = vunpack.c.h.b16 %v4873
    %v5401 = vunpack.c.l.b16 %v4874
    %v5402 = vunpack.c.h.b16 %v4874
    %v5403 = vunpack.c.l.b16 %v4875
    %v5404 = vunpack.c.h.b16 %v4875
    %v5405 = vunpack.c.l.b16 %v4876
    %v5406 = vunpack.c.h.b16 %v4876
    %v5407 = vunpack.c.l.b16 %v4877
    %v5408 = vunpack.c.h.b16 %v4877
    %v5409 = vunpack.c.l.b16 %v4878
    %v5410 = vunpack.c.h.b16 %v4878
    %v5411 = vunpack.c.l.b16 %v4879
    %v5412 = vunpack.c.h.b16 %v4879
    %v5413 = vunpack.c.l.b16 %v4880
    %v5414 = vunpack.c.h.b16 %v4880
    %v5415 = vunpack.c.l.b16 %v4881
    %v5416 = vunpack.c.h.b16 %v4881
    %v5417 = vunpack.c.l.b16 %v4882
    %v5418 = vunpack.c.h.b16 %v4882
    %v5419 = vunpack.c.l.b16 %v4883
    %v5420 = vunpack.c.h.b16 %v4883
    %v5421 = vunpack.c.l.b16 %v4884
    %v5422 = vunpack.c.h.b16 %v4884
    %v5423 = vunpack.c.l.b16 %v4885
    %v5424 = vunpack.c.h.b16 %v4885
    %v5425 = vunpack.c.l.b16 %v4886
    %v5426 = vunpack.c.h.b16 %v4886
    %v5427 = vunpack.c.l.b16 %v4887
    %v5428 = vunpack.c.h.b16 %v4887
    %v5429 = vunpack.c.l.b16 %v4888
    %v5430 = vunpack.c.h.b16 %v4888
    %v5431 = vunpack.c.l.b16 %v4889
    %v5432 = vunpack.c.h.b16 %v4889
    %v5433 = vunpack.c.l.b16 %v4890
    %v5434 = vunpack.c.h.b16 %v4890
    %v5435 = vunpack.c.l.b16 %v4891
    %v5436 = vunpack.c.h.b16 %v4891
    %v5437 = vunpack.c.l.b16 %v4892
    %v5438 = vunpack.c.h.b16 %v4892
    %v5439 = vunpack.c.l.b16 %v4893
    %v5440 = vunpack.c.h.b16 %v4893
    %v5441 = vunpack.c.l.b16 %v4894
    %v5442 = vunpack.c.h.b16 %v4894
    %v5443 = vunpack.c.l.b16 %v4895
    %v5444 = vunpack.c.h.b16 %v4895
    %v5445 = vunpack.c.l.b16 %v4896
    %v5446 = vunpack.c.h.b16 %v4896
    %v5447 = vunpack.c.l.b16 %v4897
    %v5448 = vunpack.c.h.b16 %v4897
    %v5449 = vunpack.c.l.b16 %v4898
    %v5450 = vunpack.c.h.b16 %v4898
    %v5451 = vunpack.c.l.b16 %v4899
    %v5452 = vunpack.c.h.b16 %v4899
    %v5453 = vunpack.c.l.b16 %v4900
    %v5454 = vunpack.c.h.b16 %v4900
    %v5455 = vunpack.c.l.b16 %v4901
    %v5456 = vunpack.c.h.b16 %v4901
    %v5457 = vunpack.c.l.b16 %v4902
    %v5458 = vunpack.c.h.b16 %v4902
    %v5459 = vunpack.c.l.b16 %v4903
    %v5460 = vunpack.c.h.b16 %v4903
    %v5461 = vunpack.c.l.b16 %v4904
    %v5462 = vunpack.c.h.b16 %v4904
    %v5463 = vunpack.c.l.b16 %v4905
    %v5464 = vunpack.c.h.b16 %v4905
    %v5465 = vunpack.c.l.b16 %v4906
    %v5466 = vunpack.c.h.b16 %v4906
    %v5467 = vunpack.c.l.b16 %v4907
    %v5468 = vunpack.c.h.b16 %v4907
    %v5469 = vunpack.c.l.b16 %v4908
    %v5470 = vunpack.c.h.b16 %v4908
    %v5471 = vunpack.c.l.b16 %v4909
    %v5472 = vunpack.c.h.b16 %v4909
    %v5473 = vunpack.c.l.b16 %v4910
    %v5474 = vunpack.c.h.b16 %v4910
    %v5475 = vunpack.c.l.b16 %v4911
    %v5476 = vunpack.c.h.b16 %v4911
    %v5477 = vunpack.c.l.b16 %v4912
    %v5478 = vunpack.c.h.b16 %v4912
    %v5479 = vunpack.c.l.b16 %v4913
    %v5480 = vunpack.c.h.b16 %v4913
    %v5481 = vunpack.c.l.b16 %v4914
    %v5482 = vunpack.c.h.b16 %v4914
    %v5483 = vunpack.c.l.b16 %v4915
    %v5484 = vunpack.c.h.b16 %v4915
    %v5485 = vunpack.c.l.b16 %v4916
    %v5486 = vunpack.c.h.b16 %v4916
    %v5487 = vunpack.c.l.b16 %v4917
    %v5488 = vunpack.c.h.b16 %v4917
    %v5489 = vunpack.c.l.b16 %v4918
    %v5490 = vunpack.c.h.b16 %v4918
    %v5491 = vunpack.c.l.b16 %v4919
    %v5492 = vunpack.c.h.b16 %v4919
    %v5493 = vunpack.c.l.b16 %v4920
    %v5494 = vunpack.c.h.b16 %v4920
    %v5495 = vunpack.c.l.b16 %v4921
    %v5496 = vunpack.c.h.b16 %v4921
    %v5497 = vunpack.c.l.b16 %v4922
    %v5498 = vunpack.c.h.b16 %v4922
    %v5499 = vunpack.c.l.b16 %v4923
    %v5500 = vunpack.c.h.b16 %v4923
    %v5501 = vunpack.c.l.b16 %v4924
    %v5502 = vunpack.c.h.b16 %v4924
    %v5503 = vunpack.c.l.b16 %v4925
    %v5504 = vunpack.c.h.b16 %v4925
    %v5505 = vunpack.c.l.b16 %v4926
    %v5506 = vunpack.c.h.b16 %v4926
    %v5507 = vunpack.c.l.b16 %v4927
    %v5508 = vunpack.c.h.b16 %v4927
    %v5509 = vunpack.c.l.b16 %v4928
    %v5510 = vunpack.c.h.b16 %v4928
    %v5511 = vunpack.c.l.b16 %v4929
    %v5512 = vunpack.c.h.b16 %v4929
    %v5513 = vunpack.c.l.b16 %v4930
    %v5514 = vunpack.c.h.b16 %v4930
    %v5515 = vunpack.c.l.b16 %v4931
    %v5516 = vunpack.c.h.b16 %v4931
    %v5517 = vunpack.c.l.b16 %v4932
    %v5518 = vunpack.c.h.b16 %v4932
    %v5519 = vunpack.c.l.b16 %v4933
    %v5520 = vunpack.c.h.b16 %v4933
    %v5521 = vunpack.c.l.b16 %v4934
    %v5522 = vunpack.c.h.b16 %v4934
    %v5523 = vunpack.c.l.b16 %v4935
    %v5524 = vunpack.c.h.b16 %v4935
    %v5525 = vunpack.c.l.b16 %v4936
    %v5526 = vunpack.c.h.b16 %v4936
    %v5527 = vunpack.c.l.b16 %v4937
    %v5528 = vunpack.c.h.b16 %v4937
    %v5529 = vunpack.c.l.b16 %v4938
    %v5530 = vunpack.c.h.b16 %v4938
    %v5531 = vunpack.c.l.b16 %v4939
    %v5532 = vunpack.c.h.b16 %v4939
    %v5533 = vunpack.c.l.b16 %v4940
    %v5534 = vunpack.c.h.b16 %v4940
    %v5535 = vunpack.c.l.b16 %v4941
    %v5536 = vunpack.c.h.b16 %v4941
    %v5537 = vunpack.c.l.b16 %v4942
    %v5538 = vunpack.c.h.b16 %v4942
    %v5539 = vunpack.c.l.b16 %v4943
    %v5540 = vunpack.c.h.b16 %v4943
    %v5541 = vunpack.c.l.b16 %v4944
    %v5542 = vunpack.c.h.b16 %v4944
    %v5543 = vunpack.c.l.b16 %v4945
    %v5544 = vunpack.c.h.b16 %v4945
    %v5545 = vunpack.c.l.b16 %v4946
    %v5546 = vunpack.c.h.b16 %v4946
    %v5547 = vunpack.c.l.b16 %v4947
    %v5548 = vunpack.c.h.b16 %v4947
    %v5549 = vunpack.c.l.b16 %v4948
    %v5550 = vunpack.c.h.b16 %v4948
    %v5551 = vunpack.c.l.b16 %v4949
    %v5552 = vunpack.c.h.b16 %v4949
    %v5553 = vunpack.c.l.b16 %v4950
    %v5554 = vunpack.c.h.b16 %v4950
    %v5555 = vunpack.c.l.b16 %v4951
    %v5556 = vunpack.c.h.b16 %v4951
    %v5557 = vunpack.c.l.b16 %v4952
    %v5558 = vunpack.c.h.b16 %v4952
    %v5559 = vunpack.c.l.b16 %v4953
    %v5560 = vunpack.c.h.b16 %v4953
    %v5561 = vunpack.c.l.b16 %v4954
    %v5562 = vunpack.c.h.b16 %v4954
    %v5563 = vunpack.c.l.b16 %v4955
    %v5564 = vunpack.c.h.b16 %v4955
    %v5565 = vunpack.c.l.b16 %v4956
    %v5566 = vunpack.c.h.b16 %v4956
    %v5567 = vunpack.c.l.b16 %v4957
    %v5568 = vunpack.c.h.b16 %v4957
    %v5569 = vunpack.c.l.b16 %v4958
    %v5570 = vunpack.c.h.b16 %v4958
    %v5571 = vunpack.c.l.b16 %v4959
    %v5572 = vunpack.c.h.b16 %v4959
    %v5573 = vunpack.c.l.b16 %v4960
    %v5574 = vunpack.c.h.b16 %v4960
    %v5575 = vunpack.c.l.b16 %v4961
    %v5576 = vunpack.c.h.b16 %v4961
    %v5577 = vunpack.c.l.b16 %v4962
    %v5578 = vunpack.c.h.b16 %v4962
    %v5579 = vunpack.c.l.b16 %v4963
    %v5580 = vunpack.c.h.b16 %v4963
    %v5581 = vunpack.c.l.b16 %v4964
    %v5582 = vunpack.c.h.b16 %v4964
    %v5583 = vunpack.c.l.b16 %v4965
    %v5584 = vunpack.c.h.b16 %v4965
    %v5585 = vunpack.c.l.b16 %v4966
    %v5586 = vunpack.c.h.b16 %v4966
    %v5587 = vunpack.c.l.b16 %v4967
    %v5588 = vunpack.c.h.b16 %v4967
    %v5589 = vunpack.c.l.b16 %v4968
    %v5590 = vunpack.c.h.b16 %v4968
    %v5591 = vunpack.c.l.b16 %v4969
    %v5592 = vunpack.c.h.b16 %v4969
    %v5593 = vunpack.c.l.b16 %v4970
    %v5594 = vunpack.c.h.b16 %v4970
    %v5595 = vunpack.c.l.b16 %v4971
    %v5596 = vunpack.c.h.b16 %v4971
    %v5597 = vunpack.c.l.b16 %v4972
    %v5598 = vunpack.c.h.b16 %v4972
    %v5599 = vunpack.c.l.b16 %v4973
    %v5600 = vunpack.c.h.b16 %v4973
    %v5601 = vunpack.c.l.b16 %v4974
    %v5602 = vunpack.c.h.b16 %v4974
    %v5603 = vunpack.c.l.b16 %v4975
    %v5604 = vunpack.c.h.b16 %v4975
    %v5605 = vunpack.c.l.b16 %v4976
    %v5606 = vunpack.c.h.b16 %v4976
    %v5607 = vunpack.c.l.b16 %v4977
    %v5608 = vunpack.c.h.b16 %v4977
    %v5609 = vunpack.c.l.b16 %v4978
    %v5610 = vunpack.c.h.b16 %v4978
    %v5611 = vunpack.c.l.b16 %v4979
    %v5612 = vunpack.c.h.b16 %v4979
    %v5613 = vunpack.c.l.b16 %v4980
    %v5614 = vunpack.c.h.b16 %v4980
    %v5615 = vunpack.c.l.b16 %v4981
    %v5616 = vunpack.c.h.b16 %v4981
    %v5617 = vunpack.c.l.b16 %v4982
    %v5618 = vunpack.c.h.b16 %v4982
    %v5619 = vunpack.c.l.b16 %v4983
    %v5620 = vunpack.c.h.b16 %v4983
    %v5621 = vunpack.c.l.b16 %v4984
    %v5622 = vunpack.c.h.b16 %v4984
    %v5623 = vunpack.c.l.b16 %v4985
    %v5624 = vunpack.c.h.b16 %v4985
    %v5625 = vunpack.c.l.b16 %v4986
    %v5626 = vunpack.c.h.b16 %v4986
    %v5627 = vunpack.c.l.b16 %v4987
    %v5628 = vunpack.c.h.b16 %v4987
    %v5629 = vunpack.c.l.b16 %v4988
    %v5630 = vunpack.c.h.b16 %v4988
    %v5631 = vunpack.c.l.b16 %v4989
    %v5632 = vunpack.c.h.b16 %v4989
    %v5633 = vunpack.c.l.b16 %v4990
    %v5634 = vunpack.c.h.b16 %v4990
    %v5635 = vunpack.c.l.b16 %v4991
    %v5636 = vunpack.c.h.b16 %v4991
    %v5637 = vunpack.c.l.b16 %v4992
    %v5638 = vunpack.c.h.b16 %v4992
    %v5639 = vunpack.c.l.b16 %v4993
    %v5640 = vunpack.c.h.b16 %v4993
    %v5641 = vunpack.c.l.b16 %v4994
    %v5642 = vunpack.c.h.b16 %v4994
    %v5643 = vunpack.c.l.b16 %v4995
    %v5644 = vunpack.c.h.b16 %v4995
    %v5645 = vunpack.c.l.b16 %v4996
    %v5646 = vunpack.c.h.b16 %v4996
    %v5647 = vunpack.c.l.b16 %v4997
    %v5648 = vunpack.c.h.b16 %v4997
    %v5649 = vunpack.c.l.b16 %v4998
    %v5650 = vunpack.c.h.b16 %v4998
    %v5651 = vunpack.c.l.b16 %v4999
    %v5652 = vunpack.c.h.b16 %v4999
    %v5653 = vunpack.c.l.b16 %v5000
    %v5654 = vunpack.c.h.b16 %v5000
    %v5655 = vunpack.c.l.b16 %v5001
    %v5656 = vunpack.c.h.b16 %v5001
    %v5657 = vunpack.c.l.b16 %v5002
    %v5658 = vunpack.c.h.b16 %v5002
    %v5659 = vunpack.c.l.b16 %v5003
    %v5660 = vunpack.c.h.b16 %v5003
    %v5661 = vunpack.c.l.b16 %v5004
    %v5662 = vunpack.c.h.b16 %v5004
    %v5663 = vunpack.c.l.b16 %v5005
    %v5664 = vunpack.c.h.b16 %v5005
    %v5665 = vunpack.c.l.b16 %v5006
    %v5666 = vunpack.c.h.b16 %v5006
    %v5667 = vunpack.c.l.b16 %v5007
    %v5668 = vunpack.c.h.b16 %v5007
    %v5669 = vunpack.c.l.b16 %v5008
    %v5670 = vunpack.c.h.b16 %v5008
    %v5671 = vunpack.c.l.b16 %v5009
    %v5672 = vunpack.c.h.b16 %v5009
    %v5673 = vunpack.c.l.b16 %v5010
    %v5674 = vunpack.c.h.b16 %v5010
    %v5675 = vunpack.c.l.b16 %v5011
    %v5676 = vunpack.c.h.b16 %v5011
    %v5677 = vunpack.c.l.b16 %v5012
    %v5678 = vunpack.c.h.b16 %v5012
    %v5679 = vunpack.c.l.b16 %v5013
    %v5680 = vunpack.c.h.b16 %v5013
    %v5681 = vunpack.c.l.b16 %v5014
    %v5682 = vunpack.c.h.b16 %v5014
    %v5683 = vunpack.c.l.b16 %v5015
    %v5684 = vunpack.c.h.b16 %v5015
    %v5685 = vunpack.c.l.b16 %v5016
    %v5686 = vunpack.c.h.b16 %v5016
    %v5687 = vunpack.c.l.b16 %v5017
    %v5688 = vunpack.c.h.b16 %v5017
    %v5689 = vunpack.c.l.b16 %v5018
    %v5690 = vunpack.c.h.b16 %v5018
    %v5691 = vunpack.c.l.b16 %v5019
    %v5692 = vunpack.c.h.b16 %v5019
    %v5693 = vunpack.c.l.b16 %v5020
    %v5694 = vunpack.c.h.b16 %v5020
    %v5695 = vunpack.c.l.b16 %v5021
    %v5696 = vunpack.c.h.b16 %v5021
    %v5697 = vunpack.c.l.b16 %v5022
    %v5698 = vunpack.c.h.b16 %v5022
    %v5699 = vunpack.c.l.b16 %v5023
    %v5700 = vunpack.c.h.b16 %v5023
    %v5701 = vunpack.c.l.b16 %v5024
    %v5702 = vunpack.c.h.b16 %v5024
    %v5703 = vunpack.c.l.b16 %v5025
    %v5704 = vunpack.c.h.b16 %v5025
    %v5705 = vunpack.c.l.b16 %v5026
    %v5706 = vunpack.c.h.b16 %v5026
    %v5707 = vunpack.c.l.b16 %v5027
    %v5708 = vunpack.c.h.b16 %v5027
    %v5709 = vunpack.c.l.b16 %v5028
    %v5710 = vunpack.c.h.b16 %v5028
    %v5711 = vunpack.c.l.b16 %v5029
    %v5712 = vunpack.c.h.b16 %v5029
    %v5713 = vunpack.c.l.b16 %v5030
    %v5714 = vunpack.c.h.b16 %v5030
    %v5715 = vunpack.c.l.b16 %v5031
    %v5716 = vunpack.c.h.b16 %v5031
    %v5717 = vunpack.c.l.b16 %v5032
    %v5718 = vunpack.c.h.b16 %v5032
    %v5719 = vunpack.c.l.b16 %v5033
    %v5720 = vunpack.c.h.b16 %v5033
    %v5721 = vunpack.c.l.b16 %v5034
    %v5722 = vunpack.c.h.b16 %v5034
    %v5723 = vunpack.c.l.b16 %v5035
    %v5724 = vunpack.c.h.b16 %v5035
    %v5725 = vunpack.c.l.b16 %v5036
    %v5726 = vunpack.c.h.b16 %v5036
    %v5727 = vunpack.c.l.b16 %v5037
    %v5728 = vunpack.c.h.b16 %v5037
    %v5729 = vunpack.c.l.b16 %v5038
    %v5730 = vunpack.c.h.b16 %v5038
    %v5731 = vunpack.c.l.b16 %v5039
    %v5732 = vunpack.c.h.b16 %v5039
    %v5733 = vunpack.c.l.b16 %v5040
    %v5734 = vunpack.c.h.b16 %v5040
    %v5735 = vunpack.c.l.b16 %v5041
    %v5736 = vunpack.c.h.b16 %v5041
    %v5737 = vunpack.c.l.b16 %v5042
    %v5738 = vunpack.c.h.b16 %v5042
    %v5739 = vunpack.c.l.b16 %v5043
    %v5740 = vunpack.c.h.b16 %v5043
    %v5741 = vunpack.c.l.b16 %v5044
    %v5742 = vunpack.c.h.b16 %v5044
    %v5743 = vunpack.c.l.b16 %v5045
    %v5744 = vunpack.c.h.b16 %v5045
    %v5745 = vunpack.c.l.b16 %v5046
    %v5746 = vunpack.c.h.b16 %v5046
    %v5747 = vunpack.c.l.b16 %v5047
    %v5748 = vunpack.c.h.b16 %v5047
    %v5749 = vunpack.c.l.b16 %v5048
    %v5750 = vunpack.c.h.b16 %v5048
    %v5751 = vunpack.c.l.b16 %v5049
    %v5752 = vunpack.c.h.b16 %v5049
    %v5753 = vunpack.c.l.b16 %v5050
    %v5754 = vunpack.c.h.b16 %v5050
    %v5755 = vunpack.c.l.b16 %v5051
    %v5756 = vunpack.c.h.b16 %v5051
    %v5757 = vunpack.c.l.b16 %v5052
    %v5758 = vunpack.c.h.b16 %v5052
    %v5759 = vunpack.c.l.b16 %v5053
    %v5760 = vunpack.c.h.b16 %v5053
    %v5761 = vunpack.c.l.b16 %v5054
    %v5762 = vunpack.c.h.b16 %v5054
    %v5763 = vunpack.c.l.b16 %v5055
    %v5764 = vunpack.c.h.b16 %v5055
    %v5765 = vunpack.c.l.b16 %v5056
    %v5766 = vunpack.c.h.b16 %v5056
    %v5767 = vunpack.c.l.b16 %v5057
    %v5768 = vunpack.c.h.b16 %v5057
    %v5769 = vunpack.c.l.b16 %v5058
    %v5770 = vunpack.c.h.b16 %v5058
    %v5771 = vunpack.c.l.b16 %v5059
    %v5772 = vunpack.c.h.b16 %v5059
    %v5773 = vunpack.c.l.b16 %v5060
    %v5774 = vunpack.c.h.b16 %v5060
    %v5775 = vunpack.c.l.b16 %v5061
    %v5776 = vunpack.c.h.b16 %v5061
    %v5777 = vunpack.c.l.b16 %v5062
    %v5778 = vunpack.c.h.b16 %v5062
    %v5779 = vunpack.c.l.b16 %v5063
    %v5780 = vunpack.c.h.b16 %v5063
    %v5781 = vunpack.c.l.b16 %v5064
    %v5782 = vunpack.c.h.b16 %v5064
    %v5783 = vunpack.c.l.b16 %v5065
    %v5784 = vunpack.c.h.b16 %v5065
    %v5785 = vunpack.c.l.b16 %v5066
    %v5786 = vunpack.c.h.b16 %v5066
    %v5787 = vunpack.c.l.b16 %v5067
    %v5788 = vunpack.c.h.b16 %v5067
    %v5789 = vunpack.c.l.b16 %v5068
    %v5790 = vunpack.c.h.b16 %v5068
    %v5791 = vunpack.c.l.b16 %v5069
    %v5792 = vunpack.c.h.b16 %v5069
    %v5793 = vunpack.c.l.b16 %v5070
    %v5794 = vunpack.c.h.b16 %v5070
    %v5795 = vunpack.c.l.b16 %v5071
    %v5796 = vunpack.c.h.b16 %v5071
    %v5797 = vunpack.c.l.b16 %v5072
    %v5798 = vunpack.c.h.b16 %v5072
    %v5799 = vunpack.c.l.b16 %v5073
    %v5800 = vunpack.c.h.b16 %v5073
    %v5801 = vunpack.c.l.b16 %v5074
    %v5802 = vunpack.c.h.b16 %v5074
    %v5803 = vunpack.c.l.b16 %v5075
    %v5804 = vunpack.c.h.b16 %v5075
    %v5805 = vunpack.c.l.b16 %v5076
    %v5806 = vunpack.c.h.b16 %v5076
    %v5807 = vunpack.c.l.b16 %v5077
    %v5808 = vunpack.c.h.b16 %v5077
    %v5809 = vunpack.c.l.b16 %v5078
    %v5810 = vunpack.c.h.b16 %v5078
    %v5811 = vunpack.c.l.b16 %v5079
    %v5812 = vunpack.c.h.b16 %v5079
    %v5813 = vunpack.c.l.b16 %v5080
    %v5814 = vunpack.c.h.b16 %v5080
    %v5815 = vunpack.c.l.b16 %v5081
    %v5816 = vunpack.c.h.b16 %v5081
    %v5817 = vunpack.c.l.b16 %v5082
    %v5818 = vunpack.c.h.b16 %v5082
    %v5819 = vunpack.c.l.b16 %v5083
    %v5820 = vunpack.c.h.b16 %v5083
    %v5821 = vunpack.c.l.b16 %v5084
    %v5822 = vunpack.c.h.b16 %v5084
    %v5823 = vunpack.c.l.b16 %v5085
    %v5824 = vunpack.c.h.b16 %v5085
    %v5825 = vunpack.c.l.b16 %v5086
    %v5826 = vunpack.c.h.b16 %v5086
    %v5827 = vunpack.c.l.b16 %v5087
    %v5828 = vunpack.c.h.b16 %v5087
    %v5829 = vunpack.c.l.b16 %v5088
    %v5830 = vunpack.c.h.b16 %v5088
    %v5831 = vunpack.c.l.b16 %v5089
    %v5832 = vunpack.c.h.b16 %v5089
    %v5833 = vunpack.c.l.b16 %v5090
    %v5834 = vunpack.c.h.b16 %v5090
    %v5835 = vunpack.c.l.b16 %v5091
    %v5836 = vunpack.c.h.b16 %v5091
    %v5837 = vunpack.c.l.b16 %v5092
    %v5838 = vunpack.c.h.b16 %v5092
    %v5839 = vunpack.c.l.b16 %v5093
    %v5840 = vunpack.c.h.b16 %v5093
    %v5841 = vunpack.c.l.b16 %v5094
    %v5842 = vunpack.c.h.b16 %v5094
    %v5843 = vunpack.c.l.b16 %v5095
    %v5844 = vunpack.c.h.b16 %v5095
    %v5845 = vunpack.c.l.b16 %v5096
    %v5846 = vunpack.c.h.b16 %v5096
    %v5847 = vunpack.c.l.b16 %v5097
    %v5848 = vunpack.c.h.b16 %v5097
    %v5849 = vunpack.c.l.b16 %v5098
    %v5850 = vunpack.c.h.b16 %v5098
    %v5851 = vunpack.c.l.b16 %v5099
    %v5852 = vunpack.c.h.b16 %v5099
    %v5853 = vunpack.c.l.b16 %v5100
    %v5854 = vunpack.c.h.b16 %v5100
    %v5855 = vunpack.c.l.b16 %v5101
    %v5856 = vunpack.c.h.b16 %v5101
    %v5857 = vunpack.c.l.b16 %v5102
    %v5858 = vunpack.c.h.b16 %v5102
    %v5859 = vunpack.c.l.b16 %v5103
    %v5860 = vunpack.c.h.b16 %v5103
    %v5861 = vunpack.c.l.b16 %v5104
    %v5862 = vunpack.c.h.b16 %v5104
    %v5863 = vunpack.c.l.b16 %v5105
    %v5864 = vunpack.c.h.b16 %v5105
    %v5865 = vunpack.c.l.b16 %v5106
    %v5866 = vunpack.c.h.b16 %v5106
    %v5867 = vunpack.c.l.b16 %v5107
    %v5868 = vunpack.c.h.b16 %v5107
    %v5869 = vunpack.c.l.b16 %v5108
    %v5870 = vunpack.c.h.b16 %v5108
    %v5871 = vunpack.c.l.b16 %v5109
    %v5872 = vunpack.c.h.b16 %v5109
    %v5873 = vunpack.c.l.b16 %v5110
    %v5874 = vunpack.c.h.b16 %v5110
    %v5875 = vunpack.c.l.b16 %v5111
    %v5876 = vunpack.c.h.b16 %v5111
    %v5877 = vunpack.c.l.b16 %v5112
    %v5878 = vunpack.c.h.b16 %v5112
    %v5879 = vunpack.c.l.b16 %v5113
    %v5880 = vunpack.c.h.b16 %v5113
    %v5881 = vunpack.c.l.b16 %v5114
    %v5882 = vunpack.c.h.b16 %v5114
    %v5883 = vunpack.c.l.b16 %v5115
    %v5884 = vunpack.c.h.b16 %v5115
    %v5885 = vunpack.c.l.b16 %v5116
    %v5886 = vunpack.c.h.b16 %v5116
    %v5887 = vunpack.c.l.b16 %v5117
    %v5888 = vunpack.c.h.b16 %v5117
    %v5889 = vunpack.c.l.b16 %v5118
    %v5890 = vunpack.c.h.b16 %v5118
    %v5891 = vunpack.c.l.b16 %v5119
    %v5892 = vunpack.c.h.b16 %v5119
    %v5893 = vunpack.c.l.b16 %v5120
    %v5894 = vunpack.c.h.b16 %v5120
    %v5895 = vunpack.c.l.b16 %v5121
    %v5896 = vunpack.c.h.b16 %v5121
    %v5897 = vunpack.c.l.b16 %v5122
    %v5898 = vunpack.c.h.b16 %v5122
    %v5899 = vunpack.c.l.b16 %v5123
    %v5900 = vunpack.c.h.b16 %v5123
    %v5901 = vunpack.c.l.b16 %v5124
    %v5902 = vunpack.c.h.b16 %v5124
    %v5903 = vunpack.c.l.b16 %v5125
    %v5904 = vunpack.c.h.b16 %v5125
    %v5905 = vpack.c.b16 %v5397, %v5393
    %v5906 = vpack.c.b16 %v5398, %v5394
    %v5907 = vpack.c.b16 %v5399, %v5395
    %v5908 = vpack.c.b16 %v5400, %v5396
    %v5909 = vpack.c.b16 %v5405, %v5401
    %v5910 = vpack.c.b16 %v5406, %v5402
    %v5911 = vpack.c.b16 %v5407, %v5403
    %v5912 = vpack.c.b16 %v5408, %v5404
    %v5913 = vpack.c.b16 %v5413, %v5409
    %v5914 = vpack.c.b16 %v5414, %v5410
    %v5915 = vpack.c.b16 %v5415, %v5411
    %v5916 = vpack.c.b16 %v5416, %v5412
    %v5917 = vpack.c.b16 %v5421, %v5417
    %v5918 = vpack.c.b16 %v5422, %v5418
    %v5919 = vpack.c.b16 %v5423, %v5419
    %v5920 = vpack.c.b16 %v5424, %v5420
    %v5921 = vpack.c.b16 %v5429, %v5425
    %v5922 = vpack.c.b16 %v5430, %v5426
    %v5923 = vpack.c.b16 %v5431, %v5427
    %v5924 = vpack.c.b16 %v5432, %v5428
    %v5925 = vpack.c.b16 %v5437, %v5433
    %v5926 = vpack.c.b16 %v5438, %v5434
    %v5927 = vpack.c.b16 %v5439, %v5435
    %v5928 = vpack.c.b16 %v5440, %v5436
    %v5929 = vpack.c.b16 %v5445, %v5441
    %v5930 = vpack.c.b16 %v5446, %v5442
    %v5931 = vpack.c.b16 %v5447, %v5443
    %v5932 = vpack.c.b16 %v5448, %v5444
    %v5933 = vpack.c.b16 %v5453, %v5449
    %v5934 = vpack.c.b16 %v5454, %v5450
    %v5935 = vpack.c.b16 %v5455, %v5451
    %v5936 = vpack.c.b16 %v5456, %v5452
    %v5937 = vpack.c.b16 %v5461, %v5457
    %v5938 = vpack.c.b16 %v5462, %v5458
    %v5939 = vpack.c.b16 %v5463, %v5459
    %v5940 = vpack.c.b16 %v5464, %v5460
    %v5941 = vpack.c.b16 %v5469, %v5465
    %v5942 = vpack.c.b16 %v5470, %v5466
    %v5943 = vpack.c.b16 %v5471, %v5467
    %v5944 = vpack.c.b16 %v5472, %v5468
    %v5945 = vpack.c.b16 %v5477, %v5473
    %v5946 = vpack.c.b16 %v5478, %v5474
    %v5947 = vpack.c.b16 %v5479, %v5475
    %v5948 = vpack.c.b16 %v5480, %v5476
    %v5949 = vpack.c.b16 %v5485, %v5481
    %v5950 = vpack.c.b16 %v5486, %v5482
    %v5951 = vpack.c.b16 %v5487, %v5483
    %v5952 = vpack.c.b16 %v5488, %v5484
    %v5953 = vpack.c.b16 %v5493, %v5489
    %v5954 = vpack.c.b16 %v5494, %v5490
    %v5955 = vpack.c.b16 %v5495, %v5491
    %v5956 = vpack.c.b16 %v5496, %v5492
    %v5957 = vpack.c.b16 %v5501, %v5497
    %v5958 = vpack.c.b16 %v5502, %v5498
    %v5959 = vpack.c.b16 %v5503, %v5499
    %v5960 = vpack.c.b16 %v5504, %v5500
    %v5961 = vpack.c.b16 %v5509, %v5505
    %v5962 = vpack.c.b16 %v5510, %v5506
    %v5963 = vpack.c.b16 %v5511, %v5507
    %v5964 = vpack.c.b16 %v5512, %v5508
    %v5965 = vpack.c.b16 %v5517, %v5513
    %v5966 = vpack.c.b16 %v5518, %v5514
    %v5967 = vpack.c.b16 %v5519, %v5515
    %v5968 = vpack.c.b16 %v5520, %v5516
    %v5969 = vpack.c.b16 %v5525, %v5521
    %v5970 = vpack.c.b16 %v5526, %v5522
    %v5971 = vpack.c.b16 %v5527, %v5523
    %v5972 = vpack.c.b16 %v5528, %v5524
    %v5973 = vpack.c.b16 %v5533, %v5529
    %v5974 = vpack.c.b16 %v5534, %v5530
    %v5975 = vpack.c.b16 %v5535, %v5531
    %v5976 = vpack.c.b16 %v5536, %v5532
    %v5977 = vpack.c.b16 %v5541, %v5537
    %v5978 = vpack.c.b16 %v5542, %v5538
    %v5979 = vpack.c.b16 %v5543, %v5539
    %v5980 = vpack.c.b16 %v5544, %v5540
    %v5981 = vpack.c.b16 %v5549, %v5545
    %v5982 = vpack.c.b16 %v5550, %v5546
    %v5983 = vpack.c.b16 %v5551, %v5547
    %v5984 = vpack.c.b16 %v5552, %v5548
    %v5985 = vpack.c.b16 %v5557, %v5553
    %v5986 = vpack.c.b16 %v5558, %v5554
    %v5987 = vpack.c.b16 %v5559, %v5555
    %v5988 = vpack.c.b16 %v5560, %v5556
    %v5989 = vpack.c.b16 %v5565, %v5561
    %v5990 = vpack.c.b16 %v5566, %v5562
    %v5991 = vpack.c.b16 %v5567, %v5563
    %v5992 = vpack.c.b16 %v5568, %v5564
    %v5993 = vpack.c.b16 %v5573, %v5569
    %v5994 = vpack.c.b16 %v5574, %v5570
    %v5995 = vpack.c.b16 %v5575, %v5571
    %v5996 = vpack.c.b16 %v5576, %v5572
    %v5997 = vpack.c.b16 %v5581, %v5577
    %v5998 = vpack.c.b16 %v5582, %v5578
    %v5999 = vpack.c.b16 %v5583, %v5579
    %v6000 = vpack.c.b16 %v5584, %v5580
    %v6001 = vpack.c.b16 %v5589, %v5585
    %v6002 = vpack.c.b16 %v5590, %v5586
    %v6003 = vpack.c.b16 %v5591, %v5587
    %v6004 = vpack.c.b16 %v5592, %v5588
    %v6005 = vpack.c.b16 %v5597, %v5593
    %v6006 = vpack.c.b16 %v5598, %v5594
    %v6007 = vpack.c.b16 %v5599, %v5595
    %v6008 = vpack.c.b16 %v5600, %v5596
    %v6009 = vpack.c.b16 %v5605, %v5601
    %v6010 = vpack.c.b16 %v5606, %v5602
    %v6011 = vpack.c.b16 %v5607, %v5603
    %v6012 = vpack.c.b16 %v5608, %v5604
    %v6013 = vpack.c.b16 %v5613, %v5609
    %v6014 = vpack.c.b16 %v5614, %v5610
    %v6015 = vpack.c.b16 %v5615, %v5611
    %v6016 = vpack.c.b16 %v5616, %v5612
    %v6017 = vpack.c.b16 %v5621, %v5617
    %v6018 = vpack.c.b16 %v5622, %v5618
    %v6019 = vpack.c.b16 %v5623, %v5619
    %v6020 = vpack.c.b16 %v5624, %v5620
    %v6021 = vpack.c.b16 %v5629, %v5625
    %v6022 = vpack.c.b16 %v5630, %v5626
    %v6023 = vpack.c.b16 %v5631, %v5627
    %v6024 = vpack.c.b16 %v5632, %v5628
    %v6025 = vpack.c.b16 %v5637, %v5633
    %v6026 = vpack.c.b16 %v5638, %v5634
    %v6027 = vpack.c.b16 %v5639, %v5635
    %v6028 = vpack.c.b16 %v5640, %v5636
    %v6029 = vpack.c.b16 %v5645, %v5641
    %v6030 = vpack.c.b16 %v5646, %v5642
    %v6031 = vpack.c.b16 %v5647, %v5643
    %v6032 = vpack.c.b16 %v5648, %v5644
    %v6033 = vpack.c.b16 %v5653, %v5649
    %v6034 = vpack.c.b16 %v5654, %v5650
    %v6035 = vpack.c.b16 %v5655, %v5651
    %v6036 = vpack.c.b16 %v5656, %v5652
    %v6037 = vpack.c.b16 %v5661, %v5657
    %v6038 = vpack.c.b16 %v5662, %v5658
    %v6039 = vpack.c.b16 %v5663, %v5659
    %v6040 = vpack.c.b16 %v5664, %v5660
    %v6041 = vpack.c.b16 %v5669, %v5665
    %v6042 = vpack.c.b16 %v5670, %v5666
    %v6043 = vpack.c.b16 %v5671, %v5667
    %v6044 = vpack.c.b16 %v5672, %v5668
    %v6045 = vpack.c.b16 %v5677, %v5673
    %v6046 = vpack.c.b16 %v5678, %v5674
    %v6047 = vpack.c.b16 %v5679, %v5675
    %v6048 = vpack.c.b16 %v5680, %v5676
    %v6049 = vpack.c.b16 %v5685, %v5681
    %v6050 = vpack.c.b16 %v5686, %v5682
    %v6051 = vpack.c.b16 %v5687, %v5683
    %v6052 = vpack.c.b16 %v5688, %v5684
    %v6053 = vpack.c.b16 %v5693, %v5689
    %v6054 = vpack.c.b16 %v5694, %v5690
    %v6055 = vpack.c.b16 %v5695, %v5691
    %v6056 = vpack.c.b16 %v5696, %v5692
    %v6057 = vpack.c.b16 %v5701, %v5697
    %v6058 = vpack.c.b16 %v5702, %v5698
    %v6059 = vpack.c.b16 %v5703, %v5699
    %v6060 = vpack.c.b16 %v5704, %v5700
    %v6061 = vpack.c.b16 %v5709, %v5705
    %v6062 = vpack.c.b16 %v5710, %v5706
    %v6063 = vpack.c.b16 %v5711, %v5707
    %v6064 = vpack.c.b16 %v5712, %v5708
    %v6065 = vpack.c.b16 %v5717, %v5713
    %v6066 = vpack.c.b16 %v5718, %v5714
    %v6067 = vpack.c.b16 %v5719, %v5715
    %v6068 = vpack.c.b16 %v5720, %v5716
    %v6069 = vpack.c.b16 %v5725, %v5721
    %v6070 = vpack.c.b16 %v5726, %v5722
    %v6071 = vpack.c.b16 %v5727, %v5723
    %v6072 = vpack.c.b16 %v5728, %v5724
    %v6073 = vpack.c.b16 %v5733, %v5729
    %v6074 = vpack.c.b16 %v5734, %v5730
    %v6075 = vpack.c.b16 %v5735, %v5731
    %v6076 = vpack.c.b16 %v5736, %v5732
    %v6077 = vpack.c.b16 %v5741, %v5737
    %v6078 = vpack.c.b16 %v5742, %v5738
    %v6079 = vpack.c.b16 %v5743, %v5739
    %v6080 = vpack.c.b16 %v5744, %v5740
    %v6081 = vpack.c.b16 %v5749, %v5745
    %v6082 = vpack.c.b16 %v5750, %v5746
    %v6083 = vpack.c.b16 %v5751, %v5747
    %v6084 = vpack.c.b16 %v5752, %v5748
    %v6085 = vpack.c.b16 %v5757, %v5753
    %v6086 = vpack.c.b16 %v5758, %v5754
    %v6087 = vpack.c.b16 %v5759, %v5755
    %v6088 = vpack.c.b16 %v5760, %v5756
    %v6089 = vpack.c.b16 %v5765, %v5761
    %v6090 = vpack.c.b16 %v5766, %v5762
    %v6091 = vpack.c.b16 %v5767, %v5763
    %v6092 = vpack.c.b16 %v5768, %v5764
    %v6093 = vpack.c.b16 %v5773, %v5769
    %v6094 = vpack.c.b16 %v5774, %v5770
    %v6095 = vpack.c.b16 %v5775, %v5771
    %v6096 = vpack.c.b16 %v5776, %v5772
    %v6097 = vpack.c.b16 %v5781, %v5777
    %v6098 = vpack.c.b16 %v5782, %v5778
    %v6099 = vpack.c.b16 %v5783, %v5779
    %v6100 = vpack.c.b16 %v5784, %v5780
    %v6101 = vpack.c.b16 %v5789, %v5785
    %v6102 = vpack.c.b16 %v5790, %v5786
    %v6103 = vpack.c.b16 %v5791, %v5787
    %v6104 = vpack.c.b16 %v5792, %v5788
    %v6105 = vpack.c.b16 %v5797, %v5793
    %v6106 = vpack.c.b16 %v5798, %v5794
    %v6107 = vpack.c.b16 %v5799, %v5795
    %v6108 = vpack.c.b16 %v5800, %v5796
    %v6109 = vpack.c.b16 %v5805, %v5801
    %v6110 = vpack.c.b16 %v5806, %v5802
    %v6111 = vpack.c.b16 %v5807, %v5803
    %v6112 = vpack.c.b16 %v5808, %v5804
    %v6113 = vpack.c.b16 %v5813, %v5809
    %v6114 = vpack.c.b16 %v5814, %v5810
    %v6115 = vpack.c.b16 %v5815, %v5811
    %v6116 = vpack.c.b16 %v5816, %v5812
    %v6117 = vpack.c.b16 %v5821, %v5817
    %v6118 = vpack.c.b16 %v5822, %v5818
    %v6119 = vpack.c.b16 %v5823, %v5819
    %v6120 = vpack.c.b16 %v5824, %v5820
    %v6121 = vpack.c.b16 %v5829, %v5825
    %v6122 = vpack.c.b16 %v5830, %v5826
    %v6123 = vpack.c.b16 %v5831, %v5827
    %v6124 = vpack.c.b16 %v5832, %v5828
    %v6125 = vpack.c.b16 %v5837, %v5833
    %v6126 = vpack.c.b16 %v5838, %v5834
    %v6127 = vpack.c.b16 %v5839, %v5835
    %v6128 = vpack.c.b16 %v5840, %v5836
    %v6129 = vpack.c.b16 %v5845, %v5841
    %v6130 = vpack.c.b16 %v5846, %v5842
    %v6131 = vpack.c.b16 %v5847, %v5843
    %v6132 = vpack.c.b16 %v5848, %v5844
    %v6133 = vpack.c.b16 %v5853, %v5849
    %v6134 = vpack.c.b16 %v5854, %v5850
    %v6135 = vpack.c.b16 %v5855, %v5851
    %v6136 = vpack.c.b16 %v5856, %v5852
    %v6137 = vpack.c.b16 %v5861, %v5857
    %v6138 = vpack.c.b16 %v5862, %v5858
    %v6139 = vpack.c.b16 %v5863, %v5859
    %v6140 = vpack.c.b16 %v5864, %v5860
    %v6141 = vpack.c.b16 %v5869, %v5865
    %v6142 = vpack.c.b16 %v5870, %v5866
    %v6143 = vpack.c.b16 %v5871, %v5867
    %v6144 = vpack.c.b16 %v5872, %v5868
    %v6145 = vpack.c.b16 %v5877, %v5873
    %v6146 = vpack.c.b16 %v5878, %v5874
    %v6147 = vpack.c.b16 %v5879, %v5875
    %v6148 = vpack.c.b16 %v5880, %v5876
    %v6149 = vpack.c.b16 %v5885, %v5881
    %v6150 = vpack.c.b16 %v5886, %v5882
    %v6151 = vpack.c.b16 %v5887, %v5883
    %v6152 = vpack.c.b16 %v5888, %v5884
    %v6153 = vpack.c.b16 %v5893, %v5889
    %v6154 = vpack.c.b16 %v5894, %v5890
    %v6155 = vpack.c.b16 %v5895, %v5891
    %v6156 = vpack.c.b16 %v5896, %v5892
    %v6157 = vpack.c.b16 %v5901, %v5897
    %v6158 = vpack.c.b16 %v5902, %v5898
    %v6159 = vpack.c.b16 %v5903, %v5899
    %v6160 = vpack.c.b16 %v5904, %v5900
    %6417 = vmatpush.bf16.msra.mxu0 %v5933
    %6418 = vmatpush.bf16.msra.mxu0 %v5929
    %6419 = vmatpush.bf16.msra.mxu0 %v5925
    %6420 = vmatpush.bf16.msra.mxu0 %v5921
    %6421 = vmatpush.bf16.msra.mxu0 %v5917
    %6422 = vmatpush.bf16.msra.mxu0 %v5913
    %6423 = vmatpush.bf16.msra.mxu0 %v5909
    %6424 = vmatpush.bf16.msra.mxu0 %v5905
    %6425 = vmatmul.bf16.gmra.mxu0 %v4862
    %v6426 = vpop.f32.mrf.mxu0
    %v6427 = vadd.f32 %v5129, %v6426
    %v6428 = vpop.f32.mrf.mxu0
    %6429 = vdwg.mxu0
    %6430 = vmatpush.bf16.msra.mxu0 %v5965
    %6431 = vmatpush.bf16.msra.mxu0 %v5961
    %6432 = vmatpush.bf16.msra.mxu0 %v5957
    %6433 = vmatpush.bf16.msra.mxu0 %v5953
    %6434 = vmatpush.bf16.msra.mxu0 %v5949
    %6435 = vmatpush.bf16.msra.mxu0 %v5945
    %6436 = vmatpush.bf16.msra.mxu0 %v5941
    %6437 = vmatpush.bf16.msra.mxu0 %v5937
    %6438 = vmatmul.bf16.gmra.mxu0 %v4863
    %v6439 = vpop.f32.mrf.mxu0
    %v6440 = vadd.f32 %v6427, %v6439
    %v6441 = vpop.f32.mrf.mxu0
    %6442 = vdwg.mxu0
    %6443 = vmatpush.bf16.msra.mxu0 %v5997
    %6444 = vmatpush.bf16.msra.mxu0 %v5993
    %6445 = vmatpush.bf16.msra.mxu0 %v5989
    %6446 = vmatpush.bf16.msra.mxu0 %v5985
    %6447 = vmatpush.bf16.msra.mxu0 %v5981
    %6448 = vmatpush.bf16.msra.mxu0 %v5977
    %6449 = vmatpush.bf16.msra.mxu0 %v5973
    %6450 = vmatpush.bf16.msra.mxu0 %v5969
    %6451 = vmatmul.bf16.gmra.mxu0 %v4864
    %v6452 = vpop.f32.mrf.mxu0
    %v6453 = vadd.f32 %v6440, %v6452
    %v6454 = vpop.f32.mrf.mxu0
    %6455 = vdwg.mxu0
    %6456 = vmatpush.bf16.msra.mxu0 %v6029
    %6457 = vmatpush.bf16.msra.mxu0 %v6025
    %6458 = vmatpush.bf16.msra.mxu0 %v6021
    %6459 = vmatpush.bf16.msra.mxu0 %v6017
    %6460 = vmatpush.bf16.msra.mxu0 %v6013
    %6461 = vmatpush.bf16.msra.mxu0 %v6009
    %6462 = vmatpush.bf16.msra.mxu0 %v6005
    %6463 = vmatpush.bf16.msra.mxu0 %v6001
    %6464 = vmatmul.bf16.gmra.mxu0 %v4865
    %v6465 = vpop.f32.mrf.mxu0
    %v6466 = vadd.f32 %v6453, %v6465
    %v6467 = vpop.f32.mrf.mxu0
    %6468 = vdwg.mxu0
    %6469 = vmatpush.bf16.msra.mxu0 %v6061
    %6470 = vmatpush.bf16.msra.mxu0 %v6057
    %6471 = vmatpush.bf16.msra.mxu0 %v6053
    %6472 = vmatpush.bf16.msra.mxu0 %v6049
    %6473 = vmatpush.bf16.msra.mxu0 %v6045
    %6474 = vmatpush.bf16.msra.mxu0 %v6041
    %6475 = vmatpush.bf16.msra.mxu0 %v6037
    %6476 = vmatpush.bf16.msra.mxu0 %v6033
    %6477 = vmatmul.bf16.gmra.mxu0 %v4866
    %v6478 = vpop.f32.mrf.mxu0
    %v6479 = vadd.f32 %v6466, %v6478
    %v6480 = vpop.f32.mrf.mxu0
    %6481 = vdwg.mxu0
    %6482 = vmatpush.bf16.msra.mxu0 %v6093
    %6483 = vmatpush.bf16.msra.mxu0 %v6089
    %6484 = vmatpush.bf16.msra.mxu0 %v6085
    %6485 = vmatpush.bf16.msra.mxu0 %v6081
    %6486 = vmatpush.bf16.msra.mxu0 %v6077
    %6487 = vmatpush.bf16.msra.mxu0 %v6073
    %6488 = vmatpush.bf16.msra.mxu0 %v6069
    %6489 = vmatpush.bf16.msra.mxu0 %v6065
    %6490 = vmatmul.bf16.gmra.mxu0 %v4867
    %v6491 = vpop.f32.mrf.mxu0
    %v6492 = vadd.f32 %v6479, %v6491
    %v6493 = vpop.f32.mrf.mxu0
    %6494 = vdwg.mxu0
    %6495 = vmatpush.bf16.msra.mxu0 %v6125
    %6496 = vmatpush.bf16.msra.mxu0 %v6121
    %6497 = vmatpush.bf16.msra.mxu0 %v6117
    %6498 = vmatpush.bf16.msra.mxu0 %v6113
    %6499 = vmatpush.bf16.msra.mxu0 %v6109
    %6500 = vmatpush.bf16.msra.mxu0 %v6105
    %6501 = vmatpush.bf16.msra.mxu0 %v6101
    %6502 = vmatpush.bf16.msra.mxu0 %v6097
    %6503 = vmatmul.bf16.gmra.mxu0 %v4868
    %v6504 = vpop.f32.mrf.mxu0
    %v6505 = vadd.f32 %v6492, %v6504
    %v6506 = vpop.f32.mrf.mxu0
    %6507 = vdwg.mxu0
    %6508 = vmatpush.bf16.msra.mxu0 %v6157
    %6509 = vmatpush.bf16.msra.mxu0 %v6153
    %6510 = vmatpush.bf16.msra.mxu0 %v6149
    %6511 = vmatpush.bf16.msra.mxu0 %v6145
    %6512 = vmatpush.bf16.msra.mxu0 %v6141
    %6513 = vmatpush.bf16.msra.mxu0 %v6137
    %6514 = vmatpush.bf16.msra.mxu0 %v6133
    %6515 = vmatpush.bf16.msra.mxu0 %v6129
    %6516 = vmatmul.bf16.gmra.mxu0 %v4869
    %v6517 = vpop.f32.mrf.mxu0
    %v6518 = vadd.f32 %v6505, %v6517
    %v6519 = vpop.f32.mrf.mxu0
    %6520 = vdwg.mxu0
    %6521 = vmatpush.bf16.msra.mxu0 %v5934
    %6522 = vmatpush.bf16.msra.mxu0 %v5930
    %6523 = vmatpush.bf16.msra.mxu0 %v5926
    %6524 = vmatpush.bf16.msra.mxu0 %v5922
    %6525 = vmatpush.bf16.msra.mxu0 %v5918
    %6526 = vmatpush.bf16.msra.mxu0 %v5914
    %6527 = vmatpush.bf16.msra.mxu0 %v5910
    %6528 = vmatpush.bf16.msra.mxu0 %v5906
    %6529 = vmatmul.bf16.gmra.mxu0 %v4862
    %v6530 = vpop.f32.mrf.mxu0
    %v6531 = vadd.f32 %v5130, %v6530
    %v6532 = vpop.f32.mrf.mxu0
    %6533 = vdwg.mxu0
    %6534 = vmatpush.bf16.msra.mxu0 %v5966
    %6535 = vmatpush.bf16.msra.mxu0 %v5962
    %6536 = vmatpush.bf16.msra.mxu0 %v5958
    %6537 = vmatpush.bf16.msra.mxu0 %v5954
    %6538 = vmatpush.bf16.msra.mxu0 %v5950
    %6539 = vmatpush.bf16.msra.mxu0 %v5946
    %6540 = vmatpush.bf16.msra.mxu0 %v5942
    %6541 = vmatpush.bf16.msra.mxu0 %v5938
    %6542 = vmatmul.bf16.gmra.mxu0 %v4863
    %v6543 = vpop.f32.mrf.mxu0
    %v6544 = vadd.f32 %v6531, %v6543
    %v6545 = vpop.f32.mrf.mxu0
    %6546 = vdwg.mxu0
    %6547 = vmatpush.bf16.msra.mxu0 %v5998
    %6548 = vmatpush.bf16.msra.mxu0 %v5994
    %6549 = vmatpush.bf16.msra.mxu0 %v5990
    %6550 = vmatpush.bf16.msra.mxu0 %v5986
    %6551 = vmatpush.bf16.msra.mxu0 %v5982
    %6552 = vmatpush.bf16.msra.mxu0 %v5978
    %6553 = vmatpush.bf16.msra.mxu0 %v5974
    %6554 = vmatpush.bf16.msra.mxu0 %v5970
    %6555 = vmatmul.bf16.gmra.mxu0 %v4864
    %v6556 = vpop.f32.mrf.mxu0
    %v6557 = vadd.f32 %v6544, %v6556
    %v6558 = vpop.f32.mrf.mxu0
    %6559 = vdwg.mxu0
    %6560 = vmatpush.bf16.msra.mxu0 %v6030
    %6561 = vmatpush.bf16.msra.mxu0 %v6026
    %6562 = vmatpush.bf16.msra.mxu0 %v6022
    %6563 = vmatpush.bf16.msra.mxu0 %v6018
    %6564 = vmatpush.bf16.msra.mxu0 %v6014
    %6565 = vmatpush.bf16.msra.mxu0 %v6010
    %6566 = vmatpush.bf16.msra.mxu0 %v6006
    %6567 = vmatpush.bf16.msra.mxu0 %v6002
    %6568 = vmatmul.bf16.gmra.mxu0 %v4865
    %v6569 = vpop.f32.mrf.mxu0
    %v6570 = vadd.f32 %v6557, %v6569
    %v6571 = vpop.f32.mrf.mxu0
    %6572 = vdwg.mxu0
    %6573 = vmatpush.bf16.msra.mxu0 %v6062
    %6574 = vmatpush.bf16.msra.mxu0 %v6058
    %6575 = vmatpush.bf16.msra.mxu0 %v6054
    %6576 = vmatpush.bf16.msra.mxu0 %v6050
    %6577 = vmatpush.bf16.msra.mxu0 %v6046
    %6578 = vmatpush.bf16.msra.mxu0 %v6042
    %6579 = vmatpush.bf16.msra.mxu0 %v6038
    %6580 = vmatpush.bf16.msra.mxu0 %v6034
    %6581 = vmatmul.bf16.gmra.mxu0 %v4866
    %v6582 = vpop.f32.mrf.mxu0
    %v6583 = vadd.f32 %v6570, %v6582
    %v6584 = vpop.f32.mrf.mxu0
    %6585 = vdwg.mxu0
    %6586 = vmatpush.bf16.msra.mxu0 %v6094
    %6587 = vmatpush.bf16.msra.mxu0 %v6090
    %6588 = vmatpush.bf16.msra.mxu0 %v6086
    %6589 = vmatpush.bf16.msra.mxu0 %v6082
    %6590 = vmatpush.bf16.msra.mxu0 %v6078
    %6591 = vmatpush.bf16.msra.mxu0 %v6074
    %6592 = vmatpush.bf16.msra.mxu0 %v6070
    %6593 = vmatpush.bf16.msra.mxu0 %v6066
    %6594 = vmatmul.bf16.gmra.mxu0 %v4867
    %v6595 = vpop.f32.mrf.mxu0
    %v6596 = vadd.f32 %v6583, %v6595
    %v6597 = vpop.f32.mrf.mxu0
    %6598 = vdwg.mxu0
    %6599 = vmatpush.bf16.msra.mxu0 %v6126
    %6600 = vmatpush.bf16.msra.mxu0 %v6122
    %6601 = vmatpush.bf16.msra.mxu0 %v6118
    %6602 = vmatpush.bf16.msra.mxu0 %v6114
    %6603 = vmatpush.bf16.msra.mxu0 %v6110
    %6604 = vmatpush.bf16.msra.mxu0 %v6106
    %6605 = vmatpush.bf16.msra.mxu0 %v6102
    %6606 = vmatpush.bf16.msra.mxu0 %v6098
    %6607 = vmatmul.bf16.gmra.mxu0 %v4868
    %v6608 = vpop.f32.mrf.mxu0
    %v6609 = vadd.f32 %v6596, %v6608
    %v6610 = vpop.f32.mrf.mxu0
    %6611 = vdwg.mxu0
    %6612 = vmatpush.bf16.msra.mxu0 %v6158
    %6613 = vmatpush.bf16.msra.mxu0 %v6154
    %6614 = vmatpush.bf16.msra.mxu0 %v6150
    %6615 = vmatpush.bf16.msra.mxu0 %v6146
    %6616 = vmatpush.bf16.msra.mxu0 %v6142
    %6617 = vmatpush.bf16.msra.mxu0 %v6138
    %6618 = vmatpush.bf16.msra.mxu0 %v6134
    %6619 = vmatpush.bf16.msra.mxu0 %v6130
    %6620 = vmatmul.bf16.gmra.mxu0 %v4869
    %v6621 = vpop.f32.mrf.mxu0
    %v6622 = vadd.f32 %v6609, %v6621
    %v6623 = vpop.f32.mrf.mxu0
    %6624 = vdwg.mxu0
    %6625 = vmatpush.bf16.msra.mxu0 %v5935
    %6626 = vmatpush.bf16.msra.mxu0 %v5931
    %6627 = vmatpush.bf16.msra.mxu0 %v5927
    %6628 = vmatpush.bf16.msra.mxu0 %v5923
    %6629 = vmatpush.bf16.msra.mxu0 %v5919
    %6630 = vmatpush.bf16.msra.mxu0 %v5915
    %6631 = vmatpush.bf16.msra.mxu0 %v5911
    %6632 = vmatpush.bf16.msra.mxu0 %v5907
    %6633 = vmatmul.bf16.gmra.mxu0 %v4862
    %v6634 = vpop.f32.mrf.mxu0
    %v6635 = vadd.f32 %v5131, %v6634
    %v6636 = vpop.f32.mrf.mxu0
    %6637 = vdwg.mxu0
    %6638 = vmatpush.bf16.msra.mxu0 %v5967
    %6639 = vmatpush.bf16.msra.mxu0 %v5963
    %6640 = vmatpush.bf16.msra.mxu0 %v5959
    %6641 = vmatpush.bf16.msra.mxu0 %v5955
    %6642 = vmatpush.bf16.msra.mxu0 %v5951
    %6643 = vmatpush.bf16.msra.mxu0 %v5947
    %6644 = vmatpush.bf16.msra.mxu0 %v5943
    %6645 = vmatpush.bf16.msra.mxu0 %v5939
    %6646 = vmatmul.bf16.gmra.mxu0 %v4863
    %v6647 = vpop.f32.mrf.mxu0
    %v6648 = vadd.f32 %v6635, %v6647
    %v6649 = vpop.f32.mrf.mxu0
    %6650 = vdwg.mxu0
    %6651 = vmatpush.bf16.msra.mxu0 %v5999
    %6652 = vmatpush.bf16.msra.mxu0 %v5995
    %6653 = vmatpush.bf16.msra.mxu0 %v5991
    %6654 = vmatpush.bf16.msra.mxu0 %v5987
    %6655 = vmatpush.bf16.msra.mxu0 %v5983
    %6656 = vmatpush.bf16.msra.mxu0 %v5979
    %6657 = vmatpush.bf16.msra.mxu0 %v5975
    %6658 = vmatpush.bf16.msra.mxu0 %v5971
    %6659 = vmatmul.bf16.gmra.mxu0 %v4864
    %v6660 = vpop.f32.mrf.mxu0
    %v6661 = vadd.f32 %v6648, %v6660
    %v6662 = vpop.f32.mrf.mxu0
    %6663 = vdwg.mxu0
    %6664 = vmatpush.bf16.msra.mxu0 %v6031
    %6665 = vmatpush.bf16.msra.mxu0 %v6027
    %6666 = vmatpush.bf16.msra.mxu0 %v6023
    %6667 = vmatpush.bf16.msra.mxu0 %v6019
    %6668 = vmatpush.bf16.msra.mxu0 %v6015
    %6669 = vmatpush.bf16.msra.mxu0 %v6011
    %6670 = vmatpush.bf16.msra.mxu0 %v6007
    %6671 = vmatpush.bf16.msra.mxu0 %v6003
    %6672 = vmatmul.bf16.gmra.mxu0 %v4865
    %v6673 = vpop.f32.mrf.mxu0
    %v6674 = vadd.f32 %v6661, %v6673
    %v6675 = vpop.f32.mrf.mxu0
    %6676 = vdwg.mxu0
    %6677 = vmatpush.bf16.msra.mxu0 %v6063
    %6678 = vmatpush.bf16.msra.mxu0 %v6059
    %6679 = vmatpush.bf16.msra.mxu0 %v6055
    %6680 = vmatpush.bf16.msra.mxu0 %v6051
    %6681 = vmatpush.bf16.msra.mxu0 %v6047
    %6682 = vmatpush.bf16.msra.mxu0 %v6043
    %6683 = vmatpush.bf16.msra.mxu0 %v6039
    %6684 = vmatpush.bf16.msra.mxu0 %v6035
    %6685 = vmatmul.bf16.gmra.mxu0 %v4866
    %v6686 = vpop.f32.mrf.mxu0
    %v6687 = vadd.f32 %v6674, %v6686
    %v6688 = vpop.f32.mrf.mxu0
    %6689 = vdwg.mxu0
    %6690 = vmatpush.bf16.msra.mxu0 %v6095
    %6691 = vmatpush.bf16.msra.mxu0 %v6091
    %6692 = vmatpush.bf16.msra.mxu0 %v6087
    %6693 = vmatpush.bf16.msra.mxu0 %v6083
    %6694 = vmatpush.bf16.msra.mxu0 %v6079
    %6695 = vmatpush.bf16.msra.mxu0 %v6075
    %6696 = vmatpush.bf16.msra.mxu0 %v6071
    %6697 = vmatpush.bf16.msra.mxu0 %v6067
    %6698 = vmatmul.bf16.gmra.mxu0 %v4867
    %v6699 = vpop.f32.mrf.mxu0
    %v6700 = vadd.f32 %v6687, %v6699
    %v6701 = vpop.f32.mrf.mxu0
    %6702 = vdwg.mxu0
    %6703 = vmatpush.bf16.msra.mxu0 %v6127
    %6704 = vmatpush.bf16.msra.mxu0 %v6123
    %6705 = vmatpush.bf16.msra.mxu0 %v6119
    %6706 = vmatpush.bf16.msra.mxu0 %v6115
    %6707 = vmatpush.bf16.msra.mxu0 %v6111
    %6708 = vmatpush.bf16.msra.mxu0 %v6107
    %6709 = vmatpush.bf16.msra.mxu0 %v6103
    %6710 = vmatpush.bf16.msra.mxu0 %v6099
    %6711 = vmatmul.bf16.gmra.mxu0 %v4868
    %v6712 = vpop.f32.mrf.mxu0
    %v6713 = vadd.f32 %v6700, %v6712
    %v6714 = vpop.f32.mrf.mxu0
    %6715 = vdwg.mxu0
    %6716 = vmatpush.bf16.msra.mxu0 %v6159
    %6717 = vmatpush.bf16.msra.mxu0 %v6155
    %6718 = vmatpush.bf16.msra.mxu0 %v6151
    %6719 = vmatpush.bf16.msra.mxu0 %v6147
    %6720 = vmatpush.bf16.msra.mxu0 %v6143
    %6721 = vmatpush.bf16.msra.mxu0 %v6139
    %6722 = vmatpush.bf16.msra.mxu0 %v6135
    %6723 = vmatpush.bf16.msra.mxu0 %v6131
    %6724 = vmatmul.bf16.gmra.mxu0 %v4869
    %v6725 = vpop.f32.mrf.mxu0
    %v6726 = vadd.f32 %v6713, %v6725
    %v6727 = vpop.f32.mrf.mxu0
    %6728 = vdwg.mxu0
    %6729 = vmatpush.bf16.msra.mxu0 %v5936
    %6730 = vmatpush.bf16.msra.mxu0 %v5932
    %6731 = vmatpush.bf16.msra.mxu0 %v5928
    %6732 = vmatpush.bf16.msra.mxu0 %v5924
    %6733 = vmatpush.bf16.msra.mxu0 %v5920
    %6734 = vmatpush.bf16.msra.mxu0 %v5916
    %6735 = vmatpush.bf16.msra.mxu0 %v5912
    %6736 = vmatpush.bf16.msra.mxu0 %v5908
    %6737 = vmatmul.bf16.gmra.mxu0 %v4862
    %v6738 = vpop.f32.mrf.mxu0
    %v6739 = vadd.f32 %v5132, %v6738
    %v6740 = vpop.f32.mrf.mxu0
    %6741 = vdwg.mxu0
    %6742 = vmatpush.bf16.msra.mxu0 %v5968
    %6743 = vmatpush.bf16.msra.mxu0 %v5964
    %6744 = vmatpush.bf16.msra.mxu0 %v5960
    %6745 = vmatpush.bf16.msra.mxu0 %v5956
    %6746 = vmatpush.bf16.msra.mxu0 %v5952
    %6747 = vmatpush.bf16.msra.mxu0 %v5948
    %6748 = vmatpush.bf16.msra.mxu0 %v5944
    %6749 = vmatpush.bf16.msra.mxu0 %v5940
    %6750 = vmatmul.bf16.gmra.mxu0 %v4863
    %v6751 = vpop.f32.mrf.mxu0
    %v6752 = vadd.f32 %v6739, %v6751
    %v6753 = vpop.f32.mrf.mxu0
    %6754 = vdwg.mxu0
    %6755 = vmatpush.bf16.msra.mxu0 %v6000
    %6756 = vmatpush.bf16.msra.mxu0 %v5996
    %6757 = vmatpush.bf16.msra.mxu0 %v5992
    %6758 = vmatpush.bf16.msra.mxu0 %v5988
    %6759 = vmatpush.bf16.msra.mxu0 %v5984
    %6760 = vmatpush.bf16.msra.mxu0 %v5980
    %6761 = vmatpush.bf16.msra.mxu0 %v5976
    %6762 = vmatpush.bf16.msra.mxu0 %v5972
    %6763 = vmatmul.bf16.gmra.mxu0 %v4864
    %v6764 = vpop.f32.mrf.mxu0
    %v6765 = vadd.f32 %v6752, %v6764
    %v6766 = vpop.f32.mrf.mxu0
    %6767 = vdwg.mxu0
    %6768 = vmatpush.bf16.msra.mxu0 %v6032
    %6769 = vmatpush.bf16.msra.mxu0 %v6028
    %6770 = vmatpush.bf16.msra.mxu0 %v6024
    %6771 = vmatpush.bf16.msra.mxu0 %v6020
    %6772 = vmatpush.bf16.msra.mxu0 %v6016
    %6773 = vmatpush.bf16.msra.mxu0 %v6012
    %6774 = vmatpush.bf16.msra.mxu0 %v6008
    %6775 = vmatpush.bf16.msra.mxu0 %v6004
    %6776 = vmatmul.bf16.gmra.mxu0 %v4865
    %v6777 = vpop.f32.mrf.mxu0
    %v6778 = vadd.f32 %v6765, %v6777
    %v6779 = vpop.f32.mrf.mxu0
    %6780 = vdwg.mxu0
    %6781 = vmatpush.bf16.msra.mxu0 %v6064
    %6782 = vmatpush.bf16.msra.mxu0 %v6060
    %6783 = vmatpush.bf16.msra.mxu0 %v6056
    %6784 = vmatpush.bf16.msra.mxu0 %v6052
    %6785 = vmatpush.bf16.msra.mxu0 %v6048
    %6786 = vmatpush.bf16.msra.mxu0 %v6044
    %6787 = vmatpush.bf16.msra.mxu0 %v6040
    %6788 = vmatpush.bf16.msra.mxu0 %v6036
    %6789 = vmatmul.bf16.gmra.mxu0 %v4866
    %v6790 = vpop.f32.mrf.mxu0
    %v6791 = vadd.f32 %v6778, %v6790
    %v6792 = vpop.f32.mrf.mxu0
    %6793 = vdwg.mxu0
    %6794 = vmatpush.bf16.msra.mxu0 %v6096
    %6795 = vmatpush.bf16.msra.mxu0 %v6092
    %6796 = vmatpush.bf16.msra.mxu0 %v6088
    %6797 = vmatpush.bf16.msra.mxu0 %v6084
    %6798 = vmatpush.bf16.msra.mxu0 %v6080
    %6799 = vmatpush.bf16.msra.mxu0 %v6076
    %6800 = vmatpush.bf16.msra.mxu0 %v6072
    %6801 = vmatpush.bf16.msra.mxu0 %v6068
    %6802 = vmatmul.bf16.gmra.mxu0 %v4867
    %v6803 = vpop.f32.mrf.mxu0
    %v6804 = vadd.f32 %v6791, %v6803
    %v6805 = vpop.f32.mrf.mxu0
    %6806 = vdwg.mxu0
    %6807 = vmatpush.bf16.msra.mxu0 %v6128
    %6808 = vmatpush.bf16.msra.mxu0 %v6124
    %6809 = vmatpush.bf16.msra.mxu0 %v6120
    %6810 = vmatpush.bf16.msra.mxu0 %v6116
    %6811 = vmatpush.bf16.msra.mxu0 %v6112
    %6812 = vmatpush.bf16.msra.mxu0 %v6108
    %6813 = vmatpush.bf16.msra.mxu0 %v6104
    %6814 = vmatpush.bf16.msra.mxu0 %v6100
    %6815 = vmatmul.bf16.gmra.mxu0 %v4868
    %v6816 = vpop.f32.mrf.mxu0
    %v6817 = vadd.f32 %v6804, %v6816
    %v6818 = vpop.f32.mrf.mxu0
    %6819 = vdwg.mxu0
    %6820 = vmatpush.bf16.msra.mxu0 %v6160
    %6821 = vmatpush.bf16.msra.mxu0 %v6156
    %6822 = vmatpush.bf16.msra.mxu0 %v6152
    %6823 = vmatpush.bf16.msra.mxu0 %v6148
    %6824 = vmatpush.bf16.msra.mxu0 %v6144
    %6825 = vmatpush.bf16.msra.mxu0 %v6140
    %6826 = vmatpush.bf16.msra.mxu0 %v6136
    %6827 = vmatpush.bf16.msra.mxu0 %v6132
    %6828 = vmatmul.bf16.gmra.mxu0 %v4869
    %v6829 = vpop.f32.mrf.mxu0
    %v6830 = vadd.f32 %v6817, %v6829
    %v6831 = vpop.f32.mrf.mxu0
    %6832 = vdwg.mxu0
    %vm6833 = vcmp.gt.f32.partialorder %v6518, 0.0
    %vm6834 = vcmp.gt.f32.partialorder %v6622, 0.0
    %vm6835 = vcmp.gt.f32.partialorder %v6726, 0.0
    %vm6836 = vcmp.gt.f32.partialorder %v6830, 0.0
    %v6837 = vmul.f32 %v6518, 0.2
    %v6838 = vmul.f32 %v6622, 0.2
    %v6839 = vmul.f32 %v6726, 0.2
    %v6840 = vmul.f32 %v6830, 0.2
    %v6841 = vsel %vm6833, %v6518, %v6837
    %v6842 = vsel %vm6834, %v6622, %v6838
    %v6843 = vsel %vm6835, %v6726, %v6839
    %v6844 = vsel %vm6836, %v6830, %v6840
    %v6845 = vrot.slane %v6841, 4
    %v6846 = vadd.f32 %v6841, %v6845
    %v6847 = vrot.slane %v6846, 2
    %v6848 = vadd.f32 %v6846, %v6847
    %v6849 = vrot.slane %v6848, 1
    %v6850 = vadd.f32 %v6848, %v6849
    %v6851 = vrot.slane %v6842, 4
    %v6852 = vadd.f32 %v6842, %v6851
    %v6853 = vrot.slane %v6852, 2
    %v6854 = vadd.f32 %v6852, %v6853
    %v6855 = vrot.slane %v6854, 1
    %v6856 = vadd.f32 %v6854, %v6855
    %v6857 = vrot.slane %v6843, 4
    %v6858 = vadd.f32 %v6843, %v6857
    %v6859 = vrot.slane %v6858, 2
    %v6860 = vadd.f32 %v6858, %v6859
    %v6861 = vrot.slane %v6860, 1
    %v6862 = vadd.f32 %v6860, %v6861
    %v6863 = vrot.slane %v6844, 4
    %v6864 = vadd.f32 %v6844, %v6863
    %v6865 = vrot.slane %v6864, 2
    %v6866 = vadd.f32 %v6864, %v6865
    %v6867 = vrot.slane %v6866, 1
    %v6868 = vadd.f32 %v6866, %v6867
    %v6869 = vmul.f32 %v6850, %v570
    %v6870 = vmul.f32 %v6856, %v570
    %v6871 = vmul.f32 %v6862, %v570
    %v6872 = vmul.f32 %v6868, %v570
    %v6873 = vsub.f32 %v6841, %v6869
    %v6874 = vsub.f32 %v6842, %v6870
    %v6875 = vsub.f32 %v6843, %v6871
    %v6876 = vsub.f32 %v6844, %v6872
    %v6877 = vmul.f32 %v6873, %v6873
    %v6878 = vmul.f32 %v6874, %v6874
    %v6879 = vmul.f32 %v6875, %v6875
    %v6880 = vmul.f32 %v6876, %v6876
    %v6881 = vrot.slane %v6877, 4
    %v6882 = vadd.f32 %v6877, %v6881
    %v6883 = vrot.slane %v6882, 2
    %v6884 = vadd.f32 %v6882, %v6883
    %v6885 = vrot.slane %v6884, 1
    %v6886 = vadd.f32 %v6884, %v6885
    %v6887 = vrot.slane %v6878, 4
    %v6888 = vadd.f32 %v6878, %v6887
    %v6889 = vrot.slane %v6888, 2
    %v6890 = vadd.f32 %v6888, %v6889
    %v6891 = vrot.slane %v6890, 1
    %v6892 = vadd.f32 %v6890, %v6891
    %v6893 = vrot.slane %v6879, 4
    %v6894 = vadd.f32 %v6879, %v6893
    %v6895 = vrot.slane %v6894, 2
    %v6896 = vadd.f32 %v6894, %v6895
    %v6897 = vrot.slane %v6896, 1
    %v6898 = vadd.f32 %v6896, %v6897
    %v6899 = vrot.slane %v6880, 4
    %v6900 = vadd.f32 %v6880, %v6899
    %v6901 = vrot.slane %v6900, 2
    %v6902 = vadd.f32 %v6900, %v6901
    %v6903 = vrot.slane %v6902, 1
    %v6904 = vadd.f32 %v6902, %v6903
    %v6905 = vmul.f32 %v6886, %v570
    %v6906 = vmul.f32 %v6892, %v570
    %v6907 = vmul.f32 %v6898, %v570
    %v6908 = vmul.f32 %v6904, %v570
    %v6909 = vadd.f32 %v6905, 1e-05
    %v6910 = vadd.f32 %v6906, 1e-05
    %v6911 = vadd.f32 %v6907, 1e-05
    %v6912 = vadd.f32 %v6908, 1e-05
    %v6913 = vrsqrt.pop %v6909
    %v6914 = vmul.f32 %v6913, %v6909
    %v6915 = vmul.f32 %v6914, %v6913
    %v6916 = vmul.f32 0.5, %v6915
    %v6917 = vsub.f32 1.5, %v6916
    %v6918 = vmul.f32 %v6913, %v6917
    %vm6919 = vweird.f32 %v6909
    %vm6920 = vweird.f32 %v6913
    %vm6921 = vmor %vm6919, %vm6920
    %v6922 = vsel %vm6921, %v6913, %v6918
    %v6923 = vrsqrt.pop %v6910
    %v6924 = vmul.f32 %v6923, %v6910
    %v6925 = vmul.f32 %v6924, %v6923
    %v6926 = vmul.f32 0.5, %v6925
    %v6927 = vsub.f32 1.5, %v6926
    %v6928 = vmul.f32 %v6923, %v6927
    %vm6929 = vweird.f32 %v6910
    %vm6930 = vweird.f32 %v6923
    %vm6931 = vmor %vm6929, %vm6930
    %v6932 = vsel %vm6931, %v6923, %v6928
    %v6933 = vrsqrt.pop %v6911
    %v6934 = vmul.f32 %v6933, %v6911
    %v6935 = vmul.f32 %v6934, %v6933
    %v6936 = vmul.f32 0.5, %v6935
    %v6937 = vsub.f32 1.5, %v6936
    %v6938 = vmul.f32 %v6933, %v6937
    %vm6939 = vweird.f32 %v6911
    %vm6940 = vweird.f32 %v6933
    %vm6941 = vmor %vm6939, %vm6940
    %v6942 = vsel %vm6941, %v6933, %v6938
    %v6943 = vrsqrt.pop %v6912
    %v6944 = vmul.f32 %v6943, %v6912
    %v6945 = vmul.f32 %v6944, %v6943
    %v6946 = vmul.f32 0.5, %v6945
    %v6947 = vsub.f32 1.5, %v6946
    %v6948 = vmul.f32 %v6943, %v6947
    %vm6949 = vweird.f32 %v6912
    %vm6950 = vweird.f32 %v6943
    %vm6951 = vmor %vm6949, %vm6950
    %v6952 = vsel %vm6951, %v6943, %v6948
    %v6953 = vmul.f32 %v6873, %v6922
    %v6954 = vmul.f32 %v6874, %v6932
    %v6955 = vmul.f32 %v6875, %v6942
    %v6956 = vmul.f32 %v6876, %v6952
    %s6957 = scalar_lea.vmem [#allocation12], 70
    %v6958 = vld [vmem:[%s6957] ss:$8 sm:$0xf]
    %v6960 = vperm.slane %v6958, 0
    %v6961 = vperm.slane %v6958, 1
    %v6962 = vperm.slane %v6958, 2
    %v6963 = vperm.slane %v6958, 3
    %v6968 = vmul.f32 %v6953, %v6960
    %v6969 = vmul.f32 %v6954, %v6961
    %v6970 = vmul.f32 %v6955, %v6962
    %v6971 = vmul.f32 %v6956, %v6963
    %s6972 = scalar_lea.vmem [#allocation12], 71
    %v6973 = vld [vmem:[%s6972] ss:$8 sm:$0xf]
    %v6975 = vperm.slane %v6973, 0
    %v6976 = vperm.slane %v6973, 1
    %v6977 = vperm.slane %v6973, 2
    %v6978 = vperm.slane %v6973, 3
    %v6983 = vadd.f32 %v6968, %v6975
    %v6984 = vadd.f32 %v6969, %v6976
    %v6985 = vadd.f32 %v6970, %v6977
    %v6986 = vadd.f32 %v6971, %v6978
    %s6987 = smul.u32 %s1292, 2
    %s6988 = sshll.u32 %s6987, 4
    %6989 = dma.done %s427, %s6988
    %v6990 = vpack.c.bf16 %v6983, %v6983
    %v6991 = vpack.c.bf16 %v6984, %v6984
    %v6992 = vpack.c.bf16 %v6985, %v6985
    %v6993 = vpack.c.bf16 %v6986, %v6986
    %v6994 = vld [vmem:[#allocation9] sm:$0xff]
    %v6995 = vld [vmem:[#allocation9 + $0x8] sm:$0xff]
    %v6996 = vld [vmem:[#allocation9 + $0x10] sm:$0xff]
    %v6997 = vld [vmem:[#allocation9 + $0x18] sm:$0xff]
    %v6998 = vld [vmem:[#allocation9 + $0x20] sm:$0xff]
    %v6999 = vld [vmem:[#allocation9 + $0x28] sm:$0xff]
    %v7000 = vld [vmem:[#allocation9 + $0x30] sm:$0xff]
    %v7001 = vld [vmem:[#allocation9 + $0x38] sm:$0xff]
    %v7002 = vld [vmem:[#allocation9 + $0x40] sm:$0xff]
    %v7003 = vld [vmem:[#allocation9 + $0x48] sm:$0xff]
    %v7004 = vld [vmem:[#allocation9 + $0x50] sm:$0xff]
    %v7005 = vld [vmem:[#allocation9 + $0x58] sm:$0xff]
    %v7006 = vld [vmem:[#allocation9 + $0x60] sm:$0xff]
    %v7007 = vld [vmem:[#allocation9 + $0x68] sm:$0xff]
    %v7008 = vld [vmem:[#allocation9 + $0x70] sm:$0xff]
    %v7009 = vld [vmem:[#allocation9 + $0x78] sm:$0xff]
    %v7010 = vld [vmem:[#allocation9 + $0x80] sm:$0xff]
    %v7011 = vld [vmem:[#allocation9 + $0x88] sm:$0xff]
    %v7012 = vld [vmem:[#allocation9 + $0x90] sm:$0xff]
    %v7013 = vld [vmem:[#allocation9 + $0x98] sm:$0xff]
    %v7014 = vld [vmem:[#allocation9 + $0xa0] sm:$0xff]
    %v7015 = vld [vmem:[#allocation9 + $0xa8] sm:$0xff]
    %v7016 = vld [vmem:[#allocation9 + $0xb0] sm:$0xff]
    %v7017 = vld [vmem:[#allocation9 + $0xb8] sm:$0xff]
    %v7018 = vld [vmem:[#allocation9 + $0xc0] sm:$0xff]
    %v7019 = vld [vmem:[#allocation9 + $0xc8] sm:$0xff]
    %v7020 = vld [vmem:[#allocation9 + $0xd0] sm:$0xff]
    %v7021 = vld [vmem:[#allocation9 + $0xd8] sm:$0xff]
    %v7022 = vld [vmem:[#allocation9 + $0xe0] sm:$0xff]
    %v7023 = vld [vmem:[#allocation9 + $0xe8] sm:$0xff]
    %v7024 = vld [vmem:[#allocation9 + $0xf0] sm:$0xff]
    %v7025 = vld [vmem:[#allocation9 + $0xf8] sm:$0xff]
    %v7026 = vld [vmem:[#allocation9 + $0x100] sm:$0xff]
    %v7027 = vld [vmem:[#allocation9 + $0x108] sm:$0xff]
    %v7028 = vld [vmem:[#allocation9 + $0x110] sm:$0xff]
    %v7029 = vld [vmem:[#allocation9 + $0x118] sm:$0xff]
    %v7030 = vld [vmem:[#allocation9 + $0x120] sm:$0xff]
    %v7031 = vld [vmem:[#allocation9 + $0x128] sm:$0xff]
    %v7032 = vld [vmem:[#allocation9 + $0x130] sm:$0xff]
    %v7033 = vld [vmem:[#allocation9 + $0x138] sm:$0xff]
    %v7034 = vld [vmem:[#allocation9 + $0x140] sm:$0xff]
    %v7035 = vld [vmem:[#allocation9 + $0x148] sm:$0xff]
    %v7036 = vld [vmem:[#allocation9 + $0x150] sm:$0xff]
    %v7037 = vld [vmem:[#allocation9 + $0x158] sm:$0xff]
    %v7038 = vld [vmem:[#allocation9 + $0x160] sm:$0xff]
    %v7039 = vld [vmem:[#allocation9 + $0x168] sm:$0xff]
    %v7040 = vld [vmem:[#allocation9 + $0x170] sm:$0xff]
    %v7041 = vld [vmem:[#allocation9 + $0x178] sm:$0xff]
    %v7042 = vld [vmem:[#allocation9 + $0x180] sm:$0xff]
    %v7043 = vld [vmem:[#allocation9 + $0x188] sm:$0xff]
    %v7044 = vld [vmem:[#allocation9 + $0x190] sm:$0xff]
    %v7045 = vld [vmem:[#allocation9 + $0x198] sm:$0xff]
    %v7046 = vld [vmem:[#allocation9 + $0x1a0] sm:$0xff]
    %v7047 = vld [vmem:[#allocation9 + $0x1a8] sm:$0xff]
    %v7048 = vld [vmem:[#allocation9 + $0x1b0] sm:$0xff]
    %v7049 = vld [vmem:[#allocation9 + $0x1b8] sm:$0xff]
    %v7050 = vld [vmem:[#allocation9 + $0x1c0] sm:$0xff]
    %v7051 = vld [vmem:[#allocation9 + $0x1c8] sm:$0xff]
    %v7052 = vld [vmem:[#allocation9 + $0x1d0] sm:$0xff]
    %v7053 = vld [vmem:[#allocation9 + $0x1d8] sm:$0xff]
    %v7054 = vld [vmem:[#allocation9 + $0x1e0] sm:$0xff]
    %v7055 = vld [vmem:[#allocation9 + $0x1e8] sm:$0xff]
    %v7056 = vld [vmem:[#allocation9 + $0x1f0] sm:$0xff]
    %v7057 = vld [vmem:[#allocation9 + $0x1f8] sm:$0xff]
    %s7058 = scalar_lea.vmem [#allocation12], 128
    %v7059 = vld [vmem:[%s7058] ss:$8 sm:$0x3]
    %v7061 = vperm.slane %v7059, 0
    %v7062 = vperm.slane %v7059, 1
    %v7129 = vunpack.c.l.b16 %v6994
    %v7130 = vunpack.c.h.b16 %v6994
    %v7131 = vunpack.c.l.b16 %v6995
    %v7132 = vunpack.c.h.b16 %v6995
    %v7133 = vunpack.c.l.b16 %v6996
    %v7134 = vunpack.c.h.b16 %v6996
    %v7135 = vunpack.c.l.b16 %v6997
    %v7136 = vunpack.c.h.b16 %v6997
    %v7137 = vunpack.c.l.b16 %v6998
    %v7138 = vunpack.c.h.b16 %v6998
    %v7139 = vunpack.c.l.b16 %v6999
    %v7140 = vunpack.c.h.b16 %v6999
    %v7141 = vunpack.c.l.b16 %v7000
    %v7142 = vunpack.c.h.b16 %v7000
    %v7143 = vunpack.c.l.b16 %v7001
    %v7144 = vunpack.c.h.b16 %v7001
    %v7145 = vunpack.c.l.b16 %v7002
    %v7146 = vunpack.c.h.b16 %v7002
    %v7147 = vunpack.c.l.b16 %v7003
    %v7148 = vunpack.c.h.b16 %v7003
    %v7149 = vunpack.c.l.b16 %v7004
    %v7150 = vunpack.c.h.b16 %v7004
    %v7151 = vunpack.c.l.b16 %v7005
    %v7152 = vunpack.c.h.b16 %v7005
    %v7153 = vunpack.c.l.b16 %v7006
    %v7154 = vunpack.c.h.b16 %v7006
    %v7155 = vunpack.c.l.b16 %v7007
    %v7156 = vunpack.c.h.b16 %v7007
    %v7157 = vunpack.c.l.b16 %v7008
    %v7158 = vunpack.c.h.b16 %v7008
    %v7159 = vunpack.c.l.b16 %v7009
    %v7160 = vunpack.c.h.b16 %v7009
    %v7161 = vunpack.c.l.b16 %v7010
    %v7162 = vunpack.c.h.b16 %v7010
    %v7163 = vunpack.c.l.b16 %v7011
    %v7164 = vunpack.c.h.b16 %v7011
    %v7165 = vunpack.c.l.b16 %v7012
    %v7166 = vunpack.c.h.b16 %v7012
    %v7167 = vunpack.c.l.b16 %v7013
    %v7168 = vunpack.c.h.b16 %v7013
    %v7169 = vunpack.c.l.b16 %v7014
    %v7170 = vunpack.c.h.b16 %v7014
    %v7171 = vunpack.c.l.b16 %v7015
    %v7172 = vunpack.c.h.b16 %v7015
    %v7173 = vunpack.c.l.b16 %v7016
    %v7174 = vunpack.c.h.b16 %v7016
    %v7175 = vunpack.c.l.b16 %v7017
    %v7176 = vunpack.c.h.b16 %v7017
    %v7177 = vunpack.c.l.b16 %v7018
    %v7178 = vunpack.c.h.b16 %v7018
    %v7179 = vunpack.c.l.b16 %v7019
    %v7180 = vunpack.c.h.b16 %v7019
    %v7181 = vunpack.c.l.b16 %v7020
    %v7182 = vunpack.c.h.b16 %v7020
    %v7183 = vunpack.c.l.b16 %v7021
    %v7184 = vunpack.c.h.b16 %v7021
    %v7185 = vunpack.c.l.b16 %v7022
    %v7186 = vunpack.c.h.b16 %v7022
    %v7187 = vunpack.c.l.b16 %v7023
    %v7188 = vunpack.c.h.b16 %v7023
    %v7189 = vunpack.c.l.b16 %v7024
    %v7190 = vunpack.c.h.b16 %v7024
    %v7191 = vunpack.c.l.b16 %v7025
    %v7192 = vunpack.c.h.b16 %v7025
    %v7193 = vunpack.c.l.b16 %v7026
    %v7194 = vunpack.c.h.b16 %v7026
    %v7195 = vunpack.c.l.b16 %v7027
    %v7196 = vunpack.c.h.b16 %v7027
    %v7197 = vunpack.c.l.b16 %v7028
    %v7198 = vunpack.c.h.b16 %v7028
    %v7199 = vunpack.c.l.b16 %v7029
    %v7200 = vunpack.c.h.b16 %v7029
    %v7201 = vunpack.c.l.b16 %v7030
    %v7202 = vunpack.c.h.b16 %v7030
    %v7203 = vunpack.c.l.b16 %v7031
    %v7204 = vunpack.c.h.b16 %v7031
    %v7205 = vunpack.c.l.b16 %v7032
    %v7206 = vunpack.c.h.b16 %v7032
    %v7207 = vunpack.c.l.b16 %v7033
    %v7208 = vunpack.c.h.b16 %v7033
    %v7209 = vunpack.c.l.b16 %v7034
    %v7210 = vunpack.c.h.b16 %v7034
    %v7211 = vunpack.c.l.b16 %v7035
    %v7212 = vunpack.c.h.b16 %v7035
    %v7213 = vunpack.c.l.b16 %v7036
    %v7214 = vunpack.c.h.b16 %v7036
    %v7215 = vunpack.c.l.b16 %v7037
    %v7216 = vunpack.c.h.b16 %v7037
    %v7217 = vunpack.c.l.b16 %v7038
    %v7218 = vunpack.c.h.b16 %v7038
    %v7219 = vunpack.c.l.b16 %v7039
    %v7220 = vunpack.c.h.b16 %v7039
    %v7221 = vunpack.c.l.b16 %v7040
    %v7222 = vunpack.c.h.b16 %v7040
    %v7223 = vunpack.c.l.b16 %v7041
    %v7224 = vunpack.c.h.b16 %v7041
    %v7225 = vunpack.c.l.b16 %v7042
    %v7226 = vunpack.c.h.b16 %v7042
    %v7227 = vunpack.c.l.b16 %v7043
    %v7228 = vunpack.c.h.b16 %v7043
    %v7229 = vunpack.c.l.b16 %v7044
    %v7230 = vunpack.c.h.b16 %v7044
    %v7231 = vunpack.c.l.b16 %v7045
    %v7232 = vunpack.c.h.b16 %v7045
    %v7233 = vunpack.c.l.b16 %v7046
    %v7234 = vunpack.c.h.b16 %v7046
    %v7235 = vunpack.c.l.b16 %v7047
    %v7236 = vunpack.c.h.b16 %v7047
    %v7237 = vunpack.c.l.b16 %v7048
    %v7238 = vunpack.c.h.b16 %v7048
    %v7239 = vunpack.c.l.b16 %v7049
    %v7240 = vunpack.c.h.b16 %v7049
    %v7241 = vunpack.c.l.b16 %v7050
    %v7242 = vunpack.c.h.b16 %v7050
    %v7243 = vunpack.c.l.b16 %v7051
    %v7244 = vunpack.c.h.b16 %v7051
    %v7245 = vunpack.c.l.b16 %v7052
    %v7246 = vunpack.c.h.b16 %v7052
    %v7247 = vunpack.c.l.b16 %v7053
    %v7248 = vunpack.c.h.b16 %v7053
    %v7249 = vunpack.c.l.b16 %v7054
    %v7250 = vunpack.c.h.b16 %v7054
    %v7251 = vunpack.c.l.b16 %v7055
    %v7252 = vunpack.c.h.b16 %v7055
    %v7253 = vunpack.c.l.b16 %v7056
    %v7254 = vunpack.c.h.b16 %v7056
    %v7255 = vunpack.c.l.b16 %v7057
    %v7256 = vunpack.c.h.b16 %v7057
    %v7257 = vpack.c.b16 %v7131, %v7129
    %v7258 = vpack.c.b16 %v7132, %v7130
    %v7259 = vpack.c.b16 %v7135, %v7133
    %v7260 = vpack.c.b16 %v7136, %v7134
    %v7261 = vpack.c.b16 %v7139, %v7137
    %v7262 = vpack.c.b16 %v7140, %v7138
    %v7263 = vpack.c.b16 %v7143, %v7141
    %v7264 = vpack.c.b16 %v7144, %v7142
    %v7265 = vpack.c.b16 %v7147, %v7145
    %v7266 = vpack.c.b16 %v7148, %v7146
    %v7267 = vpack.c.b16 %v7151, %v7149
    %v7268 = vpack.c.b16 %v7152, %v7150
    %v7269 = vpack.c.b16 %v7155, %v7153
    %v7270 = vpack.c.b16 %v7156, %v7154
    %v7271 = vpack.c.b16 %v7159, %v7157
    %v7272 = vpack.c.b16 %v7160, %v7158
    %v7273 = vpack.c.b16 %v7163, %v7161
    %v7274 = vpack.c.b16 %v7164, %v7162
    %v7275 = vpack.c.b16 %v7167, %v7165
    %v7276 = vpack.c.b16 %v7168, %v7166
    %v7277 = vpack.c.b16 %v7171, %v7169
    %v7278 = vpack.c.b16 %v7172, %v7170
    %v7279 = vpack.c.b16 %v7175, %v7173
    %v7280 = vpack.c.b16 %v7176, %v7174
    %v7281 = vpack.c.b16 %v7179, %v7177
    %v7282 = vpack.c.b16 %v7180, %v7178
    %v7283 = vpack.c.b16 %v7183, %v7181
    %v7284 = vpack.c.b16 %v7184, %v7182
    %v7285 = vpack.c.b16 %v7187, %v7185
    %v7286 = vpack.c.b16 %v7188, %v7186
    %v7287 = vpack.c.b16 %v7191, %v7189
    %v7288 = vpack.c.b16 %v7192, %v7190
    %v7289 = vpack.c.b16 %v7195, %v7193
    %v7290 = vpack.c.b16 %v7196, %v7194
    %v7291 = vpack.c.b16 %v7199, %v7197
    %v7292 = vpack.c.b16 %v7200, %v7198
    %v7293 = vpack.c.b16 %v7203, %v7201
    %v7294 = vpack.c.b16 %v7204, %v7202
    %v7295 = vpack.c.b16 %v7207, %v7205
    %v7296 = vpack.c.b16 %v7208, %v7206
    %v7297 = vpack.c.b16 %v7211, %v7209
    %v7298 = vpack.c.b16 %v7212, %v7210
    %v7299 = vpack.c.b16 %v7215, %v7213
    %v7300 = vpack.c.b16 %v7216, %v7214
    %v7301 = vpack.c.b16 %v7219, %v7217
    %v7302 = vpack.c.b16 %v7220, %v7218
    %v7303 = vpack.c.b16 %v7223, %v7221
    %v7304 = vpack.c.b16 %v7224, %v7222
    %v7305 = vpack.c.b16 %v7227, %v7225
    %v7306 = vpack.c.b16 %v7228, %v7226
    %v7307 = vpack.c.b16 %v7231, %v7229
    %v7308 = vpack.c.b16 %v7232, %v7230
    %v7309 = vpack.c.b16 %v7235, %v7233
    %v7310 = vpack.c.b16 %v7236, %v7234
    %v7311 = vpack.c.b16 %v7239, %v7237
    %v7312 = vpack.c.b16 %v7240, %v7238
    %v7313 = vpack.c.b16 %v7243, %v7241
    %v7314 = vpack.c.b16 %v7244, %v7242
    %v7315 = vpack.c.b16 %v7247, %v7245
    %v7316 = vpack.c.b16 %v7248, %v7246
    %v7317 = vpack.c.b16 %v7251, %v7249
    %v7318 = vpack.c.b16 %v7252, %v7250
    %v7319 = vpack.c.b16 %v7255, %v7253
    %v7320 = vpack.c.b16 %v7256, %v7254
    %7385 = vmatpush.bf16.msra.mxu0 %v7271
    %7386 = vmatpush.bf16.msra.mxu0 %v7269
    %7387 = vmatpush.bf16.msra.mxu0 %v7267
    %7388 = vmatpush.bf16.msra.mxu0 %v7265
    %7389 = vmatpush.bf16.msra.mxu0 %v7263
    %7390 = vmatpush.bf16.msra.mxu0 %v7261
    %7391 = vmatpush.bf16.msra.mxu0 %v7259
    %7392 = vmatpush.bf16.msra.mxu0 %v7257
    %7393 = vmatmul.bf16.gmra.mxu0 %v6990
    %v7394 = vpop.f32.mrf.mxu0
    %v7395 = vadd.f32 %v7061, %v7394
    %v7396 = vpop.f32.mrf.mxu0
    %7397 = vdwg.mxu0
    %7398 = vmatpush.bf16.msra.mxu0 %v7287
    %7399 = vmatpush.bf16.msra.mxu0 %v7285
    %7400 = vmatpush.bf16.msra.mxu0 %v7283
    %7401 = vmatpush.bf16.msra.mxu0 %v7281
    %7402 = vmatpush.bf16.msra.mxu0 %v7279
    %7403 = vmatpush.bf16.msra.mxu0 %v7277
    %7404 = vmatpush.bf16.msra.mxu0 %v7275
    %7405 = vmatpush.bf16.msra.mxu0 %v7273
    %7406 = vmatmul.bf16.gmra.mxu0 %v6991
    %v7407 = vpop.f32.mrf.mxu0
    %v7408 = vadd.f32 %v7395, %v7407
    %v7409 = vpop.f32.mrf.mxu0
    %7410 = vdwg.mxu0
    %7411 = vmatpush.bf16.msra.mxu0 %v7303
    %7412 = vmatpush.bf16.msra.mxu0 %v7301
    %7413 = vmatpush.bf16.msra.mxu0 %v7299
    %7414 = vmatpush.bf16.msra.mxu0 %v7297
    %7415 = vmatpush.bf16.msra.mxu0 %v7295
    %7416 = vmatpush.bf16.msra.mxu0 %v7293
    %7417 = vmatpush.bf16.msra.mxu0 %v7291
    %7418 = vmatpush.bf16.msra.mxu0 %v7289
    %7419 = vmatmul.bf16.gmra.mxu0 %v6992
    %v7420 = vpop.f32.mrf.mxu0
    %v7421 = vadd.f32 %v7408, %v7420
    %v7422 = vpop.f32.mrf.mxu0
    %7423 = vdwg.mxu0
    %7424 = vmatpush.bf16.msra.mxu0 %v7319
    %7425 = vmatpush.bf16.msra.mxu0 %v7317
    %7426 = vmatpush.bf16.msra.mxu0 %v7315
    %7427 = vmatpush.bf16.msra.mxu0 %v7313
    %7428 = vmatpush.bf16.msra.mxu0 %v7311
    %7429 = vmatpush.bf16.msra.mxu0 %v7309
    %7430 = vmatpush.bf16.msra.mxu0 %v7307
    %7431 = vmatpush.bf16.msra.mxu0 %v7305
    %7432 = vmatmul.bf16.gmra.mxu0 %v6993
    %v7433 = vpop.f32.mrf.mxu0
    %v7434 = vadd.f32 %v7421, %v7433
    %v7435 = vpop.f32.mrf.mxu0
    %7436 = vdwg.mxu0
    %7437 = vmatpush.bf16.msra.mxu0 %v7272
    %7438 = vmatpush.bf16.msra.mxu0 %v7270
    %7439 = vmatpush.bf16.msra.mxu0 %v7268
    %7440 = vmatpush.bf16.msra.mxu0 %v7266
    %7441 = vmatpush.bf16.msra.mxu0 %v7264
    %7442 = vmatpush.bf16.msra.mxu0 %v7262
    %7443 = vmatpush.bf16.msra.mxu0 %v7260
    %7444 = vmatpush.bf16.msra.mxu0 %v7258
    %7445 = vmatmul.bf16.gmra.mxu0 %v6990
    %v7446 = vpop.f32.mrf.mxu0
    %v7447 = vadd.f32 %v7062, %v7446
    %v7448 = vpop.f32.mrf.mxu0
    %7449 = vdwg.mxu0
    %7450 = vmatpush.bf16.msra.mxu0 %v7288
    %7451 = vmatpush.bf16.msra.mxu0 %v7286
    %7452 = vmatpush.bf16.msra.mxu0 %v7284
    %7453 = vmatpush.bf16.msra.mxu0 %v7282
    %7454 = vmatpush.bf16.msra.mxu0 %v7280
    %7455 = vmatpush.bf16.msra.mxu0 %v7278
    %7456 = vmatpush.bf16.msra.mxu0 %v7276
    %7457 = vmatpush.bf16.msra.mxu0 %v7274
    %7458 = vmatmul.bf16.gmra.mxu0 %v6991
    %v7459 = vpop.f32.mrf.mxu0
    %v7460 = vadd.f32 %v7447, %v7459
    %v7461 = vpop.f32.mrf.mxu0
    %7462 = vdwg.mxu0
    %7463 = vmatpush.bf16.msra.mxu0 %v7304
    %7464 = vmatpush.bf16.msra.mxu0 %v7302
    %7465 = vmatpush.bf16.msra.mxu0 %v7300
    %7466 = vmatpush.bf16.msra.mxu0 %v7298
    %7467 = vmatpush.bf16.msra.mxu0 %v7296
    %7468 = vmatpush.bf16.msra.mxu0 %v7294
    %7469 = vmatpush.bf16.msra.mxu0 %v7292
    %7470 = vmatpush.bf16.msra.mxu0 %v7290
    %7471 = vmatmul.bf16.gmra.mxu0 %v6992
    %v7472 = vpop.f32.mrf.mxu0
    %v7473 = vadd.f32 %v7460, %v7472
    %v7474 = vpop.f32.mrf.mxu0
    %7475 = vdwg.mxu0
    %7476 = vmatpush.bf16.msra.mxu0 %v7320
    %7477 = vmatpush.bf16.msra.mxu0 %v7318
    %7478 = vmatpush.bf16.msra.mxu0 %v7316
    %7479 = vmatpush.bf16.msra.mxu0 %v7314
    %7480 = vmatpush.bf16.msra.mxu0 %v7312
    %7481 = vmatpush.bf16.msra.mxu0 %v7310
    %7482 = vmatpush.bf16.msra.mxu0 %v7308
    %7483 = vmatpush.bf16.msra.mxu0 %v7306
    %7484 = vmatmul.bf16.gmra.mxu0 %v6993
    %v7485 = vpop.f32.mrf.mxu0
    %v7486 = vadd.f32 %v7473, %v7485
    %v7487 = vpop.f32.mrf.mxu0
    %7488 = vdwg.mxu0
    %vm7489 = vcmp.gt.f32.partialorder %v7434, 0.0
    %vm7490 = vcmp.gt.f32.partialorder %v7486, 0.0
    %v7491 = vmul.f32 %v7434, 0.2
    %v7492 = vmul.f32 %v7486, 0.2
    %v7493 = vsel %vm7489, %v7434, %v7491
    %v7494 = vsel %vm7490, %v7486, %v7492
    %v7495 = vrot.slane %v7493, 4
    %v7496 = vadd.f32 %v7493, %v7495
    %v7497 = vrot.slane %v7496, 2
    %v7498 = vadd.f32 %v7496, %v7497
    %v7499 = vrot.slane %v7498, 1
    %v7500 = vadd.f32 %v7498, %v7499
    %v7501 = vrot.slane %v7494, 4
    %v7502 = vadd.f32 %v7494, %v7501
    %v7503 = vrot.slane %v7502, 2
    %v7504 = vadd.f32 %v7502, %v7503
    %v7505 = vrot.slane %v7504, 1
    %v7506 = vadd.f32 %v7504, %v7505
    %v7507 = vmul.f32 %v7500, %v570
    %v7508 = vmul.f32 %v7506, %v570
    %v7509 = vsub.f32 %v7493, %v7507
    %v7510 = vsub.f32 %v7494, %v7508
    %v7511 = vmul.f32 %v7509, %v7509
    %v7512 = vmul.f32 %v7510, %v7510
    %v7513 = vrot.slane %v7511, 4
    %v7514 = vadd.f32 %v7511, %v7513
    %v7515 = vrot.slane %v7514, 2
    %v7516 = vadd.f32 %v7514, %v7515
    %v7517 = vrot.slane %v7516, 1
    %v7518 = vadd.f32 %v7516, %v7517
    %v7519 = vrot.slane %v7512, 4
    %v7520 = vadd.f32 %v7512, %v7519
    %v7521 = vrot.slane %v7520, 2
    %v7522 = vadd.f32 %v7520, %v7521
    %v7523 = vrot.slane %v7522, 1
    %v7524 = vadd.f32 %v7522, %v7523
    %v7525 = vmul.f32 %v7518, %v570
    %v7526 = vmul.f32 %v7524, %v570
    %v7527 = vadd.f32 %v7525, 1e-05
    %v7528 = vadd.f32 %v7526, 1e-05
    %v7529 = vrsqrt.pop %v7527
    %v7530 = vmul.f32 %v7529, %v7527
    %v7531 = vmul.f32 %v7530, %v7529
    %v7532 = vmul.f32 0.5, %v7531
    %v7533 = vsub.f32 1.5, %v7532
    %v7534 = vmul.f32 %v7529, %v7533
    %vm7535 = vweird.f32 %v7527
    %vm7536 = vweird.f32 %v7529
    %vm7537 = vmor %vm7535, %vm7536
    %v7538 = vsel %vm7537, %v7529, %v7534
    %v7539 = vrsqrt.pop %v7528
    %v7540 = vmul.f32 %v7539, %v7528
    %v7541 = vmul.f32 %v7540, %v7539
    %v7542 = vmul.f32 0.5, %v7541
    %v7543 = vsub.f32 1.5, %v7542
    %v7544 = vmul.f32 %v7539, %v7543
    %vm7545 = vweird.f32 %v7528
    %vm7546 = vweird.f32 %v7539
    %vm7547 = vmor %vm7545, %vm7546
    %v7548 = vsel %vm7547, %v7539, %v7544
    %v7549 = vmul.f32 %v7509, %v7538
    %v7550 = vmul.f32 %v7510, %v7548
    %s7551 = scalar_lea.vmem [#allocation12], 129
    %v7552 = vld [vmem:[%s7551] ss:$8 sm:$0x3]
    %v7554 = vperm.slane %v7552, 0
    %v7555 = vperm.slane %v7552, 1
    %v7558 = vmul.f32 %v7549, %v7554
    %v7559 = vmul.f32 %v7550, %v7555
    %s7560 = scalar_lea.vmem [#allocation12], 130
    %v7561 = vld [vmem:[%s7560] ss:$8 sm:$0x3]
    %v7563 = vperm.slane %v7561, 0
    %v7564 = vperm.slane %v7561, 1
    %v7567 = vadd.f32 %v7558, %v7563
    %v7568 = vadd.f32 %v7559, %v7564
    %s7569 = smul.u32 %s633, 1
    %s7570 = sshll.u32 %s7569, 4
    %7571 = dma.done %s441, %s7570
    %v7572 = vpack.c.bf16 %v7567, %v7567
    %v7573 = vpack.c.bf16 %v7568, %v7568
    %v7574 = vld [vmem:[#allocation10] sm:$0xf]
    %v7575 = vld [vmem:[#allocation10 + $0x4] sm:$0xf]
    %v7576 = vld [vmem:[#allocation10 + $0x8] sm:$0xf]
    %v7577 = vld [vmem:[#allocation10 + $0xc] sm:$0xf]
    %v7578 = vld [vmem:[#allocation10 + $0x10] sm:$0xf]
    %v7579 = vld [vmem:[#allocation10 + $0x14] sm:$0xf]
    %v7580 = vld [vmem:[#allocation10 + $0x18] sm:$0xf]
    %v7581 = vld [vmem:[#allocation10 + $0x1c] sm:$0xf]
    %v7582 = vld [vmem:[#allocation10 + $0x20] sm:$0xf]
    %v7583 = vld [vmem:[#allocation10 + $0x24] sm:$0xf]
    %v7584 = vld [vmem:[#allocation10 + $0x28] sm:$0xf]
    %v7585 = vld [vmem:[#allocation10 + $0x2c] sm:$0xf]
    %v7586 = vld [vmem:[#allocation10 + $0x30] sm:$0xf]
    %v7587 = vld [vmem:[#allocation10 + $0x34] sm:$0xf]
    %v7588 = vld [vmem:[#allocation10 + $0x38] sm:$0xf]
    %v7589 = vld [vmem:[#allocation10 + $0x3c] sm:$0xf]
    %v7590 = vld [vmem:[#allocation10 + $0x40] sm:$0xf]
    %v7591 = vld [vmem:[#allocation10 + $0x44] sm:$0xf]
    %v7592 = vld [vmem:[#allocation10 + $0x48] sm:$0xf]
    %v7593 = vld [vmem:[#allocation10 + $0x4c] sm:$0xf]
    %v7594 = vld [vmem:[#allocation10 + $0x50] sm:$0xf]
    %v7595 = vld [vmem:[#allocation10 + $0x54] sm:$0xf]
    %v7596 = vld [vmem:[#allocation10 + $0x58] sm:$0xf]
    %v7597 = vld [vmem:[#allocation10 + $0x5c] sm:$0xf]
    %v7598 = vld [vmem:[#allocation10 + $0x60] sm:$0xf]
    %v7599 = vld [vmem:[#allocation10 + $0x64] sm:$0xf]
    %v7600 = vld [vmem:[#allocation10 + $0x68] sm:$0xf]
    %v7601 = vld [vmem:[#allocation10 + $0x6c] sm:$0xf]
    %v7602 = vld [vmem:[#allocation10 + $0x70] sm:$0xf]
    %v7603 = vld [vmem:[#allocation10 + $0x74] sm:$0xf]
    %v7604 = vld [vmem:[#allocation10 + $0x78] sm:$0xf]
    %v7605 = vld [vmem:[#allocation10 + $0x7c] sm:$0xf]
    %v7606 = vld [vmem:[#allocation12 + $0x83] ss:$0 sm:$0xff]
    %v7639 = vunpack.c.l.b16 %v7574
    %v7640 = vunpack.c.l.b16 %v7575
    %v7641 = vunpack.c.l.b16 %v7576
    %v7642 = vunpack.c.l.b16 %v7577
    %v7643 = vunpack.c.l.b16 %v7578
    %v7644 = vunpack.c.l.b16 %v7579
    %v7645 = vunpack.c.l.b16 %v7580
    %v7646 = vunpack.c.l.b16 %v7581
    %v7647 = vunpack.c.l.b16 %v7582
    %v7648 = vunpack.c.l.b16 %v7583
    %v7649 = vunpack.c.l.b16 %v7584
    %v7650 = vunpack.c.l.b16 %v7585
    %v7651 = vunpack.c.l.b16 %v7586
    %v7652 = vunpack.c.l.b16 %v7587
    %v7653 = vunpack.c.l.b16 %v7588
    %v7654 = vunpack.c.l.b16 %v7589
    %v7655 = vunpack.c.l.b16 %v7590
    %v7656 = vunpack.c.l.b16 %v7591
    %v7657 = vunpack.c.l.b16 %v7592
    %v7658 = vunpack.c.l.b16 %v7593
    %v7659 = vunpack.c.l.b16 %v7594
    %v7660 = vunpack.c.l.b16 %v7595
    %v7661 = vunpack.c.l.b16 %v7596
    %v7662 = vunpack.c.l.b16 %v7597
    %v7663 = vunpack.c.l.b16 %v7598
    %v7664 = vunpack.c.l.b16 %v7599
    %v7665 = vunpack.c.l.b16 %v7600
    %v7666 = vunpack.c.l.b16 %v7601
    %v7667 = vunpack.c.l.b16 %v7602
    %v7668 = vunpack.c.l.b16 %v7603
    %v7669 = vunpack.c.l.b16 %v7604
    %v7670 = vunpack.c.l.b16 %v7605
    %v7671 = vpack.c.b16 %v7640, %v7639
    %v7672 = vpack.c.b16 %v7642, %v7641
    %v7673 = vpack.c.b16 %v7644, %v7643
    %v7674 = vpack.c.b16 %v7646, %v7645
    %v7675 = vpack.c.b16 %v7648, %v7647
    %v7676 = vpack.c.b16 %v7650, %v7649
    %v7677 = vpack.c.b16 %v7652, %v7651
    %v7678 = vpack.c.b16 %v7654, %v7653
    %v7679 = vpack.c.b16 %v7656, %v7655
    %v7680 = vpack.c.b16 %v7658, %v7657
    %v7681 = vpack.c.b16 %v7660, %v7659
    %v7682 = vpack.c.b16 %v7662, %v7661
    %v7683 = vpack.c.b16 %v7664, %v7663
    %v7684 = vpack.c.b16 %v7666, %v7665
    %v7685 = vpack.c.b16 %v7668, %v7667
    %v7686 = vpack.c.b16 %v7670, %v7669
    %7703 = vmatpush.bf16.msra.mxu0 %v7678
    %7704 = vmatpush.bf16.msra.mxu0 %v7677
    %7705 = vmatpush.bf16.msra.mxu0 %v7676
    %7706 = vmatpush.bf16.msra.mxu0 %v7675
    %7707 = vmatpush.bf16.msra.mxu0 %v7674
    %7708 = vmatpush.bf16.msra.mxu0 %v7673
    %7709 = vmatpush.bf16.msra.mxu0 %v7672
    %7710 = vmatpush.bf16.msra.mxu0 %v7671
    %7711 = vmatmul.bf16.gmra.mxu0 %v7572
    %v7712 = vpop.f32.mrf.mxu0
    %v7713 = vadd.f32 %v7606, %v7712
    %v7714 = vpop.f32.mrf.mxu0
    %7715 = vdwg.mxu0
    %7716 = vmatpush.bf16.msra.mxu0 %v7686
    %7717 = vmatpush.bf16.msra.mxu0 %v7685
    %7718 = vmatpush.bf16.msra.mxu0 %v7684
    %7719 = vmatpush.bf16.msra.mxu0 %v7683
    %7720 = vmatpush.bf16.msra.mxu0 %v7682
    %7721 = vmatpush.bf16.msra.mxu0 %v7681
    %7722 = vmatpush.bf16.msra.mxu0 %v7680
    %7723 = vmatpush.bf16.msra.mxu0 %v7679
    %7724 = vmatmul.bf16.gmra.mxu0 %v7573
    %v7725 = vpop.f32.mrf.mxu0
    %v7726 = vadd.f32 %v7713, %v7725
    %v7727 = vpop.f32.mrf.mxu0
    %7728 = vdwg.mxu0
    %7729 = vst.msk [vmem:[%s13] sm:$0xff] %vm516, %v7726
    %7731 = vrot.lane.b32.xlu0 %v4205, 16
    %v7732 = vpop.permute.xlu0 %7731
    %vm7734 = vcmask 195712
    %7735 = vst.msk [vmem:[%s13] sm:$0xff] %vm7734, %v7732
    %vm7736 = vcmask 261312
    %7737 = vst.msk [vmem:[%s13] sm:$0xff] %vm7736, %v7732
    // Predicated region
    $region148: #{cvae_forward.1} parent=1 // pred_check
      _
    $region149: #{cvae_forward.1} parent=1 // pred_check_branch
      %7739 = sbr.rel (0) target = $region151
    $region150: #{cvae_forward.1} parent=1 // pred_region
      _
    $region151: #{cvae_forward.1} parent=1 // pred_fallthru
      _
    // Predicated region
    $region152: #{cvae_forward.1} parent=1 // pred_check
      _
    $region153: #{cvae_forward.1} parent=1 // pred_check_branch
      %7741 = sbr.rel (0) target = $region155
    $region154: #{cvae_forward.1} parent=1 // pred_region
      _
    $region155: #{cvae_forward.1} parent=1 // pred_fallthru
      _
    %7742 = vsyncpa [#allocation13], 1
  %7743 = vsyncmov [#allocation11]
  %s7744 = vpop.sfrf %7743
  %p7745 = scmp.eq.s32.totalorder %s7744, 0
  %p7746 = pneg %p7745
  %7748 = shalt.err (%p7746)
  %s7749 = scalar_lea.sflag [#allocation11], 1
  %7750 = vsyncmov %s7749
  %s7751 = vpop.sfrf %7750
  %p7752 = scmp.eq.s32.totalorder %s7751, 0
  %p7753 = pneg %p7752
  %7755 = shalt.err (%p7753)
  %s7756 = scalar_lea.sflag [#allocation11], 2
  %7757 = vsyncmov %s7756
  %s7758 = vpop.sfrf %7757
  %p7759 = scmp.eq.s32.totalorder %s7758, 0
  %p7760 = pneg %p7759
  %7762 = shalt.err (%p7760)
  %s7763 = scalar_lea.sflag [#allocation11], 3
  %7764 = vsyncmov %s7763
  %s7765 = vpop.sfrf %7764
  %p7766 = scmp.eq.s32.totalorder %s7765, 0
  %p7767 = pneg %p7766
  %7769 = shalt.err (%p7767)
  %s7770 = scalar_lea.sflag [#allocation11], 4
  %7771 = vsyncmov %s7770
  %s7772 = vpop.sfrf %7771
  %p7773 = scmp.eq.s32.totalorder %s7772, 0
  %p7774 = pneg %p7773
  %7776 = shalt.err (%p7774)
  %s7777 = scalar_lea.sflag [#allocation11], 5
  %7778 = vsyncmov %s7777
  %s7779 = vpop.sfrf %7778
  %p7780 = scmp.eq.s32.totalorder %s7779, 0
  %p7781 = pneg %p7780
  %7783 = shalt.err (%p7781)
  %s7784 = scalar_lea.sflag [#allocation11], 6
  %7785 = vsyncmov %s7784
  %s7786 = vpop.sfrf %7785
  %p7787 = scmp.eq.s32.totalorder %s7786, 0
  %p7788 = pneg %p7787
  %7790 = shalt.err (%p7788)
  %s7791 = scalar_lea.sflag [#allocation11], 7
  %7792 = vsyncmov %s7791
  %s7793 = vpop.sfrf %7792
  %p7794 = scmp.eq.s32.totalorder %s7793, 0
  %p7795 = pneg %p7794
  %7797 = shalt.err (%p7795)
  %s7798 = scalar_lea.sflag [#allocation11], 8
  %7799 = vsyncmov %s7798
  %s7800 = vpop.sfrf %7799
  %p7801 = scmp.eq.s32.totalorder %s7800, 0
  %p7802 = pneg %p7801
  %7804 = shalt.err (%p7802)

</llo_original>
